<compile_context>
chip_gen: v7x
topology: tpu7x:2x2x1
jax: 0.10.0
libtpu: 0.0.40
codegen_flags: <defaults>
</compile_context>

<pallas_src>
import functools

import jax
import jax.numpy as jnp
from jax.experimental import pallas as pl
from jax.experimental.pallas import tpu as pltpu

LANE = 128   # pad all channel / feature dims to the 128-lane vreg width
K1 = 32      # conv1 im2col contraction (3*3*3 = 27) padded to 32
SUB = 8      # sublane padding for the tiny per-image row counts (GAP/proj)


# ----------------------------------------------------------------------------
# Fused kernel: conv1+BN+ReLU -> conv2+BN+ReLU -> GAP -> Linear (+normalize)
# One grid step = `ipb` images.  All intermediates stay in VMEM.
# ----------------------------------------------------------------------------
def _fused_head_kernel(panel_ref, w1_ref, s1_ref, b1_ref, mask1_ref,
                       w2_ref, s2_ref, b2_ref,
                       gap_ref, wp_ref, bp_ref,
                       o_ref,
                       h1p_ref,
                       *, H, W, ipb, normalized):
    Wp = W + 2
    cell = (H + 2) * Wp                 # padded-flat rows per image
    M = ipb * cell                      # activation rows per grid step
    guard = h1p_ref.shape[0] - M        # OOB-guard rows for the row-offset taps

    # ---- conv1 (3x3/s1/p1) as ONE lane-dense MXU matmul over the wrapper-built
    #      im2col panel, fused with folded BatchNorm(eval) + ReLU ---------------
    h1 = jnp.dot(panel_ref[...], w1_ref[...], preferred_element_type=jnp.float32)
    h1 = jnp.maximum(h1 * s1_ref[...] + b1_ref[...], 0.0)          # [M, LANE]
    # Zero the 1-px halo ring (conv2's padding) via the precomputed row mask and
    # write the activation ONCE, already in conv2's padded-flat layout, in bf16.
    h1p_ref[:M, :] = (h1 * mask1_ref[...]).astype(jnp.bfloat16)
    h1p_ref[M:, :] = jnp.zeros((guard, LANE), jnp.bfloat16)        # keep taps finite

    # ---- conv2 + folded BN + ReLU: 9 row-offset taps, value-accumulated -------
    # Each tap is a plain row-offset view (no slice+reshape copies); the first
    # tap assigns (no accumulator zero-init), the rest add.
    acc = None
    for k in range(9):
        dy, dx = divmod(k, 3)
        patch = h1p_ref[pl.ds(dy * Wp + dx, M), :]                 # [M, LANE] bf16
        part = jnp.dot(patch, w2_ref[k], preferred_element_type=jnp.float32)
        acc = part if acc is None else acc + part
    a2 = jnp.maximum(acc * s2_ref[...] + b2_ref[...], 0.0)         # [M, LANE]

    # ---- global average pool: one tiny selection-matrix matmul that masks the
    #      junk/halo rows, segments per image, and averages in a single pass ----
    feat = jnp.dot(gap_ref[...], a2, preferred_element_type=jnp.float32)  # [SUB, LANE]

    # ---- projector Linear + optional F.normalize(p=2, dim=1, eps=1e-12) -------
    z = jnp.dot(feat.astype(jnp.bfloat16), wp_ref[...],
                preferred_element_type=jnp.float32) + bp_ref[...]         # [SUB, LANE]
    if normalized:
        ss = jnp.sum(z * z, axis=-1, keepdims=True)
        # z / max(||z||, eps) == z * rsqrt(max(||z||^2, eps^2));  rsqrt -> EUP
        z = z * jax.lax.rsqrt(jnp.maximum(ss, 1e-24))
    o_ref[...] = z[:ipb].reshape(1, ipb, LANE)


# ----------------------------------------------------------------------------
# Parameter / layout preparation (runs once under jit, negligible XLA work)
# ----------------------------------------------------------------------------
def _fold_bn(gamma, beta, mean, var, cout_pad, eps=1e-5):
    inv = 1.0 / jnp.sqrt(var + eps)
    scale = gamma * inv
    shift = beta - mean * scale
    pad = cout_pad - scale.shape[0]
    scale = jnp.pad(scale, (0, pad)).reshape(1, cout_pad).astype(jnp.float32)
    shift = jnp.pad(shift, (0, pad)).reshape(1, cout_pad).astype(jnp.float32)
    return scale, shift


def _prep_w1(w_oihw):
    cout, cin, kh, kw = w_oihw.shape
    # (kh, kw, cin) contraction order -> matches the wrapper im2col concat order.
    w = jnp.transpose(w_oihw, (2, 3, 1, 0)).reshape(kh * kw * cin, cout)
    w = jnp.pad(w, ((0, K1 - kh * kw * cin), (0, LANE - cout)))
    return w.astype(jnp.bfloat16)


def _prep_w2(w_oihw, cin_pad, cout_pad):
    cout, cin, kh, kw = w_oihw.shape
    # OIHW -> (kh*kw, Cin, Cout), matching the (dy, dx) tap order in-kernel.
    w = jnp.transpose(w_oihw, (2, 3, 1, 0)).reshape(kh * kw, cin, cout)
    w = jnp.pad(w, ((0, 0), (0, cin_pad - cin), (0, cout_pad - cout)))
    return w.astype(jnp.bfloat16)


def _im2col_conv1(x_nhwc, H, W):
    # conv1 is evaluated on the *padded* (H+2)x(W+2) output grid so its result
    # can be stored straight into conv2's halo-padded flat layout in one store.
    B, _, _, cin = x_nhwc.shape
    xp = jnp.pad(x_nhwc, ((0, 0), (2, 2), (2, 2), (0, 0)))
    Hp, Wp = H + 2, W + 2
    taps = [xp[:, dy:dy + Hp, dx:dx + Wp, :] for dy in range(3) for dx in range(3)]
    panel = jnp.concatenate(taps, axis=-1).reshape(B * Hp * Wp, 9 * cin)
    panel = jnp.pad(panel, ((0, 0), (0, K1 - 9 * cin)))
    return panel.astype(jnp.bfloat16)


def _masks(H, W, ipb):
    Hp, Wp = H + 2, W + 2
    cell = Hp * Wp
    M = ipb * cell
    r = jnp.arange(M)
    rr = r % cell
    py, px = rr // Wp, rr % Wp
    # conv1 halo mask (1 on the interior H x W pixels, 0 on the padding ring)
    interior = (py >= 1) & (py <= H) & (px >= 1) & (px <= W)
    mask1 = interior.astype(jnp.float32).reshape(M, 1)
    # conv2 accumulator row j = i*cell + y*Wp + x holds output pixel (i, y, x);
    # GAP selection matrix: 1/(H*W) on image i's valid rows, 0 elsewhere.
    i_img = r // cell
    valid = (py < H) & (px < W)
    rows = jnp.arange(SUB)[:, None]
    gap = jnp.where((rows == i_img[None, :]) & valid[None, :],
                    1.0 / (H * W), 0.0).astype(jnp.float32)
    return mask1, gap


# ----------------------------------------------------------------------------
# Forward: both views in one pallas_call
# ----------------------------------------------------------------------------
@functools.partial(jax.jit, static_argnames=("normalized", "images_per_step"))
def cov_model3_forward(params, y1, y2, normalized=True, images_per_step=2):
    y = jnp.concatenate([y1, y2], axis=0)                    # [2N, C, H, W]
    B, Cin, H, W = y.shape
    ipb = images_per_step if (B % images_per_step == 0) else B
    G = B // ipb
    Hp, Wp = H + 2, W + 2
    cell = Hp * Wp
    M = ipb * cell
    guard = -(-(2 * Wp + 2) // SUB) * SUB                    # row-offset OOB guard

    x = jnp.transpose(y, (0, 2, 3, 1))                       # NHWC
    panel = _im2col_conv1(x, H, W)                           # [B*cell, K1] bf16

    w1 = _prep_w1(params["w1"])
    s1, b1 = _fold_bn(params["bn1_g"], params["bn1_b"],
                      params["bn1_m"], params["bn1_v"], LANE)
    w2 = _prep_w2(params["w2"], LANE, LANE)
    s2, b2 = _fold_bn(params["bn2_g"], params["bn2_b"],
                      params["bn2_m"], params["bn2_v"], LANE)
    mask1, gap = _masks(H, W, ipb)

    feat_dim, proj_dim = params["proj_w"].shape
    wp = jnp.pad(params["proj_w"],
                 ((0, LANE - feat_dim), (0, LANE - proj_dim))).astype(jnp.bfloat16)
    bp = jnp.pad(params["proj_b"],
                 (0, LANE - proj_dim)).reshape(1, LANE).astype(jnp.float32)

    kernel = functools.partial(_fused_head_kernel, H=H, W=W, ipb=ipb,
                               normalized=normalized)
    z = pl.pallas_call(
        kernel,
        out_shape=jax.ShapeDtypeStruct((G, ipb, LANE), jnp.float32),
        grid=(G,),
        in_specs=[
            pl.BlockSpec((M, K1), lambda g: (g, 0)),             # conv1 im2col panel
            pl.BlockSpec((K1, LANE), lambda g: (0, 0)),          # w1
            pl.BlockSpec((1, LANE), lambda g: (0, 0)),           # bn1 scale
            pl.BlockSpec((1, LANE), lambda g: (0, 0)),           # bn1 shift
            pl.BlockSpec((M, 1), lambda g: (0, 0)),              # conv1 halo mask
            pl.BlockSpec((9, LANE, LANE), lambda g: (0, 0, 0)),  # w2 (9 taps)
            pl.BlockSpec((1, LANE), lambda g: (0, 0)),           # bn2 scale
            pl.BlockSpec((1, LANE), lambda g: (0, 0)),           # bn2 shift
            pl.BlockSpec((SUB, M), lambda g: (0, 0)),            # GAP selection
            pl.BlockSpec((LANE, LANE), lambda g: (0, 0)),        # proj W
            pl.BlockSpec((1, LANE), lambda g: (0, 0)),           # proj b
        ],
        out_specs=pl.BlockSpec((1, ipb, LANE), lambda g: (g, 0, 0)),
        scratch_shapes=[
            pltpu.VMEM((M + guard, LANE), jnp.bfloat16),         # conv1 act, flat+halo
        ],
        compiler_params=pltpu.CompilerParams(
            dimension_semantics=("parallel",)),                  # megacore hint
    )(panel, w1, s1, b1, mask1, w2, s2, b2, gap, wp, bp)

    z = z.reshape(B, LANE)[:, :proj_dim]
    n = y1.shape[0]
    return z[:n], z[n:]


# ----------------------------------------------------------------------------
# Pure-JAX reference (for numerical validation)
# ----------------------------------------------------------------------------
def _reference_forward(params, y1, y2, normalized=True):
    def conv_bn_relu(x, w, g, b, m, v, eps=1e-5):
        out = jax.lax.conv_general_dilated(
            x, jnp.transpose(w, (2, 3, 1, 0)), (1, 1), "SAME",
            dimension_numbers=("NHWC", "HWIO", "NHWC"))
        scale = g / jnp.sqrt(v + eps)
        return jnp.maximum(out * scale + (b - m * scale), 0.0)

    def backbone(y):
        x = jnp.transpose(y, (0, 2, 3, 1)).astype(jnp.float32)
        x = conv_bn_relu(x, params["w1"], params["bn1_g"], params["bn1_b"],
                         params["bn1_m"], params["bn1_v"])
        x = conv_bn_relu(x, params["w2"], params["bn2_g"], params["bn2_b"],
                         params["bn2_m"], params["bn2_v"])
        return jnp.mean(x, axis=(1, 2))

    def head(f):
        z = f @ params["proj_w"] + params["proj_b"]
        if normalized:
            nrm = jnp.linalg.norm(z, axis=1, keepdims=True)
            z = z / jnp.maximum(nrm, 1e-12)
        return z

    return head(backbone(y1)), head(backbone(y2))


# ----------------------------------------------------------------------------
# Parameters
# ----------------------------------------------------------------------------
def init_params(key, cin=3, c1=16, feat_dim=32, proj_dim=16):
    ks = jax.random.split(key, 4)
    scale = 0.1
    return {
        "w1": scale * jax.random.normal(ks[0], (c1, cin, 3, 3), jnp.float32),
        "bn1_g": jnp.ones((c1,), jnp.float32),
        "bn1_b": jnp.zeros((c1,), jnp.float32),
        "bn1_m": jnp.zeros((c1,), jnp.float32),
        "bn1_v": jnp.ones((c1,), jnp.float32),
        "w2": scale * jax.random.normal(ks[1], (feat_dim, c1, 3, 3), jnp.float32),
        "bn2_g": jnp.ones((feat_dim,), jnp.float32),
        "bn2_b": jnp.zeros((feat_dim,), jnp.float32),
        "bn2_m": jnp.zeros((feat_dim,), jnp.float32),
        "bn2_v": jnp.ones((feat_dim,), jnp.float32),
        "proj_w": scale * jax.random.normal(ks[2], (feat_dim, proj_dim), jnp.float32),
        "proj_b": scale * jax.random.normal(ks[3], (proj_dim,), jnp.float32),
    }


if __name__ == "__main__":
    key = jax.random.PRNGKey(0)
    k_p, k_y1, k_y2 = jax.random.split(key, 3)

    params = init_params(k_p, cin=3, c1=16, feat_dim=32, proj_dim=16)

    # Two augmented views, PyTorch NCHW convention: [batch=2, C=3, H=16, W=16]
    y1 = jax.random.normal(k_y1, (2, 3, 16, 16), jnp.float32)
    y2 = jax.random.normal(k_y2, (2, 3, 16, 16), jnp.float32)

    z1, z2 = cov_model3_forward(params, y1, y2, normalized=True)
    jax.block_until_ready((z1, z2))

    # sanity: shapes, unit L2 norms, and agreement with a pure-JAX reference
    assert z1.shape == (2, 16) and z2.shape == (2, 16)
    n1 = jnp.linalg.norm(z1, axis=1)
    n2 = jnp.linalg.norm(z2, axis=1)
    assert jnp.allclose(n1, 1.0, atol=1e-4) and jnp.allclose(n2, 1.0, atol=1e-4)

    r1, r2 = _reference_forward(params, y1, y2, normalized=True)
    assert jnp.allclose(z1, r1, atol=5e-2), float(jnp.max(jnp.abs(z1 - r1)))
    assert jnp.allclose(z2, r2, atol=5e-2), float(jnp.max(jnp.abs(z2 - r2)))

    print("KERNEL_OK")
</pallas_src>

<mosaic_0001>
module attributes {stable_mosaic.version = 11 : i64} {
  func.func @_fused_head_kernel(%arg0: i32, %arg1: memref<648x32xbf16, #tpu.memory_space<vmem>>, %arg2: memref<32x128xbf16, #tpu.memory_space<vmem>>, %arg3: memref<1x128xf32, #tpu.memory_space<vmem>>, %arg4: memref<1x128xf32, #tpu.memory_space<vmem>>, %arg5: memref<648x1xf32, #tpu.memory_space<vmem>>, %arg6: memref<9x128x128xbf16, #tpu.memory_space<vmem>>, %arg7: memref<1x128xf32, #tpu.memory_space<vmem>>, %arg8: memref<1x128xf32, #tpu.memory_space<vmem>>, %arg9: memref<8x648xf32, #tpu.memory_space<vmem>>, %arg10: memref<128x128xbf16, #tpu.memory_space<vmem>>, %arg11: memref<1x128xf32, #tpu.memory_space<vmem>>, %arg12: memref<1x2x128xf32, #tpu.memory_space<vmem>>, %arg13: memref<688x128xbf16, #tpu.memory_space<vmem>>) attributes {dimension_semantics = [#tpu.dimension_semantics<parallel>], iteration_bounds = array<i64: 2>, scalar_prefetch = 0 : i64, scratch_operands = 1 : i64, tpu.core_type = #tpu.core_type<tc>, window_params = [{transform_indices = @transform_0, window_bounds = array<i64: 648, 32>}, {pipeline_mode = #tpu.pipeline_mode<synchronous>, transform_indices = @transform_1, window_bounds = array<i64: 32, 128>}, {pipeline_mode = #tpu.pipeline_mode<synchronous>, transform_indices = @transform_2, window_bounds = array<i64: 1, 128>}, {pipeline_mode = #tpu.pipeline_mode<synchronous>, transform_indices = @transform_3, window_bounds = array<i64: 1, 128>}, {pipeline_mode = #tpu.pipeline_mode<synchronous>, transform_indices = @transform_4, window_bounds = array<i64: 648, 1>}, {pipeline_mode = #tpu.pipeline_mode<synchronous>, transform_indices = @transform_5, window_bounds = array<i64: 9, 128, 128>}, {pipeline_mode = #tpu.pipeline_mode<synchronous>, transform_indices = @transform_6, window_bounds = array<i64: 1, 128>}, {pipeline_mode = #tpu.pipeline_mode<synchronous>, transform_indices = @transform_7, window_bounds = array<i64: 1, 128>}, {pipeline_mode = #tpu.pipeline_mode<synchronous>, transform_indices = @transform_8, window_bounds = array<i64: 8, 648>}, {pipeline_mode = #tpu.pipeline_mode<synchronous>, transform_indices = @transform_9, window_bounds = array<i64: 128, 128>}, {pipeline_mode = #tpu.pipeline_mode<synchronous>, transform_indices = @transform_10, window_bounds = array<i64: 1, 128>}, {transform_indices = @transform_11, window_bounds = array<i64: 1, 2, 128>}]} {
    %c0 = arith.constant 0 : index
    %c0_0 = arith.constant 0 : index
    %0 = vector.load %arg1[%c0, %c0_0] : memref<648x32xbf16, #tpu.memory_space<vmem>>, vector<648x32xbf16>
    %c0_1 = arith.constant 0 : index
    %c0_2 = arith.constant 0 : index
    %1 = vector.load %arg2[%c0_1, %c0_2] : memref<32x128xbf16, #tpu.memory_space<vmem>>, vector<32x128xbf16>
    %cst = arith.constant dense<0.000000e+00> : vector<648x128xf32>
    %2 = tpu.matmul %0, %1, %cst {dimension_numbers = #tpu.dot_dimension_numbers<[1], [0], [0], [1], [0, 0, 1, 1], [], []>} : vector<648x32xbf16>, vector<32x128xbf16>, vector<648x128xf32> -> vector<648x128xf32>
    %c0_3 = arith.constant 0 : index
    %c0_4 = arith.constant 0 : index
    %3 = vector.load %arg3[%c0_3, %c0_4] : memref<1x128xf32, #tpu.memory_space<vmem>>, vector<1x128xf32>
    %4 = vector.broadcast %3 : vector<1x128xf32> to vector<648x128xf32>
    %5 = arith.mulf %2, %4 : vector<648x128xf32>
    %c0_5 = arith.constant 0 : index
    %c0_6 = arith.constant 0 : index
    %6 = vector.load %arg4[%c0_5, %c0_6] : memref<1x128xf32, #tpu.memory_space<vmem>>, vector<1x128xf32>
    %7 = vector.broadcast %6 : vector<1x128xf32> to vector<648x128xf32>
    %8 = arith.addf %5, %7 : vector<648x128xf32>
    %cst_7 = arith.constant 0.000000e+00 : f32
    %9 = vector.broadcast %cst_7 : f32 to vector<648x128xf32>
    %10 = arith.maximumf %8, %9 : vector<648x128xf32>
    %c0_8 = arith.constant 0 : index
    %c0_9 = arith.constant 0 : index
    %11 = vector.load %arg5[%c0_8, %c0_9] : memref<648x1xf32, #tpu.memory_space<vmem>>, vector<648x1xf32>
    %12 = vector.broadcast %11 : vector<648x1xf32> to vector<648x128xf32>
    %13 = arith.mulf %10, %12 : vector<648x128xf32>
    %14 = arith.truncf %13 : vector<648x128xf32> to vector<648x128xbf16>
    %c0_10 = arith.constant 0 : index
    %c0_11 = arith.constant 0 : index
    %15 = vector.load %arg13[%c0_10, %c0_11] : memref<688x128xbf16, #tpu.memory_space<vmem>>, vector<648x128xbf16>
    tpu.vector_store %arg13[%c0_10, %c0_11], %14 {strides = array<i32>} : memref<688x128xbf16, #tpu.memory_space<vmem>>, vector<648x128xbf16>,
    %cst_12 = arith.constant 0.000000e+00 : bf16
    %16 = vector.broadcast %cst_12 : bf16 to vector<40x128xbf16>
    %c648 = arith.constant 648 : index
    %c0_13 = arith.constant 0 : index
    %17 = vector.load %arg13[%c648, %c0_13] : memref<688x128xbf16, #tpu.memory_space<vmem>>, vector<40x128xbf16>
    tpu.vector_store %arg13[%c648, %c0_13], %16 {strides = array<i32>} : memref<688x128xbf16, #tpu.memory_space<vmem>>, vector<40x128xbf16>,
    %c0_14 = arith.constant 0 : index
    %c0_15 = arith.constant 0 : index
    %18 = vector.load %arg13[%c0_14, %c0_15] : memref<688x128xbf16, #tpu.memory_space<vmem>>, vector<648x128xbf16>
    %c0_16 = arith.constant 0 : index
    %c0_17 = arith.constant 0 : index
    %c0_18 = arith.constant 0 : index
    %19 = vector.load %arg6[%c0_16, %c0_17, %c0_18] : memref<9x128x128xbf16, #tpu.memory_space<vmem>>, vector<1x128x128xbf16>
    %20 = vector.shape_cast %19 : vector<1x128x128xbf16> to vector<128x128xbf16>
    %cst_19 = arith.constant dense<0.000000e+00> : vector<648x128xf32>
    %21 = tpu.matmul %18, %20, %cst_19 {dimension_numbers = #tpu.dot_dimension_numbers<[1], [0], [0], [1], [0, 0, 1, 1], [], []>} : vector<648x128xbf16>, vector<128x128xbf16>, vector<648x128xf32> -> vector<648x128xf32>
    %c1 = arith.constant 1 : index
    %c0_20 = arith.constant 0 : index
    %22 = vector.load %arg13[%c1, %c0_20] : memref<688x128xbf16, #tpu.memory_space<vmem>>, vector<648x128xbf16>
    %c1_21 = arith.constant 1 : index
    %c0_22 = arith.constant 0 : index
    %c0_23 = arith.constant 0 : index
    %23 = vector.load %arg6[%c1_21, %c0_22, %c0_23] : memref<9x128x128xbf16, #tpu.memory_space<vmem>>, vector<1x128x128xbf16>
    %24 = vector.shape_cast %23 : vector<1x128x128xbf16> to vector<128x128xbf16>
    %cst_24 = arith.constant dense<0.000000e+00> : vector<648x128xf32>
    %25 = tpu.matmul %22, %24, %cst_24 {dimension_numbers = #tpu.dot_dimension_numbers<[1], [0], [0], [1], [0, 0, 1, 1], [], []>} : vector<648x128xbf16>, vector<128x128xbf16>, vector<648x128xf32> -> vector<648x128xf32>
    %26 = arith.addf %21, %25 : vector<648x128xf32>
    %c2 = arith.constant 2 : index
    %c0_25 = arith.constant 0 : index
    %27 = vector.load %arg13[%c2, %c0_25] : memref<688x128xbf16, #tpu.memory_space<vmem>>, vector<648x128xbf16>
    %c2_26 = arith.constant 2 : index
    %c0_27 = arith.constant 0 : index
    %c0_28 = arith.constant 0 : index
    %28 = vector.load %arg6[%c2_26, %c0_27, %c0_28] : memref<9x128x128xbf16, #tpu.memory_space<vmem>>, vector<1x128x128xbf16>
    %29 = vector.shape_cast %28 : vector<1x128x128xbf16> to vector<128x128xbf16>
    %cst_29 = arith.constant dense<0.000000e+00> : vector<648x128xf32>
    %30 = tpu.matmul %27, %29, %cst_29 {dimension_numbers = #tpu.dot_dimension_numbers<[1], [0], [0], [1], [0, 0, 1, 1], [], []>} : vector<648x128xbf16>, vector<128x128xbf16>, vector<648x128xf32> -> vector<648x128xf32>
    %31 = arith.addf %26, %30 : vector<648x128xf32>
    %c18 = arith.constant 18 : index
    %c0_30 = arith.constant 0 : index
    %32 = vector.load %arg13[%c18, %c0_30] : memref<688x128xbf16, #tpu.memory_space<vmem>>, vector<648x128xbf16>
    %c3 = arith.constant 3 : index
    %c0_31 = arith.constant 0 : index
    %c0_32 = arith.constant 0 : index
    %33 = vector.load %arg6[%c3, %c0_31, %c0_32] : memref<9x128x128xbf16, #tpu.memory_space<vmem>>, vector<1x128x128xbf16>
    %34 = vector.shape_cast %33 : vector<1x128x128xbf16> to vector<128x128xbf16>
    %cst_33 = arith.constant dense<0.000000e+00> : vector<648x128xf32>
    %35 = tpu.matmul %32, %34, %cst_33 {dimension_numbers = #tpu.dot_dimension_numbers<[1], [0], [0], [1], [0, 0, 1, 1], [], []>} : vector<648x128xbf16>, vector<128x128xbf16>, vector<648x128xf32> -> vector<648x128xf32>
    %36 = arith.addf %31, %35 : vector<648x128xf32>
    %c19 = arith.constant 19 : index
    %c0_34 = arith.constant 0 : index
    %37 = vector.load %arg13[%c19, %c0_34] : memref<688x128xbf16, #tpu.memory_space<vmem>>, vector<648x128xbf16>
    %c4 = arith.constant 4 : index
    %c0_35 = arith.constant 0 : index
    %c0_36 = arith.constant 0 : index
    %38 = vector.load %arg6[%c4, %c0_35, %c0_36] : memref<9x128x128xbf16, #tpu.memory_space<vmem>>, vector<1x128x128xbf16>
    %39 = vector.shape_cast %38 : vector<1x128x128xbf16> to vector<128x128xbf16>
    %cst_37 = arith.constant dense<0.000000e+00> : vector<648x128xf32>
    %40 = tpu.matmul %37, %39, %cst_37 {dimension_numbers = #tpu.dot_dimension_numbers<[1], [0], [0], [1], [0, 0, 1, 1], [], []>} : vector<648x128xbf16>, vector<128x128xbf16>, vector<648x128xf32> -> vector<648x128xf32>
    %41 = arith.addf %36, %40 : vector<648x128xf32>
    %c20 = arith.constant 20 : index
    %c0_38 = arith.constant 0 : index
    %42 = vector.load %arg13[%c20, %c0_38] : memref<688x128xbf16, #tpu.memory_space<vmem>>, vector<648x128xbf16>
    %c5 = arith.constant 5 : index
    %c0_39 = arith.constant 0 : index
    %c0_40 = arith.constant 0 : index
    %43 = vector.load %arg6[%c5, %c0_39, %c0_40] : memref<9x128x128xbf16, #tpu.memory_space<vmem>>, vector<1x128x128xbf16>
    %44 = vector.shape_cast %43 : vector<1x128x128xbf16> to vector<128x128xbf16>
    %cst_41 = arith.constant dense<0.000000e+00> : vector<648x128xf32>
    %45 = tpu.matmul %42, %44, %cst_41 {dimension_numbers = #tpu.dot_dimension_numbers<[1], [0], [0], [1], [0, 0, 1, 1], [], []>} : vector<648x128xbf16>, vector<128x128xbf16>, vector<648x128xf32> -> vector<648x128xf32>
    %46 = arith.addf %41, %45 : vector<648x128xf32>
    %c36 = arith.constant 36 : index
    %c0_42 = arith.constant 0 : index
    %47 = vector.load %arg13[%c36, %c0_42] : memref<688x128xbf16, #tpu.memory_space<vmem>>, vector<648x128xbf16>
    %c6 = arith.constant 6 : index
    %c0_43 = arith.constant 0 : index
    %c0_44 = arith.constant 0 : index
    %48 = vector.load %arg6[%c6, %c0_43, %c0_44] : memref<9x128x128xbf16, #tpu.memory_space<vmem>>, vector<1x128x128xbf16>
    %49 = vector.shape_cast %48 : vector<1x128x128xbf16> to vector<128x128xbf16>
    %cst_45 = arith.constant dense<0.000000e+00> : vector<648x128xf32>
    %50 = tpu.matmul %47, %49, %cst_45 {dimension_numbers = #tpu.dot_dimension_numbers<[1], [0], [0], [1], [0, 0, 1, 1], [], []>} : vector<648x128xbf16>, vector<128x128xbf16>, vector<648x128xf32> -> vector<648x128xf32>
    %51 = arith.addf %46, %50 : vector<648x128xf32>
    %c37 = arith.constant 37 : index
    %c0_46 = arith.constant 0 : index
    %52 = vector.load %arg13[%c37, %c0_46] : memref<688x128xbf16, #tpu.memory_space<vmem>>, vector<648x128xbf16>
    %c7 = arith.constant 7 : index
    %c0_47 = arith.constant 0 : index
    %c0_48 = arith.constant 0 : index
    %53 = vector.load %arg6[%c7, %c0_47, %c0_48] : memref<9x128x128xbf16, #tpu.memory_space<vmem>>, vector<1x128x128xbf16>
    %54 = vector.shape_cast %53 : vector<1x128x128xbf16> to vector<128x128xbf16>
    %cst_49 = arith.constant dense<0.000000e+00> : vector<648x128xf32>
    %55 = tpu.matmul %52, %54, %cst_49 {dimension_numbers = #tpu.dot_dimension_numbers<[1], [0], [0], [1], [0, 0, 1, 1], [], []>} : vector<648x128xbf16>, vector<128x128xbf16>, vector<648x128xf32> -> vector<648x128xf32>
    %56 = arith.addf %51, %55 : vector<648x128xf32>
    %c38 = arith.constant 38 : index
    %c0_50 = arith.constant 0 : index
    %57 = vector.load %arg13[%c38, %c0_50] : memref<688x128xbf16, #tpu.memory_space<vmem>>, vector<648x128xbf16>
    %c8 = arith.constant 8 : index
    %c0_51 = arith.constant 0 : index
    %c0_52 = arith.constant 0 : index
    %58 = vector.load %arg6[%c8, %c0_51, %c0_52] : memref<9x128x128xbf16, #tpu.memory_space<vmem>>, vector<1x128x128xbf16>
    %59 = vector.shape_cast %58 : vector<1x128x128xbf16> to vector<128x128xbf16>
    %cst_53 = arith.constant dense<0.000000e+00> : vector<648x128xf32>
    %60 = tpu.matmul %57, %59, %cst_53 {dimension_numbers = #tpu.dot_dimension_numbers<[1], [0], [0], [1], [0, 0, 1, 1], [], []>} : vector<648x128xbf16>, vector<128x128xbf16>, vector<648x128xf32> -> vector<648x128xf32>
    %61 = arith.addf %56, %60 : vector<648x128xf32>
    %c0_54 = arith.constant 0 : index
    %c0_55 = arith.constant 0 : index
    %62 = vector.load %arg7[%c0_54, %c0_55] : memref<1x128xf32, #tpu.memory_space<vmem>>, vector<1x128xf32>
    %63 = vector.broadcast %62 : vector<1x128xf32> to vector<648x128xf32>
    %64 = arith.mulf %61, %63 : vector<648x128xf32>
    %c0_56 = arith.constant 0 : index
    %c0_57 = arith.constant 0 : index
    %65 = vector.load %arg8[%c0_56, %c0_57] : memref<1x128xf32, #tpu.memory_space<vmem>>, vector<1x128xf32>
    %66 = vector.broadcast %65 : vector<1x128xf32> to vector<648x128xf32>
    %67 = arith.addf %64, %66 : vector<648x128xf32>
    %cst_58 = arith.constant 0.000000e+00 : f32
    %68 = vector.broadcast %cst_58 : f32 to vector<648x128xf32>
    %69 = arith.maximumf %67, %68 : vector<648x128xf32>
    %c0_59 = arith.constant 0 : index
    %c0_60 = arith.constant 0 : index
    %70 = vector.load %arg9[%c0_59, %c0_60] : memref<8x648xf32, #tpu.memory_space<vmem>>, vector<8x648xf32>
    %cst_61 = arith.constant dense<0.000000e+00> : vector<8x128xf32>
    %71 = tpu.matmul %70, %69, %cst_61 {dimension_numbers = #tpu.dot_dimension_numbers<[1], [0], [0], [1], [0, 0, 1, 1], [], []>} : vector<8x648xf32>, vector<648x128xf32>, vector<8x128xf32> -> vector<8x128xf32>
    %72 = arith.truncf %71 : vector<8x128xf32> to vector<8x128xbf16>
    %c0_62 = arith.constant 0 : index
    %c0_63 = arith.constant 0 : index
    %73 = vector.load %arg10[%c0_62, %c0_63] : memref<128x128xbf16, #tpu.memory_space<vmem>>, vector<128x128xbf16>
    %cst_64 = arith.constant dense<0.000000e+00> : vector<8x128xf32>
    %74 = tpu.matmul %72, %73, %cst_64 {dimension_numbers = #tpu.dot_dimension_numbers<[1], [0], [0], [1], [0, 0, 1, 1], [], []>} : vector<8x128xbf16>, vector<128x128xbf16>, vector<8x128xf32> -> vector<8x128xf32>
    %c0_65 = arith.constant 0 : index
    %c0_66 = arith.constant 0 : index
    %75 = vector.load %arg11[%c0_65, %c0_66] : memref<1x128xf32, #tpu.memory_space<vmem>>, vector<1x128xf32>
    %76 = vector.broadcast %75 : vector<1x128xf32> to vector<8x128xf32>
    %77 = arith.addf %74, %76 : vector<8x128xf32>
    %78 = arith.mulf %77, %77 : vector<8x128xf32>
    %cst_67 = arith.constant dense<0.000000e+00> : vector<8xf32>
    %79 = vector.multi_reduction <add>, %78, %cst_67 [1] : vector<8x128xf32> to vector<8xf32>
    %80 = vector.shape_cast %79 : vector<8xf32> to vector<8x1xf32>
    %cst_68 = arith.constant 1.000000e-24 : f32
    %81 = vector.broadcast %cst_68 : f32 to vector<8x1xf32>
    %82 = arith.maximumf %80, %81 : vector<8x1xf32>
    %83 = math.rsqrt %82 : vector<8x1xf32>
    %84 = vector.broadcast %83 : vector<8x1xf32> to vector<8x128xf32>
    %85 = arith.mulf %77, %84 : vector<8x128xf32>
    %86 = vector.extract_strided_slice %85 {offsets = [0, 0], sizes = [2, 128], strides = [1, 1]} : vector<8x128xf32> to vector<2x128xf32>
    %87 = vector.shape_cast %86 : vector<2x128xf32> to vector<1x2x128xf32>
    %c0_69 = arith.constant 0 : index
    %c0_70 = arith.constant 0 : index
    %c0_71 = arith.constant 0 : index
    %88 = vector.load %arg12[%c0_69, %c0_70, %c0_71] : memref<1x2x128xf32, #tpu.memory_space<vmem>>, vector<1x2x128xf32>
    tpu.vector_store %arg12[%c0_69, %c0_70, %c0_71], %87 {strides = array<i32>} : memref<1x2x128xf32, #tpu.memory_space<vmem>>, vector<1x2x128xf32>,
    return
  }
  func.func @transform_0(%arg0: i32) -> (i32, i32) {
    %c0_i32 = arith.constant 0 : i32
    %c0_i32_0 = arith.constant 0 : i32
    return %arg0, %c0_i32 : i32, i32
  }
  func.func @transform_1(%arg0: i32) -> (i32, i32) {
    %c0_i32 = arith.constant 0 : i32
    %c0_i32_0 = arith.constant 0 : i32
    %c0_i32_1 = arith.constant 0 : i32
    return %c0_i32, %c0_i32_0 : i32, i32
  }
  func.func @transform_2(%arg0: i32) -> (i32, i32) {
    %c0_i32 = arith.constant 0 : i32
    %c0_i32_0 = arith.constant 0 : i32
    %c0_i32_1 = arith.constant 0 : i32
    return %c0_i32, %c0_i32_0 : i32, i32
  }
  func.func @transform_3(%arg0: i32) -> (i32, i32) {
    %c0_i32 = arith.constant 0 : i32
    %c0_i32_0 = arith.constant 0 : i32
    %c0_i32_1 = arith.constant 0 : i32
    return %c0_i32, %c0_i32_0 : i32, i32
  }
  func.func @transform_4(%arg0: i32) -> (i32, i32) {
    %c0_i32 = arith.constant 0 : i32
    %c0_i32_0 = arith.constant 0 : i32
    %c0_i32_1 = arith.constant 0 : i32
    return %c0_i32, %c0_i32_0 : i32, i32
  }
  func.func @transform_5(%arg0: i32) -> (i32, i32, i32) {
    %c0_i32 = arith.constant 0 : i32
    %c0_i32_0 = arith.constant 0 : i32
    %c0_i32_1 = arith.constant 0 : i32
    %c0_i32_2 = arith.constant 0 : i32
    return %c0_i32, %c0_i32_0, %c0_i32_1 : i32, i32, i32
  }
  func.func @transform_6(%arg0: i32) -> (i32, i32) {
    %c0_i32 = arith.constant 0 : i32
    %c0_i32_0 = arith.constant 0 : i32
    %c0_i32_1 = arith.constant 0 : i32
    return %c0_i32, %c0_i32_0 : i32, i32
  }
  func.func @transform_7(%arg0: i32) -> (i32, i32) {
    %c0_i32 = arith.constant 0 : i32
    %c0_i32_0 = arith.constant 0 : i32
    %c0_i32_1 = arith.constant 0 : i32
    return %c0_i32, %c0_i32_0 : i32, i32
  }
  func.func @transform_8(%arg0: i32) -> (i32, i32) {
    %c0_i32 = arith.constant 0 : i32
    %c0_i32_0 = arith.constant 0 : i32
    %c0_i32_1 = arith.constant 0 : i32
    return %c0_i32, %c0_i32_0 : i32, i32
  }
  func.func @transform_9(%arg0: i32) -> (i32, i32) {
    %c0_i32 = arith.constant 0 : i32
    %c0_i32_0 = arith.constant 0 : i32
    %c0_i32_1 = arith.constant 0 : i32
    return %c0_i32, %c0_i32_0 : i32, i32
  }
  func.func @transform_10(%arg0: i32) -> (i32, i32) {
    %c0_i32 = arith.constant 0 : i32
    %c0_i32_0 = arith.constant 0 : i32
    %c0_i32_1 = arith.constant 0 : i32
    return %c0_i32, %c0_i32_0 : i32, i32
  }
  func.func @transform_11(%arg0: i32) -> (i32, i32, i32) {
    %c0_i32 = arith.constant 0 : i32
    %c0_i32_0 = arith.constant 0 : i32
    %c0_i32_1 = arith.constant 0 : i32
    return %arg0, %c0_i32, %c0_i32_0 : i32, i32, i32
  }
}

</mosaic_0001>

<llo_original>
// kernel: cov_model3_forward.1
$region0: #{cov_model3_forward.1}
  #allocation0 [shape = 'u32[]', space=smem, size = 0x4, offset = 0x4, fixed_abs, tag = 'smem constant byte address 0x4 - core index']
  #allocation1 [shape = 'u32[144,128]{1,0:T(1,128)}', space=vmem, size = 0x12000, scoped, tag = 'internal scratch']
  #allocation2 [shape = 'bf16[688,128]{1,0:T(16,128)(2,1)}', space=vmem, size = 0x2b000, scoped, tag = 'scratch operand']
  %s0 = inlined_call_operand.vmem [shape: bf16[1296,32], index: 0, kind: input, shape index: {}]
  %s1 = inlined_call_operand.vmem [shape: bf16[32,128], index: 1, kind: input, shape index: {}]
  %s2 = inlined_call_operand.vmem [shape: f32[1,128], index: 2, kind: input, shape index: {}]
  %s3 = inlined_call_operand.vmem [shape: f32[1,128], index: 3, kind: input, shape index: {}]
  %s4 = inlined_call_operand.vmem [shape: f32[648,1], index: 4, kind: input, shape index: {}]
  %s5 = inlined_call_operand.vmem [shape: bf16[9,128,128], index: 5, kind: input, shape index: {}]
  %s6 = inlined_call_operand.vmem [shape: f32[1,128], index: 6, kind: input, shape index: {}]
  %s7 = inlined_call_operand.vmem [shape: f32[1,128], index: 7, kind: input, shape index: {}]
  %s8 = inlined_call_operand.vmem [shape: f32[8,648], index: 8, kind: input, shape index: {}]
  %s9 = inlined_call_operand.vmem [shape: bf16[128,128], index: 9, kind: input, shape index: {}]
  %s10 = inlined_call_operand.vmem [shape: f32[1,128], index: 10, kind: input, shape index: {}]
  %s11 = inlined_call_operand.vmem [shape: f32[2,2,128], index: 11, kind: output, shape index: {}]
  %s12 = sld [smem:[#allocation0]]
  $region77: #{cov_model3_forward.1} parent=0
    _
  %s14 = ssub.s32 1, %s12
  %s15 = scalar_select 0, %s14, %s12
  loop: start=0, step=1, limit=4
  $region2: #{cov_model3_forward.1} parent=0 // loop_pre_header
    _
  $region3: #{cov_model3_forward.1} parent=0 // loop_header
    %s17 = sphi 0, %s21
    %p18 = scmp.ge.s32.totalorder %s17, 4
    %s27 = sphi 0, %s29
    %s30 = sphi 0, %s27
    %s31 = sphi 0, %s30
    %s47 = sphi 0, %s31
    %s51 = sphi 0, %s51
    %s53 = sphi 0, %s51
    %s54 = sphi 0, %s53
    %s68 = sphi 0, %s54
    %s72 = sphi 0, %s72
    %s74 = sphi 0, %s72
    %s75 = sphi 0, %s74
    %s89 = sphi 0, %s75
    %s93 = sphi 0, %s93
    %s95 = sphi 0, %s93
    %s96 = sphi 0, %s95
    %s110 = sphi 0, %s96
    %s114 = sphi 0, %s114
    %s116 = sphi 0, %s114
    %s117 = sphi 0, %s116
    %s131 = sphi 0, %s117
    %s135 = sphi 0, %s135
    %s137 = sphi 0, %s135
    %s138 = sphi 0, %s137
    %s152 = sphi 0, %s138
    %s156 = sphi 0, %s156
    %s158 = sphi 0, %s156
    %s159 = sphi 0, %s158
    %s173 = sphi 0, %s159
    %s177 = sphi 0, %s177
    %s179 = sphi 0, %s177
    %s180 = sphi 0, %s179
    %s194 = sphi 0, %s180
    %s198 = sphi 0, %s198
    %s200 = sphi 0, %s198
    %s201 = sphi 0, %s200
    %s215 = sphi 0, %s201
    %s219 = sphi 0, %s219
    %s221 = sphi 0, %s219
    %s222 = sphi 0, %s221
    %s236 = sphi 0, %s222
    %s240 = sphi 0, %s240
    %s242 = sphi 0, %s240
    %s243 = sphi 0, %s242
    %s257 = sphi 0, %s243
    %s263 = sphi 0, %s265
    %s266 = sphi 0, %s263
    %s267 = sphi 0, %s266
    %s283 = sphi 0, %s267
  $region4: #{cov_model3_forward.1} parent=0 // loop_header_branch
    %20 = sbr.rel (%p18) target = $region8
  $region5: #{cov_model3_forward.1} parent=0 // loop_body
    %s22 = ssub.s32 %s17, 1
    %s23 = ssub.s32 %s17, 2
    %s24 = sadd.s32 %s17, 1
    %s25 = ssub.s32 %s17, %s24
    %p26 = scmp.eq.s32.totalorder %s25, 0
    %s28 = sadd.s32 %s27, 1
    %s29 = scalar_select %p26, %s27, %s28
    %p32 = pneg %p26
    %p33 = scmp.eq.s32.totalorder %s17, 1
    %p34 = por %p32, %p33
    %p35 = scmp.ne.s32.totalorder %s27, %s30
    %p36 = scmp.eq.s32.totalorder %s17, 0
    %p37 = por %p35, %p36
    %p38 = scmp.ne.s32.totalorder %s27, %s30
    %p39 = scmp.eq.s32.totalorder %s22, 1
    %p40 = por %p38, %p39
    %p41 = scmp.ne.s32.totalorder %s30, %s31
    %p42 = scmp.eq.s32.totalorder %s22, 0
    %p43 = por %p41, %p42
    %p44 = scmp.ne.s32.totalorder %s30, %s31
    %p45 = scmp.eq.s32.totalorder %s23, 1
    %p46 = por %p44, %p45
    %p48 = scmp.ne.s32.totalorder %s31, %s47
    %p49 = scmp.eq.s32.totalorder %s23, 0
    %p50 = por %p48, %p49
    %s52 = sadd.s32 %s51, 1
    %p55 = scmp.eq.s32.totalorder %s17, 1
    %p56 = scmp.ne.s32.totalorder %s51, %s53
    %p57 = scmp.eq.s32.totalorder %s17, 0
    %p58 = por %p56, %p57
    %p59 = scmp.ne.s32.totalorder %s51, %s53
    %p60 = scmp.eq.s32.totalorder %s22, 1
    %p61 = por %p59, %p60
    %p62 = scmp.ne.s32.totalorder %s53, %s54
    %p63 = scmp.eq.s32.totalorder %s22, 0
    %p64 = por %p62, %p63
    %p65 = scmp.ne.s32.totalorder %s53, %s54
    %p66 = scmp.eq.s32.totalorder %s23, 1
    %p67 = por %p65, %p66
    %p69 = scmp.ne.s32.totalorder %s54, %s68
    %p70 = scmp.eq.s32.totalorder %s23, 0
    %p71 = por %p69, %p70
    %s73 = sadd.s32 %s72, 1
    %p76 = scmp.eq.s32.totalorder %s17, 1
    %p77 = scmp.ne.s32.totalorder %s72, %s74
    %p78 = scmp.eq.s32.totalorder %s17, 0
    %p79 = por %p77, %p78
    %p80 = scmp.ne.s32.totalorder %s72, %s74
    %p81 = scmp.eq.s32.totalorder %s22, 1
    %p82 = por %p80, %p81
    %p83 = scmp.ne.s32.totalorder %s74, %s75
    %p84 = scmp.eq.s32.totalorder %s22, 0
    %p85 = por %p83, %p84
    %p86 = scmp.ne.s32.totalorder %s74, %s75
    %p87 = scmp.eq.s32.totalorder %s23, 1
    %p88 = por %p86, %p87
    %p90 = scmp.ne.s32.totalorder %s75, %s89
    %p91 = scmp.eq.s32.totalorder %s23, 0
    %p92 = por %p90, %p91
    %s94 = sadd.s32 %s93, 1
    %p97 = scmp.eq.s32.totalorder %s17, 1
    %p98 = scmp.ne.s32.totalorder %s93, %s95
    %p99 = scmp.eq.s32.totalorder %s17, 0
    %p100 = por %p98, %p99
    %p101 = scmp.ne.s32.totalorder %s93, %s95
    %p102 = scmp.eq.s32.totalorder %s22, 1
    %p103 = por %p101, %p102
    %p104 = scmp.ne.s32.totalorder %s95, %s96
    %p105 = scmp.eq.s32.totalorder %s22, 0
    %p106 = por %p104, %p105
    %p107 = scmp.ne.s32.totalorder %s95, %s96
    %p108 = scmp.eq.s32.totalorder %s23, 1
    %p109 = por %p107, %p108
    %p111 = scmp.ne.s32.totalorder %s96, %s110
    %p112 = scmp.eq.s32.totalorder %s23, 0
    %p113 = por %p111, %p112
    %s115 = sadd.s32 %s114, 1
    %p118 = scmp.eq.s32.totalorder %s17, 1
    %p119 = scmp.ne.s32.totalorder %s114, %s116
    %p120 = scmp.eq.s32.totalorder %s17, 0
    %p121 = por %p119, %p120
    %p122 = scmp.ne.s32.totalorder %s114, %s116
    %p123 = scmp.eq.s32.totalorder %s22, 1
    %p124 = por %p122, %p123
    %p125 = scmp.ne.s32.totalorder %s116, %s117
    %p126 = scmp.eq.s32.totalorder %s22, 0
    %p127 = por %p125, %p126
    %p128 = scmp.ne.s32.totalorder %s116, %s117
    %p129 = scmp.eq.s32.totalorder %s23, 1
    %p130 = por %p128, %p129
    %p132 = scmp.ne.s32.totalorder %s117, %s131
    %p133 = scmp.eq.s32.totalorder %s23, 0
    %p134 = por %p132, %p133
    %s136 = sadd.s32 %s135, 1
    %p139 = scmp.eq.s32.totalorder %s17, 1
    %p140 = scmp.ne.s32.totalorder %s135, %s137
    %p141 = scmp.eq.s32.totalorder %s17, 0
    %p142 = por %p140, %p141
    %p143 = scmp.ne.s32.totalorder %s135, %s137
    %p144 = scmp.eq.s32.totalorder %s22, 1
    %p145 = por %p143, %p144
    %p146 = scmp.ne.s32.totalorder %s137, %s138
    %p147 = scmp.eq.s32.totalorder %s22, 0
    %p148 = por %p146, %p147
    %p149 = scmp.ne.s32.totalorder %s137, %s138
    %p150 = scmp.eq.s32.totalorder %s23, 1
    %p151 = por %p149, %p150
    %p153 = scmp.ne.s32.totalorder %s138, %s152
    %p154 = scmp.eq.s32.totalorder %s23, 0
    %p155 = por %p153, %p154
    %s157 = sadd.s32 %s156, 1
    %p160 = scmp.eq.s32.totalorder %s17, 1
    %p161 = scmp.ne.s32.totalorder %s156, %s158
    %p162 = scmp.eq.s32.totalorder %s17, 0
    %p163 = por %p161, %p162
    %p164 = scmp.ne.s32.totalorder %s156, %s158
    %p165 = scmp.eq.s32.totalorder %s22, 1
    %p166 = por %p164, %p165
    %p167 = scmp.ne.s32.totalorder %s158, %s159
    %p168 = scmp.eq.s32.totalorder %s22, 0
    %p169 = por %p167, %p168
    %p170 = scmp.ne.s32.totalorder %s158, %s159
    %p171 = scmp.eq.s32.totalorder %s23, 1
    %p172 = por %p170, %p171
    %p174 = scmp.ne.s32.totalorder %s159, %s173
    %p175 = scmp.eq.s32.totalorder %s23, 0
    %p176 = por %p174, %p175
    %s178 = sadd.s32 %s177, 1
    %p181 = scmp.eq.s32.totalorder %s17, 1
    %p182 = scmp.ne.s32.totalorder %s177, %s179
    %p183 = scmp.eq.s32.totalorder %s17, 0
    %p184 = por %p182, %p183
    %p185 = scmp.ne.s32.totalorder %s177, %s179
    %p186 = scmp.eq.s32.totalorder %s22, 1
    %p187 = por %p185, %p186
    %p188 = scmp.ne.s32.totalorder %s179, %s180
    %p189 = scmp.eq.s32.totalorder %s22, 0
    %p190 = por %p188, %p189
    %p191 = scmp.ne.s32.totalorder %s179, %s180
    %p192 = scmp.eq.s32.totalorder %s23, 1
    %p193 = por %p191, %p192
    %p195 = scmp.ne.s32.totalorder %s180, %s194
    %p196 = scmp.eq.s32.totalorder %s23, 0
    %p197 = por %p195, %p196
    %s199 = sadd.s32 %s198, 1
    %p202 = scmp.eq.s32.totalorder %s17, 1
    %p203 = scmp.ne.s32.totalorder %s198, %s200
    %p204 = scmp.eq.s32.totalorder %s17, 0
    %p205 = por %p203, %p204
    %p206 = scmp.ne.s32.totalorder %s198, %s200
    %p207 = scmp.eq.s32.totalorder %s22, 1
    %p208 = por %p206, %p207
    %p209 = scmp.ne.s32.totalorder %s200, %s201
    %p210 = scmp.eq.s32.totalorder %s22, 0
    %p211 = por %p209, %p210
    %p212 = scmp.ne.s32.totalorder %s200, %s201
    %p213 = scmp.eq.s32.totalorder %s23, 1
    %p214 = por %p212, %p213
    %p216 = scmp.ne.s32.totalorder %s201, %s215
    %p217 = scmp.eq.s32.totalorder %s23, 0
    %p218 = por %p216, %p217
    %s220 = sadd.s32 %s219, 1
    %p223 = scmp.eq.s32.totalorder %s17, 1
    %p224 = scmp.ne.s32.totalorder %s219, %s221
    %p225 = scmp.eq.s32.totalorder %s17, 0
    %p226 = por %p224, %p225
    %p227 = scmp.ne.s32.totalorder %s219, %s221
    %p228 = scmp.eq.s32.totalorder %s22, 1
    %p229 = por %p227, %p228
    %p230 = scmp.ne.s32.totalorder %s221, %s222
    %p231 = scmp.eq.s32.totalorder %s22, 0
    %p232 = por %p230, %p231
    %p233 = scmp.ne.s32.totalorder %s221, %s222
    %p234 = scmp.eq.s32.totalorder %s23, 1
    %p235 = por %p233, %p234
    %p237 = scmp.ne.s32.totalorder %s222, %s236
    %p238 = scmp.eq.s32.totalorder %s23, 0
    %p239 = por %p237, %p238
    %s241 = sadd.s32 %s240, 1
    %p244 = scmp.eq.s32.totalorder %s17, 1
    %p245 = scmp.ne.s32.totalorder %s240, %s242
    %p246 = scmp.eq.s32.totalorder %s17, 0
    %p247 = por %p245, %p246
    %p248 = scmp.ne.s32.totalorder %s240, %s242
    %p249 = scmp.eq.s32.totalorder %s22, 1
    %p250 = por %p248, %p249
    %p251 = scmp.ne.s32.totalorder %s242, %s243
    %p252 = scmp.eq.s32.totalorder %s22, 0
    %p253 = por %p251, %p252
    %p254 = scmp.ne.s32.totalorder %s242, %s243
    %p255 = scmp.eq.s32.totalorder %s23, 1
    %p256 = por %p254, %p255
    %p258 = scmp.ne.s32.totalorder %s243, %s257
    %p259 = scmp.eq.s32.totalorder %s23, 0
    %p260 = por %p258, %p259
    %s261 = ssub.s32 %s17, %s24
    %p262 = scmp.eq.s32.totalorder %s261, 0
    %s264 = sadd.s32 %s263, 1
    %s265 = scalar_select %p262, %s263, %s264
    %p268 = pneg %p262
    %p269 = scmp.eq.s32.totalorder %s17, 1
    %p270 = por %p268, %p269
    %p271 = scmp.ne.s32.totalorder %s263, %s266
    %p272 = scmp.eq.s32.totalorder %s17, 0
    %p273 = por %p271, %p272
    %p274 = scmp.ne.s32.totalorder %s263, %s266
    %p275 = scmp.eq.s32.totalorder %s22, 1
    %p276 = por %p274, %p275
    %p277 = scmp.ne.s32.totalorder %s266, %s267
    %p278 = scmp.eq.s32.totalorder %s22, 0
    %p279 = por %p277, %p278
    %p280 = scmp.ne.s32.totalorder %s266, %s267
    %p281 = scmp.eq.s32.totalorder %s23, 1
    %p282 = por %p280, %p281
    %p284 = scmp.ne.s32.totalorder %s267, %s283
    %p285 = scmp.eq.s32.totalorder %s23, 0
    %p286 = por %p284, %p285
    %p287 = scmp.le.s32.totalorder 1, %s17
    %p288 = scmp.lt.s32.totalorder %s17, 3
    %p289 = pnand %p287, %p288
    %p290 = pneg %p289
    // Predicated region
    $region9: #{cov_model3_forward.1} parent=5 // pred_check
      _
    $region10: #{cov_model3_forward.1} parent=5 // pred_check_branch
      %292 = sbr.rel (%p289) target = $region12
    $region11: #{cov_model3_forward.1} parent=5 // pred_region
      %s293 = ssub.s32 %s17, 1
      // Predicated region
      $region13: #{cov_model3_forward.1} parent=11 // pred_check
        %p294 = pneg %p64
      $region14: #{cov_model3_forward.1} parent=11 // pred_check_branch
        %296 = sbr.rel (%p294) target = $region16
      $region15: #{cov_model3_forward.1} parent=11 // pred_region
        _
      $region16: #{cov_model3_forward.1} parent=11 // pred_fallthru
        _
      // Predicated region
      $region17: #{cov_model3_forward.1} parent=11 // pred_check
        %p297 = pneg %p85
      $region18: #{cov_model3_forward.1} parent=11 // pred_check_branch
        %299 = sbr.rel (%p297) target = $region20
      $region19: #{cov_model3_forward.1} parent=11 // pred_region
        _
      $region20: #{cov_model3_forward.1} parent=11 // pred_fallthru
        _
      // Predicated region
      $region21: #{cov_model3_forward.1} parent=11 // pred_check
        %p300 = pneg %p106
      $region22: #{cov_model3_forward.1} parent=11 // pred_check_branch
        %302 = sbr.rel (%p300) target = $region24
      $region23: #{cov_model3_forward.1} parent=11 // pred_region
        _
      $region24: #{cov_model3_forward.1} parent=11 // pred_fallthru
        _
      // Predicated region
      $region25: #{cov_model3_forward.1} parent=11 // pred_check
        %p303 = pneg %p127
      $region26: #{cov_model3_forward.1} parent=11 // pred_check_branch
        %305 = sbr.rel (%p303) target = $region28
      $region27: #{cov_model3_forward.1} parent=11 // pred_region
        _
      $region28: #{cov_model3_forward.1} parent=11 // pred_fallthru
        _
      // Predicated region
      $region29: #{cov_model3_forward.1} parent=11 // pred_check
        %p306 = pneg %p148
      $region30: #{cov_model3_forward.1} parent=11 // pred_check_branch
        %308 = sbr.rel (%p306) target = $region32
      $region31: #{cov_model3_forward.1} parent=11 // pred_region
        _
      $region32: #{cov_model3_forward.1} parent=11 // pred_fallthru
        _
      // Predicated region
      $region33: #{cov_model3_forward.1} parent=11 // pred_check
        %p309 = pneg %p169
      $region34: #{cov_model3_forward.1} parent=11 // pred_check_branch
        %311 = sbr.rel (%p309) target = $region36
      $region35: #{cov_model3_forward.1} parent=11 // pred_region
        _
      $region36: #{cov_model3_forward.1} parent=11 // pred_fallthru
        _
      // Predicated region
      $region37: #{cov_model3_forward.1} parent=11 // pred_check
        %p312 = pneg %p190
      $region38: #{cov_model3_forward.1} parent=11 // pred_check_branch
        %314 = sbr.rel (%p312) target = $region40
      $region39: #{cov_model3_forward.1} parent=11 // pred_region
        _
      $region40: #{cov_model3_forward.1} parent=11 // pred_fallthru
        _
      // Predicated region
      $region41: #{cov_model3_forward.1} parent=11 // pred_check
        %p315 = pneg %p211
      $region42: #{cov_model3_forward.1} parent=11 // pred_check_branch
        %317 = sbr.rel (%p315) target = $region44
      $region43: #{cov_model3_forward.1} parent=11 // pred_region
        _
      $region44: #{cov_model3_forward.1} parent=11 // pred_fallthru
        _
      // Predicated region
      $region45: #{cov_model3_forward.1} parent=11 // pred_check
        %p318 = pneg %p232
      $region46: #{cov_model3_forward.1} parent=11 // pred_check_branch
        %320 = sbr.rel (%p318) target = $region48
      $region47: #{cov_model3_forward.1} parent=11 // pred_region
        _
      $region48: #{cov_model3_forward.1} parent=11 // pred_fallthru
        _
      // Predicated region
      $region49: #{cov_model3_forward.1} parent=11 // pred_check
        %p321 = pneg %p253
      $region50: #{cov_model3_forward.1} parent=11 // pred_check_branch
        %323 = sbr.rel (%p321) target = $region52
      $region51: #{cov_model3_forward.1} parent=11 // pred_region
        _
      $region52: #{cov_model3_forward.1} parent=11 // pred_fallthru
        _
    $region12: #{cov_model3_forward.1} parent=5 // pred_fallthru
      _
    %p324 = scmp.lt.s32.totalorder %s17, 2
    // Predicated region
    $region53: #{cov_model3_forward.1} parent=5 // pred_check
      %p325 = pneg %p324
    $region54: #{cov_model3_forward.1} parent=5 // pred_check_branch
      %327 = sbr.rel (%p325) target = $region56
    $region55: #{cov_model3_forward.1} parent=5 // pred_region
      // Predicated region
      $region57: #{cov_model3_forward.1} parent=55 // pred_check
        %p328 = pneg %p37
      $region58: #{cov_model3_forward.1} parent=55 // pred_check_branch
        %330 = sbr.rel (%p328) target = $region60
      $region59: #{cov_model3_forward.1} parent=55 // pred_region
        %s331 = smul.u32 81, %s17
        %p332 = scmp.lt.s32.totalorder %s331, 161
        %s333 = scalar_select %p332, %s331, 161
        %s334 = smul.addr %s333, 4
        %s335 = scalar_lea.vmem %s0, %s334
        %s336 = smul.u32 81, %s17
      $region60: #{cov_model3_forward.1} parent=55 // pred_fallthru
        _
    $region56: #{cov_model3_forward.1} parent=5 // pred_fallthru
      _
    %p337 = scmp.le.s32.totalorder 1, %s17
    %p338 = scmp.lt.s32.totalorder %s17, 3
    %p339 = pnand %p337, %p338
    %p340 = pneg %p339
    // Predicated region
    $region61: #{cov_model3_forward.1} parent=5 // pred_check
      _
    $region62: #{cov_model3_forward.1} parent=5 // pred_check_branch
      %342 = sbr.rel (%p339) target = $region64
    $region63: #{cov_model3_forward.1} parent=5 // pred_region
      %s343 = ssub.s32 %s17, 1
      %s344 = smul.u32 81, %s22
      %p345 = scmp.lt.s32.totalorder %s344, 161
      %s346 = scalar_select %p345, %s344, 161
      %s347 = smul.addr %s346, 4
      %s348 = scalar_lea.vmem %s0, %s347
      %p349 = pneg %p43
      %p350 = pneg %p40
      %p351 = pneg %p64
      %p352 = pneg %p61
      %p353 = pneg %p85
      %p354 = pneg %p82
      %p355 = pneg %p106
      %p356 = pneg %p103
      %p357 = pneg %p127
      %p358 = pneg %p124
      %p359 = pneg %p148
      %p360 = pneg %p145
      %p361 = pneg %p169
      %p362 = pneg %p166
      %p363 = pneg %p190
      %p364 = pneg %p187
      %p365 = pneg %p211
      %p366 = pneg %p208
      %p367 = pneg %p232
      %p368 = pneg %p229
      %p369 = pneg %p253
      %p370 = pneg %p250
      %p371 = pneg %p279
      %p372 = pneg %p276
      %p373 = scmp.lt.s32.totalorder %s22, 1
      %s374 = scalar_select %p373, %s22, 1
      %s375 = smul.addr %s374, 2
      %s376 = scalar_lea.vmem %s11, %s375
      %s377 = smul.u32 81, %s22
      %p378 = scmp.lt.s32.totalorder %s377, 161
      %s379 = scalar_select %p378, %s377, 161
      %s380 = smul.addr %s379, 4
      %s381 = scalar_lea.vmem %s0, %s380
      %s382 = smul.u32 81, %s22
      %p383 = scmp.lt.s32.totalorder %s22, 1
      %s384 = scalar_select %p383, %s22, 1
      %s385 = smul.addr %s384, 2
      %s386 = scalar_lea.vmem %s11, %s385
      %v388 = vld [vmem:[%s381] sm:$0xf]
      %v389 = vld [vmem:[%s381 + $0x4] sm:$0xf]
      %v390 = vld [vmem:[%s381 + $0x8] sm:$0xf]
      %v391 = vld [vmem:[%s381 + $0xc] sm:$0xf]
      %v392 = vld [vmem:[%s381 + $0x10] sm:$0xf]
      %v393 = vld [vmem:[%s381 + $0x14] sm:$0xf]
      %v394 = vld [vmem:[%s381 + $0x18] sm:$0xf]
      %v395 = vld [vmem:[%s381 + $0x1c] sm:$0xf]
      %v396 = vld [vmem:[%s381 + $0x20] sm:$0xf]
      %v397 = vld [vmem:[%s381 + $0x24] sm:$0xf]
      %v398 = vld [vmem:[%s381 + $0x28] sm:$0xf]
      %v399 = vld [vmem:[%s381 + $0x2c] sm:$0xf]
      %v400 = vld [vmem:[%s381 + $0x30] sm:$0xf]
      %v401 = vld [vmem:[%s381 + $0x34] sm:$0xf]
      %v402 = vld [vmem:[%s381 + $0x38] sm:$0xf]
      %v403 = vld [vmem:[%s381 + $0x3c] sm:$0xf]
      %v404 = vld [vmem:[%s381 + $0x40] sm:$0xf]
      %v405 = vld [vmem:[%s381 + $0x44] sm:$0xf]
      %v406 = vld [vmem:[%s381 + $0x48] sm:$0xf]
      %v407 = vld [vmem:[%s381 + $0x4c] sm:$0xf]
      %v408 = vld [vmem:[%s381 + $0x50] sm:$0xf]
      %v409 = vld [vmem:[%s381 + $0x54] sm:$0xf]
      %v410 = vld [vmem:[%s381 + $0x58] sm:$0xf]
      %v411 = vld [vmem:[%s381 + $0x5c] sm:$0xf]
      %v412 = vld [vmem:[%s381 + $0x60] sm:$0xf]
      %v413 = vld [vmem:[%s381 + $0x64] sm:$0xf]
      %v414 = vld [vmem:[%s381 + $0x68] sm:$0xf]
      %v415 = vld [vmem:[%s381 + $0x6c] sm:$0xf]
      %v416 = vld [vmem:[%s381 + $0x70] sm:$0xf]
      %v417 = vld [vmem:[%s381 + $0x74] sm:$0xf]
      %v418 = vld [vmem:[%s381 + $0x78] sm:$0xf]
      %v419 = vld [vmem:[%s381 + $0x7c] sm:$0xf]
      %v420 = vld [vmem:[%s381 + $0x80] sm:$0xf]
      %v421 = vld [vmem:[%s381 + $0x84] sm:$0xf]
      %v422 = vld [vmem:[%s381 + $0x88] sm:$0xf]
      %v423 = vld [vmem:[%s381 + $0x8c] sm:$0xf]
      %v424 = vld [vmem:[%s381 + $0x90] sm:$0xf]
      %v425 = vld [vmem:[%s381 + $0x94] sm:$0xf]
      %v426 = vld [vmem:[%s381 + $0x98] sm:$0xf]
      %v427 = vld [vmem:[%s381 + $0x9c] sm:$0xf]
      %v428 = vld [vmem:[%s381 + $0xa0] sm:$0xf]
      %v429 = vld [vmem:[%s381 + $0xa4] sm:$0xf]
      %v430 = vld [vmem:[%s381 + $0xa8] sm:$0xf]
      %v431 = vld [vmem:[%s381 + $0xac] sm:$0xf]
      %v432 = vld [vmem:[%s381 + $0xb0] sm:$0xf]
      %v433 = vld [vmem:[%s381 + $0xb4] sm:$0xf]
      %v434 = vld [vmem:[%s381 + $0xb8] sm:$0xf]
      %v435 = vld [vmem:[%s381 + $0xbc] sm:$0xf]
      %v436 = vld [vmem:[%s381 + $0xc0] sm:$0xf]
      %v437 = vld [vmem:[%s381 + $0xc4] sm:$0xf]
      %v438 = vld [vmem:[%s381 + $0xc8] sm:$0xf]
      %v439 = vld [vmem:[%s381 + $0xcc] sm:$0xf]
      %v440 = vld [vmem:[%s381 + $0xd0] sm:$0xf]
      %v441 = vld [vmem:[%s381 + $0xd4] sm:$0xf]
      %v442 = vld [vmem:[%s381 + $0xd8] sm:$0xf]
      %v443 = vld [vmem:[%s381 + $0xdc] sm:$0xf]
      %v444 = vld [vmem:[%s381 + $0xe0] sm:$0xf]
      %v445 = vld [vmem:[%s381 + $0xe4] sm:$0xf]
      %v446 = vld [vmem:[%s381 + $0xe8] sm:$0xf]
      %v447 = vld [vmem:[%s381 + $0xec] sm:$0xf]
      %v448 = vld [vmem:[%s381 + $0xf0] sm:$0xf]
      %v449 = vld [vmem:[%s381 + $0xf4] sm:$0xf]
      %v450 = vld [vmem:[%s381 + $0xf8] sm:$0xf]
      %v451 = vld [vmem:[%s381 + $0xfc] sm:$0xf]
      %v452 = vld [vmem:[%s381 + $0x100] sm:$0xf]
      %v453 = vld [vmem:[%s381 + $0x104] sm:$0xf]
      %v454 = vld [vmem:[%s381 + $0x108] sm:$0xf]
      %v455 = vld [vmem:[%s381 + $0x10c] sm:$0xf]
      %v456 = vld [vmem:[%s381 + $0x110] sm:$0xf]
      %v457 = vld [vmem:[%s381 + $0x114] sm:$0xf]
      %v458 = vld [vmem:[%s381 + $0x118] sm:$0xf]
      %v459 = vld [vmem:[%s381 + $0x11c] sm:$0xf]
      %v460 = vld [vmem:[%s381 + $0x120] sm:$0xf]
      %v461 = vld [vmem:[%s381 + $0x124] sm:$0xf]
      %v462 = vld [vmem:[%s381 + $0x128] sm:$0xf]
      %v463 = vld [vmem:[%s381 + $0x12c] sm:$0xf]
      %v464 = vld [vmem:[%s381 + $0x130] sm:$0xf]
      %v465 = vld [vmem:[%s381 + $0x134] sm:$0xf]
      %v466 = vld [vmem:[%s381 + $0x138] sm:$0xf]
      %v467 = vld [vmem:[%s381 + $0x13c] sm:$0xf]
      %v468 = vld [vmem:[%s381 + $0x140] sm:$0xf]
      %v469 = vld [vmem:[%s1] sm:$0xf]
      %v470 = vld [vmem:[%s1 + $0x4] sm:$0xf]
      %v471 = vld [vmem:[%s1 + $0x8] sm:$0xf]
      %v472 = vld [vmem:[%s1 + $0xc] sm:$0xf]
      %v554 = vunpack.c.l.b16 %v388
      %v555 = vunpack.c.l.b16 %v389
      %v556 = vunpack.c.l.b16 %v390
      %v557 = vunpack.c.l.b16 %v391
      %v558 = vunpack.c.l.b16 %v392
      %v559 = vunpack.c.l.b16 %v393
      %v560 = vunpack.c.l.b16 %v394
      %v561 = vunpack.c.l.b16 %v395
      %v562 = vunpack.c.l.b16 %v396
      %v563 = vunpack.c.l.b16 %v397
      %v564 = vunpack.c.l.b16 %v398
      %v565 = vunpack.c.l.b16 %v399
      %v566 = vunpack.c.l.b16 %v400
      %v567 = vunpack.c.l.b16 %v401
      %v568 = vunpack.c.l.b16 %v402
      %v569 = vunpack.c.l.b16 %v403
      %v570 = vunpack.c.l.b16 %v404
      %v571 = vunpack.c.l.b16 %v405
      %v572 = vunpack.c.l.b16 %v406
      %v573 = vunpack.c.l.b16 %v407
      %v574 = vunpack.c.l.b16 %v408
      %v575 = vunpack.c.l.b16 %v409
      %v576 = vunpack.c.l.b16 %v410
      %v577 = vunpack.c.l.b16 %v411
      %v578 = vunpack.c.l.b16 %v412
      %v579 = vunpack.c.l.b16 %v413
      %v580 = vunpack.c.l.b16 %v414
      %v581 = vunpack.c.l.b16 %v415
      %v582 = vunpack.c.l.b16 %v416
      %v583 = vunpack.c.l.b16 %v417
      %v584 = vunpack.c.l.b16 %v418
      %v585 = vunpack.c.l.b16 %v419
      %v586 = vunpack.c.l.b16 %v420
      %v587 = vunpack.c.l.b16 %v421
      %v588 = vunpack.c.l.b16 %v422
      %v589 = vunpack.c.l.b16 %v423
      %v590 = vunpack.c.l.b16 %v424
      %v591 = vunpack.c.l.b16 %v425
      %v592 = vunpack.c.l.b16 %v426
      %v593 = vunpack.c.l.b16 %v427
      %v594 = vunpack.c.l.b16 %v428
      %v595 = vunpack.c.l.b16 %v429
      %v596 = vunpack.c.l.b16 %v430
      %v597 = vunpack.c.l.b16 %v431
      %v598 = vunpack.c.l.b16 %v432
      %v599 = vunpack.c.l.b16 %v433
      %v600 = vunpack.c.l.b16 %v434
      %v601 = vunpack.c.l.b16 %v435
      %v602 = vunpack.c.l.b16 %v436
      %v603 = vunpack.c.l.b16 %v437
      %v604 = vunpack.c.l.b16 %v438
      %v605 = vunpack.c.l.b16 %v439
      %v606 = vunpack.c.l.b16 %v440
      %v607 = vunpack.c.l.b16 %v441
      %v608 = vunpack.c.l.b16 %v442
      %v609 = vunpack.c.l.b16 %v443
      %v610 = vunpack.c.l.b16 %v444
      %v611 = vunpack.c.l.b16 %v445
      %v612 = vunpack.c.l.b16 %v446
      %v613 = vunpack.c.l.b16 %v447
      %v614 = vunpack.c.l.b16 %v448
      %v615 = vunpack.c.l.b16 %v449
      %v616 = vunpack.c.l.b16 %v450
      %v617 = vunpack.c.l.b16 %v451
      %v618 = vunpack.c.l.b16 %v452
      %v619 = vunpack.c.l.b16 %v453
      %v620 = vunpack.c.l.b16 %v454
      %v621 = vunpack.c.l.b16 %v455
      %v622 = vunpack.c.l.b16 %v456
      %v623 = vunpack.c.l.b16 %v457
      %v624 = vunpack.c.l.b16 %v458
      %v625 = vunpack.c.l.b16 %v459
      %v626 = vunpack.c.l.b16 %v460
      %v627 = vunpack.c.l.b16 %v461
      %v628 = vunpack.c.l.b16 %v462
      %v629 = vunpack.c.l.b16 %v463
      %v630 = vunpack.c.l.b16 %v464
      %v631 = vunpack.c.l.b16 %v465
      %v632 = vunpack.c.l.b16 %v466
      %v633 = vunpack.c.l.b16 %v467
      %v634 = vunpack.c.l.b16 %v468
      %v635 = vpack.c.b16 %v555, %v554
      %v636 = vpack.c.b16 %v557, %v556
      %v637 = vpack.c.b16 %v559, %v558
      %v638 = vpack.c.b16 %v561, %v560
      %v639 = vpack.c.b16 %v563, %v562
      %v640 = vpack.c.b16 %v565, %v564
      %v641 = vpack.c.b16 %v567, %v566
      %v642 = vpack.c.b16 %v569, %v568
      %v643 = vpack.c.b16 %v571, %v570
      %v644 = vpack.c.b16 %v573, %v572
      %v645 = vpack.c.b16 %v575, %v574
      %v646 = vpack.c.b16 %v577, %v576
      %v647 = vpack.c.b16 %v579, %v578
      %v648 = vpack.c.b16 %v581, %v580
      %v649 = vpack.c.b16 %v583, %v582
      %v650 = vpack.c.b16 %v585, %v584
      %v651 = vpack.c.b16 %v587, %v586
      %v652 = vpack.c.b16 %v589, %v588
      %v653 = vpack.c.b16 %v591, %v590
      %v654 = vpack.c.b16 %v593, %v592
      %v655 = vpack.c.b16 %v595, %v594
      %v656 = vpack.c.b16 %v597, %v596
      %v657 = vpack.c.b16 %v599, %v598
      %v658 = vpack.c.b16 %v601, %v600
      %v659 = vpack.c.b16 %v603, %v602
      %v660 = vpack.c.b16 %v605, %v604
      %v661 = vpack.c.b16 %v607, %v606
      %v662 = vpack.c.b16 %v609, %v608
      %v663 = vpack.c.b16 %v611, %v610
      %v664 = vpack.c.b16 %v613, %v612
      %v665 = vpack.c.b16 %v615, %v614
      %v666 = vpack.c.b16 %v617, %v616
      %v667 = vpack.c.b16 %v619, %v618
      %v668 = vpack.c.b16 %v621, %v620
      %v669 = vpack.c.b16 %v623, %v622
      %v670 = vpack.c.b16 %v625, %v624
      %v671 = vpack.c.b16 %v627, %v626
      %v672 = vpack.c.b16 %v629, %v628
      %v673 = vpack.c.b16 %v631, %v630
      %v674 = vpack.c.b16 %v633, %v632
      %v675 = vpack.c.b16 %v634, %v634
      %v680 = vunpack.c.l.b16 %v469
      %v681 = vunpack.c.l.b16 %v470
      %v682 = vunpack.c.l.b16 %v471
      %v683 = vunpack.c.l.b16 %v472
      %v684 = vpack.c.b16 %v681, %v680
      %v685 = vpack.c.b16 %v683, %v682
      %vm688 = vcmask 261120
      %v690 = vsel %vm688, %v635, 0
      %v693 = vsel %vm688, %v636, 0
      %v696 = vsel %vm688, %v637, 0
      %v699 = vsel %vm688, %v638, 0
      %v702 = vsel %vm688, %v639, 0
      %v705 = vsel %vm688, %v640, 0
      %v708 = vsel %vm688, %v641, 0
      %v711 = vsel %vm688, %v642, 0
      %v714 = vsel %vm688, %v643, 0
      %v717 = vsel %vm688, %v644, 0
      %v720 = vsel %vm688, %v645, 0
      %v723 = vsel %vm688, %v646, 0
      %v726 = vsel %vm688, %v647, 0
      %v729 = vsel %vm688, %v648, 0
      %v732 = vsel %vm688, %v649, 0
      %v735 = vsel %vm688, %v650, 0
      %v738 = vsel %vm688, %v651, 0
      %v741 = vsel %vm688, %v652, 0
      %v744 = vsel %vm688, %v653, 0
      %v747 = vsel %vm688, %v654, 0
      %v750 = vsel %vm688, %v655, 0
      %v753 = vsel %vm688, %v656, 0
      %v756 = vsel %vm688, %v657, 0
      %v759 = vsel %vm688, %v658, 0
      %v762 = vsel %vm688, %v659, 0
      %v765 = vsel %vm688, %v660, 0
      %v768 = vsel %vm688, %v661, 0
      %v771 = vsel %vm688, %v662, 0
      %v774 = vsel %vm688, %v663, 0
      %v777 = vsel %vm688, %v664, 0
      %v780 = vsel %vm688, %v665, 0
      %v783 = vsel %vm688, %v666, 0
      %v786 = vsel %vm688, %v667, 0
      %v789 = vsel %vm688, %v668, 0
      %v792 = vsel %vm688, %v669, 0
      %v795 = vsel %vm688, %v670, 0
      %v798 = vsel %vm688, %v671, 0
      %v801 = vsel %vm688, %v672, 0
      %v804 = vsel %vm688, %v673, 0
      %v807 = vsel %vm688, %v674, 0
      %v810 = vsel %vm688, %v675, 0
      %812 = vmatprep.subr.bf16.mxu0 0
      %813 = vmatpush1.bf16.msra.mxu0 %v684
      %814 = vmatprep.subr.bf16.mxu0 0
      %815 = vmatpush1.bf16.msra.mxu0 %v685
      %816 = vmatprep.subr.bf16.mxu0 0
      %817 = vmatpush1.bf16.msra.mxu0 0
      %818 = vmatprep.subr.bf16.mxu0 0
      %819 = vmatpush1.bf16.msra.mxu0 0
      %820 = vmatprep.subr.bf16.mxu0 0
      %821 = vmatpush1.bf16.msra.mxu0 0
      %822 = vmatprep.subr.bf16.mxu0 0
      %823 = vmatpush1.bf16.msra.mxu0 0
      %824 = vmatprep.subr.bf16.mxu0 0
      %825 = vmatpush1.bf16.msra.mxu0 0
      %826 = vmatprep.subr.bf16.mxu0 0
      %827 = vmatpush1.bf16.msra.mxu0 0
      %828 = vmatprep.subr.bf16.mxu0 0
      %829 = vmatpush1.bf16.msra.mxu0 0
      %830 = vmatprep.subr.bf16.mxu0 0
      %831 = vmatpush1.bf16.msra.mxu0 0
      %832 = vmatprep.subr.bf16.mxu0 0
      %833 = vmatpush1.bf16.msra.mxu0 0
      %834 = vmatprep.subr.bf16.mxu0 0
      %835 = vmatpush1.bf16.msra.mxu0 0
      %836 = vmatprep.subr.bf16.mxu0 0
      %837 = vmatpush1.bf16.msra.mxu0 0
      %838 = vmatprep.subr.bf16.mxu0 0
      %839 = vmatpush1.bf16.msra.mxu0 0
      %840 = vmatprep.subr.bf16.mxu0 0
      %841 = vmatpush1.bf16.msra.mxu0 0
      %842 = vmatprep.subr.bf16.mxu0 0
      %843 = vmatpush1.bf16.msra.mxu0 0
      %844 = vmatprep.mubr.bf16.mxu0 0
      %845 = vmatmul.mubr.bf16.gmra.mrb[0].mxu0 %v690
      %v846 = vpop.f32.mrb[0].mxu0
      %v847 = vadd.f32 0.0, %v846
      %v848 = vpop.f32.mrb[0].mxu0
      %v849 = vpop.f32.mrb[0].mxu0
      %v850 = vadd.f32 0.0, %v849
      %v851 = vpop.f32.mrb[0].mxu0
      %852 = vmatprep.mubr.bf16.mxu0 0
      %853 = vmatmul.mubr.bf16.gmra.mrb[0].mxu0 %v693
      %v854 = vpop.f32.mrb[0].mxu0
      %v855 = vadd.f32 0.0, %v854
      %v856 = vpop.f32.mrb[0].mxu0
      %v857 = vpop.f32.mrb[0].mxu0
      %v858 = vadd.f32 0.0, %v857
      %v859 = vpop.f32.mrb[0].mxu0
      %860 = vmatprep.mubr.bf16.mxu0 0
      %861 = vmatmul.mubr.bf16.gmra.mrb[0].mxu0 %v696
      %v862 = vpop.f32.mrb[0].mxu0
      %v863 = vadd.f32 0.0, %v862
      %v864 = vpop.f32.mrb[0].mxu0
      %v865 = vpop.f32.mrb[0].mxu0
      %v866 = vadd.f32 0.0, %v865
      %v867 = vpop.f32.mrb[0].mxu0
      %868 = vmatprep.mubr.bf16.mxu0 0
      %869 = vmatmul.mubr.bf16.gmra.mrb[0].mxu0 %v699
      %v870 = vpop.f32.mrb[0].mxu0
      %v871 = vadd.f32 0.0, %v870
      %v872 = vpop.f32.mrb[0].mxu0
      %v873 = vpop.f32.mrb[0].mxu0
      %v874 = vadd.f32 0.0, %v873
      %v875 = vpop.f32.mrb[0].mxu0
      %876 = vmatprep.mubr.bf16.mxu0 0
      %877 = vmatmul.mubr.bf16.gmra.mrb[0].mxu0 %v702
      %v878 = vpop.f32.mrb[0].mxu0
      %v879 = vadd.f32 0.0, %v878
      %v880 = vpop.f32.mrb[0].mxu0
      %v881 = vpop.f32.mrb[0].mxu0
      %v882 = vadd.f32 0.0, %v881
      %v883 = vpop.f32.mrb[0].mxu0
      %884 = vmatprep.mubr.bf16.mxu0 0
      %885 = vmatmul.mubr.bf16.gmra.mrb[0].mxu0 %v705
      %v886 = vpop.f32.mrb[0].mxu0
      %v887 = vadd.f32 0.0, %v886
      %v888 = vpop.f32.mrb[0].mxu0
      %v889 = vpop.f32.mrb[0].mxu0
      %v890 = vadd.f32 0.0, %v889
      %v891 = vpop.f32.mrb[0].mxu0
      %892 = vmatprep.mubr.bf16.mxu0 0
      %893 = vmatmul.mubr.bf16.gmra.mrb[0].mxu0 %v708
      %v894 = vpop.f32.mrb[0].mxu0
      %v895 = vadd.f32 0.0, %v894
      %v896 = vpop.f32.mrb[0].mxu0
      %v897 = vpop.f32.mrb[0].mxu0
      %v898 = vadd.f32 0.0, %v897
      %v899 = vpop.f32.mrb[0].mxu0
      %900 = vmatprep.mubr.bf16.mxu0 0
      %901 = vmatmul.mubr.bf16.gmra.mrb[0].mxu0 %v711
      %v902 = vpop.f32.mrb[0].mxu0
      %v903 = vadd.f32 0.0, %v902
      %v904 = vpop.f32.mrb[0].mxu0
      %v905 = vpop.f32.mrb[0].mxu0
      %v906 = vadd.f32 0.0, %v905
      %v907 = vpop.f32.mrb[0].mxu0
      %908 = vmatprep.mubr.bf16.mxu0 0
      %909 = vmatmul.mubr.bf16.gmra.mrb[0].mxu0 %v714
      %v910 = vpop.f32.mrb[0].mxu0
      %v911 = vadd.f32 0.0, %v910
      %v912 = vpop.f32.mrb[0].mxu0
      %v913 = vpop.f32.mrb[0].mxu0
      %v914 = vadd.f32 0.0, %v913
      %v915 = vpop.f32.mrb[0].mxu0
      %916 = vmatprep.mubr.bf16.mxu0 0
      %917 = vmatmul.mubr.bf16.gmra.mrb[0].mxu0 %v717
      %v918 = vpop.f32.mrb[0].mxu0
      %v919 = vadd.f32 0.0, %v918
      %v920 = vpop.f32.mrb[0].mxu0
      %v921 = vpop.f32.mrb[0].mxu0
      %v922 = vadd.f32 0.0, %v921
      %v923 = vpop.f32.mrb[0].mxu0
      %924 = vmatprep.mubr.bf16.mxu0 0
      %925 = vmatmul.mubr.bf16.gmra.mrb[0].mxu0 %v720
      %v926 = vpop.f32.mrb[0].mxu0
      %v927 = vadd.f32 0.0, %v926
      %v928 = vpop.f32.mrb[0].mxu0
      %v929 = vpop.f32.mrb[0].mxu0
      %v930 = vadd.f32 0.0, %v929
      %v931 = vpop.f32.mrb[0].mxu0
      %932 = vmatprep.mubr.bf16.mxu0 0
      %933 = vmatmul.mubr.bf16.gmra.mrb[0].mxu0 %v723
      %v934 = vpop.f32.mrb[0].mxu0
      %v935 = vadd.f32 0.0, %v934
      %v936 = vpop.f32.mrb[0].mxu0
      %v937 = vpop.f32.mrb[0].mxu0
      %v938 = vadd.f32 0.0, %v937
      %v939 = vpop.f32.mrb[0].mxu0
      %940 = vmatprep.mubr.bf16.mxu0 0
      %941 = vmatmul.mubr.bf16.gmra.mrb[0].mxu0 %v726
      %v942 = vpop.f32.mrb[0].mxu0
      %v943 = vadd.f32 0.0, %v942
      %v944 = vpop.f32.mrb[0].mxu0
      %v945 = vpop.f32.mrb[0].mxu0
      %v946 = vadd.f32 0.0, %v945
      %v947 = vpop.f32.mrb[0].mxu0
      %948 = vmatprep.mubr.bf16.mxu0 0
      %949 = vmatmul.mubr.bf16.gmra.mrb[0].mxu0 %v729
      %v950 = vpop.f32.mrb[0].mxu0
      %v951 = vadd.f32 0.0, %v950
      %v952 = vpop.f32.mrb[0].mxu0
      %v953 = vpop.f32.mrb[0].mxu0
      %v954 = vadd.f32 0.0, %v953
      %v955 = vpop.f32.mrb[0].mxu0
      %956 = vmatprep.mubr.bf16.mxu0 0
      %957 = vmatmul.mubr.bf16.gmra.mrb[0].mxu0 %v732
      %v958 = vpop.f32.mrb[0].mxu0
      %v959 = vadd.f32 0.0, %v958
      %v960 = vpop.f32.mrb[0].mxu0
      %v961 = vpop.f32.mrb[0].mxu0
      %v962 = vadd.f32 0.0, %v961
      %v963 = vpop.f32.mrb[0].mxu0
      %964 = vmatprep.mubr.bf16.mxu0 0
      %965 = vmatmul.mubr.bf16.gmra.mrb[0].mxu0 %v735
      %v966 = vpop.f32.mrb[0].mxu0
      %v967 = vadd.f32 0.0, %v966
      %v968 = vpop.f32.mrb[0].mxu0
      %v969 = vpop.f32.mrb[0].mxu0
      %v970 = vadd.f32 0.0, %v969
      %v971 = vpop.f32.mrb[0].mxu0
      %972 = vmatprep.mubr.bf16.mxu0 0
      %973 = vmatmul.mubr.bf16.gmra.mrb[0].mxu0 %v738
      %v974 = vpop.f32.mrb[0].mxu0
      %v975 = vadd.f32 0.0, %v974
      %v976 = vpop.f32.mrb[0].mxu0
      %v977 = vpop.f32.mrb[0].mxu0
      %v978 = vadd.f32 0.0, %v977
      %v979 = vpop.f32.mrb[0].mxu0
      %980 = vmatprep.mubr.bf16.mxu0 0
      %981 = vmatmul.mubr.bf16.gmra.mrb[0].mxu0 %v741
      %v982 = vpop.f32.mrb[0].mxu0
      %v983 = vadd.f32 0.0, %v982
      %v984 = vpop.f32.mrb[0].mxu0
      %v985 = vpop.f32.mrb[0].mxu0
      %v986 = vadd.f32 0.0, %v985
      %v987 = vpop.f32.mrb[0].mxu0
      %988 = vmatprep.mubr.bf16.mxu0 0
      %989 = vmatmul.mubr.bf16.gmra.mrb[0].mxu0 %v744
      %v990 = vpop.f32.mrb[0].mxu0
      %v991 = vadd.f32 0.0, %v990
      %v992 = vpop.f32.mrb[0].mxu0
      %v993 = vpop.f32.mrb[0].mxu0
      %v994 = vadd.f32 0.0, %v993
      %v995 = vpop.f32.mrb[0].mxu0
      %996 = vmatprep.mubr.bf16.mxu0 0
      %997 = vmatmul.mubr.bf16.gmra.mrb[0].mxu0 %v747
      %v998 = vpop.f32.mrb[0].mxu0
      %v999 = vadd.f32 0.0, %v998
      %v1000 = vpop.f32.mrb[0].mxu0
      %v1001 = vpop.f32.mrb[0].mxu0
      %v1002 = vadd.f32 0.0, %v1001
      %v1003 = vpop.f32.mrb[0].mxu0
      %1004 = vmatprep.mubr.bf16.mxu0 0
      %1005 = vmatmul.mubr.bf16.gmra.mrb[0].mxu0 %v750
      %v1006 = vpop.f32.mrb[0].mxu0
      %v1007 = vadd.f32 0.0, %v1006
      %v1008 = vpop.f32.mrb[0].mxu0
      %v1009 = vpop.f32.mrb[0].mxu0
      %v1010 = vadd.f32 0.0, %v1009
      %v1011 = vpop.f32.mrb[0].mxu0
      %1012 = vmatprep.mubr.bf16.mxu0 0
      %1013 = vmatmul.mubr.bf16.gmra.mrb[0].mxu0 %v753
      %v1014 = vpop.f32.mrb[0].mxu0
      %v1015 = vadd.f32 0.0, %v1014
      %v1016 = vpop.f32.mrb[0].mxu0
      %v1017 = vpop.f32.mrb[0].mxu0
      %v1018 = vadd.f32 0.0, %v1017
      %v1019 = vpop.f32.mrb[0].mxu0
      %1020 = vmatprep.mubr.bf16.mxu0 0
      %1021 = vmatmul.mubr.bf16.gmra.mrb[0].mxu0 %v756
      %v1022 = vpop.f32.mrb[0].mxu0
      %v1023 = vadd.f32 0.0, %v1022
      %v1024 = vpop.f32.mrb[0].mxu0
      %v1025 = vpop.f32.mrb[0].mxu0
      %v1026 = vadd.f32 0.0, %v1025
      %v1027 = vpop.f32.mrb[0].mxu0
      %1028 = vmatprep.mubr.bf16.mxu0 0
      %1029 = vmatmul.mubr.bf16.gmra.mrb[0].mxu0 %v759
      %v1030 = vpop.f32.mrb[0].mxu0
      %v1031 = vadd.f32 0.0, %v1030
      %v1032 = vpop.f32.mrb[0].mxu0
      %v1033 = vpop.f32.mrb[0].mxu0
      %v1034 = vadd.f32 0.0, %v1033
      %v1035 = vpop.f32.mrb[0].mxu0
      %1036 = vmatprep.mubr.bf16.mxu0 0
      %1037 = vmatmul.mubr.bf16.gmra.mrb[0].mxu0 %v762
      %v1038 = vpop.f32.mrb[0].mxu0
      %v1039 = vadd.f32 0.0, %v1038
      %v1040 = vpop.f32.mrb[0].mxu0
      %v1041 = vpop.f32.mrb[0].mxu0
      %v1042 = vadd.f32 0.0, %v1041
      %v1043 = vpop.f32.mrb[0].mxu0
      %1044 = vmatprep.mubr.bf16.mxu0 0
      %1045 = vmatmul.mubr.bf16.gmra.mrb[0].mxu0 %v765
      %v1046 = vpop.f32.mrb[0].mxu0
      %v1047 = vadd.f32 0.0, %v1046
      %v1048 = vpop.f32.mrb[0].mxu0
      %v1049 = vpop.f32.mrb[0].mxu0
      %v1050 = vadd.f32 0.0, %v1049
      %v1051 = vpop.f32.mrb[0].mxu0
      %1052 = vmatprep.mubr.bf16.mxu0 0
      %1053 = vmatmul.mubr.bf16.gmra.mrb[0].mxu0 %v768
      %v1054 = vpop.f32.mrb[0].mxu0
      %v1055 = vadd.f32 0.0, %v1054
      %v1056 = vpop.f32.mrb[0].mxu0
      %v1057 = vpop.f32.mrb[0].mxu0
      %v1058 = vadd.f32 0.0, %v1057
      %v1059 = vpop.f32.mrb[0].mxu0
      %1060 = vmatprep.mubr.bf16.mxu0 0
      %1061 = vmatmul.mubr.bf16.gmra.mrb[0].mxu0 %v771
      %v1062 = vpop.f32.mrb[0].mxu0
      %v1063 = vadd.f32 0.0, %v1062
      %v1064 = vpop.f32.mrb[0].mxu0
      %v1065 = vpop.f32.mrb[0].mxu0
      %v1066 = vadd.f32 0.0, %v1065
      %v1067 = vpop.f32.mrb[0].mxu0
      %1068 = vmatprep.mubr.bf16.mxu0 0
      %1069 = vmatmul.mubr.bf16.gmra.mrb[0].mxu0 %v774
      %v1070 = vpop.f32.mrb[0].mxu0
      %v1071 = vadd.f32 0.0, %v1070
      %v1072 = vpop.f32.mrb[0].mxu0
      %v1073 = vpop.f32.mrb[0].mxu0
      %v1074 = vadd.f32 0.0, %v1073
      %v1075 = vpop.f32.mrb[0].mxu0
      %1076 = vmatprep.mubr.bf16.mxu0 0
      %1077 = vmatmul.mubr.bf16.gmra.mrb[0].mxu0 %v777
      %v1078 = vpop.f32.mrb[0].mxu0
      %v1079 = vadd.f32 0.0, %v1078
      %v1080 = vpop.f32.mrb[0].mxu0
      %v1081 = vpop.f32.mrb[0].mxu0
      %v1082 = vadd.f32 0.0, %v1081
      %v1083 = vpop.f32.mrb[0].mxu0
      %1084 = vmatprep.mubr.bf16.mxu0 0
      %1085 = vmatmul.mubr.bf16.gmra.mrb[0].mxu0 %v780
      %v1086 = vpop.f32.mrb[0].mxu0
      %v1087 = vadd.f32 0.0, %v1086
      %v1088 = vpop.f32.mrb[0].mxu0
      %v1089 = vpop.f32.mrb[0].mxu0
      %v1090 = vadd.f32 0.0, %v1089
      %v1091 = vpop.f32.mrb[0].mxu0
      %1092 = vmatprep.mubr.bf16.mxu0 0
      %1093 = vmatmul.mubr.bf16.gmra.mrb[0].mxu0 %v783
      %v1094 = vpop.f32.mrb[0].mxu0
      %v1095 = vadd.f32 0.0, %v1094
      %v1096 = vpop.f32.mrb[0].mxu0
      %v1097 = vpop.f32.mrb[0].mxu0
      %v1098 = vadd.f32 0.0, %v1097
      %v1099 = vpop.f32.mrb[0].mxu0
      %1100 = vmatprep.mubr.bf16.mxu0 0
      %1101 = vmatmul.mubr.bf16.gmra.mrb[0].mxu0 %v786
      %v1102 = vpop.f32.mrb[0].mxu0
      %v1103 = vadd.f32 0.0, %v1102
      %v1104 = vpop.f32.mrb[0].mxu0
      %v1105 = vpop.f32.mrb[0].mxu0
      %v1106 = vadd.f32 0.0, %v1105
      %v1107 = vpop.f32.mrb[0].mxu0
      %1108 = vmatprep.mubr.bf16.mxu0 0
      %1109 = vmatmul.mubr.bf16.gmra.mrb[0].mxu0 %v789
      %v1110 = vpop.f32.mrb[0].mxu0
      %v1111 = vadd.f32 0.0, %v1110
      %v1112 = vpop.f32.mrb[0].mxu0
      %v1113 = vpop.f32.mrb[0].mxu0
      %v1114 = vadd.f32 0.0, %v1113
      %v1115 = vpop.f32.mrb[0].mxu0
      %1116 = vmatprep.mubr.bf16.mxu0 0
      %1117 = vmatmul.mubr.bf16.gmra.mrb[0].mxu0 %v792
      %v1118 = vpop.f32.mrb[0].mxu0
      %v1119 = vadd.f32 0.0, %v1118
      %v1120 = vpop.f32.mrb[0].mxu0
      %v1121 = vpop.f32.mrb[0].mxu0
      %v1122 = vadd.f32 0.0, %v1121
      %v1123 = vpop.f32.mrb[0].mxu0
      %1124 = vmatprep.mubr.bf16.mxu0 0
      %1125 = vmatmul.mubr.bf16.gmra.mrb[0].mxu0 %v795
      %v1126 = vpop.f32.mrb[0].mxu0
      %v1127 = vadd.f32 0.0, %v1126
      %v1128 = vpop.f32.mrb[0].mxu0
      %v1129 = vpop.f32.mrb[0].mxu0
      %v1130 = vadd.f32 0.0, %v1129
      %v1131 = vpop.f32.mrb[0].mxu0
      %1132 = vmatprep.mubr.bf16.mxu0 0
      %1133 = vmatmul.mubr.bf16.gmra.mrb[0].mxu0 %v798
      %v1134 = vpop.f32.mrb[0].mxu0
      %v1135 = vadd.f32 0.0, %v1134
      %v1136 = vpop.f32.mrb[0].mxu0
      %v1137 = vpop.f32.mrb[0].mxu0
      %v1138 = vadd.f32 0.0, %v1137
      %v1139 = vpop.f32.mrb[0].mxu0
      %1140 = vmatprep.mubr.bf16.mxu0 0
      %1141 = vmatmul.mubr.bf16.gmra.mrb[0].mxu0 %v801
      %v1142 = vpop.f32.mrb[0].mxu0
      %v1143 = vadd.f32 0.0, %v1142
      %v1144 = vpop.f32.mrb[0].mxu0
      %v1145 = vpop.f32.mrb[0].mxu0
      %v1146 = vadd.f32 0.0, %v1145
      %v1147 = vpop.f32.mrb[0].mxu0
      %1148 = vmatprep.mubr.bf16.mxu0 0
      %1149 = vmatmul.mubr.bf16.gmra.mrb[0].mxu0 %v804
      %v1150 = vpop.f32.mrb[0].mxu0
      %v1151 = vadd.f32 0.0, %v1150
      %v1152 = vpop.f32.mrb[0].mxu0
      %v1153 = vpop.f32.mrb[0].mxu0
      %v1154 = vadd.f32 0.0, %v1153
      %v1155 = vpop.f32.mrb[0].mxu0
      %1156 = vmatprep.mubr.bf16.mxu0 0
      %1157 = vmatmul.mubr.bf16.gmra.mrb[0].mxu0 %v807
      %v1158 = vpop.f32.mrb[0].mxu0
      %v1159 = vadd.f32 0.0, %v1158
      %v1160 = vpop.f32.mrb[0].mxu0
      %v1161 = vpop.f32.mrb[0].mxu0
      %v1162 = vadd.f32 0.0, %v1161
      %v1163 = vpop.f32.mrb[0].mxu0
      %1164 = vmatprep.mubr.bf16.mxu0 0
      %1165 = vmatmul.mubr.bf16.gmra.mrb[0].mxu0 %v810
      %v1166 = vpop.f32.mrb[0].mxu0
      %v1167 = vadd.f32 0.0, %v1166
      %v1168 = vpop.f32.mrb[0].mxu0
      %v1169 = vpop.f32.mrb[0].mxu0
      %v1170 = vpop.f32.mrb[0].mxu0
      %1171 = vdwg.mxu0
      %v1172 = vld [vmem:[%s2] sm:$0x1]
      %v1174 = vlaneseq
      %v1175 = vshrl.u32 %v1174, 7
      %v1176 = vsub.s32 0, %v1175
      %v1177 = vrot.slane %v1172, %v1176
      %v1179 = vmul.f32 %v847, %v1177
      %v1180 = vmul.f32 %v850, %v1177
      %v1181 = vmul.f32 %v855, %v1177
      %v1182 = vmul.f32 %v858, %v1177
      %v1183 = vmul.f32 %v863, %v1177
      %v1184 = vmul.f32 %v866, %v1177
      %v1185 = vmul.f32 %v871, %v1177
      %v1186 = vmul.f32 %v874, %v1177
      %v1187 = vmul.f32 %v879, %v1177
      %v1188 = vmul.f32 %v882, %v1177
      %v1189 = vmul.f32 %v887, %v1177
      %v1190 = vmul.f32 %v890, %v1177
      %v1191 = vmul.f32 %v895, %v1177
      %v1192 = vmul.f32 %v898, %v1177
      %v1193 = vmul.f32 %v903, %v1177
      %v1194 = vmul.f32 %v906, %v1177
      %v1195 = vmul.f32 %v911, %v1177
      %v1196 = vmul.f32 %v914, %v1177
      %v1197 = vmul.f32 %v919, %v1177
      %v1198 = vmul.f32 %v922, %v1177
      %v1199 = vmul.f32 %v927, %v1177
      %v1200 = vmul.f32 %v930, %v1177
      %v1201 = vmul.f32 %v935, %v1177
      %v1202 = vmul.f32 %v938, %v1177
      %v1203 = vmul.f32 %v943, %v1177
      %v1204 = vmul.f32 %v946, %v1177
      %v1205 = vmul.f32 %v951, %v1177
      %v1206 = vmul.f32 %v954, %v1177
      %v1207 = vmul.f32 %v959, %v1177
      %v1208 = vmul.f32 %v962, %v1177
      %v1209 = vmul.f32 %v967, %v1177
      %v1210 = vmul.f32 %v970, %v1177
      %v1211 = vmul.f32 %v975, %v1177
      %v1212 = vmul.f32 %v978, %v1177
      %v1213 = vmul.f32 %v983, %v1177
      %v1214 = vmul.f32 %v986, %v1177
      %v1215 = vmul.f32 %v991, %v1177
      %v1216 = vmul.f32 %v994, %v1177
      %v1217 = vmul.f32 %v999, %v1177
      %v1218 = vmul.f32 %v1002, %v1177
      %v1219 = vmul.f32 %v1007, %v1177
      %v1220 = vmul.f32 %v1010, %v1177
      %v1221 = vmul.f32 %v1015, %v1177
      %v1222 = vmul.f32 %v1018, %v1177
      %v1223 = vmul.f32 %v1023, %v1177
      %v1224 = vmul.f32 %v1026, %v1177
      %v1225 = vmul.f32 %v1031, %v1177
      %v1226 = vmul.f32 %v1034, %v1177
      %v1227 = vmul.f32 %v1039, %v1177
      %v1228 = vmul.f32 %v1042, %v1177
      %v1229 = vmul.f32 %v1047, %v1177
      %v1230 = vmul.f32 %v1050, %v1177
      %v1231 = vmul.f32 %v1055, %v1177
      %v1232 = vmul.f32 %v1058, %v1177
      %v1233 = vmul.f32 %v1063, %v1177
      %v1234 = vmul.f32 %v1066, %v1177
      %v1235 = vmul.f32 %v1071, %v1177
      %v1236 = vmul.f32 %v1074, %v1177
      %v1237 = vmul.f32 %v1079, %v1177
      %v1238 = vmul.f32 %v1082, %v1177
      %v1239 = vmul.f32 %v1087, %v1177
      %v1240 = vmul.f32 %v1090, %v1177
      %v1241 = vmul.f32 %v1095, %v1177
      %v1242 = vmul.f32 %v1098, %v1177
      %v1243 = vmul.f32 %v1103, %v1177
      %v1244 = vmul.f32 %v1106, %v1177
      %v1245 = vmul.f32 %v1111, %v1177
      %v1246 = vmul.f32 %v1114, %v1177
      %v1247 = vmul.f32 %v1119, %v1177
      %v1248 = vmul.f32 %v1122, %v1177
      %v1249 = vmul.f32 %v1127, %v1177
      %v1250 = vmul.f32 %v1130, %v1177
      %v1251 = vmul.f32 %v1135, %v1177
      %v1252 = vmul.f32 %v1138, %v1177
      %v1253 = vmul.f32 %v1143, %v1177
      %v1254 = vmul.f32 %v1146, %v1177
      %v1255 = vmul.f32 %v1151, %v1177
      %v1256 = vmul.f32 %v1154, %v1177
      %v1257 = vmul.f32 %v1159, %v1177
      %v1258 = vmul.f32 %v1162, %v1177
      %v1259 = vmul.f32 %v1167, %v1177
      %v1260 = vld [vmem:[%s3] sm:$0x1]
      %v1262 = vlaneseq
      %v1263 = vshrl.u32 %v1262, 7
      %v1264 = vsub.s32 0, %v1263
      %v1265 = vrot.slane %v1260, %v1264
      %v1267 = vadd.f32 %v1179, %v1265
      %v1268 = vadd.f32 %v1180, %v1265
      %v1269 = vadd.f32 %v1181, %v1265
      %v1270 = vadd.f32 %v1182, %v1265
      %v1271 = vadd.f32 %v1183, %v1265
      %v1272 = vadd.f32 %v1184, %v1265
      %v1273 = vadd.f32 %v1185, %v1265
      %v1274 = vadd.f32 %v1186, %v1265
      %v1275 = vadd.f32 %v1187, %v1265
      %v1276 = vadd.f32 %v1188, %v1265
      %v1277 = vadd.f32 %v1189, %v1265
      %v1278 = vadd.f32 %v1190, %v1265
      %v1279 = vadd.f32 %v1191, %v1265
      %v1280 = vadd.f32 %v1192, %v1265
      %v1281 = vadd.f32 %v1193, %v1265
      %v1282 = vadd.f32 %v1194, %v1265
      %v1283 = vadd.f32 %v1195, %v1265
      %v1284 = vadd.f32 %v1196, %v1265
      %v1285 = vadd.f32 %v1197, %v1265
      %v1286 = vadd.f32 %v1198, %v1265
      %v1287 = vadd.f32 %v1199, %v1265
      %v1288 = vadd.f32 %v1200, %v1265
      %v1289 = vadd.f32 %v1201, %v1265
      %v1290 = vadd.f32 %v1202, %v1265
      %v1291 = vadd.f32 %v1203, %v1265
      %v1292 = vadd.f32 %v1204, %v1265
      %v1293 = vadd.f32 %v1205, %v1265
      %v1294 = vadd.f32 %v1206, %v1265
      %v1295 = vadd.f32 %v1207, %v1265
      %v1296 = vadd.f32 %v1208, %v1265
      %v1297 = vadd.f32 %v1209, %v1265
      %v1298 = vadd.f32 %v1210, %v1265
      %v1299 = vadd.f32 %v1211, %v1265
      %v1300 = vadd.f32 %v1212, %v1265
      %v1301 = vadd.f32 %v1213, %v1265
      %v1302 = vadd.f32 %v1214, %v1265
      %v1303 = vadd.f32 %v1215, %v1265
      %v1304 = vadd.f32 %v1216, %v1265
      %v1305 = vadd.f32 %v1217, %v1265
      %v1306 = vadd.f32 %v1218, %v1265
      %v1307 = vadd.f32 %v1219, %v1265
      %v1308 = vadd.f32 %v1220, %v1265
      %v1309 = vadd.f32 %v1221, %v1265
      %v1310 = vadd.f32 %v1222, %v1265
      %v1311 = vadd.f32 %v1223, %v1265
      %v1312 = vadd.f32 %v1224, %v1265
      %v1313 = vadd.f32 %v1225, %v1265
      %v1314 = vadd.f32 %v1226, %v1265
      %v1315 = vadd.f32 %v1227, %v1265
      %v1316 = vadd.f32 %v1228, %v1265
      %v1317 = vadd.f32 %v1229, %v1265
      %v1318 = vadd.f32 %v1230, %v1265
      %v1319 = vadd.f32 %v1231, %v1265
      %v1320 = vadd.f32 %v1232, %v1265
      %v1321 = vadd.f32 %v1233, %v1265
      %v1322 = vadd.f32 %v1234, %v1265
      %v1323 = vadd.f32 %v1235, %v1265
      %v1324 = vadd.f32 %v1236, %v1265
      %v1325 = vadd.f32 %v1237, %v1265
      %v1326 = vadd.f32 %v1238, %v1265
      %v1327 = vadd.f32 %v1239, %v1265
      %v1328 = vadd.f32 %v1240, %v1265
      %v1329 = vadd.f32 %v1241, %v1265
      %v1330 = vadd.f32 %v1242, %v1265
      %v1331 = vadd.f32 %v1243, %v1265
      %v1332 = vadd.f32 %v1244, %v1265
      %v1333 = vadd.f32 %v1245, %v1265
      %v1334 = vadd.f32 %v1246, %v1265
      %v1335 = vadd.f32 %v1247, %v1265
      %v1336 = vadd.f32 %v1248, %v1265
      %v1337 = vadd.f32 %v1249, %v1265
      %v1338 = vadd.f32 %v1250, %v1265
      %v1339 = vadd.f32 %v1251, %v1265
      %v1340 = vadd.f32 %v1252, %v1265
      %v1341 = vadd.f32 %v1253, %v1265
      %v1342 = vadd.f32 %v1254, %v1265
      %v1343 = vadd.f32 %v1255, %v1265
      %v1344 = vadd.f32 %v1256, %v1265
      %v1345 = vadd.f32 %v1257, %v1265
      %v1346 = vadd.f32 %v1258, %v1265
      %v1347 = vadd.f32 %v1259, %v1265
      %v1348 = vmax.f32 %v1267, 0.0
      %v1349 = vmax.f32 %v1268, 0.0
      %v1350 = vmax.f32 %v1269, 0.0
      %v1351 = vmax.f32 %v1270, 0.0
      %v1352 = vmax.f32 %v1271, 0.0
      %v1353 = vmax.f32 %v1272, 0.0
      %v1354 = vmax.f32 %v1273, 0.0
      %v1355 = vmax.f32 %v1274, 0.0
      %v1356 = vmax.f32 %v1275, 0.0
      %v1357 = vmax.f32 %v1276, 0.0
      %v1358 = vmax.f32 %v1277, 0.0
      %v1359 = vmax.f32 %v1278, 0.0
      %v1360 = vmax.f32 %v1279, 0.0
      %v1361 = vmax.f32 %v1280, 0.0
      %v1362 = vmax.f32 %v1281, 0.0
      %v1363 = vmax.f32 %v1282, 0.0
      %v1364 = vmax.f32 %v1283, 0.0
      %v1365 = vmax.f32 %v1284, 0.0
      %v1366 = vmax.f32 %v1285, 0.0
      %v1367 = vmax.f32 %v1286, 0.0
      %v1368 = vmax.f32 %v1287, 0.0
      %v1369 = vmax.f32 %v1288, 0.0
      %v1370 = vmax.f32 %v1289, 0.0
      %v1371 = vmax.f32 %v1290, 0.0
      %v1372 = vmax.f32 %v1291, 0.0
      %v1373 = vmax.f32 %v1292, 0.0
      %v1374 = vmax.f32 %v1293, 0.0
      %v1375 = vmax.f32 %v1294, 0.0
      %v1376 = vmax.f32 %v1295, 0.0
      %v1377 = vmax.f32 %v1296, 0.0
      %v1378 = vmax.f32 %v1297, 0.0
      %v1379 = vmax.f32 %v1298, 0.0
      %v1380 = vmax.f32 %v1299, 0.0
      %v1381 = vmax.f32 %v1300, 0.0
      %v1382 = vmax.f32 %v1301, 0.0
      %v1383 = vmax.f32 %v1302, 0.0
      %v1384 = vmax.f32 %v1303, 0.0
      %v1385 = vmax.f32 %v1304, 0.0
      %v1386 = vmax.f32 %v1305, 0.0
      %v1387 = vmax.f32 %v1306, 0.0
      %v1388 = vmax.f32 %v1307, 0.0
      %v1389 = vmax.f32 %v1308, 0.0
      %v1390 = vmax.f32 %v1309, 0.0
      %v1391 = vmax.f32 %v1310, 0.0
      %v1392 = vmax.f32 %v1311, 0.0
      %v1393 = vmax.f32 %v1312, 0.0
      %v1394 = vmax.f32 %v1313, 0.0
      %v1395 = vmax.f32 %v1314, 0.0
      %v1396 = vmax.f32 %v1315, 0.0
      %v1397 = vmax.f32 %v1316, 0.0
      %v1398 = vmax.f32 %v1317, 0.0
      %v1399 = vmax.f32 %v1318, 0.0
      %v1400 = vmax.f32 %v1319, 0.0
      %v1401 = vmax.f32 %v1320, 0.0
      %v1402 = vmax.f32 %v1321, 0.0
      %v1403 = vmax.f32 %v1322, 0.0
      %v1404 = vmax.f32 %v1323, 0.0
      %v1405 = vmax.f32 %v1324, 0.0
      %v1406 = vmax.f32 %v1325, 0.0
      %v1407 = vmax.f32 %v1326, 0.0
      %v1408 = vmax.f32 %v1327, 0.0
      %v1409 = vmax.f32 %v1328, 0.0
      %v1410 = vmax.f32 %v1329, 0.0
      %v1411 = vmax.f32 %v1330, 0.0
      %v1412 = vmax.f32 %v1331, 0.0
      %v1413 = vmax.f32 %v1332, 0.0
      %v1414 = vmax.f32 %v1333, 0.0
      %v1415 = vmax.f32 %v1334, 0.0
      %v1416 = vmax.f32 %v1335, 0.0
      %v1417 = vmax.f32 %v1336, 0.0
      %v1418 = vmax.f32 %v1337, 0.0
      %v1419 = vmax.f32 %v1338, 0.0
      %v1420 = vmax.f32 %v1339, 0.0
      %v1421 = vmax.f32 %v1340, 0.0
      %v1422 = vmax.f32 %v1341, 0.0
      %v1423 = vmax.f32 %v1342, 0.0
      %v1424 = vmax.f32 %v1343, 0.0
      %v1425 = vmax.f32 %v1344, 0.0
      %v1426 = vmax.f32 %v1345, 0.0
      %v1427 = vmax.f32 %v1346, 0.0
      %v1428 = vmax.f32 %v1347, 0.0
      %v1429 = vld [vmem:[%s4] sm:$0xff]
      %v1430 = vld [vmem:[%s4 + $0x8] sm:$0xff]
      %v1431 = vld [vmem:[%s4 + $0x10] sm:$0xff]
      %v1432 = vld [vmem:[%s4 + $0x18] sm:$0xff]
      %v1433 = vld [vmem:[%s4 + $0x20] sm:$0xff]
      %v1434 = vld [vmem:[%s4 + $0x28] sm:$0xff]
      %v1435 = vld [vmem:[%s4 + $0x30] sm:$0xff]
      %v1436 = vld [vmem:[%s4 + $0x38] sm:$0xff]
      %v1437 = vld [vmem:[%s4 + $0x40] sm:$0xff]
      %v1438 = vld [vmem:[%s4 + $0x48] sm:$0xff]
      %v1439 = vld [vmem:[%s4 + $0x50] sm:$0xff]
      %v1440 = vld [vmem:[%s4 + $0x58] sm:$0xff]
      %v1441 = vld [vmem:[%s4 + $0x60] sm:$0xff]
      %v1442 = vld [vmem:[%s4 + $0x68] sm:$0xff]
      %v1443 = vld [vmem:[%s4 + $0x70] sm:$0xff]
      %v1444 = vld [vmem:[%s4 + $0x78] sm:$0xff]
      %v1445 = vld [vmem:[%s4 + $0x80] sm:$0xff]
      %v1446 = vld [vmem:[%s4 + $0x88] sm:$0xff]
      %v1447 = vld [vmem:[%s4 + $0x90] sm:$0xff]
      %v1448 = vld [vmem:[%s4 + $0x98] sm:$0xff]
      %v1449 = vld [vmem:[%s4 + $0xa0] sm:$0xff]
      %v1450 = vld [vmem:[%s4 + $0xa8] sm:$0xff]
      %v1451 = vld [vmem:[%s4 + $0xb0] sm:$0xff]
      %v1452 = vld [vmem:[%s4 + $0xb8] sm:$0xff]
      %v1453 = vld [vmem:[%s4 + $0xc0] sm:$0xff]
      %v1454 = vld [vmem:[%s4 + $0xc8] sm:$0xff]
      %v1455 = vld [vmem:[%s4 + $0xd0] sm:$0xff]
      %v1456 = vld [vmem:[%s4 + $0xd8] sm:$0xff]
      %v1457 = vld [vmem:[%s4 + $0xe0] sm:$0xff]
      %v1458 = vld [vmem:[%s4 + $0xe8] sm:$0xff]
      %v1459 = vld [vmem:[%s4 + $0xf0] sm:$0xff]
      %v1460 = vld [vmem:[%s4 + $0xf8] sm:$0xff]
      %v1461 = vld [vmem:[%s4 + $0x100] sm:$0xff]
      %v1462 = vld [vmem:[%s4 + $0x108] sm:$0xff]
      %v1463 = vld [vmem:[%s4 + $0x110] sm:$0xff]
      %v1464 = vld [vmem:[%s4 + $0x118] sm:$0xff]
      %v1465 = vld [vmem:[%s4 + $0x120] sm:$0xff]
      %v1466 = vld [vmem:[%s4 + $0x128] sm:$0xff]
      %v1467 = vld [vmem:[%s4 + $0x130] sm:$0xff]
      %v1468 = vld [vmem:[%s4 + $0x138] sm:$0xff]
      %v1469 = vld [vmem:[%s4 + $0x140] sm:$0xff]
      %v1470 = vld [vmem:[%s4 + $0x148] sm:$0xff]
      %v1471 = vld [vmem:[%s4 + $0x150] sm:$0xff]
      %v1472 = vld [vmem:[%s4 + $0x158] sm:$0xff]
      %v1473 = vld [vmem:[%s4 + $0x160] sm:$0xff]
      %v1474 = vld [vmem:[%s4 + $0x168] sm:$0xff]
      %v1475 = vld [vmem:[%s4 + $0x170] sm:$0xff]
      %v1476 = vld [vmem:[%s4 + $0x178] sm:$0xff]
      %v1477 = vld [vmem:[%s4 + $0x180] sm:$0xff]
      %v1478 = vld [vmem:[%s4 + $0x188] sm:$0xff]
      %v1479 = vld [vmem:[%s4 + $0x190] sm:$0xff]
      %v1480 = vld [vmem:[%s4 + $0x198] sm:$0xff]
      %v1481 = vld [vmem:[%s4 + $0x1a0] sm:$0xff]
      %v1482 = vld [vmem:[%s4 + $0x1a8] sm:$0xff]
      %v1483 = vld [vmem:[%s4 + $0x1b0] sm:$0xff]
      %v1484 = vld [vmem:[%s4 + $0x1b8] sm:$0xff]
      %v1485 = vld [vmem:[%s4 + $0x1c0] sm:$0xff]
      %v1486 = vld [vmem:[%s4 + $0x1c8] sm:$0xff]
      %v1487 = vld [vmem:[%s4 + $0x1d0] sm:$0xff]
      %v1488 = vld [vmem:[%s4 + $0x1d8] sm:$0xff]
      %v1489 = vld [vmem:[%s4 + $0x1e0] sm:$0xff]
      %v1490 = vld [vmem:[%s4 + $0x1e8] sm:$0xff]
      %v1491 = vld [vmem:[%s4 + $0x1f0] sm:$0xff]
      %v1492 = vld [vmem:[%s4 + $0x1f8] sm:$0xff]
      %v1493 = vld [vmem:[%s4 + $0x200] sm:$0xff]
      %v1494 = vld [vmem:[%s4 + $0x208] sm:$0xff]
      %v1495 = vld [vmem:[%s4 + $0x210] sm:$0xff]
      %v1496 = vld [vmem:[%s4 + $0x218] sm:$0xff]
      %v1497 = vld [vmem:[%s4 + $0x220] sm:$0xff]
      %v1498 = vld [vmem:[%s4 + $0x228] sm:$0xff]
      %v1499 = vld [vmem:[%s4 + $0x230] sm:$0xff]
      %v1500 = vld [vmem:[%s4 + $0x238] sm:$0xff]
      %v1501 = vld [vmem:[%s4 + $0x240] sm:$0xff]
      %v1502 = vld [vmem:[%s4 + $0x248] sm:$0xff]
      %v1503 = vld [vmem:[%s4 + $0x250] sm:$0xff]
      %v1504 = vld [vmem:[%s4 + $0x258] sm:$0xff]
      %v1505 = vld [vmem:[%s4 + $0x260] sm:$0xff]
      %v1506 = vld [vmem:[%s4 + $0x268] sm:$0xff]
      %v1507 = vld [vmem:[%s4 + $0x270] sm:$0xff]
      %v1508 = vld [vmem:[%s4 + $0x278] sm:$0xff]
      %v1509 = vld [vmem:[%s4 + $0x280] sm:$0xff]
      %1511 = vset.pattern.permute.xlu0 0
      %1512 = vperm.xlu0 %1511, %v1429
      %v1513 = vpop.permute.xlu0 %1512
      %1516 = vset.pattern.permute.xlu0 0
      %1517 = vperm.xlu0 %1516, %v1430
      %v1518 = vpop.permute.xlu0 %1517
      %1521 = vset.pattern.permute.xlu0 0
      %1522 = vperm.xlu0 %1521, %v1431
      %v1523 = vpop.permute.xlu0 %1522
      %1526 = vset.pattern.permute.xlu0 0
      %1527 = vperm.xlu0 %1526, %v1432
      %v1528 = vpop.permute.xlu0 %1527
      %1531 = vset.pattern.permute.xlu0 0
      %1532 = vperm.xlu0 %1531, %v1433
      %v1533 = vpop.permute.xlu0 %1532
      %1536 = vset.pattern.permute.xlu0 0
      %1537 = vperm.xlu0 %1536, %v1434
      %v1538 = vpop.permute.xlu0 %1537
      %1541 = vset.pattern.permute.xlu0 0
      %1542 = vperm.xlu0 %1541, %v1435
      %v1543 = vpop.permute.xlu0 %1542
      %1546 = vset.pattern.permute.xlu0 0
      %1547 = vperm.xlu0 %1546, %v1436
      %v1548 = vpop.permute.xlu0 %1547
      %1551 = vset.pattern.permute.xlu0 0
      %1552 = vperm.xlu0 %1551, %v1437
      %v1553 = vpop.permute.xlu0 %1552
      %1556 = vset.pattern.permute.xlu0 0
      %1557 = vperm.xlu0 %1556, %v1438
      %v1558 = vpop.permute.xlu0 %1557
      %1561 = vset.pattern.permute.xlu0 0
      %1562 = vperm.xlu0 %1561, %v1439
      %v1563 = vpop.permute.xlu0 %1562
      %1566 = vset.pattern.permute.xlu0 0
      %1567 = vperm.xlu0 %1566, %v1440
      %v1568 = vpop.permute.xlu0 %1567
      %1571 = vset.pattern.permute.xlu0 0
      %1572 = vperm.xlu0 %1571, %v1441
      %v1573 = vpop.permute.xlu0 %1572
      %1576 = vset.pattern.permute.xlu0 0
      %1577 = vperm.xlu0 %1576, %v1442
      %v1578 = vpop.permute.xlu0 %1577
      %1581 = vset.pattern.permute.xlu0 0
      %1582 = vperm.xlu0 %1581, %v1443
      %v1583 = vpop.permute.xlu0 %1582
      %1586 = vset.pattern.permute.xlu0 0
      %1587 = vperm.xlu0 %1586, %v1444
      %v1588 = vpop.permute.xlu0 %1587
      %1591 = vset.pattern.permute.xlu0 0
      %1592 = vperm.xlu0 %1591, %v1445
      %v1593 = vpop.permute.xlu0 %1592
      %1596 = vset.pattern.permute.xlu0 0
      %1597 = vperm.xlu0 %1596, %v1446
      %v1598 = vpop.permute.xlu0 %1597
      %1601 = vset.pattern.permute.xlu0 0
      %1602 = vperm.xlu0 %1601, %v1447
      %v1603 = vpop.permute.xlu0 %1602
      %1606 = vset.pattern.permute.xlu0 0
      %1607 = vperm.xlu0 %1606, %v1448
      %v1608 = vpop.permute.xlu0 %1607
      %1611 = vset.pattern.permute.xlu0 0
      %1612 = vperm.xlu0 %1611, %v1449
      %v1613 = vpop.permute.xlu0 %1612
      %1616 = vset.pattern.permute.xlu0 0
      %1617 = vperm.xlu0 %1616, %v1450
      %v1618 = vpop.permute.xlu0 %1617
      %1621 = vset.pattern.permute.xlu0 0
      %1622 = vperm.xlu0 %1621, %v1451
      %v1623 = vpop.permute.xlu0 %1622
      %1626 = vset.pattern.permute.xlu0 0
      %1627 = vperm.xlu0 %1626, %v1452
      %v1628 = vpop.permute.xlu0 %1627
      %1631 = vset.pattern.permute.xlu0 0
      %1632 = vperm.xlu0 %1631, %v1453
      %v1633 = vpop.permute.xlu0 %1632
      %1636 = vset.pattern.permute.xlu0 0
      %1637 = vperm.xlu0 %1636, %v1454
      %v1638 = vpop.permute.xlu0 %1637
      %1641 = vset.pattern.permute.xlu0 0
      %1642 = vperm.xlu0 %1641, %v1455
      %v1643 = vpop.permute.xlu0 %1642
      %1646 = vset.pattern.permute.xlu0 0
      %1647 = vperm.xlu0 %1646, %v1456
      %v1648 = vpop.permute.xlu0 %1647
      %1651 = vset.pattern.permute.xlu0 0
      %1652 = vperm.xlu0 %1651, %v1457
      %v1653 = vpop.permute.xlu0 %1652
      %1656 = vset.pattern.permute.xlu0 0
      %1657 = vperm.xlu0 %1656, %v1458
      %v1658 = vpop.permute.xlu0 %1657
      %1661 = vset.pattern.permute.xlu0 0
      %1662 = vperm.xlu0 %1661, %v1459
      %v1663 = vpop.permute.xlu0 %1662
      %1666 = vset.pattern.permute.xlu0 0
      %1667 = vperm.xlu0 %1666, %v1460
      %v1668 = vpop.permute.xlu0 %1667
      %1671 = vset.pattern.permute.xlu0 0
      %1672 = vperm.xlu0 %1671, %v1461
      %v1673 = vpop.permute.xlu0 %1672
      %1676 = vset.pattern.permute.xlu0 0
      %1677 = vperm.xlu0 %1676, %v1462
      %v1678 = vpop.permute.xlu0 %1677
      %1681 = vset.pattern.permute.xlu0 0
      %1682 = vperm.xlu0 %1681, %v1463
      %v1683 = vpop.permute.xlu0 %1682
      %1686 = vset.pattern.permute.xlu0 0
      %1687 = vperm.xlu0 %1686, %v1464
      %v1688 = vpop.permute.xlu0 %1687
      %1691 = vset.pattern.permute.xlu0 0
      %1692 = vperm.xlu0 %1691, %v1465
      %v1693 = vpop.permute.xlu0 %1692
      %1696 = vset.pattern.permute.xlu0 0
      %1697 = vperm.xlu0 %1696, %v1466
      %v1698 = vpop.permute.xlu0 %1697
      %1701 = vset.pattern.permute.xlu0 0
      %1702 = vperm.xlu0 %1701, %v1467
      %v1703 = vpop.permute.xlu0 %1702
      %1706 = vset.pattern.permute.xlu0 0
      %1707 = vperm.xlu0 %1706, %v1468
      %v1708 = vpop.permute.xlu0 %1707
      %1711 = vset.pattern.permute.xlu0 0
      %1712 = vperm.xlu0 %1711, %v1469
      %v1713 = vpop.permute.xlu0 %1712
      %1716 = vset.pattern.permute.xlu0 0
      %1717 = vperm.xlu0 %1716, %v1470
      %v1718 = vpop.permute.xlu0 %1717
      %1721 = vset.pattern.permute.xlu0 0
      %1722 = vperm.xlu0 %1721, %v1471
      %v1723 = vpop.permute.xlu0 %1722
      %1726 = vset.pattern.permute.xlu0 0
      %1727 = vperm.xlu0 %1726, %v1472
      %v1728 = vpop.permute.xlu0 %1727
      %1731 = vset.pattern.permute.xlu0 0
      %1732 = vperm.xlu0 %1731, %v1473
      %v1733 = vpop.permute.xlu0 %1732
      %1736 = vset.pattern.permute.xlu0 0
      %1737 = vperm.xlu0 %1736, %v1474
      %v1738 = vpop.permute.xlu0 %1737
      %1741 = vset.pattern.permute.xlu0 0
      %1742 = vperm.xlu0 %1741, %v1475
      %v1743 = vpop.permute.xlu0 %1742
      %1746 = vset.pattern.permute.xlu0 0
      %1747 = vperm.xlu0 %1746, %v1476
      %v1748 = vpop.permute.xlu0 %1747
      %1751 = vset.pattern.permute.xlu0 0
      %1752 = vperm.xlu0 %1751, %v1477
      %v1753 = vpop.permute.xlu0 %1752
      %1756 = vset.pattern.permute.xlu0 0
      %1757 = vperm.xlu0 %1756, %v1478
      %v1758 = vpop.permute.xlu0 %1757
      %1761 = vset.pattern.permute.xlu0 0
      %1762 = vperm.xlu0 %1761, %v1479
      %v1763 = vpop.permute.xlu0 %1762
      %1766 = vset.pattern.permute.xlu0 0
      %1767 = vperm.xlu0 %1766, %v1480
      %v1768 = vpop.permute.xlu0 %1767
      %1771 = vset.pattern.permute.xlu0 0
      %1772 = vperm.xlu0 %1771, %v1481
      %v1773 = vpop.permute.xlu0 %1772
      %1776 = vset.pattern.permute.xlu0 0
      %1777 = vperm.xlu0 %1776, %v1482
      %v1778 = vpop.permute.xlu0 %1777
      %1781 = vset.pattern.permute.xlu0 0
      %1782 = vperm.xlu0 %1781, %v1483
      %v1783 = vpop.permute.xlu0 %1782
      %1786 = vset.pattern.permute.xlu0 0
      %1787 = vperm.xlu0 %1786, %v1484
      %v1788 = vpop.permute.xlu0 %1787
      %1791 = vset.pattern.permute.xlu0 0
      %1792 = vperm.xlu0 %1791, %v1485
      %v1793 = vpop.permute.xlu0 %1792
      %1796 = vset.pattern.permute.xlu0 0
      %1797 = vperm.xlu0 %1796, %v1486
      %v1798 = vpop.permute.xlu0 %1797
      %1801 = vset.pattern.permute.xlu0 0
      %1802 = vperm.xlu0 %1801, %v1487
      %v1803 = vpop.permute.xlu0 %1802
      %1806 = vset.pattern.permute.xlu0 0
      %1807 = vperm.xlu0 %1806, %v1488
      %v1808 = vpop.permute.xlu0 %1807
      %1811 = vset.pattern.permute.xlu0 0
      %1812 = vperm.xlu0 %1811, %v1489
      %v1813 = vpop.permute.xlu0 %1812
      %1816 = vset.pattern.permute.xlu0 0
      %1817 = vperm.xlu0 %1816, %v1490
      %v1818 = vpop.permute.xlu0 %1817
      %1821 = vset.pattern.permute.xlu0 0
      %1822 = vperm.xlu0 %1821, %v1491
      %v1823 = vpop.permute.xlu0 %1822
      %1826 = vset.pattern.permute.xlu0 0
      %1827 = vperm.xlu0 %1826, %v1492
      %v1828 = vpop.permute.xlu0 %1827
      %1831 = vset.pattern.permute.xlu0 0
      %1832 = vperm.xlu0 %1831, %v1493
      %v1833 = vpop.permute.xlu0 %1832
      %1836 = vset.pattern.permute.xlu0 0
      %1837 = vperm.xlu0 %1836, %v1494
      %v1838 = vpop.permute.xlu0 %1837
      %1841 = vset.pattern.permute.xlu0 0
      %1842 = vperm.xlu0 %1841, %v1495
      %v1843 = vpop.permute.xlu0 %1842
      %1846 = vset.pattern.permute.xlu0 0
      %1847 = vperm.xlu0 %1846, %v1496
      %v1848 = vpop.permute.xlu0 %1847
      %1851 = vset.pattern.permute.xlu0 0
      %1852 = vperm.xlu0 %1851, %v1497
      %v1853 = vpop.permute.xlu0 %1852
      %1856 = vset.pattern.permute.xlu0 0
      %1857 = vperm.xlu0 %1856, %v1498
      %v1858 = vpop.permute.xlu0 %1857
      %1861 = vset.pattern.permute.xlu0 0
      %1862 = vperm.xlu0 %1861, %v1499
      %v1863 = vpop.permute.xlu0 %1862
      %1866 = vset.pattern.permute.xlu0 0
      %1867 = vperm.xlu0 %1866, %v1500
      %v1868 = vpop.permute.xlu0 %1867
      %1871 = vset.pattern.permute.xlu0 0
      %1872 = vperm.xlu0 %1871, %v1501
      %v1873 = vpop.permute.xlu0 %1872
      %1876 = vset.pattern.permute.xlu0 0
      %1877 = vperm.xlu0 %1876, %v1502
      %v1878 = vpop.permute.xlu0 %1877
      %1881 = vset.pattern.permute.xlu0 0
      %1882 = vperm.xlu0 %1881, %v1503
      %v1883 = vpop.permute.xlu0 %1882
      %1886 = vset.pattern.permute.xlu0 0
      %1887 = vperm.xlu0 %1886, %v1504
      %v1888 = vpop.permute.xlu0 %1887
      %1891 = vset.pattern.permute.xlu0 0
      %1892 = vperm.xlu0 %1891, %v1505
      %v1893 = vpop.permute.xlu0 %1892
      %1896 = vset.pattern.permute.xlu0 0
      %1897 = vperm.xlu0 %1896, %v1506
      %v1898 = vpop.permute.xlu0 %1897
      %1901 = vset.pattern.permute.xlu0 0
      %1902 = vperm.xlu0 %1901, %v1507
      %v1903 = vpop.permute.xlu0 %1902
      %1906 = vset.pattern.permute.xlu0 0
      %1907 = vperm.xlu0 %1906, %v1508
      %v1908 = vpop.permute.xlu0 %1907
      %1911 = vset.pattern.permute.xlu0 0
      %1912 = vperm.xlu0 %1911, %v1509
      %v1913 = vpop.permute.xlu0 %1912
      %v1915 = vmul.f32 %v1348, %v1513
      %v1916 = vmul.f32 %v1349, %v1518
      %v1917 = vmul.f32 %v1350, %v1523
      %v1918 = vmul.f32 %v1351, %v1528
      %v1919 = vmul.f32 %v1352, %v1533
      %v1920 = vmul.f32 %v1353, %v1538
      %v1921 = vmul.f32 %v1354, %v1543
      %v1922 = vmul.f32 %v1355, %v1548
      %v1923 = vmul.f32 %v1356, %v1553
      %v1924 = vmul.f32 %v1357, %v1558
      %v1925 = vmul.f32 %v1358, %v1563
      %v1926 = vmul.f32 %v1359, %v1568
      %v1927 = vmul.f32 %v1360, %v1573
      %v1928 = vmul.f32 %v1361, %v1578
      %v1929 = vmul.f32 %v1362, %v1583
      %v1930 = vmul.f32 %v1363, %v1588
      %v1931 = vmul.f32 %v1364, %v1593
      %v1932 = vmul.f32 %v1365, %v1598
      %v1933 = vmul.f32 %v1366, %v1603
      %v1934 = vmul.f32 %v1367, %v1608
      %v1935 = vmul.f32 %v1368, %v1613
      %v1936 = vmul.f32 %v1369, %v1618
      %v1937 = vmul.f32 %v1370, %v1623
      %v1938 = vmul.f32 %v1371, %v1628
      %v1939 = vmul.f32 %v1372, %v1633
      %v1940 = vmul.f32 %v1373, %v1638
      %v1941 = vmul.f32 %v1374, %v1643
      %v1942 = vmul.f32 %v1375, %v1648
      %v1943 = vmul.f32 %v1376, %v1653
      %v1944 = vmul.f32 %v1377, %v1658
      %v1945 = vmul.f32 %v1378, %v1663
      %v1946 = vmul.f32 %v1379, %v1668
      %v1947 = vmul.f32 %v1380, %v1673
      %v1948 = vmul.f32 %v1381, %v1678
      %v1949 = vmul.f32 %v1382, %v1683
      %v1950 = vmul.f32 %v1383, %v1688
      %v1951 = vmul.f32 %v1384, %v1693
      %v1952 = vmul.f32 %v1385, %v1698
      %v1953 = vmul.f32 %v1386, %v1703
      %v1954 = vmul.f32 %v1387, %v1708
      %v1955 = vmul.f32 %v1388, %v1713
      %v1956 = vmul.f32 %v1389, %v1718
      %v1957 = vmul.f32 %v1390, %v1723
      %v1958 = vmul.f32 %v1391, %v1728
      %v1959 = vmul.f32 %v1392, %v1733
      %v1960 = vmul.f32 %v1393, %v1738
      %v1961 = vmul.f32 %v1394, %v1743
      %v1962 = vmul.f32 %v1395, %v1748
      %v1963 = vmul.f32 %v1396, %v1753
      %v1964 = vmul.f32 %v1397, %v1758
      %v1965 = vmul.f32 %v1398, %v1763
      %v1966 = vmul.f32 %v1399, %v1768
      %v1967 = vmul.f32 %v1400, %v1773
      %v1968 = vmul.f32 %v1401, %v1778
      %v1969 = vmul.f32 %v1402, %v1783
      %v1970 = vmul.f32 %v1403, %v1788
      %v1971 = vmul.f32 %v1404, %v1793
      %v1972 = vmul.f32 %v1405, %v1798
      %v1973 = vmul.f32 %v1406, %v1803
      %v1974 = vmul.f32 %v1407, %v1808
      %v1975 = vmul.f32 %v1408, %v1813
      %v1976 = vmul.f32 %v1409, %v1818
      %v1977 = vmul.f32 %v1410, %v1823
      %v1978 = vmul.f32 %v1411, %v1828
      %v1979 = vmul.f32 %v1412, %v1833
      %v1980 = vmul.f32 %v1413, %v1838
      %v1981 = vmul.f32 %v1414, %v1843
      %v1982 = vmul.f32 %v1415, %v1848
      %v1983 = vmul.f32 %v1416, %v1853
      %v1984 = vmul.f32 %v1417, %v1858
      %v1985 = vmul.f32 %v1418, %v1863
      %v1986 = vmul.f32 %v1419, %v1868
      %v1987 = vmul.f32 %v1420, %v1873
      %v1988 = vmul.f32 %v1421, %v1878
      %v1989 = vmul.f32 %v1422, %v1883
      %v1990 = vmul.f32 %v1423, %v1888
      %v1991 = vmul.f32 %v1424, %v1893
      %v1992 = vmul.f32 %v1425, %v1898
      %v1993 = vmul.f32 %v1426, %v1903
      %v1994 = vmul.f32 %v1427, %v1908
      %v1995 = vmul.f32 %v1428, %v1913
      %v1996 = vpack.c.bf16 %v1916, %v1915
      %v1997 = vpack.c.bf16 %v1918, %v1917
      %v1998 = vpack.c.bf16 %v1920, %v1919
      %v1999 = vpack.c.bf16 %v1922, %v1921
      %v2000 = vpack.c.bf16 %v1924, %v1923
      %v2001 = vpack.c.bf16 %v1926, %v1925
      %v2002 = vpack.c.bf16 %v1928, %v1927
      %v2003 = vpack.c.bf16 %v1930, %v1929
      %v2004 = vpack.c.bf16 %v1932, %v1931
      %v2005 = vpack.c.bf16 %v1934, %v1933
      %v2006 = vpack.c.bf16 %v1936, %v1935
      %v2007 = vpack.c.bf16 %v1938, %v1937
      %v2008 = vpack.c.bf16 %v1940, %v1939
      %v2009 = vpack.c.bf16 %v1942, %v1941
      %v2010 = vpack.c.bf16 %v1944, %v1943
      %v2011 = vpack.c.bf16 %v1946, %v1945
      %v2012 = vpack.c.bf16 %v1948, %v1947
      %v2013 = vpack.c.bf16 %v1950, %v1949
      %v2014 = vpack.c.bf16 %v1952, %v1951
      %v2015 = vpack.c.bf16 %v1954, %v1953
      %v2016 = vpack.c.bf16 %v1956, %v1955
      %v2017 = vpack.c.bf16 %v1958, %v1957
      %v2018 = vpack.c.bf16 %v1960, %v1959
      %v2019 = vpack.c.bf16 %v1962, %v1961
      %v2020 = vpack.c.bf16 %v1964, %v1963
      %v2021 = vpack.c.bf16 %v1966, %v1965
      %v2022 = vpack.c.bf16 %v1968, %v1967
      %v2023 = vpack.c.bf16 %v1970, %v1969
      %v2024 = vpack.c.bf16 %v1972, %v1971
      %v2025 = vpack.c.bf16 %v1974, %v1973
      %v2026 = vpack.c.bf16 %v1976, %v1975
      %v2027 = vpack.c.bf16 %v1978, %v1977
      %v2028 = vpack.c.bf16 %v1980, %v1979
      %v2029 = vpack.c.bf16 %v1982, %v1981
      %v2030 = vpack.c.bf16 %v1984, %v1983
      %v2031 = vpack.c.bf16 %v1986, %v1985
      %v2032 = vpack.c.bf16 %v1988, %v1987
      %v2033 = vpack.c.bf16 %v1990, %v1989
      %v2034 = vpack.c.bf16 %v1992, %v1991
      %v2035 = vpack.c.bf16 %v1994, %v1993
      %v2036 = vpack.c.bf16 %v1995, %v1995
      %2037 = vst [vmem:[#allocation2] sm:$0xff] %v1996
      %2038 = vst [vmem:[#allocation2 + $0x8] sm:$0xff] %v1997
      %2039 = vst [vmem:[#allocation2 + $0x10] sm:$0xff] %v1998
      %2040 = vst [vmem:[#allocation2 + $0x18] sm:$0xff] %v1999
      %2041 = vst [vmem:[#allocation2 + $0x20] sm:$0xff] %v2000
      %2042 = vst [vmem:[#allocation2 + $0x28] sm:$0xff] %v2001
      %2043 = vst [vmem:[#allocation2 + $0x30] sm:$0xff] %v2002
      %2044 = vst [vmem:[#allocation2 + $0x38] sm:$0xff] %v2003
      %2045 = vst [vmem:[#allocation2 + $0x40] sm:$0xff] %v2004
      %2046 = vst [vmem:[#allocation2 + $0x48] sm:$0xff] %v2005
      %2047 = vst [vmem:[#allocation2 + $0x50] sm:$0xff] %v2006
      %2048 = vst [vmem:[#allocation2 + $0x58] sm:$0xff] %v2007
      %2049 = vst [vmem:[#allocation2 + $0x60] sm:$0xff] %v2008
      %2050 = vst [vmem:[#allocation2 + $0x68] sm:$0xff] %v2009
      %2051 = vst [vmem:[#allocation2 + $0x70] sm:$0xff] %v2010
      %2052 = vst [vmem:[#allocation2 + $0x78] sm:$0xff] %v2011
      %2053 = vst [vmem:[#allocation2 + $0x80] sm:$0xff] %v2012
      %2054 = vst [vmem:[#allocation2 + $0x88] sm:$0xff] %v2013
      %2055 = vst [vmem:[#allocation2 + $0x90] sm:$0xff] %v2014
      %2056 = vst [vmem:[#allocation2 + $0x98] sm:$0xff] %v2015
      %2057 = vst [vmem:[#allocation2 + $0xa0] sm:$0xff] %v2016
      %2058 = vst [vmem:[#allocation2 + $0xa8] sm:$0xff] %v2017
      %2059 = vst [vmem:[#allocation2 + $0xb0] sm:$0xff] %v2018
      %2060 = vst [vmem:[#allocation2 + $0xb8] sm:$0xff] %v2019
      %2061 = vst [vmem:[#allocation2 + $0xc0] sm:$0xff] %v2020
      %2062 = vst [vmem:[#allocation2 + $0xc8] sm:$0xff] %v2021
      %2063 = vst [vmem:[#allocation2 + $0xd0] sm:$0xff] %v2022
      %2064 = vst [vmem:[#allocation2 + $0xd8] sm:$0xff] %v2023
      %2065 = vst [vmem:[#allocation2 + $0xe0] sm:$0xff] %v2024
      %2066 = vst [vmem:[#allocation2 + $0xe8] sm:$0xff] %v2025
      %2067 = vst [vmem:[#allocation2 + $0xf0] sm:$0xff] %v2026
      %2068 = vst [vmem:[#allocation2 + $0xf8] sm:$0xff] %v2027
      %2069 = vst [vmem:[#allocation2 + $0x100] sm:$0xff] %v2028
      %2070 = vst [vmem:[#allocation2 + $0x108] sm:$0xff] %v2029
      %2071 = vst [vmem:[#allocation2 + $0x110] sm:$0xff] %v2030
      %2072 = vst [vmem:[#allocation2 + $0x118] sm:$0xff] %v2031
      %2073 = vst [vmem:[#allocation2 + $0x120] sm:$0xff] %v2032
      %2074 = vst [vmem:[#allocation2 + $0x128] sm:$0xff] %v2033
      %2075 = vst [vmem:[#allocation2 + $0x130] sm:$0xff] %v2034
      %2076 = vst [vmem:[#allocation2 + $0x138] sm:$0xff] %v2035
      %2077 = vst [vmem:[#allocation2 + $0x140] sm:$0xf] %v2036
      %2078 = vst [vmem:[#allocation2 + $0x140] sm:$0xf0] 0
      %2079 = vst [vmem:[#allocation2 + $0x148] sm:$0xff] 0
      %2080 = vst [vmem:[#allocation2 + $0x150] sm:$0xff] 0
      %v2081 = vld [vmem:[#allocation2] sm:$0xff]
      %v2082 = vld [vmem:[#allocation2 + $0x8] sm:$0xff]
      %v2083 = vld [vmem:[#allocation2 + $0x10] sm:$0xff]
      %v2084 = vld [vmem:[#allocation2 + $0x18] sm:$0xff]
      %v2085 = vld [vmem:[#allocation2 + $0x20] sm:$0xff]
      %v2086 = vld [vmem:[#allocation2 + $0x28] sm:$0xff]
      %v2087 = vld [vmem:[#allocation2 + $0x30] sm:$0xff]
      %v2088 = vld [vmem:[#allocation2 + $0x38] sm:$0xff]
      %v2089 = vld [vmem:[#allocation2 + $0x40] sm:$0xff]
      %v2090 = vld [vmem:[#allocation2 + $0x48] sm:$0xff]
      %v2091 = vld [vmem:[#allocation2 + $0x50] sm:$0xff]
      %v2092 = vld [vmem:[#allocation2 + $0x58] sm:$0xff]
      %v2093 = vld [vmem:[#allocation2 + $0x60] sm:$0xff]
      %v2094 = vld [vmem:[#allocation2 + $0x68] sm:$0xff]
      %v2095 = vld [vmem:[#allocation2 + $0x70] sm:$0xff]
      %v2096 = vld [vmem:[#allocation2 + $0x78] sm:$0xff]
      %v2097 = vld [vmem:[#allocation2 + $0x80] sm:$0xff]
      %v2098 = vld [vmem:[#allocation2 + $0x88] sm:$0xff]
      %v2099 = vld [vmem:[#allocation2 + $0x90] sm:$0xff]
      %v2100 = vld [vmem:[#allocation2 + $0x98] sm:$0xff]
      %v2101 = vld [vmem:[#allocation2 + $0xa0] sm:$0xff]
      %v2102 = vld [vmem:[#allocation2 + $0xa8] sm:$0xff]
      %v2103 = vld [vmem:[#allocation2 + $0xb0] sm:$0xff]
      %v2104 = vld [vmem:[#allocation2 + $0xb8] sm:$0xff]
      %v2105 = vld [vmem:[#allocation2 + $0xc0] sm:$0xff]
      %v2106 = vld [vmem:[#allocation2 + $0xc8] sm:$0xff]
      %v2107 = vld [vmem:[#allocation2 + $0xd0] sm:$0xff]
      %v2108 = vld [vmem:[#allocation2 + $0xd8] sm:$0xff]
      %v2109 = vld [vmem:[#allocation2 + $0xe0] sm:$0xff]
      %v2110 = vld [vmem:[#allocation2 + $0xe8] sm:$0xff]
      %v2111 = vld [vmem:[#allocation2 + $0xf0] sm:$0xff]
      %v2112 = vld [vmem:[#allocation2 + $0xf8] sm:$0xff]
      %v2113 = vld [vmem:[#allocation2 + $0x100] sm:$0xff]
      %v2114 = vld [vmem:[#allocation2 + $0x108] sm:$0xff]
      %v2115 = vld [vmem:[#allocation2 + $0x110] sm:$0xff]
      %v2116 = vld [vmem:[#allocation2 + $0x118] sm:$0xff]
      %v2117 = vld [vmem:[#allocation2 + $0x120] sm:$0xff]
      %v2118 = vld [vmem:[#allocation2 + $0x128] sm:$0xff]
      %v2119 = vld [vmem:[#allocation2 + $0x130] sm:$0xff]
      %v2120 = vld [vmem:[#allocation2 + $0x138] sm:$0xff]
      %v2121 = vld [vmem:[#allocation2 + $0x140] sm:$0xf]
      %v2122 = vld [vmem:[%s5] sm:$0xf]
      %v2123 = vld [vmem:[%s5 + $0x4] sm:$0xf]
      %v2124 = vld [vmem:[%s5 + $0x8] sm:$0xf]
      %v2125 = vld [vmem:[%s5 + $0xc] sm:$0xf]
      %v2126 = vld [vmem:[%s5 + $0x10] sm:$0xf]
      %v2127 = vld [vmem:[%s5 + $0x14] sm:$0xf]
      %v2128 = vld [vmem:[%s5 + $0x18] sm:$0xf]
      %v2129 = vld [vmem:[%s5 + $0x1c] sm:$0xf]
      %v2130 = vld [vmem:[%s5 + $0x20] sm:$0xf]
      %v2131 = vld [vmem:[%s5 + $0x24] sm:$0xf]
      %v2132 = vld [vmem:[%s5 + $0x28] sm:$0xf]
      %v2133 = vld [vmem:[%s5 + $0x2c] sm:$0xf]
      %v2134 = vld [vmem:[%s5 + $0x30] sm:$0xf]
      %v2135 = vld [vmem:[%s5 + $0x34] sm:$0xf]
      %v2136 = vld [vmem:[%s5 + $0x38] sm:$0xf]
      %v2137 = vld [vmem:[%s5 + $0x3c] sm:$0xf]
      %v2138 = vld [vmem:[#allocation2 + $0x140] sm:$0x1f]
      %s2139 = scalar_lea.vmem %s5, 64
      %v2140 = vld [vmem:[%s2139] sm:$0xf]
      %v2141 = vld [vmem:[%s2139 + $0x4] sm:$0xf]
      %v2142 = vld [vmem:[%s2139 + $0x8] sm:$0xf]
      %v2143 = vld [vmem:[%s2139 + $0xc] sm:$0xf]
      %v2144 = vld [vmem:[%s2139 + $0x10] sm:$0xf]
      %v2145 = vld [vmem:[%s2139 + $0x14] sm:$0xf]
      %v2146 = vld [vmem:[%s2139 + $0x18] sm:$0xf]
      %v2147 = vld [vmem:[%s2139 + $0x1c] sm:$0xf]
      %v2148 = vld [vmem:[%s2139 + $0x20] sm:$0xf]
      %v2149 = vld [vmem:[%s2139 + $0x24] sm:$0xf]
      %v2150 = vld [vmem:[%s2139 + $0x28] sm:$0xf]
      %v2151 = vld [vmem:[%s2139 + $0x2c] sm:$0xf]
      %v2152 = vld [vmem:[%s2139 + $0x30] sm:$0xf]
      %v2153 = vld [vmem:[%s2139 + $0x34] sm:$0xf]
      %v2154 = vld [vmem:[%s2139 + $0x38] sm:$0xf]
      %v2155 = vld [vmem:[%s2139 + $0x3c] sm:$0xf]
      %vm2156 = vsmask.f32 7424
      %v2158 = vshrl.u32 %v2081, 16
      %v2160 = vshll.u32 %v2081, 16
      %v2162 = vrot.slane %v2160, 1
      %v2163 = vor.u32 %v2158, %v2162
      %v2165 = vshll.u32 %v2082, 16
      %v2167 = vrot.slane %v2165, 1
      %v2168 = vsel %vm2156, %v2163, %v2167
      %v2169 = vshrl.u32 %v2082, 16
      %v2171 = vor.u32 %v2169, %v2167
      %v2173 = vshll.u32 %v2083, 16
      %v2175 = vrot.slane %v2173, 1
      %v2176 = vsel %vm2156, %v2171, %v2175
      %v2177 = vshrl.u32 %v2083, 16
      %v2179 = vor.u32 %v2177, %v2175
      %v2181 = vshll.u32 %v2084, 16
      %v2183 = vrot.slane %v2181, 1
      %v2184 = vsel %vm2156, %v2179, %v2183
      %v2185 = vshrl.u32 %v2084, 16
      %v2187 = vor.u32 %v2185, %v2183
      %v2189 = vshll.u32 %v2085, 16
      %v2191 = vrot.slane %v2189, 1
      %v2192 = vsel %vm2156, %v2187, %v2191
      %v2193 = vshrl.u32 %v2085, 16
      %v2195 = vor.u32 %v2193, %v2191
      %v2197 = vshll.u32 %v2086, 16
      %v2199 = vrot.slane %v2197, 1
      %v2200 = vsel %vm2156, %v2195, %v2199
      %v2201 = vshrl.u32 %v2086, 16
      %v2203 = vor.u32 %v2201, %v2199
      %v2205 = vshll.u32 %v2087, 16
      %v2207 = vrot.slane %v2205, 1
      %v2208 = vsel %vm2156, %v2203, %v2207
      %v2209 = vshrl.u32 %v2087, 16
      %v2211 = vor.u32 %v2209, %v2207
      %v2213 = vshll.u32 %v2088, 16
      %v2215 = vrot.slane %v2213, 1
      %v2216 = vsel %vm2156, %v2211, %v2215
      %v2217 = vshrl.u32 %v2088, 16
      %v2219 = vor.u32 %v2217, %v2215
      %v2221 = vshll.u32 %v2089, 16
      %v2223 = vrot.slane %v2221, 1
      %v2224 = vsel %vm2156, %v2219, %v2223
      %v2225 = vshrl.u32 %v2089, 16
      %v2227 = vor.u32 %v2225, %v2223
      %v2229 = vshll.u32 %v2090, 16
      %v2231 = vrot.slane %v2229, 1
      %v2232 = vsel %vm2156, %v2227, %v2231
      %v2233 = vshrl.u32 %v2090, 16
      %v2235 = vor.u32 %v2233, %v2231
      %v2237 = vshll.u32 %v2091, 16
      %v2239 = vrot.slane %v2237, 1
      %v2240 = vsel %vm2156, %v2235, %v2239
      %v2241 = vshrl.u32 %v2091, 16
      %v2243 = vor.u32 %v2241, %v2239
      %v2245 = vshll.u32 %v2092, 16
      %v2247 = vrot.slane %v2245, 1
      %v2248 = vsel %vm2156, %v2243, %v2247
      %v2249 = vshrl.u32 %v2092, 16
      %v2251 = vor.u32 %v2249, %v2247
      %v2253 = vshll.u32 %v2093, 16
      %v2255 = vrot.slane %v2253, 1
      %v2256 = vsel %vm2156, %v2251, %v2255
      %v2257 = vshrl.u32 %v2093, 16
      %v2259 = vor.u32 %v2257, %v2255
      %v2261 = vshll.u32 %v2094, 16
      %v2263 = vrot.slane %v2261, 1
      %v2264 = vsel %vm2156, %v2259, %v2263
      %v2265 = vshrl.u32 %v2094, 16
      %v2267 = vor.u32 %v2265, %v2263
      %v2269 = vshll.u32 %v2095, 16
      %v2271 = vrot.slane %v2269, 1
      %v2272 = vsel %vm2156, %v2267, %v2271
      %v2273 = vshrl.u32 %v2095, 16
      %v2275 = vor.u32 %v2273, %v2271
      %v2277 = vshll.u32 %v2096, 16
      %v2279 = vrot.slane %v2277, 1
      %v2280 = vsel %vm2156, %v2275, %v2279
      %v2281 = vshrl.u32 %v2096, 16
      %v2283 = vor.u32 %v2281, %v2279
      %v2285 = vshll.u32 %v2097, 16
      %v2287 = vrot.slane %v2285, 1
      %v2288 = vsel %vm2156, %v2283, %v2287
      %v2289 = vshrl.u32 %v2097, 16
      %v2291 = vor.u32 %v2289, %v2287
      %v2293 = vshll.u32 %v2098, 16
      %v2295 = vrot.slane %v2293, 1
      %v2296 = vsel %vm2156, %v2291, %v2295
      %v2297 = vshrl.u32 %v2098, 16
      %v2299 = vor.u32 %v2297, %v2295
      %v2301 = vshll.u32 %v2099, 16
      %v2303 = vrot.slane %v2301, 1
      %v2304 = vsel %vm2156, %v2299, %v2303
      %v2305 = vshrl.u32 %v2099, 16
      %v2307 = vor.u32 %v2305, %v2303
      %v2309 = vshll.u32 %v2100, 16
      %v2311 = vrot.slane %v2309, 1
      %v2312 = vsel %vm2156, %v2307, %v2311
      %v2313 = vshrl.u32 %v2100, 16
      %v2315 = vor.u32 %v2313, %v2311
      %v2317 = vshll.u32 %v2101, 16
      %v2319 = vrot.slane %v2317, 1
      %v2320 = vsel %vm2156, %v2315, %v2319
      %v2321 = vshrl.u32 %v2101, 16
      %v2323 = vor.u32 %v2321, %v2319
      %v2325 = vshll.u32 %v2102, 16
      %v2327 = vrot.slane %v2325, 1
      %v2328 = vsel %vm2156, %v2323, %v2327
      %v2329 = vshrl.u32 %v2102, 16
      %v2331 = vor.u32 %v2329, %v2327
      %v2333 = vshll.u32 %v2103, 16
      %v2335 = vrot.slane %v2333, 1
      %v2336 = vsel %vm2156, %v2331, %v2335
      %v2337 = vshrl.u32 %v2103, 16
      %v2339 = vor.u32 %v2337, %v2335
      %v2341 = vshll.u32 %v2104, 16
      %v2343 = vrot.slane %v2341, 1
      %v2344 = vsel %vm2156, %v2339, %v2343
      %v2345 = vshrl.u32 %v2104, 16
      %v2347 = vor.u32 %v2345, %v2343
      %v2349 = vshll.u32 %v2105, 16
      %v2351 = vrot.slane %v2349, 1
      %v2352 = vsel %vm2156, %v2347, %v2351
      %v2353 = vshrl.u32 %v2105, 16
      %v2355 = vor.u32 %v2353, %v2351
      %v2357 = vshll.u32 %v2106, 16
      %v2359 = vrot.slane %v2357, 1
      %v2360 = vsel %vm2156, %v2355, %v2359
      %v2361 = vshrl.u32 %v2106, 16
      %v2363 = vor.u32 %v2361, %v2359
      %v2365 = vshll.u32 %v2107, 16
      %v2367 = vrot.slane %v2365, 1
      %v2368 = vsel %vm2156, %v2363, %v2367
      %v2369 = vshrl.u32 %v2107, 16
      %v2371 = vor.u32 %v2369, %v2367
      %v2373 = vshll.u32 %v2108, 16
      %v2375 = vrot.slane %v2373, 1
      %v2376 = vsel %vm2156, %v2371, %v2375
      %v2377 = vshrl.u32 %v2108, 16
      %v2379 = vor.u32 %v2377, %v2375
      %v2381 = vshll.u32 %v2109, 16
      %v2383 = vrot.slane %v2381, 1
      %v2384 = vsel %vm2156, %v2379, %v2383
      %v2385 = vshrl.u32 %v2109, 16
      %v2387 = vor.u32 %v2385, %v2383
      %v2389 = vshll.u32 %v2110, 16
      %v2391 = vrot.slane %v2389, 1
      %v2392 = vsel %vm2156, %v2387, %v2391
      %v2393 = vshrl.u32 %v2110, 16
      %v2395 = vor.u32 %v2393, %v2391
      %v2397 = vshll.u32 %v2111, 16
      %v2399 = vrot.slane %v2397, 1
      %v2400 = vsel %vm2156, %v2395, %v2399
      %v2401 = vshrl.u32 %v2111, 16
      %v2403 = vor.u32 %v2401, %v2399
      %v2405 = vshll.u32 %v2112, 16
      %v2407 = vrot.slane %v2405, 1
      %v2408 = vsel %vm2156, %v2403, %v2407
      %v2409 = vshrl.u32 %v2112, 16
      %v2411 = vor.u32 %v2409, %v2407
      %v2413 = vshll.u32 %v2113, 16
      %v2415 = vrot.slane %v2413, 1
      %v2416 = vsel %vm2156, %v2411, %v2415
      %v2417 = vshrl.u32 %v2113, 16
      %v2419 = vor.u32 %v2417, %v2415
      %v2421 = vshll.u32 %v2114, 16
      %v2423 = vrot.slane %v2421, 1
      %v2424 = vsel %vm2156, %v2419, %v2423
      %v2425 = vshrl.u32 %v2114, 16
      %v2427 = vor.u32 %v2425, %v2423
      %v2429 = vshll.u32 %v2115, 16
      %v2431 = vrot.slane %v2429, 1
      %v2432 = vsel %vm2156, %v2427, %v2431
      %v2433 = vshrl.u32 %v2115, 16
      %v2435 = vor.u32 %v2433, %v2431
      %v2437 = vshll.u32 %v2116, 16
      %v2439 = vrot.slane %v2437, 1
      %v2440 = vsel %vm2156, %v2435, %v2439
      %v2441 = vshrl.u32 %v2116, 16
      %v2443 = vor.u32 %v2441, %v2439
      %v2445 = vshll.u32 %v2117, 16
      %v2447 = vrot.slane %v2445, 1
      %v2448 = vsel %vm2156, %v2443, %v2447
      %v2449 = vshrl.u32 %v2117, 16
      %v2451 = vor.u32 %v2449, %v2447
      %v2453 = vshll.u32 %v2118, 16
      %v2455 = vrot.slane %v2453, 1
      %v2456 = vsel %vm2156, %v2451, %v2455
      %v2457 = vshrl.u32 %v2118, 16
      %v2459 = vor.u32 %v2457, %v2455
      %v2461 = vshll.u32 %v2119, 16
      %v2463 = vrot.slane %v2461, 1
      %v2464 = vsel %vm2156, %v2459, %v2463
      %v2465 = vshrl.u32 %v2119, 16
      %v2467 = vor.u32 %v2465, %v2463
      %v2469 = vshll.u32 %v2120, 16
      %v2471 = vrot.slane %v2469, 1
      %v2472 = vsel %vm2156, %v2467, %v2471
      %v2473 = vshrl.u32 %v2120, 16
      %v2475 = vor.u32 %v2473, %v2471
      %v2477 = vshll.u32 %v2138, 16
      %v2479 = vrot.slane %v2477, 1
      %v2480 = vsel %vm2156, %v2475, %v2479
      %v2481 = vshrl.u32 %v2138, 16
      %v2483 = vor.u32 %v2481, %v2479
      %v2541 = vunpack.c.l.b16 %v2140
      %v2542 = vunpack.c.l.b16 %v2141
      %v2543 = vunpack.c.l.b16 %v2142
      %v2544 = vunpack.c.l.b16 %v2143
      %v2545 = vunpack.c.l.b16 %v2144
      %v2546 = vunpack.c.l.b16 %v2145
      %v2547 = vunpack.c.l.b16 %v2146
      %v2548 = vunpack.c.l.b16 %v2147
      %v2549 = vunpack.c.l.b16 %v2148
      %v2550 = vunpack.c.l.b16 %v2149
      %v2551 = vunpack.c.l.b16 %v2150
      %v2552 = vunpack.c.l.b16 %v2151
      %v2553 = vunpack.c.l.b16 %v2152
      %v2554 = vunpack.c.l.b16 %v2153
      %v2555 = vunpack.c.l.b16 %v2154
      %v2556 = vunpack.c.l.b16 %v2155
      %v2557 = vpack.c.b16 %v2542, %v2541
      %v2558 = vpack.c.b16 %v2544, %v2543
      %v2559 = vpack.c.b16 %v2546, %v2545
      %v2560 = vpack.c.b16 %v2548, %v2547
      %v2561 = vpack.c.b16 %v2550, %v2549
      %v2562 = vpack.c.b16 %v2552, %v2551
      %v2563 = vpack.c.b16 %v2554, %v2553
      %v2564 = vpack.c.b16 %v2556, %v2555
      %2573 = vmatprep.subr.bf16.mxu0 0
      %2574 = vmatpush1.bf16.msra.mxu0 %v2557
      %2575 = vmatprep.subr.bf16.mxu0 0
      %2576 = vmatpush1.bf16.msra.mxu0 %v2558
      %2577 = vmatprep.subr.bf16.mxu0 0
      %2578 = vmatpush1.bf16.msra.mxu0 %v2559
      %2579 = vmatprep.subr.bf16.mxu0 0
      %2580 = vmatpush1.bf16.msra.mxu0 %v2560
      %2581 = vmatprep.subr.bf16.mxu0 0
      %2582 = vmatpush1.bf16.msra.mxu0 %v2561
      %2583 = vmatprep.subr.bf16.mxu0 0
      %2584 = vmatpush1.bf16.msra.mxu0 %v2562
      %2585 = vmatprep.subr.bf16.mxu0 0
      %2586 = vmatpush1.bf16.msra.mxu0 %v2563
      %2587 = vmatprep.subr.bf16.mxu0 0
      %2588 = vmatpush1.bf16.msra.mxu0 %v2564
      %2589 = vmatprep.subr.bf16.mxu0 0
      %2590 = vmatpush1.bf16.msra.mxu0 0
      %2591 = vmatprep.subr.bf16.mxu0 0
      %2592 = vmatpush1.bf16.msra.mxu0 0
      %2593 = vmatprep.subr.bf16.mxu0 0
      %2594 = vmatpush1.bf16.msra.mxu0 0
      %2595 = vmatprep.subr.bf16.mxu0 0
      %2596 = vmatpush1.bf16.msra.mxu0 0
      %2597 = vmatprep.subr.bf16.mxu0 0
      %2598 = vmatpush1.bf16.msra.mxu0 0
      %2599 = vmatprep.subr.bf16.mxu0 0
      %2600 = vmatpush1.bf16.msra.mxu0 0
      %2601 = vmatprep.subr.bf16.mxu0 0
      %2602 = vmatpush1.bf16.msra.mxu0 0
      %2603 = vmatprep.subr.bf16.mxu0 0
      %2604 = vmatpush1.bf16.msra.mxu0 0
      %2605 = vmatprep.mubr.bf16.mxu0 0
      %2606 = vmatmul.mubr.bf16.gmra.mrb[0].mxu0 %v2168
      %v2607 = vpop.f32.mrb[0].mxu0
      %v2608 = vadd.f32 0.0, %v2607
      %v2609 = vpop.f32.mrb[0].mxu0
      %v2610 = vpop.f32.mrb[0].mxu0
      %v2611 = vadd.f32 0.0, %v2610
      %v2612 = vpop.f32.mrb[0].mxu0
      %2613 = vmatprep.mubr.bf16.mxu0 0
      %2614 = vmatmul.mubr.bf16.gmra.mrb[0].mxu0 %v2176
      %v2615 = vpop.f32.mrb[0].mxu0
      %v2616 = vadd.f32 0.0, %v2615
      %v2617 = vpop.f32.mrb[0].mxu0
      %v2618 = vpop.f32.mrb[0].mxu0
      %v2619 = vadd.f32 0.0, %v2618
      %v2620 = vpop.f32.mrb[0].mxu0
      %2621 = vmatprep.mubr.bf16.mxu0 0
      %2622 = vmatmul.mubr.bf16.gmra.mrb[0].mxu0 %v2184
      %v2623 = vpop.f32.mrb[0].mxu0
      %v2624 = vadd.f32 0.0, %v2623
      %v2625 = vpop.f32.mrb[0].mxu0
      %v2626 = vpop.f32.mrb[0].mxu0
      %v2627 = vadd.f32 0.0, %v2626
      %v2628 = vpop.f32.mrb[0].mxu0
      %2629 = vmatprep.mubr.bf16.mxu0 0
      %2630 = vmatmul.mubr.bf16.gmra.mrb[0].mxu0 %v2192
      %v2631 = vpop.f32.mrb[0].mxu0
      %v2632 = vadd.f32 0.0, %v2631
      %v2633 = vpop.f32.mrb[0].mxu0
      %v2634 = vpop.f32.mrb[0].mxu0
      %v2635 = vadd.f32 0.0, %v2634
      %v2636 = vpop.f32.mrb[0].mxu0
      %2637 = vmatprep.mubr.bf16.mxu0 0
      %2638 = vmatmul.mubr.bf16.gmra.mrb[0].mxu0 %v2200
      %v2639 = vpop.f32.mrb[0].mxu0
      %v2640 = vadd.f32 0.0, %v2639
      %v2641 = vpop.f32.mrb[0].mxu0
      %v2642 = vpop.f32.mrb[0].mxu0
      %v2643 = vadd.f32 0.0, %v2642
      %v2644 = vpop.f32.mrb[0].mxu0
      %2645 = vmatprep.mubr.bf16.mxu0 0
      %2646 = vmatmul.mubr.bf16.gmra.mrb[0].mxu0 %v2208
      %v2647 = vpop.f32.mrb[0].mxu0
      %v2648 = vadd.f32 0.0, %v2647
      %v2649 = vpop.f32.mrb[0].mxu0
      %v2650 = vpop.f32.mrb[0].mxu0
      %v2651 = vadd.f32 0.0, %v2650
      %v2652 = vpop.f32.mrb[0].mxu0
      %2653 = vmatprep.mubr.bf16.mxu0 0
      %2654 = vmatmul.mubr.bf16.gmra.mrb[0].mxu0 %v2216
      %v2655 = vpop.f32.mrb[0].mxu0
      %v2656 = vadd.f32 0.0, %v2655
      %v2657 = vpop.f32.mrb[0].mxu0
      %v2658 = vpop.f32.mrb[0].mxu0
      %v2659 = vadd.f32 0.0, %v2658
      %v2660 = vpop.f32.mrb[0].mxu0
      %2661 = vmatprep.mubr.bf16.mxu0 0
      %2662 = vmatmul.mubr.bf16.gmra.mrb[0].mxu0 %v2224
      %v2663 = vpop.f32.mrb[0].mxu0
      %v2664 = vadd.f32 0.0, %v2663
      %v2665 = vpop.f32.mrb[0].mxu0
      %v2666 = vpop.f32.mrb[0].mxu0
      %v2667 = vadd.f32 0.0, %v2666
      %v2668 = vpop.f32.mrb[0].mxu0
      %2669 = vmatprep.mubr.bf16.mxu0 0
      %2670 = vmatmul.mubr.bf16.gmra.mrb[0].mxu0 %v2232
      %v2671 = vpop.f32.mrb[0].mxu0
      %v2672 = vadd.f32 0.0, %v2671
      %v2673 = vpop.f32.mrb[0].mxu0
      %v2674 = vpop.f32.mrb[0].mxu0
      %v2675 = vadd.f32 0.0, %v2674
      %v2676 = vpop.f32.mrb[0].mxu0
      %2677 = vmatprep.mubr.bf16.mxu0 0
      %2678 = vmatmul.mubr.bf16.gmra.mrb[0].mxu0 %v2240
      %v2679 = vpop.f32.mrb[0].mxu0
      %v2680 = vadd.f32 0.0, %v2679
      %v2681 = vpop.f32.mrb[0].mxu0
      %v2682 = vpop.f32.mrb[0].mxu0
      %v2683 = vadd.f32 0.0, %v2682
      %v2684 = vpop.f32.mrb[0].mxu0
      %2685 = vmatprep.mubr.bf16.mxu0 0
      %2686 = vmatmul.mubr.bf16.gmra.mrb[0].mxu0 %v2248
      %v2687 = vpop.f32.mrb[0].mxu0
      %v2688 = vadd.f32 0.0, %v2687
      %v2689 = vpop.f32.mrb[0].mxu0
      %v2690 = vpop.f32.mrb[0].mxu0
      %v2691 = vadd.f32 0.0, %v2690
      %v2692 = vpop.f32.mrb[0].mxu0
      %2693 = vmatprep.mubr.bf16.mxu0 0
      %2694 = vmatmul.mubr.bf16.gmra.mrb[0].mxu0 %v2256
      %v2695 = vpop.f32.mrb[0].mxu0
      %v2696 = vadd.f32 0.0, %v2695
      %v2697 = vpop.f32.mrb[0].mxu0
      %v2698 = vpop.f32.mrb[0].mxu0
      %v2699 = vadd.f32 0.0, %v2698
      %v2700 = vpop.f32.mrb[0].mxu0
      %2701 = vmatprep.mubr.bf16.mxu0 0
      %2702 = vmatmul.mubr.bf16.gmra.mrb[0].mxu0 %v2264
      %v2703 = vpop.f32.mrb[0].mxu0
      %v2704 = vadd.f32 0.0, %v2703
      %v2705 = vpop.f32.mrb[0].mxu0
      %v2706 = vpop.f32.mrb[0].mxu0
      %v2707 = vadd.f32 0.0, %v2706
      %v2708 = vpop.f32.mrb[0].mxu0
      %2709 = vmatprep.mubr.bf16.mxu0 0
      %2710 = vmatmul.mubr.bf16.gmra.mrb[0].mxu0 %v2272
      %v2711 = vpop.f32.mrb[0].mxu0
      %v2712 = vadd.f32 0.0, %v2711
      %v2713 = vpop.f32.mrb[0].mxu0
      %v2714 = vpop.f32.mrb[0].mxu0
      %v2715 = vadd.f32 0.0, %v2714
      %v2716 = vpop.f32.mrb[0].mxu0
      %2717 = vmatprep.mubr.bf16.mxu0 0
      %2718 = vmatmul.mubr.bf16.gmra.mrb[0].mxu0 %v2280
      %v2719 = vpop.f32.mrb[0].mxu0
      %v2720 = vadd.f32 0.0, %v2719
      %v2721 = vpop.f32.mrb[0].mxu0
      %v2722 = vpop.f32.mrb[0].mxu0
      %v2723 = vadd.f32 0.0, %v2722
      %v2724 = vpop.f32.mrb[0].mxu0
      %2725 = vmatprep.mubr.bf16.mxu0 0
      %2726 = vmatmul.mubr.bf16.gmra.mrb[0].mxu0 %v2288
      %v2727 = vpop.f32.mrb[0].mxu0
      %v2728 = vadd.f32 0.0, %v2727
      %v2729 = vpop.f32.mrb[0].mxu0
      %v2730 = vpop.f32.mrb[0].mxu0
      %v2731 = vadd.f32 0.0, %v2730
      %v2732 = vpop.f32.mrb[0].mxu0
      %2733 = vmatprep.mubr.bf16.mxu0 0
      %2734 = vmatmul.mubr.bf16.gmra.mrb[0].mxu0 %v2296
      %v2735 = vpop.f32.mrb[0].mxu0
      %v2736 = vadd.f32 0.0, %v2735
      %v2737 = vpop.f32.mrb[0].mxu0
      %v2738 = vpop.f32.mrb[0].mxu0
      %v2739 = vadd.f32 0.0, %v2738
      %v2740 = vpop.f32.mrb[0].mxu0
      %2741 = vmatprep.mubr.bf16.mxu0 0
      %2742 = vmatmul.mubr.bf16.gmra.mrb[0].mxu0 %v2304
      %v2743 = vpop.f32.mrb[0].mxu0
      %v2744 = vadd.f32 0.0, %v2743
      %v2745 = vpop.f32.mrb[0].mxu0
      %v2746 = vpop.f32.mrb[0].mxu0
      %v2747 = vadd.f32 0.0, %v2746
      %v2748 = vpop.f32.mrb[0].mxu0
      %2749 = vmatprep.mubr.bf16.mxu0 0
      %2750 = vmatmul.mubr.bf16.gmra.mrb[0].mxu0 %v2312
      %v2751 = vpop.f32.mrb[0].mxu0
      %v2752 = vadd.f32 0.0, %v2751
      %v2753 = vpop.f32.mrb[0].mxu0
      %v2754 = vpop.f32.mrb[0].mxu0
      %v2755 = vadd.f32 0.0, %v2754
      %v2756 = vpop.f32.mrb[0].mxu0
      %2757 = vmatprep.mubr.bf16.mxu0 0
      %2758 = vmatmul.mubr.bf16.gmra.mrb[0].mxu0 %v2320
      %v2759 = vpop.f32.mrb[0].mxu0
      %v2760 = vadd.f32 0.0, %v2759
      %v2761 = vpop.f32.mrb[0].mxu0
      %v2762 = vpop.f32.mrb[0].mxu0
      %v2763 = vadd.f32 0.0, %v2762
      %v2764 = vpop.f32.mrb[0].mxu0
      %2765 = vmatprep.mubr.bf16.mxu0 0
      %2766 = vmatmul.mubr.bf16.gmra.mrb[0].mxu0 %v2328
      %v2767 = vpop.f32.mrb[0].mxu0
      %v2768 = vadd.f32 0.0, %v2767
      %v2769 = vpop.f32.mrb[0].mxu0
      %v2770 = vpop.f32.mrb[0].mxu0
      %v2771 = vadd.f32 0.0, %v2770
      %v2772 = vpop.f32.mrb[0].mxu0
      %2773 = vmatprep.mubr.bf16.mxu0 0
      %2774 = vmatmul.mubr.bf16.gmra.mrb[0].mxu0 %v2336
      %v2775 = vpop.f32.mrb[0].mxu0
      %v2776 = vadd.f32 0.0, %v2775
      %v2777 = vpop.f32.mrb[0].mxu0
      %v2778 = vpop.f32.mrb[0].mxu0
      %v2779 = vadd.f32 0.0, %v2778
      %v2780 = vpop.f32.mrb[0].mxu0
      %2781 = vmatprep.mubr.bf16.mxu0 0
      %2782 = vmatmul.mubr.bf16.gmra.mrb[0].mxu0 %v2344
      %v2783 = vpop.f32.mrb[0].mxu0
      %v2784 = vadd.f32 0.0, %v2783
      %v2785 = vpop.f32.mrb[0].mxu0
      %v2786 = vpop.f32.mrb[0].mxu0
      %v2787 = vadd.f32 0.0, %v2786
      %v2788 = vpop.f32.mrb[0].mxu0
      %2789 = vmatprep.mubr.bf16.mxu0 0
      %2790 = vmatmul.mubr.bf16.gmra.mrb[0].mxu0 %v2352
      %v2791 = vpop.f32.mrb[0].mxu0
      %v2792 = vadd.f32 0.0, %v2791
      %v2793 = vpop.f32.mrb[0].mxu0
      %v2794 = vpop.f32.mrb[0].mxu0
      %v2795 = vadd.f32 0.0, %v2794
      %v2796 = vpop.f32.mrb[0].mxu0
      %2797 = vmatprep.mubr.bf16.mxu0 0
      %2798 = vmatmul.mubr.bf16.gmra.mrb[0].mxu0 %v2360
      %v2799 = vpop.f32.mrb[0].mxu0
      %v2800 = vadd.f32 0.0, %v2799
      %v2801 = vpop.f32.mrb[0].mxu0
      %v2802 = vpop.f32.mrb[0].mxu0
      %v2803 = vadd.f32 0.0, %v2802
      %v2804 = vpop.f32.mrb[0].mxu0
      %2805 = vmatprep.mubr.bf16.mxu0 0
      %2806 = vmatmul.mubr.bf16.gmra.mrb[0].mxu0 %v2368
      %v2807 = vpop.f32.mrb[0].mxu0
      %v2808 = vadd.f32 0.0, %v2807
      %v2809 = vpop.f32.mrb[0].mxu0
      %v2810 = vpop.f32.mrb[0].mxu0
      %v2811 = vadd.f32 0.0, %v2810
      %v2812 = vpop.f32.mrb[0].mxu0
      %2813 = vmatprep.mubr.bf16.mxu0 0
      %2814 = vmatmul.mubr.bf16.gmra.mrb[0].mxu0 %v2376
      %v2815 = vpop.f32.mrb[0].mxu0
      %v2816 = vadd.f32 0.0, %v2815
      %v2817 = vpop.f32.mrb[0].mxu0
      %v2818 = vpop.f32.mrb[0].mxu0
      %v2819 = vadd.f32 0.0, %v2818
      %v2820 = vpop.f32.mrb[0].mxu0
      %2821 = vmatprep.mubr.bf16.mxu0 0
      %2822 = vmatmul.mubr.bf16.gmra.mrb[0].mxu0 %v2384
      %v2823 = vpop.f32.mrb[0].mxu0
      %v2824 = vadd.f32 0.0, %v2823
      %v2825 = vpop.f32.mrb[0].mxu0
      %v2826 = vpop.f32.mrb[0].mxu0
      %v2827 = vadd.f32 0.0, %v2826
      %v2828 = vpop.f32.mrb[0].mxu0
      %2829 = vmatprep.mubr.bf16.mxu0 0
      %2830 = vmatmul.mubr.bf16.gmra.mrb[0].mxu0 %v2392
      %v2831 = vpop.f32.mrb[0].mxu0
      %v2832 = vadd.f32 0.0, %v2831
      %v2833 = vpop.f32.mrb[0].mxu0
      %v2834 = vpop.f32.mrb[0].mxu0
      %v2835 = vadd.f32 0.0, %v2834
      %v2836 = vpop.f32.mrb[0].mxu0
      %2837 = vmatprep.mubr.bf16.mxu0 0
      %2838 = vmatmul.mubr.bf16.gmra.mrb[0].mxu0 %v2400
      %v2839 = vpop.f32.mrb[0].mxu0
      %v2840 = vadd.f32 0.0, %v2839
      %v2841 = vpop.f32.mrb[0].mxu0
      %v2842 = vpop.f32.mrb[0].mxu0
      %v2843 = vadd.f32 0.0, %v2842
      %v2844 = vpop.f32.mrb[0].mxu0
      %2845 = vmatprep.mubr.bf16.mxu0 0
      %2846 = vmatmul.mubr.bf16.gmra.mrb[0].mxu0 %v2408
      %v2847 = vpop.f32.mrb[0].mxu0
      %v2848 = vadd.f32 0.0, %v2847
      %v2849 = vpop.f32.mrb[0].mxu0
      %v2850 = vpop.f32.mrb[0].mxu0
      %v2851 = vadd.f32 0.0, %v2850
      %v2852 = vpop.f32.mrb[0].mxu0
      %2853 = vmatprep.mubr.bf16.mxu0 0
      %2854 = vmatmul.mubr.bf16.gmra.mrb[0].mxu0 %v2416
      %v2855 = vpop.f32.mrb[0].mxu0
      %v2856 = vadd.f32 0.0, %v2855
      %v2857 = vpop.f32.mrb[0].mxu0
      %v2858 = vpop.f32.mrb[0].mxu0
      %v2859 = vadd.f32 0.0, %v2858
      %v2860 = vpop.f32.mrb[0].mxu0
      %2861 = vmatprep.mubr.bf16.mxu0 0
      %2862 = vmatmul.mubr.bf16.gmra.mrb[0].mxu0 %v2424
      %v2863 = vpop.f32.mrb[0].mxu0
      %v2864 = vadd.f32 0.0, %v2863
      %v2865 = vpop.f32.mrb[0].mxu0
      %v2866 = vpop.f32.mrb[0].mxu0
      %v2867 = vadd.f32 0.0, %v2866
      %v2868 = vpop.f32.mrb[0].mxu0
      %2869 = vmatprep.mubr.bf16.mxu0 0
      %2870 = vmatmul.mubr.bf16.gmra.mrb[0].mxu0 %v2432
      %v2871 = vpop.f32.mrb[0].mxu0
      %v2872 = vadd.f32 0.0, %v2871
      %v2873 = vpop.f32.mrb[0].mxu0
      %v2874 = vpop.f32.mrb[0].mxu0
      %v2875 = vadd.f32 0.0, %v2874
      %v2876 = vpop.f32.mrb[0].mxu0
      %2877 = vmatprep.mubr.bf16.mxu0 0
      %2878 = vmatmul.mubr.bf16.gmra.mrb[0].mxu0 %v2440
      %v2879 = vpop.f32.mrb[0].mxu0
      %v2880 = vadd.f32 0.0, %v2879
      %v2881 = vpop.f32.mrb[0].mxu0
      %v2882 = vpop.f32.mrb[0].mxu0
      %v2883 = vadd.f32 0.0, %v2882
      %v2884 = vpop.f32.mrb[0].mxu0
      %2885 = vmatprep.mubr.bf16.mxu0 0
      %2886 = vmatmul.mubr.bf16.gmra.mrb[0].mxu0 %v2448
      %v2887 = vpop.f32.mrb[0].mxu0
      %v2888 = vadd.f32 0.0, %v2887
      %v2889 = vpop.f32.mrb[0].mxu0
      %v2890 = vpop.f32.mrb[0].mxu0
      %v2891 = vadd.f32 0.0, %v2890
      %v2892 = vpop.f32.mrb[0].mxu0
      %2893 = vmatprep.mubr.bf16.mxu0 0
      %2894 = vmatmul.mubr.bf16.gmra.mrb[0].mxu0 %v2456
      %v2895 = vpop.f32.mrb[0].mxu0
      %v2896 = vadd.f32 0.0, %v2895
      %v2897 = vpop.f32.mrb[0].mxu0
      %v2898 = vpop.f32.mrb[0].mxu0
      %v2899 = vadd.f32 0.0, %v2898
      %v2900 = vpop.f32.mrb[0].mxu0
      %2901 = vmatprep.mubr.bf16.mxu0 0
      %2902 = vmatmul.mubr.bf16.gmra.mrb[0].mxu0 %v2464
      %v2903 = vpop.f32.mrb[0].mxu0
      %v2904 = vadd.f32 0.0, %v2903
      %v2905 = vpop.f32.mrb[0].mxu0
      %v2906 = vpop.f32.mrb[0].mxu0
      %v2907 = vadd.f32 0.0, %v2906
      %v2908 = vpop.f32.mrb[0].mxu0
      %2909 = vmatprep.mubr.bf16.mxu0 0
      %2910 = vmatmul.mubr.bf16.gmra.mrb[0].mxu0 %v2472
      %v2911 = vpop.f32.mrb[0].mxu0
      %v2912 = vadd.f32 0.0, %v2911
      %v2913 = vpop.f32.mrb[0].mxu0
      %v2914 = vpop.f32.mrb[0].mxu0
      %v2915 = vadd.f32 0.0, %v2914
      %v2916 = vpop.f32.mrb[0].mxu0
      %2917 = vmatprep.mubr.bf16.mxu0 0
      %2918 = vmatmul.mubr.bf16.gmra.mrb[0].mxu0 %v2480
      %v2919 = vpop.f32.mrb[0].mxu0
      %v2920 = vadd.f32 0.0, %v2919
      %v2921 = vpop.f32.mrb[0].mxu0
      %v2922 = vpop.f32.mrb[0].mxu0
      %v2923 = vadd.f32 0.0, %v2922
      %v2924 = vpop.f32.mrb[0].mxu0
      %2925 = vmatprep.mubr.bf16.mxu0 0
      %2926 = vmatmul.mubr.bf16.gmra.mrb[0].mxu0 %v2483
      %v2927 = vpop.f32.mrb[0].mxu0
      %v2928 = vadd.f32 0.0, %v2927
      %v2929 = vpop.f32.mrb[0].mxu0
      %v2930 = vpop.f32.mrb[0].mxu0
      %v2931 = vpop.f32.mrb[0].mxu0
      %2932 = vdwg.mxu0
      %v2949 = vunpack.c.l.b16 %v2122
      %v2950 = vunpack.c.l.b16 %v2123
      %v2951 = vunpack.c.l.b16 %v2124
      %v2952 = vunpack.c.l.b16 %v2125
      %v2953 = vunpack.c.l.b16 %v2126
      %v2954 = vunpack.c.l.b16 %v2127
      %v2955 = vunpack.c.l.b16 %v2128
      %v2956 = vunpack.c.l.b16 %v2129
      %v2957 = vunpack.c.l.b16 %v2130
      %v2958 = vunpack.c.l.b16 %v2131
      %v2959 = vunpack.c.l.b16 %v2132
      %v2960 = vunpack.c.l.b16 %v2133
      %v2961 = vunpack.c.l.b16 %v2134
      %v2962 = vunpack.c.l.b16 %v2135
      %v2963 = vunpack.c.l.b16 %v2136
      %v2964 = vunpack.c.l.b16 %v2137
      %v2965 = vpack.c.b16 %v2950, %v2949
      %v2966 = vpack.c.b16 %v2952, %v2951
      %v2967 = vpack.c.b16 %v2954, %v2953
      %v2968 = vpack.c.b16 %v2956, %v2955
      %v2969 = vpack.c.b16 %v2958, %v2957
      %v2970 = vpack.c.b16 %v2960, %v2959
      %v2971 = vpack.c.b16 %v2962, %v2961
      %v2972 = vpack.c.b16 %v2964, %v2963
      %2981 = vmatprep.subr.bf16.mxu0 0
      %2982 = vmatpush1.bf16.msra.mxu0 %v2965
      %2983 = vmatprep.subr.bf16.mxu0 0
      %2984 = vmatpush1.bf16.msra.mxu0 %v2966
      %2985 = vmatprep.subr.bf16.mxu0 0
      %2986 = vmatpush1.bf16.msra.mxu0 %v2967
      %2987 = vmatprep.subr.bf16.mxu0 0
      %2988 = vmatpush1.bf16.msra.mxu0 %v2968
      %2989 = vmatprep.subr.bf16.mxu0 0
      %2990 = vmatpush1.bf16.msra.mxu0 %v2969
      %2991 = vmatprep.subr.bf16.mxu0 0
      %2992 = vmatpush1.bf16.msra.mxu0 %v2970
      %2993 = vmatprep.subr.bf16.mxu0 0
      %2994 = vmatpush1.bf16.msra.mxu0 %v2971
      %2995 = vmatprep.subr.bf16.mxu0 0
      %2996 = vmatpush1.bf16.msra.mxu0 %v2972
      %2997 = vmatprep.subr.bf16.mxu0 0
      %2998 = vmatpush1.bf16.msra.mxu0 0
      %2999 = vmatprep.subr.bf16.mxu0 0
      %3000 = vmatpush1.bf16.msra.mxu0 0
      %3001 = vmatprep.subr.bf16.mxu0 0
      %3002 = vmatpush1.bf16.msra.mxu0 0
      %3003 = vmatprep.subr.bf16.mxu0 0
      %3004 = vmatpush1.bf16.msra.mxu0 0
      %3005 = vmatprep.subr.bf16.mxu0 0
      %3006 = vmatpush1.bf16.msra.mxu0 0
      %3007 = vmatprep.subr.bf16.mxu0 0
      %3008 = vmatpush1.bf16.msra.mxu0 0
      %3009 = vmatprep.subr.bf16.mxu0 0
      %3010 = vmatpush1.bf16.msra.mxu0 0
      %3011 = vmatprep.subr.bf16.mxu0 0
      %3012 = vmatpush1.bf16.msra.mxu0 0
      %3013 = vmatprep.mubr.bf16.mxu0 0
      %3014 = vmatmul.mubr.bf16.gmra.mrb[0].mxu0 %v2081
      %v3015 = vpop.f32.mrb[0].mxu0
      %v3016 = vadd.f32 %v2608, %v3015
      %v3017 = vpop.f32.mrb[0].mxu0
      %v3018 = vpop.f32.mrb[0].mxu0
      %v3019 = vadd.f32 %v2611, %v3018
      %v3020 = vpop.f32.mrb[0].mxu0
      %3021 = vmatprep.mubr.bf16.mxu0 0
      %3022 = vmatmul.mubr.bf16.gmra.mrb[0].mxu0 %v2082
      %v3023 = vpop.f32.mrb[0].mxu0
      %v3024 = vadd.f32 %v2616, %v3023
      %v3025 = vpop.f32.mrb[0].mxu0
      %v3026 = vpop.f32.mrb[0].mxu0
      %v3027 = vadd.f32 %v2619, %v3026
      %v3028 = vpop.f32.mrb[0].mxu0
      %3029 = vmatprep.mubr.bf16.mxu0 0
      %3030 = vmatmul.mubr.bf16.gmra.mrb[0].mxu0 %v2083
      %v3031 = vpop.f32.mrb[0].mxu0
      %v3032 = vadd.f32 %v2624, %v3031
      %v3033 = vpop.f32.mrb[0].mxu0
      %v3034 = vpop.f32.mrb[0].mxu0
      %v3035 = vadd.f32 %v2627, %v3034
      %v3036 = vpop.f32.mrb[0].mxu0
      %3037 = vmatprep.mubr.bf16.mxu0 0
      %3038 = vmatmul.mubr.bf16.gmra.mrb[0].mxu0 %v2084
      %v3039 = vpop.f32.mrb[0].mxu0
      %v3040 = vadd.f32 %v2632, %v3039
      %v3041 = vpop.f32.mrb[0].mxu0
      %v3042 = vpop.f32.mrb[0].mxu0
      %v3043 = vadd.f32 %v2635, %v3042
      %v3044 = vpop.f32.mrb[0].mxu0
      %3045 = vmatprep.mubr.bf16.mxu0 0
      %3046 = vmatmul.mubr.bf16.gmra.mrb[0].mxu0 %v2085
      %v3047 = vpop.f32.mrb[0].mxu0
      %v3048 = vadd.f32 %v2640, %v3047
      %v3049 = vpop.f32.mrb[0].mxu0
      %v3050 = vpop.f32.mrb[0].mxu0
      %v3051 = vadd.f32 %v2643, %v3050
      %v3052 = vpop.f32.mrb[0].mxu0
      %3053 = vmatprep.mubr.bf16.mxu0 0
      %3054 = vmatmul.mubr.bf16.gmra.mrb[0].mxu0 %v2086
      %v3055 = vpop.f32.mrb[0].mxu0
      %v3056 = vadd.f32 %v2648, %v3055
      %v3057 = vpop.f32.mrb[0].mxu0
      %v3058 = vpop.f32.mrb[0].mxu0
      %v3059 = vadd.f32 %v2651, %v3058
      %v3060 = vpop.f32.mrb[0].mxu0
      %3061 = vmatprep.mubr.bf16.mxu0 0
      %3062 = vmatmul.mubr.bf16.gmra.mrb[0].mxu0 %v2087
      %v3063 = vpop.f32.mrb[0].mxu0
      %v3064 = vadd.f32 %v2656, %v3063
      %v3065 = vpop.f32.mrb[0].mxu0
      %v3066 = vpop.f32.mrb[0].mxu0
      %v3067 = vadd.f32 %v2659, %v3066
      %v3068 = vpop.f32.mrb[0].mxu0
      %3069 = vmatprep.mubr.bf16.mxu0 0
      %3070 = vmatmul.mubr.bf16.gmra.mrb[0].mxu0 %v2088
      %v3071 = vpop.f32.mrb[0].mxu0
      %v3072 = vadd.f32 %v2664, %v3071
      %v3073 = vpop.f32.mrb[0].mxu0
      %v3074 = vpop.f32.mrb[0].mxu0
      %v3075 = vadd.f32 %v2667, %v3074
      %v3076 = vpop.f32.mrb[0].mxu0
      %3077 = vmatprep.mubr.bf16.mxu0 0
      %3078 = vmatmul.mubr.bf16.gmra.mrb[0].mxu0 %v2089
      %v3079 = vpop.f32.mrb[0].mxu0
      %v3080 = vadd.f32 %v2672, %v3079
      %v3081 = vpop.f32.mrb[0].mxu0
      %v3082 = vpop.f32.mrb[0].mxu0
      %v3083 = vadd.f32 %v2675, %v3082
      %v3084 = vpop.f32.mrb[0].mxu0
      %3085 = vmatprep.mubr.bf16.mxu0 0
      %3086 = vmatmul.mubr.bf16.gmra.mrb[0].mxu0 %v2090
      %v3087 = vpop.f32.mrb[0].mxu0
      %v3088 = vadd.f32 %v2680, %v3087
      %v3089 = vpop.f32.mrb[0].mxu0
      %v3090 = vpop.f32.mrb[0].mxu0
      %v3091 = vadd.f32 %v2683, %v3090
      %v3092 = vpop.f32.mrb[0].mxu0
      %3093 = vmatprep.mubr.bf16.mxu0 0
      %3094 = vmatmul.mubr.bf16.gmra.mrb[0].mxu0 %v2091
      %v3095 = vpop.f32.mrb[0].mxu0
      %v3096 = vadd.f32 %v2688, %v3095
      %v3097 = vpop.f32.mrb[0].mxu0
      %v3098 = vpop.f32.mrb[0].mxu0
      %v3099 = vadd.f32 %v2691, %v3098
      %v3100 = vpop.f32.mrb[0].mxu0
      %3101 = vmatprep.mubr.bf16.mxu0 0
      %3102 = vmatmul.mubr.bf16.gmra.mrb[0].mxu0 %v2092
      %v3103 = vpop.f32.mrb[0].mxu0
      %v3104 = vadd.f32 %v2696, %v3103
      %v3105 = vpop.f32.mrb[0].mxu0
      %v3106 = vpop.f32.mrb[0].mxu0
      %v3107 = vadd.f32 %v2699, %v3106
      %v3108 = vpop.f32.mrb[0].mxu0
      %3109 = vmatprep.mubr.bf16.mxu0 0
      %3110 = vmatmul.mubr.bf16.gmra.mrb[0].mxu0 %v2093
      %v3111 = vpop.f32.mrb[0].mxu0
      %v3112 = vadd.f32 %v2704, %v3111
      %v3113 = vpop.f32.mrb[0].mxu0
      %v3114 = vpop.f32.mrb[0].mxu0
      %v3115 = vadd.f32 %v2707, %v3114
      %v3116 = vpop.f32.mrb[0].mxu0
      %3117 = vmatprep.mubr.bf16.mxu0 0
      %3118 = vmatmul.mubr.bf16.gmra.mrb[0].mxu0 %v2094
      %v3119 = vpop.f32.mrb[0].mxu0
      %v3120 = vadd.f32 %v2712, %v3119
      %v3121 = vpop.f32.mrb[0].mxu0
      %v3122 = vpop.f32.mrb[0].mxu0
      %v3123 = vadd.f32 %v2715, %v3122
      %v3124 = vpop.f32.mrb[0].mxu0
      %3125 = vmatprep.mubr.bf16.mxu0 0
      %3126 = vmatmul.mubr.bf16.gmra.mrb[0].mxu0 %v2095
      %v3127 = vpop.f32.mrb[0].mxu0
      %v3128 = vadd.f32 %v2720, %v3127
      %v3129 = vpop.f32.mrb[0].mxu0
      %v3130 = vpop.f32.mrb[0].mxu0
      %v3131 = vadd.f32 %v2723, %v3130
      %v3132 = vpop.f32.mrb[0].mxu0
      %3133 = vmatprep.mubr.bf16.mxu0 0
      %3134 = vmatmul.mubr.bf16.gmra.mrb[0].mxu0 %v2096
      %v3135 = vpop.f32.mrb[0].mxu0
      %v3136 = vadd.f32 %v2728, %v3135
      %v3137 = vpop.f32.mrb[0].mxu0
      %v3138 = vpop.f32.mrb[0].mxu0
      %v3139 = vadd.f32 %v2731, %v3138
      %v3140 = vpop.f32.mrb[0].mxu0
      %3141 = vmatprep.mubr.bf16.mxu0 0
      %3142 = vmatmul.mubr.bf16.gmra.mrb[0].mxu0 %v2097
      %v3143 = vpop.f32.mrb[0].mxu0
      %v3144 = vadd.f32 %v2736, %v3143
      %v3145 = vpop.f32.mrb[0].mxu0
      %v3146 = vpop.f32.mrb[0].mxu0
      %v3147 = vadd.f32 %v2739, %v3146
      %v3148 = vpop.f32.mrb[0].mxu0
      %3149 = vmatprep.mubr.bf16.mxu0 0
      %3150 = vmatmul.mubr.bf16.gmra.mrb[0].mxu0 %v2098
      %v3151 = vpop.f32.mrb[0].mxu0
      %v3152 = vadd.f32 %v2744, %v3151
      %v3153 = vpop.f32.mrb[0].mxu0
      %v3154 = vpop.f32.mrb[0].mxu0
      %v3155 = vadd.f32 %v2747, %v3154
      %v3156 = vpop.f32.mrb[0].mxu0
      %3157 = vmatprep.mubr.bf16.mxu0 0
      %3158 = vmatmul.mubr.bf16.gmra.mrb[0].mxu0 %v2099
      %v3159 = vpop.f32.mrb[0].mxu0
      %v3160 = vadd.f32 %v2752, %v3159
      %v3161 = vpop.f32.mrb[0].mxu0
      %v3162 = vpop.f32.mrb[0].mxu0
      %v3163 = vadd.f32 %v2755, %v3162
      %v3164 = vpop.f32.mrb[0].mxu0
      %3165 = vmatprep.mubr.bf16.mxu0 0
      %3166 = vmatmul.mubr.bf16.gmra.mrb[0].mxu0 %v2100
      %v3167 = vpop.f32.mrb[0].mxu0
      %v3168 = vadd.f32 %v2760, %v3167
      %v3169 = vpop.f32.mrb[0].mxu0
      %v3170 = vpop.f32.mrb[0].mxu0
      %v3171 = vadd.f32 %v2763, %v3170
      %v3172 = vpop.f32.mrb[0].mxu0
      %3173 = vmatprep.mubr.bf16.mxu0 0
      %3174 = vmatmul.mubr.bf16.gmra.mrb[0].mxu0 %v2101
      %v3175 = vpop.f32.mrb[0].mxu0
      %v3176 = vadd.f32 %v2768, %v3175
      %v3177 = vpop.f32.mrb[0].mxu0
      %v3178 = vpop.f32.mrb[0].mxu0
      %v3179 = vadd.f32 %v2771, %v3178
      %v3180 = vpop.f32.mrb[0].mxu0
      %3181 = vmatprep.mubr.bf16.mxu0 0
      %3182 = vmatmul.mubr.bf16.gmra.mrb[0].mxu0 %v2102
      %v3183 = vpop.f32.mrb[0].mxu0
      %v3184 = vadd.f32 %v2776, %v3183
      %v3185 = vpop.f32.mrb[0].mxu0
      %v3186 = vpop.f32.mrb[0].mxu0
      %v3187 = vadd.f32 %v2779, %v3186
      %v3188 = vpop.f32.mrb[0].mxu0
      %3189 = vmatprep.mubr.bf16.mxu0 0
      %3190 = vmatmul.mubr.bf16.gmra.mrb[0].mxu0 %v2103
      %v3191 = vpop.f32.mrb[0].mxu0
      %v3192 = vadd.f32 %v2784, %v3191
      %v3193 = vpop.f32.mrb[0].mxu0
      %v3194 = vpop.f32.mrb[0].mxu0
      %v3195 = vadd.f32 %v2787, %v3194
      %v3196 = vpop.f32.mrb[0].mxu0
      %3197 = vmatprep.mubr.bf16.mxu0 0
      %3198 = vmatmul.mubr.bf16.gmra.mrb[0].mxu0 %v2104
      %v3199 = vpop.f32.mrb[0].mxu0
      %v3200 = vadd.f32 %v2792, %v3199
      %v3201 = vpop.f32.mrb[0].mxu0
      %v3202 = vpop.f32.mrb[0].mxu0
      %v3203 = vadd.f32 %v2795, %v3202
      %v3204 = vpop.f32.mrb[0].mxu0
      %3205 = vmatprep.mubr.bf16.mxu0 0
      %3206 = vmatmul.mubr.bf16.gmra.mrb[0].mxu0 %v2105
      %v3207 = vpop.f32.mrb[0].mxu0
      %v3208 = vadd.f32 %v2800, %v3207
      %v3209 = vpop.f32.mrb[0].mxu0
      %v3210 = vpop.f32.mrb[0].mxu0
      %v3211 = vadd.f32 %v2803, %v3210
      %v3212 = vpop.f32.mrb[0].mxu0
      %3213 = vmatprep.mubr.bf16.mxu0 0
      %3214 = vmatmul.mubr.bf16.gmra.mrb[0].mxu0 %v2106
      %v3215 = vpop.f32.mrb[0].mxu0
      %v3216 = vadd.f32 %v2808, %v3215
      %v3217 = vpop.f32.mrb[0].mxu0
      %v3218 = vpop.f32.mrb[0].mxu0
      %v3219 = vadd.f32 %v2811, %v3218
      %v3220 = vpop.f32.mrb[0].mxu0
      %3221 = vmatprep.mubr.bf16.mxu0 0
      %3222 = vmatmul.mubr.bf16.gmra.mrb[0].mxu0 %v2107
      %v3223 = vpop.f32.mrb[0].mxu0
      %v3224 = vadd.f32 %v2816, %v3223
      %v3225 = vpop.f32.mrb[0].mxu0
      %v3226 = vpop.f32.mrb[0].mxu0
      %v3227 = vadd.f32 %v2819, %v3226
      %v3228 = vpop.f32.mrb[0].mxu0
      %3229 = vmatprep.mubr.bf16.mxu0 0
      %3230 = vmatmul.mubr.bf16.gmra.mrb[0].mxu0 %v2108
      %v3231 = vpop.f32.mrb[0].mxu0
      %v3232 = vadd.f32 %v2824, %v3231
      %v3233 = vpop.f32.mrb[0].mxu0
      %v3234 = vpop.f32.mrb[0].mxu0
      %v3235 = vadd.f32 %v2827, %v3234
      %v3236 = vpop.f32.mrb[0].mxu0
      %3237 = vmatprep.mubr.bf16.mxu0 0
      %3238 = vmatmul.mubr.bf16.gmra.mrb[0].mxu0 %v2109
      %v3239 = vpop.f32.mrb[0].mxu0
      %v3240 = vadd.f32 %v2832, %v3239
      %v3241 = vpop.f32.mrb[0].mxu0
      %v3242 = vpop.f32.mrb[0].mxu0
      %v3243 = vadd.f32 %v2835, %v3242
      %v3244 = vpop.f32.mrb[0].mxu0
      %3245 = vmatprep.mubr.bf16.mxu0 0
      %3246 = vmatmul.mubr.bf16.gmra.mrb[0].mxu0 %v2110
      %v3247 = vpop.f32.mrb[0].mxu0
      %v3248 = vadd.f32 %v2840, %v3247
      %v3249 = vpop.f32.mrb[0].mxu0
      %v3250 = vpop.f32.mrb[0].mxu0
      %v3251 = vadd.f32 %v2843, %v3250
      %v3252 = vpop.f32.mrb[0].mxu0
      %3253 = vmatprep.mubr.bf16.mxu0 0
      %3254 = vmatmul.mubr.bf16.gmra.mrb[0].mxu0 %v2111
      %v3255 = vpop.f32.mrb[0].mxu0
      %v3256 = vadd.f32 %v2848, %v3255
      %v3257 = vpop.f32.mrb[0].mxu0
      %v3258 = vpop.f32.mrb[0].mxu0
      %v3259 = vadd.f32 %v2851, %v3258
      %v3260 = vpop.f32.mrb[0].mxu0
      %3261 = vmatprep.mubr.bf16.mxu0 0
      %3262 = vmatmul.mubr.bf16.gmra.mrb[0].mxu0 %v2112
      %v3263 = vpop.f32.mrb[0].mxu0
      %v3264 = vadd.f32 %v2856, %v3263
      %v3265 = vpop.f32.mrb[0].mxu0
      %v3266 = vpop.f32.mrb[0].mxu0
      %v3267 = vadd.f32 %v2859, %v3266
      %v3268 = vpop.f32.mrb[0].mxu0
      %3269 = vmatprep.mubr.bf16.mxu0 0
      %3270 = vmatmul.mubr.bf16.gmra.mrb[0].mxu0 %v2113
      %v3271 = vpop.f32.mrb[0].mxu0
      %v3272 = vadd.f32 %v2864, %v3271
      %v3273 = vpop.f32.mrb[0].mxu0
      %v3274 = vpop.f32.mrb[0].mxu0
      %v3275 = vadd.f32 %v2867, %v3274
      %v3276 = vpop.f32.mrb[0].mxu0
      %3277 = vmatprep.mubr.bf16.mxu0 0
      %3278 = vmatmul.mubr.bf16.gmra.mrb[0].mxu0 %v2114
      %v3279 = vpop.f32.mrb[0].mxu0
      %v3280 = vadd.f32 %v2872, %v3279
      %v3281 = vpop.f32.mrb[0].mxu0
      %v3282 = vpop.f32.mrb[0].mxu0
      %v3283 = vadd.f32 %v2875, %v3282
      %v3284 = vpop.f32.mrb[0].mxu0
      %3285 = vmatprep.mubr.bf16.mxu0 0
      %3286 = vmatmul.mubr.bf16.gmra.mrb[0].mxu0 %v2115
      %v3287 = vpop.f32.mrb[0].mxu0
      %v3288 = vadd.f32 %v2880, %v3287
      %v3289 = vpop.f32.mrb[0].mxu0
      %v3290 = vpop.f32.mrb[0].mxu0
      %v3291 = vadd.f32 %v2883, %v3290
      %v3292 = vpop.f32.mrb[0].mxu0
      %3293 = vmatprep.mubr.bf16.mxu0 0
      %3294 = vmatmul.mubr.bf16.gmra.mrb[0].mxu0 %v2116
      %v3295 = vpop.f32.mrb[0].mxu0
      %v3296 = vadd.f32 %v2888, %v3295
      %v3297 = vpop.f32.mrb[0].mxu0
      %v3298 = vpop.f32.mrb[0].mxu0
      %v3299 = vadd.f32 %v2891, %v3298
      %v3300 = vpop.f32.mrb[0].mxu0
      %3301 = vmatprep.mubr.bf16.mxu0 0
      %3302 = vmatmul.mubr.bf16.gmra.mrb[0].mxu0 %v2117
      %v3303 = vpop.f32.mrb[0].mxu0
      %v3304 = vadd.f32 %v2896, %v3303
      %v3305 = vpop.f32.mrb[0].mxu0
      %v3306 = vpop.f32.mrb[0].mxu0
      %v3307 = vadd.f32 %v2899, %v3306
      %v3308 = vpop.f32.mrb[0].mxu0
      %3309 = vmatprep.mubr.bf16.mxu0 0
      %3310 = vmatmul.mubr.bf16.gmra.mrb[0].mxu0 %v2118
      %v3311 = vpop.f32.mrb[0].mxu0
      %v3312 = vadd.f32 %v2904, %v3311
      %v3313 = vpop.f32.mrb[0].mxu0
      %v3314 = vpop.f32.mrb[0].mxu0
      %v3315 = vadd.f32 %v2907, %v3314
      %v3316 = vpop.f32.mrb[0].mxu0
      %3317 = vmatprep.mubr.bf16.mxu0 0
      %3318 = vmatmul.mubr.bf16.gmra.mrb[0].mxu0 %v2119
      %v3319 = vpop.f32.mrb[0].mxu0
      %v3320 = vadd.f32 %v2912, %v3319
      %v3321 = vpop.f32.mrb[0].mxu0
      %v3322 = vpop.f32.mrb[0].mxu0
      %v3323 = vadd.f32 %v2915, %v3322
      %v3324 = vpop.f32.mrb[0].mxu0
      %3325 = vmatprep.mubr.bf16.mxu0 0
      %3326 = vmatmul.mubr.bf16.gmra.mrb[0].mxu0 %v2120
      %v3327 = vpop.f32.mrb[0].mxu0
      %v3328 = vadd.f32 %v2920, %v3327
      %v3329 = vpop.f32.mrb[0].mxu0
      %v3330 = vpop.f32.mrb[0].mxu0
      %v3331 = vadd.f32 %v2923, %v3330
      %v3332 = vpop.f32.mrb[0].mxu0
      %3333 = vmatprep.mubr.bf16.mxu0 0
      %3334 = vmatmul.mubr.bf16.gmra.mrb[0].mxu0 %v2121
      %v3335 = vpop.f32.mrb[0].mxu0
      %v3336 = vadd.f32 %v2928, %v3335
      %v3337 = vpop.f32.mrb[0].mxu0
      %v3338 = vpop.f32.mrb[0].mxu0
      %v3339 = vpop.f32.mrb[0].mxu0
      %3340 = vdwg.mxu0
      %v3341 = vld [vmem:[#allocation2] sm:$0xfe]
      %s3342 = scalar_lea.vmem %s5, 128
      %v3343 = vld [vmem:[%s3342] sm:$0xf]
      %v3344 = vld [vmem:[%s3342 + $0x4] sm:$0xf]
      %v3345 = vld [vmem:[%s3342 + $0x8] sm:$0xf]
      %v3346 = vld [vmem:[%s3342 + $0xc] sm:$0xf]
      %v3347 = vld [vmem:[%s3342 + $0x10] sm:$0xf]
      %v3348 = vld [vmem:[%s3342 + $0x14] sm:$0xf]
      %v3349 = vld [vmem:[%s3342 + $0x18] sm:$0xf]
      %v3350 = vld [vmem:[%s3342 + $0x1c] sm:$0xf]
      %v3351 = vld [vmem:[%s3342 + $0x20] sm:$0xf]
      %v3352 = vld [vmem:[%s3342 + $0x24] sm:$0xf]
      %v3353 = vld [vmem:[%s3342 + $0x28] sm:$0xf]
      %v3354 = vld [vmem:[%s3342 + $0x2c] sm:$0xf]
      %v3355 = vld [vmem:[%s3342 + $0x30] sm:$0xf]
      %v3356 = vld [vmem:[%s3342 + $0x34] sm:$0xf]
      %v3357 = vld [vmem:[%s3342 + $0x38] sm:$0xf]
      %v3358 = vld [vmem:[%s3342 + $0x3c] sm:$0xf]
      %vm3400 = vcmask 1046528
      %v3401 = vrot.slane %v3341, 1
      %v3402 = vrot.slane %v2082, 1
      %v3403 = vsel %vm3400, %v3401, %v3402
      %v3404 = vrot.slane %v2083, 1
      %v3405 = vsel %vm3400, %v3402, %v3404
      %v3406 = vrot.slane %v2084, 1
      %v3407 = vsel %vm3400, %v3404, %v3406
      %v3408 = vrot.slane %v2085, 1
      %v3409 = vsel %vm3400, %v3406, %v3408
      %v3410 = vrot.slane %v2086, 1
      %v3411 = vsel %vm3400, %v3408, %v3410
      %v3412 = vrot.slane %v2087, 1
      %v3413 = vsel %vm3400, %v3410, %v3412
      %v3414 = vrot.slane %v2088, 1
      %v3415 = vsel %vm3400, %v3412, %v3414
      %v3416 = vrot.slane %v2089, 1
      %v3417 = vsel %vm3400, %v3414, %v3416
      %v3418 = vrot.slane %v2090, 1
      %v3419 = vsel %vm3400, %v3416, %v3418
      %v3420 = vrot.slane %v2091, 1
      %v3421 = vsel %vm3400, %v3418, %v3420
      %v3422 = vrot.slane %v2092, 1
      %v3423 = vsel %vm3400, %v3420, %v3422
      %v3424 = vrot.slane %v2093, 1
      %v3425 = vsel %vm3400, %v3422, %v3424
      %v3426 = vrot.slane %v2094, 1
      %v3427 = vsel %vm3400, %v3424, %v3426
      %v3428 = vrot.slane %v2095, 1
      %v3429 = vsel %vm3400, %v3426, %v3428
      %v3430 = vrot.slane %v2096, 1
      %v3431 = vsel %vm3400, %v3428, %v3430
      %v3432 = vrot.slane %v2097, 1
      %v3433 = vsel %vm3400, %v3430, %v3432
      %v3434 = vrot.slane %v2098, 1
      %v3435 = vsel %vm3400, %v3432, %v3434
      %v3436 = vrot.slane %v2099, 1
      %v3437 = vsel %vm3400, %v3434, %v3436
      %v3438 = vrot.slane %v2100, 1
      %v3439 = vsel %vm3400, %v3436, %v3438
      %v3440 = vrot.slane %v2101, 1
      %v3441 = vsel %vm3400, %v3438, %v3440
      %v3442 = vrot.slane %v2102, 1
      %v3443 = vsel %vm3400, %v3440, %v3442
      %v3444 = vrot.slane %v2103, 1
      %v3445 = vsel %vm3400, %v3442, %v3444
      %v3446 = vrot.slane %v2104, 1
      %v3447 = vsel %vm3400, %v3444, %v3446
      %v3448 = vrot.slane %v2105, 1
      %v3449 = vsel %vm3400, %v3446, %v3448
      %v3450 = vrot.slane %v2106, 1
      %v3451 = vsel %vm3400, %v3448, %v3450
      %v3452 = vrot.slane %v2107, 1
      %v3453 = vsel %vm3400, %v3450, %v3452
      %v3454 = vrot.slane %v2108, 1
      %v3455 = vsel %vm3400, %v3452, %v3454
      %v3456 = vrot.slane %v2109, 1
      %v3457 = vsel %vm3400, %v3454, %v3456
      %v3458 = vrot.slane %v2110, 1
      %v3459 = vsel %vm3400, %v3456, %v3458
      %v3460 = vrot.slane %v2111, 1
      %v3461 = vsel %vm3400, %v3458, %v3460
      %v3462 = vrot.slane %v2112, 1
      %v3463 = vsel %vm3400, %v3460, %v3462
      %v3464 = vrot.slane %v2113, 1
      %v3465 = vsel %vm3400, %v3462, %v3464
      %v3466 = vrot.slane %v2114, 1
      %v3467 = vsel %vm3400, %v3464, %v3466
      %v3468 = vrot.slane %v2115, 1
      %v3469 = vsel %vm3400, %v3466, %v3468
      %v3470 = vrot.slane %v2116, 1
      %v3471 = vsel %vm3400, %v3468, %v3470
      %v3472 = vrot.slane %v2117, 1
      %v3473 = vsel %vm3400, %v3470, %v3472
      %v3474 = vrot.slane %v2118, 1
      %v3475 = vsel %vm3400, %v3472, %v3474
      %v3476 = vrot.slane %v2119, 1
      %v3477 = vsel %vm3400, %v3474, %v3476
      %v3478 = vrot.slane %v2120, 1
      %v3479 = vsel %vm3400, %v3476, %v3478
      %v3480 = vrot.slane %v2138, 1
      %v3481 = vsel %vm3400, %v3478, %v3480
      %v3539 = vunpack.c.l.b16 %v3343
      %v3540 = vunpack.c.l.b16 %v3344
      %v3541 = vunpack.c.l.b16 %v3345
      %v3542 = vunpack.c.l.b16 %v3346
      %v3543 = vunpack.c.l.b16 %v3347
      %v3544 = vunpack.c.l.b16 %v3348
      %v3545 = vunpack.c.l.b16 %v3349
      %v3546 = vunpack.c.l.b16 %v3350
      %v3547 = vunpack.c.l.b16 %v3351
      %v3548 = vunpack.c.l.b16 %v3352
      %v3549 = vunpack.c.l.b16 %v3353
      %v3550 = vunpack.c.l.b16 %v3354
      %v3551 = vunpack.c.l.b16 %v3355
      %v3552 = vunpack.c.l.b16 %v3356
      %v3553 = vunpack.c.l.b16 %v3357
      %v3554 = vunpack.c.l.b16 %v3358
      %v3555 = vpack.c.b16 %v3540, %v3539
      %v3556 = vpack.c.b16 %v3542, %v3541
      %v3557 = vpack.c.b16 %v3544, %v3543
      %v3558 = vpack.c.b16 %v3546, %v3545
      %v3559 = vpack.c.b16 %v3548, %v3547
      %v3560 = vpack.c.b16 %v3550, %v3549
      %v3561 = vpack.c.b16 %v3552, %v3551
      %v3562 = vpack.c.b16 %v3554, %v3553
      %3571 = vmatprep.subr.bf16.mxu0 0
      %3572 = vmatpush1.bf16.msra.mxu0 %v3555
      %3573 = vmatprep.subr.bf16.mxu0 0
      %3574 = vmatpush1.bf16.msra.mxu0 %v3556
      %3575 = vmatprep.subr.bf16.mxu0 0
      %3576 = vmatpush1.bf16.msra.mxu0 %v3557
      %3577 = vmatprep.subr.bf16.mxu0 0
      %3578 = vmatpush1.bf16.msra.mxu0 %v3558
      %3579 = vmatprep.subr.bf16.mxu0 0
      %3580 = vmatpush1.bf16.msra.mxu0 %v3559
      %3581 = vmatprep.subr.bf16.mxu0 0
      %3582 = vmatpush1.bf16.msra.mxu0 %v3560
      %3583 = vmatprep.subr.bf16.mxu0 0
      %3584 = vmatpush1.bf16.msra.mxu0 %v3561
      %3585 = vmatprep.subr.bf16.mxu0 0
      %3586 = vmatpush1.bf16.msra.mxu0 %v3562
      %3587 = vmatprep.subr.bf16.mxu0 0
      %3588 = vmatpush1.bf16.msra.mxu0 0
      %3589 = vmatprep.subr.bf16.mxu0 0
      %3590 = vmatpush1.bf16.msra.mxu0 0
      %3591 = vmatprep.subr.bf16.mxu0 0
      %3592 = vmatpush1.bf16.msra.mxu0 0
      %3593 = vmatprep.subr.bf16.mxu0 0
      %3594 = vmatpush1.bf16.msra.mxu0 0
      %3595 = vmatprep.subr.bf16.mxu0 0
      %3596 = vmatpush1.bf16.msra.mxu0 0
      %3597 = vmatprep.subr.bf16.mxu0 0
      %3598 = vmatpush1.bf16.msra.mxu0 0
      %3599 = vmatprep.subr.bf16.mxu0 0
      %3600 = vmatpush1.bf16.msra.mxu0 0
      %3601 = vmatprep.subr.bf16.mxu0 0
      %3602 = vmatpush1.bf16.msra.mxu0 0
      %3603 = vmatprep.mubr.bf16.mxu0 0
      %3604 = vmatmul.mubr.bf16.gmra.mrb[0].mxu0 %v3403
      %v3605 = vpop.f32.mrb[0].mxu0
      %v3606 = vadd.f32 0.0, %v3605
      %v3607 = vpop.f32.mrb[0].mxu0
      %v3608 = vpop.f32.mrb[0].mxu0
      %v3609 = vadd.f32 0.0, %v3608
      %v3610 = vpop.f32.mrb[0].mxu0
      %3611 = vmatprep.mubr.bf16.mxu0 0
      %3612 = vmatmul.mubr.bf16.gmra.mrb[0].mxu0 %v3405
      %v3613 = vpop.f32.mrb[0].mxu0
      %v3614 = vadd.f32 0.0, %v3613
      %v3615 = vpop.f32.mrb[0].mxu0
      %v3616 = vpop.f32.mrb[0].mxu0
      %v3617 = vadd.f32 0.0, %v3616
      %v3618 = vpop.f32.mrb[0].mxu0
      %3619 = vmatprep.mubr.bf16.mxu0 0
      %3620 = vmatmul.mubr.bf16.gmra.mrb[0].mxu0 %v3407
      %v3621 = vpop.f32.mrb[0].mxu0
      %v3622 = vadd.f32 0.0, %v3621
      %v3623 = vpop.f32.mrb[0].mxu0
      %v3624 = vpop.f32.mrb[0].mxu0
      %v3625 = vadd.f32 0.0, %v3624
      %v3626 = vpop.f32.mrb[0].mxu0
      %3627 = vmatprep.mubr.bf16.mxu0 0
      %3628 = vmatmul.mubr.bf16.gmra.mrb[0].mxu0 %v3409
      %v3629 = vpop.f32.mrb[0].mxu0
      %v3630 = vadd.f32 0.0, %v3629
      %v3631 = vpop.f32.mrb[0].mxu0
      %v3632 = vpop.f32.mrb[0].mxu0
      %v3633 = vadd.f32 0.0, %v3632
      %v3634 = vpop.f32.mrb[0].mxu0
      %3635 = vmatprep.mubr.bf16.mxu0 0
      %3636 = vmatmul.mubr.bf16.gmra.mrb[0].mxu0 %v3411
      %v3637 = vpop.f32.mrb[0].mxu0
      %v3638 = vadd.f32 0.0, %v3637
      %v3639 = vpop.f32.mrb[0].mxu0
      %v3640 = vpop.f32.mrb[0].mxu0
      %v3641 = vadd.f32 0.0, %v3640
      %v3642 = vpop.f32.mrb[0].mxu0
      %3643 = vmatprep.mubr.bf16.mxu0 0
      %3644 = vmatmul.mubr.bf16.gmra.mrb[0].mxu0 %v3413
      %v3645 = vpop.f32.mrb[0].mxu0
      %v3646 = vadd.f32 0.0, %v3645
      %v3647 = vpop.f32.mrb[0].mxu0
      %v3648 = vpop.f32.mrb[0].mxu0
      %v3649 = vadd.f32 0.0, %v3648
      %v3650 = vpop.f32.mrb[0].mxu0
      %3651 = vmatprep.mubr.bf16.mxu0 0
      %3652 = vmatmul.mubr.bf16.gmra.mrb[0].mxu0 %v3415
      %v3653 = vpop.f32.mrb[0].mxu0
      %v3654 = vadd.f32 0.0, %v3653
      %v3655 = vpop.f32.mrb[0].mxu0
      %v3656 = vpop.f32.mrb[0].mxu0
      %v3657 = vadd.f32 0.0, %v3656
      %v3658 = vpop.f32.mrb[0].mxu0
      %3659 = vmatprep.mubr.bf16.mxu0 0
      %3660 = vmatmul.mubr.bf16.gmra.mrb[0].mxu0 %v3417
      %v3661 = vpop.f32.mrb[0].mxu0
      %v3662 = vadd.f32 0.0, %v3661
      %v3663 = vpop.f32.mrb[0].mxu0
      %v3664 = vpop.f32.mrb[0].mxu0
      %v3665 = vadd.f32 0.0, %v3664
      %v3666 = vpop.f32.mrb[0].mxu0
      %3667 = vmatprep.mubr.bf16.mxu0 0
      %3668 = vmatmul.mubr.bf16.gmra.mrb[0].mxu0 %v3419
      %v3669 = vpop.f32.mrb[0].mxu0
      %v3670 = vadd.f32 0.0, %v3669
      %v3671 = vpop.f32.mrb[0].mxu0
      %v3672 = vpop.f32.mrb[0].mxu0
      %v3673 = vadd.f32 0.0, %v3672
      %v3674 = vpop.f32.mrb[0].mxu0
      %3675 = vmatprep.mubr.bf16.mxu0 0
      %3676 = vmatmul.mubr.bf16.gmra.mrb[0].mxu0 %v3421
      %v3677 = vpop.f32.mrb[0].mxu0
      %v3678 = vadd.f32 0.0, %v3677
      %v3679 = vpop.f32.mrb[0].mxu0
      %v3680 = vpop.f32.mrb[0].mxu0
      %v3681 = vadd.f32 0.0, %v3680
      %v3682 = vpop.f32.mrb[0].mxu0
      %3683 = vmatprep.mubr.bf16.mxu0 0
      %3684 = vmatmul.mubr.bf16.gmra.mrb[0].mxu0 %v3423
      %v3685 = vpop.f32.mrb[0].mxu0
      %v3686 = vadd.f32 0.0, %v3685
      %v3687 = vpop.f32.mrb[0].mxu0
      %v3688 = vpop.f32.mrb[0].mxu0
      %v3689 = vadd.f32 0.0, %v3688
      %v3690 = vpop.f32.mrb[0].mxu0
      %3691 = vmatprep.mubr.bf16.mxu0 0
      %3692 = vmatmul.mubr.bf16.gmra.mrb[0].mxu0 %v3425
      %v3693 = vpop.f32.mrb[0].mxu0
      %v3694 = vadd.f32 0.0, %v3693
      %v3695 = vpop.f32.mrb[0].mxu0
      %v3696 = vpop.f32.mrb[0].mxu0
      %v3697 = vadd.f32 0.0, %v3696
      %v3698 = vpop.f32.mrb[0].mxu0
      %3699 = vmatprep.mubr.bf16.mxu0 0
      %3700 = vmatmul.mubr.bf16.gmra.mrb[0].mxu0 %v3427
      %v3701 = vpop.f32.mrb[0].mxu0
      %v3702 = vadd.f32 0.0, %v3701
      %v3703 = vpop.f32.mrb[0].mxu0
      %v3704 = vpop.f32.mrb[0].mxu0
      %v3705 = vadd.f32 0.0, %v3704
      %v3706 = vpop.f32.mrb[0].mxu0
      %3707 = vmatprep.mubr.bf16.mxu0 0
      %3708 = vmatmul.mubr.bf16.gmra.mrb[0].mxu0 %v3429
      %v3709 = vpop.f32.mrb[0].mxu0
      %v3710 = vadd.f32 0.0, %v3709
      %v3711 = vpop.f32.mrb[0].mxu0
      %v3712 = vpop.f32.mrb[0].mxu0
      %v3713 = vadd.f32 0.0, %v3712
      %v3714 = vpop.f32.mrb[0].mxu0
      %3715 = vmatprep.mubr.bf16.mxu0 0
      %3716 = vmatmul.mubr.bf16.gmra.mrb[0].mxu0 %v3431
      %v3717 = vpop.f32.mrb[0].mxu0
      %v3718 = vadd.f32 0.0, %v3717
      %v3719 = vpop.f32.mrb[0].mxu0
      %v3720 = vpop.f32.mrb[0].mxu0
      %v3721 = vadd.f32 0.0, %v3720
      %v3722 = vpop.f32.mrb[0].mxu0
      %3723 = vmatprep.mubr.bf16.mxu0 0
      %3724 = vmatmul.mubr.bf16.gmra.mrb[0].mxu0 %v3433
      %v3725 = vpop.f32.mrb[0].mxu0
      %v3726 = vadd.f32 0.0, %v3725
      %v3727 = vpop.f32.mrb[0].mxu0
      %v3728 = vpop.f32.mrb[0].mxu0
      %v3729 = vadd.f32 0.0, %v3728
      %v3730 = vpop.f32.mrb[0].mxu0
      %3731 = vmatprep.mubr.bf16.mxu0 0
      %3732 = vmatmul.mubr.bf16.gmra.mrb[0].mxu0 %v3435
      %v3733 = vpop.f32.mrb[0].mxu0
      %v3734 = vadd.f32 0.0, %v3733
      %v3735 = vpop.f32.mrb[0].mxu0
      %v3736 = vpop.f32.mrb[0].mxu0
      %v3737 = vadd.f32 0.0, %v3736
      %v3738 = vpop.f32.mrb[0].mxu0
      %3739 = vmatprep.mubr.bf16.mxu0 0
      %3740 = vmatmul.mubr.bf16.gmra.mrb[0].mxu0 %v3437
      %v3741 = vpop.f32.mrb[0].mxu0
      %v3742 = vadd.f32 0.0, %v3741
      %v3743 = vpop.f32.mrb[0].mxu0
      %v3744 = vpop.f32.mrb[0].mxu0
      %v3745 = vadd.f32 0.0, %v3744
      %v3746 = vpop.f32.mrb[0].mxu0
      %3747 = vmatprep.mubr.bf16.mxu0 0
      %3748 = vmatmul.mubr.bf16.gmra.mrb[0].mxu0 %v3439
      %v3749 = vpop.f32.mrb[0].mxu0
      %v3750 = vadd.f32 0.0, %v3749
      %v3751 = vpop.f32.mrb[0].mxu0
      %v3752 = vpop.f32.mrb[0].mxu0
      %v3753 = vadd.f32 0.0, %v3752
      %v3754 = vpop.f32.mrb[0].mxu0
      %3755 = vmatprep.mubr.bf16.mxu0 0
      %3756 = vmatmul.mubr.bf16.gmra.mrb[0].mxu0 %v3441
      %v3757 = vpop.f32.mrb[0].mxu0
      %v3758 = vadd.f32 0.0, %v3757
      %v3759 = vpop.f32.mrb[0].mxu0
      %v3760 = vpop.f32.mrb[0].mxu0
      %v3761 = vadd.f32 0.0, %v3760
      %v3762 = vpop.f32.mrb[0].mxu0
      %3763 = vmatprep.mubr.bf16.mxu0 0
      %3764 = vmatmul.mubr.bf16.gmra.mrb[0].mxu0 %v3443
      %v3765 = vpop.f32.mrb[0].mxu0
      %v3766 = vadd.f32 0.0, %v3765
      %v3767 = vpop.f32.mrb[0].mxu0
      %v3768 = vpop.f32.mrb[0].mxu0
      %v3769 = vadd.f32 0.0, %v3768
      %v3770 = vpop.f32.mrb[0].mxu0
      %3771 = vmatprep.mubr.bf16.mxu0 0
      %3772 = vmatmul.mubr.bf16.gmra.mrb[0].mxu0 %v3445
      %v3773 = vpop.f32.mrb[0].mxu0
      %v3774 = vadd.f32 0.0, %v3773
      %v3775 = vpop.f32.mrb[0].mxu0
      %v3776 = vpop.f32.mrb[0].mxu0
      %v3777 = vadd.f32 0.0, %v3776
      %v3778 = vpop.f32.mrb[0].mxu0
      %3779 = vmatprep.mubr.bf16.mxu0 0
      %3780 = vmatmul.mubr.bf16.gmra.mrb[0].mxu0 %v3447
      %v3781 = vpop.f32.mrb[0].mxu0
      %v3782 = vadd.f32 0.0, %v3781
      %v3783 = vpop.f32.mrb[0].mxu0
      %v3784 = vpop.f32.mrb[0].mxu0
      %v3785 = vadd.f32 0.0, %v3784
      %v3786 = vpop.f32.mrb[0].mxu0
      %3787 = vmatprep.mubr.bf16.mxu0 0
      %3788 = vmatmul.mubr.bf16.gmra.mrb[0].mxu0 %v3449
      %v3789 = vpop.f32.mrb[0].mxu0
      %v3790 = vadd.f32 0.0, %v3789
      %v3791 = vpop.f32.mrb[0].mxu0
      %v3792 = vpop.f32.mrb[0].mxu0
      %v3793 = vadd.f32 0.0, %v3792
      %v3794 = vpop.f32.mrb[0].mxu0
      %3795 = vmatprep.mubr.bf16.mxu0 0
      %3796 = vmatmul.mubr.bf16.gmra.mrb[0].mxu0 %v3451
      %v3797 = vpop.f32.mrb[0].mxu0
      %v3798 = vadd.f32 0.0, %v3797
      %v3799 = vpop.f32.mrb[0].mxu0
      %v3800 = vpop.f32.mrb[0].mxu0
      %v3801 = vadd.f32 0.0, %v3800
      %v3802 = vpop.f32.mrb[0].mxu0
      %3803 = vmatprep.mubr.bf16.mxu0 0
      %3804 = vmatmul.mubr.bf16.gmra.mrb[0].mxu0 %v3453
      %v3805 = vpop.f32.mrb[0].mxu0
      %v3806 = vadd.f32 0.0, %v3805
      %v3807 = vpop.f32.mrb[0].mxu0
      %v3808 = vpop.f32.mrb[0].mxu0
      %v3809 = vadd.f32 0.0, %v3808
      %v3810 = vpop.f32.mrb[0].mxu0
      %3811 = vmatprep.mubr.bf16.mxu0 0
      %3812 = vmatmul.mubr.bf16.gmra.mrb[0].mxu0 %v3455
      %v3813 = vpop.f32.mrb[0].mxu0
      %v3814 = vadd.f32 0.0, %v3813
      %v3815 = vpop.f32.mrb[0].mxu0
      %v3816 = vpop.f32.mrb[0].mxu0
      %v3817 = vadd.f32 0.0, %v3816
      %v3818 = vpop.f32.mrb[0].mxu0
      %3819 = vmatprep.mubr.bf16.mxu0 0
      %3820 = vmatmul.mubr.bf16.gmra.mrb[0].mxu0 %v3457
      %v3821 = vpop.f32.mrb[0].mxu0
      %v3822 = vadd.f32 0.0, %v3821
      %v3823 = vpop.f32.mrb[0].mxu0
      %v3824 = vpop.f32.mrb[0].mxu0
      %v3825 = vadd.f32 0.0, %v3824
      %v3826 = vpop.f32.mrb[0].mxu0
      %3827 = vmatprep.mubr.bf16.mxu0 0
      %3828 = vmatmul.mubr.bf16.gmra.mrb[0].mxu0 %v3459
      %v3829 = vpop.f32.mrb[0].mxu0
      %v3830 = vadd.f32 0.0, %v3829
      %v3831 = vpop.f32.mrb[0].mxu0
      %v3832 = vpop.f32.mrb[0].mxu0
      %v3833 = vadd.f32 0.0, %v3832
      %v3834 = vpop.f32.mrb[0].mxu0
      %3835 = vmatprep.mubr.bf16.mxu0 0
      %3836 = vmatmul.mubr.bf16.gmra.mrb[0].mxu0 %v3461
      %v3837 = vpop.f32.mrb[0].mxu0
      %v3838 = vadd.f32 0.0, %v3837
      %v3839 = vpop.f32.mrb[0].mxu0
      %v3840 = vpop.f32.mrb[0].mxu0
      %v3841 = vadd.f32 0.0, %v3840
      %v3842 = vpop.f32.mrb[0].mxu0
      %3843 = vmatprep.mubr.bf16.mxu0 0
      %3844 = vmatmul.mubr.bf16.gmra.mrb[0].mxu0 %v3463
      %v3845 = vpop.f32.mrb[0].mxu0
      %v3846 = vadd.f32 0.0, %v3845
      %v3847 = vpop.f32.mrb[0].mxu0
      %v3848 = vpop.f32.mrb[0].mxu0
      %v3849 = vadd.f32 0.0, %v3848
      %v3850 = vpop.f32.mrb[0].mxu0
      %3851 = vmatprep.mubr.bf16.mxu0 0
      %3852 = vmatmul.mubr.bf16.gmra.mrb[0].mxu0 %v3465
      %v3853 = vpop.f32.mrb[0].mxu0
      %v3854 = vadd.f32 0.0, %v3853
      %v3855 = vpop.f32.mrb[0].mxu0
      %v3856 = vpop.f32.mrb[0].mxu0
      %v3857 = vadd.f32 0.0, %v3856
      %v3858 = vpop.f32.mrb[0].mxu0
      %3859 = vmatprep.mubr.bf16.mxu0 0
      %3860 = vmatmul.mubr.bf16.gmra.mrb[0].mxu0 %v3467
      %v3861 = vpop.f32.mrb[0].mxu0
      %v3862 = vadd.f32 0.0, %v3861
      %v3863 = vpop.f32.mrb[0].mxu0
      %v3864 = vpop.f32.mrb[0].mxu0
      %v3865 = vadd.f32 0.0, %v3864
      %v3866 = vpop.f32.mrb[0].mxu0
      %3867 = vmatprep.mubr.bf16.mxu0 0
      %3868 = vmatmul.mubr.bf16.gmra.mrb[0].mxu0 %v3469
      %v3869 = vpop.f32.mrb[0].mxu0
      %v3870 = vadd.f32 0.0, %v3869
      %v3871 = vpop.f32.mrb[0].mxu0
      %v3872 = vpop.f32.mrb[0].mxu0
      %v3873 = vadd.f32 0.0, %v3872
      %v3874 = vpop.f32.mrb[0].mxu0
      %3875 = vmatprep.mubr.bf16.mxu0 0
      %3876 = vmatmul.mubr.bf16.gmra.mrb[0].mxu0 %v3471
      %v3877 = vpop.f32.mrb[0].mxu0
      %v3878 = vadd.f32 0.0, %v3877
      %v3879 = vpop.f32.mrb[0].mxu0
      %v3880 = vpop.f32.mrb[0].mxu0
      %v3881 = vadd.f32 0.0, %v3880
      %v3882 = vpop.f32.mrb[0].mxu0
      %3883 = vmatprep.mubr.bf16.mxu0 0
      %3884 = vmatmul.mubr.bf16.gmra.mrb[0].mxu0 %v3473
      %v3885 = vpop.f32.mrb[0].mxu0
      %v3886 = vadd.f32 0.0, %v3885
      %v3887 = vpop.f32.mrb[0].mxu0
      %v3888 = vpop.f32.mrb[0].mxu0
      %v3889 = vadd.f32 0.0, %v3888
      %v3890 = vpop.f32.mrb[0].mxu0
      %3891 = vmatprep.mubr.bf16.mxu0 0
      %3892 = vmatmul.mubr.bf16.gmra.mrb[0].mxu0 %v3475
      %v3893 = vpop.f32.mrb[0].mxu0
      %v3894 = vadd.f32 0.0, %v3893
      %v3895 = vpop.f32.mrb[0].mxu0
      %v3896 = vpop.f32.mrb[0].mxu0
      %v3897 = vadd.f32 0.0, %v3896
      %v3898 = vpop.f32.mrb[0].mxu0
      %3899 = vmatprep.mubr.bf16.mxu0 0
      %3900 = vmatmul.mubr.bf16.gmra.mrb[0].mxu0 %v3477
      %v3901 = vpop.f32.mrb[0].mxu0
      %v3902 = vadd.f32 0.0, %v3901
      %v3903 = vpop.f32.mrb[0].mxu0
      %v3904 = vpop.f32.mrb[0].mxu0
      %v3905 = vadd.f32 0.0, %v3904
      %v3906 = vpop.f32.mrb[0].mxu0
      %3907 = vmatprep.mubr.bf16.mxu0 0
      %3908 = vmatmul.mubr.bf16.gmra.mrb[0].mxu0 %v3479
      %v3909 = vpop.f32.mrb[0].mxu0
      %v3910 = vadd.f32 0.0, %v3909
      %v3911 = vpop.f32.mrb[0].mxu0
      %v3912 = vpop.f32.mrb[0].mxu0
      %v3913 = vadd.f32 0.0, %v3912
      %v3914 = vpop.f32.mrb[0].mxu0
      %3915 = vmatprep.mubr.bf16.mxu0 0
      %3916 = vmatmul.mubr.bf16.gmra.mrb[0].mxu0 %v3481
      %v3917 = vpop.f32.mrb[0].mxu0
      %v3918 = vadd.f32 0.0, %v3917
      %v3919 = vpop.f32.mrb[0].mxu0
      %v3920 = vpop.f32.mrb[0].mxu0
      %v3921 = vadd.f32 0.0, %v3920
      %v3922 = vpop.f32.mrb[0].mxu0
      %3923 = vmatprep.mubr.bf16.mxu0 0
      %3924 = vmatmul.mubr.bf16.gmra.mrb[0].mxu0 %v3480
      %v3925 = vpop.f32.mrb[0].mxu0
      %v3926 = vadd.f32 0.0, %v3925
      %v3927 = vpop.f32.mrb[0].mxu0
      %v3928 = vpop.f32.mrb[0].mxu0
      %v3929 = vpop.f32.mrb[0].mxu0
      %3930 = vdwg.mxu0
      %v3931 = vadd.f32 %v3016, %v3606
      %v3932 = vadd.f32 %v3019, %v3609
      %v3933 = vadd.f32 %v3024, %v3614
      %v3934 = vadd.f32 %v3027, %v3617
      %v3935 = vadd.f32 %v3032, %v3622
      %v3936 = vadd.f32 %v3035, %v3625
      %v3937 = vadd.f32 %v3040, %v3630
      %v3938 = vadd.f32 %v3043, %v3633
      %v3939 = vadd.f32 %v3048, %v3638
      %v3940 = vadd.f32 %v3051, %v3641
      %v3941 = vadd.f32 %v3056, %v3646
      %v3942 = vadd.f32 %v3059, %v3649
      %v3943 = vadd.f32 %v3064, %v3654
      %v3944 = vadd.f32 %v3067, %v3657
      %v3945 = vadd.f32 %v3072, %v3662
      %v3946 = vadd.f32 %v3075, %v3665
      %v3947 = vadd.f32 %v3080, %v3670
      %v3948 = vadd.f32 %v3083, %v3673
      %v3949 = vadd.f32 %v3088, %v3678
      %v3950 = vadd.f32 %v3091, %v3681
      %v3951 = vadd.f32 %v3096, %v3686
      %v3952 = vadd.f32 %v3099, %v3689
      %v3953 = vadd.f32 %v3104, %v3694
      %v3954 = vadd.f32 %v3107, %v3697
      %v3955 = vadd.f32 %v3112, %v3702
      %v3956 = vadd.f32 %v3115, %v3705
      %v3957 = vadd.f32 %v3120, %v3710
      %v3958 = vadd.f32 %v3123, %v3713
      %v3959 = vadd.f32 %v3128, %v3718
      %v3960 = vadd.f32 %v3131, %v3721
      %v3961 = vadd.f32 %v3136, %v3726
      %v3962 = vadd.f32 %v3139, %v3729
      %v3963 = vadd.f32 %v3144, %v3734
      %v3964 = vadd.f32 %v3147, %v3737
      %v3965 = vadd.f32 %v3152, %v3742
      %v3966 = vadd.f32 %v3155, %v3745
      %v3967 = vadd.f32 %v3160, %v3750
      %v3968 = vadd.f32 %v3163, %v3753
      %v3969 = vadd.f32 %v3168, %v3758
      %v3970 = vadd.f32 %v3171, %v3761
      %v3971 = vadd.f32 %v3176, %v3766
      %v3972 = vadd.f32 %v3179, %v3769
      %v3973 = vadd.f32 %v3184, %v3774
      %v3974 = vadd.f32 %v3187, %v3777
      %v3975 = vadd.f32 %v3192, %v3782
      %v3976 = vadd.f32 %v3195, %v3785
      %v3977 = vadd.f32 %v3200, %v3790
      %v3978 = vadd.f32 %v3203, %v3793
      %v3979 = vadd.f32 %v3208, %v3798
      %v3980 = vadd.f32 %v3211, %v3801
      %v3981 = vadd.f32 %v3216, %v3806
      %v3982 = vadd.f32 %v3219, %v3809
      %v3983 = vadd.f32 %v3224, %v3814
      %v3984 = vadd.f32 %v3227, %v3817
      %v3985 = vadd.f32 %v3232, %v3822
      %v3986 = vadd.f32 %v3235, %v3825
      %v3987 = vadd.f32 %v3240, %v3830
      %v3988 = vadd.f32 %v3243, %v3833
      %v3989 = vadd.f32 %v3248, %v3838
      %v3990 = vadd.f32 %v3251, %v3841
      %v3991 = vadd.f32 %v3256, %v3846
      %v3992 = vadd.f32 %v3259, %v3849
      %v3993 = vadd.f32 %v3264, %v3854
      %v3994 = vadd.f32 %v3267, %v3857
      %v3995 = vadd.f32 %v3272, %v3862
      %v3996 = vadd.f32 %v3275, %v3865
      %v3997 = vadd.f32 %v3280, %v3870
      %v3998 = vadd.f32 %v3283, %v3873
      %v3999 = vadd.f32 %v3288, %v3878
      %v4000 = vadd.f32 %v3291, %v3881
      %v4001 = vadd.f32 %v3296, %v3886
      %v4002 = vadd.f32 %v3299, %v3889
      %v4003 = vadd.f32 %v3304, %v3894
      %v4004 = vadd.f32 %v3307, %v3897
      %v4005 = vadd.f32 %v3312, %v3902
      %v4006 = vadd.f32 %v3315, %v3905
      %v4007 = vadd.f32 %v3320, %v3910
      %v4008 = vadd.f32 %v3323, %v3913
      %v4009 = vadd.f32 %v3328, %v3918
      %v4010 = vadd.f32 %v3331, %v3921
      %v4011 = vadd.f32 %v3336, %v3926
      %v4012 = vld [vmem:[#allocation2 + $0x8] sm:$0xfe]
      %v4013 = vld [vmem:[#allocation2 + $0x10] sm:$0xff]
      %v4014 = vld [vmem:[#allocation2 + $0x18] sm:$0xff]
      %v4015 = vld [vmem:[#allocation2 + $0x20] sm:$0xff]
      %v4016 = vld [vmem:[#allocation2 + $0x28] sm:$0xff]
      %v4017 = vld [vmem:[#allocation2 + $0x30] sm:$0xff]
      %v4018 = vld [vmem:[#allocation2 + $0x38] sm:$0xff]
      %v4019 = vld [vmem:[#allocation2 + $0x40] sm:$0xff]
      %v4020 = vld [vmem:[#allocation2 + $0x48] sm:$0xff]
      %v4021 = vld [vmem:[#allocation2 + $0x50] sm:$0xff]
      %v4022 = vld [vmem:[#allocation2 + $0x58] sm:$0xff]
      %v4023 = vld [vmem:[#allocation2 + $0x60] sm:$0xff]
      %v4024 = vld [vmem:[#allocation2 + $0x68] sm:$0xff]
      %v4025 = vld [vmem:[#allocation2 + $0x70] sm:$0xff]
      %v4026 = vld [vmem:[#allocation2 + $0x78] sm:$0xff]
      %v4027 = vld [vmem:[#allocation2 + $0x80] sm:$0xff]
      %v4028 = vld [vmem:[#allocation2 + $0x88] sm:$0xff]
      %v4029 = vld [vmem:[#allocation2 + $0x90] sm:$0xff]
      %v4030 = vld [vmem:[#allocation2 + $0x98] sm:$0xff]
      %v4031 = vld [vmem:[#allocation2 + $0xa0] sm:$0xff]
      %v4032 = vld [vmem:[#allocation2 + $0xa8] sm:$0xff]
      %v4033 = vld [vmem:[#allocation2 + $0xb0] sm:$0xff]
      %v4034 = vld [vmem:[#allocation2 + $0xb8] sm:$0xff]
      %v4035 = vld [vmem:[#allocation2 + $0xc0] sm:$0xff]
      %v4036 = vld [vmem:[#allocation2 + $0xc8] sm:$0xff]
      %v4037 = vld [vmem:[#allocation2 + $0xd0] sm:$0xff]
      %v4038 = vld [vmem:[#allocation2 + $0xd8] sm:$0xff]
      %v4039 = vld [vmem:[#allocation2 + $0xe0] sm:$0xff]
      %v4040 = vld [vmem:[#allocation2 + $0xe8] sm:$0xff]
      %v4041 = vld [vmem:[#allocation2 + $0xf0] sm:$0xff]
      %v4042 = vld [vmem:[#allocation2 + $0xf8] sm:$0xff]
      %v4043 = vld [vmem:[#allocation2 + $0x100] sm:$0xff]
      %v4044 = vld [vmem:[#allocation2 + $0x108] sm:$0xff]
      %v4045 = vld [vmem:[#allocation2 + $0x110] sm:$0xff]
      %v4046 = vld [vmem:[#allocation2 + $0x118] sm:$0xff]
      %v4047 = vld [vmem:[#allocation2 + $0x120] sm:$0xff]
      %v4048 = vld [vmem:[#allocation2 + $0x128] sm:$0xff]
      %v4049 = vld [vmem:[#allocation2 + $0x130] sm:$0xff]
      %v4050 = vld [vmem:[#allocation2 + $0x138] sm:$0xff]
      %v4051 = vld [vmem:[#allocation2 + $0x140] sm:$0xff]
      %v4052 = vld [vmem:[#allocation2 + $0x148] sm:$0x1f]
      %s4053 = scalar_lea.vmem %s5, 192
      %v4054 = vld [vmem:[%s4053] sm:$0xf]
      %v4055 = vld [vmem:[%s4053 + $0x4] sm:$0xf]
      %v4056 = vld [vmem:[%s4053 + $0x8] sm:$0xf]
      %v4057 = vld [vmem:[%s4053 + $0xc] sm:$0xf]
      %v4058 = vld [vmem:[%s4053 + $0x10] sm:$0xf]
      %v4059 = vld [vmem:[%s4053 + $0x14] sm:$0xf]
      %v4060 = vld [vmem:[%s4053 + $0x18] sm:$0xf]
      %v4061 = vld [vmem:[%s4053 + $0x1c] sm:$0xf]
      %v4062 = vld [vmem:[%s4053 + $0x20] sm:$0xf]
      %v4063 = vld [vmem:[%s4053 + $0x24] sm:$0xf]
      %v4064 = vld [vmem:[%s4053 + $0x28] sm:$0xf]
      %v4065 = vld [vmem:[%s4053 + $0x2c] sm:$0xf]
      %v4066 = vld [vmem:[%s4053 + $0x30] sm:$0xf]
      %v4067 = vld [vmem:[%s4053 + $0x34] sm:$0xf]
      %v4068 = vld [vmem:[%s4053 + $0x38] sm:$0xf]
      %v4069 = vld [vmem:[%s4053 + $0x3c] sm:$0xf]
      %v4111 = vrot.slane %v4012, 1
      %v4112 = vrot.slane %v4013, 1
      %v4113 = vsel %vm3400, %v4111, %v4112
      %v4114 = vrot.slane %v4014, 1
      %v4115 = vsel %vm3400, %v4112, %v4114
      %v4116 = vrot.slane %v4015, 1
      %v4117 = vsel %vm3400, %v4114, %v4116
      %v4118 = vrot.slane %v4016, 1
      %v4119 = vsel %vm3400, %v4116, %v4118
      %v4120 = vrot.slane %v4017, 1
      %v4121 = vsel %vm3400, %v4118, %v4120
      %v4122 = vrot.slane %v4018, 1
      %v4123 = vsel %vm3400, %v4120, %v4122
      %v4124 = vrot.slane %v4019, 1
      %v4125 = vsel %vm3400, %v4122, %v4124
      %v4126 = vrot.slane %v4020, 1
      %v4127 = vsel %vm3400, %v4124, %v4126
      %v4128 = vrot.slane %v4021, 1
      %v4129 = vsel %vm3400, %v4126, %v4128
      %v4130 = vrot.slane %v4022, 1
      %v4131 = vsel %vm3400, %v4128, %v4130
      %v4132 = vrot.slane %v4023, 1
      %v4133 = vsel %vm3400, %v4130, %v4132
      %v4134 = vrot.slane %v4024, 1
      %v4135 = vsel %vm3400, %v4132, %v4134
      %v4136 = vrot.slane %v4025, 1
      %v4137 = vsel %vm3400, %v4134, %v4136
      %v4138 = vrot.slane %v4026, 1
      %v4139 = vsel %vm3400, %v4136, %v4138
      %v4140 = vrot.slane %v4027, 1
      %v4141 = vsel %vm3400, %v4138, %v4140
      %v4142 = vrot.slane %v4028, 1
      %v4143 = vsel %vm3400, %v4140, %v4142
      %v4144 = vrot.slane %v4029, 1
      %v4145 = vsel %vm3400, %v4142, %v4144
      %v4146 = vrot.slane %v4030, 1
      %v4147 = vsel %vm3400, %v4144, %v4146
      %v4148 = vrot.slane %v4031, 1
      %v4149 = vsel %vm3400, %v4146, %v4148
      %v4150 = vrot.slane %v4032, 1
      %v4151 = vsel %vm3400, %v4148, %v4150
      %v4152 = vrot.slane %v4033, 1
      %v4153 = vsel %vm3400, %v4150, %v4152
      %v4154 = vrot.slane %v4034, 1
      %v4155 = vsel %vm3400, %v4152, %v4154
      %v4156 = vrot.slane %v4035, 1
      %v4157 = vsel %vm3400, %v4154, %v4156
      %v4158 = vrot.slane %v4036, 1
      %v4159 = vsel %vm3400, %v4156, %v4158
      %v4160 = vrot.slane %v4037, 1
      %v4161 = vsel %vm3400, %v4158, %v4160
      %v4162 = vrot.slane %v4038, 1
      %v4163 = vsel %vm3400, %v4160, %v4162
      %v4164 = vrot.slane %v4039, 1
      %v4165 = vsel %vm3400, %v4162, %v4164
      %v4166 = vrot.slane %v4040, 1
      %v4167 = vsel %vm3400, %v4164, %v4166
      %v4168 = vrot.slane %v4041, 1
      %v4169 = vsel %vm3400, %v4166, %v4168
      %v4170 = vrot.slane %v4042, 1
      %v4171 = vsel %vm3400, %v4168, %v4170
      %v4172 = vrot.slane %v4043, 1
      %v4173 = vsel %vm3400, %v4170, %v4172
      %v4174 = vrot.slane %v4044, 1
      %v4175 = vsel %vm3400, %v4172, %v4174
      %v4176 = vrot.slane %v4045, 1
      %v4177 = vsel %vm3400, %v4174, %v4176
      %v4178 = vrot.slane %v4046, 1
      %v4179 = vsel %vm3400, %v4176, %v4178
      %v4180 = vrot.slane %v4047, 1
      %v4181 = vsel %vm3400, %v4178, %v4180
      %v4182 = vrot.slane %v4048, 1
      %v4183 = vsel %vm3400, %v4180, %v4182
      %v4184 = vrot.slane %v4049, 1
      %v4185 = vsel %vm3400, %v4182, %v4184
      %v4186 = vrot.slane %v4050, 1
      %v4187 = vsel %vm3400, %v4184, %v4186
      %v4188 = vrot.slane %v4051, 1
      %v4189 = vsel %vm3400, %v4186, %v4188
      %v4190 = vrot.slane %v4052, 1
      %v4191 = vsel %vm3400, %v4188, %v4190
      %v4249 = vunpack.c.l.b16 %v4054
      %v4250 = vunpack.c.l.b16 %v4055
      %v4251 = vunpack.c.l.b16 %v4056
      %v4252 = vunpack.c.l.b16 %v4057
      %v4253 = vunpack.c.l.b16 %v4058
      %v4254 = vunpack.c.l.b16 %v4059
      %v4255 = vunpack.c.l.b16 %v4060
      %v4256 = vunpack.c.l.b16 %v4061
      %v4257 = vunpack.c.l.b16 %v4062
      %v4258 = vunpack.c.l.b16 %v4063
      %v4259 = vunpack.c.l.b16 %v4064
      %v4260 = vunpack.c.l.b16 %v4065
      %v4261 = vunpack.c.l.b16 %v4066
      %v4262 = vunpack.c.l.b16 %v4067
      %v4263 = vunpack.c.l.b16 %v4068
      %v4264 = vunpack.c.l.b16 %v4069
      %v4265 = vpack.c.b16 %v4250, %v4249
      %v4266 = vpack.c.b16 %v4252, %v4251
      %v4267 = vpack.c.b16 %v4254, %v4253
      %v4268 = vpack.c.b16 %v4256, %v4255
      %v4269 = vpack.c.b16 %v4258, %v4257
      %v4270 = vpack.c.b16 %v4260, %v4259
      %v4271 = vpack.c.b16 %v4262, %v4261
      %v4272 = vpack.c.b16 %v4264, %v4263
      %4281 = vmatprep.subr.bf16.mxu0 0
      %4282 = vmatpush1.bf16.msra.mxu0 %v4265
      %4283 = vmatprep.subr.bf16.mxu0 0
      %4284 = vmatpush1.bf16.msra.mxu0 %v4266
      %4285 = vmatprep.subr.bf16.mxu0 0
      %4286 = vmatpush1.bf16.msra.mxu0 %v4267
      %4287 = vmatprep.subr.bf16.mxu0 0
      %4288 = vmatpush1.bf16.msra.mxu0 %v4268
      %4289 = vmatprep.subr.bf16.mxu0 0
      %4290 = vmatpush1.bf16.msra.mxu0 %v4269
      %4291 = vmatprep.subr.bf16.mxu0 0
      %4292 = vmatpush1.bf16.msra.mxu0 %v4270
      %4293 = vmatprep.subr.bf16.mxu0 0
      %4294 = vmatpush1.bf16.msra.mxu0 %v4271
      %4295 = vmatprep.subr.bf16.mxu0 0
      %4296 = vmatpush1.bf16.msra.mxu0 %v4272
      %4297 = vmatprep.subr.bf16.mxu0 0
      %4298 = vmatpush1.bf16.msra.mxu0 0
      %4299 = vmatprep.subr.bf16.mxu0 0
      %4300 = vmatpush1.bf16.msra.mxu0 0
      %4301 = vmatprep.subr.bf16.mxu0 0
      %4302 = vmatpush1.bf16.msra.mxu0 0
      %4303 = vmatprep.subr.bf16.mxu0 0
      %4304 = vmatpush1.bf16.msra.mxu0 0
      %4305 = vmatprep.subr.bf16.mxu0 0
      %4306 = vmatpush1.bf16.msra.mxu0 0
      %4307 = vmatprep.subr.bf16.mxu0 0
      %4308 = vmatpush1.bf16.msra.mxu0 0
      %4309 = vmatprep.subr.bf16.mxu0 0
      %4310 = vmatpush1.bf16.msra.mxu0 0
      %4311 = vmatprep.subr.bf16.mxu0 0
      %4312 = vmatpush1.bf16.msra.mxu0 0
      %4313 = vmatprep.mubr.bf16.mxu0 0
      %4314 = vmatmul.mubr.bf16.gmra.mrb[0].mxu0 %v4113
      %v4315 = vpop.f32.mrb[0].mxu0
      %v4316 = vadd.f32 0.0, %v4315
      %v4317 = vpop.f32.mrb[0].mxu0
      %v4318 = vpop.f32.mrb[0].mxu0
      %v4319 = vadd.f32 0.0, %v4318
      %v4320 = vpop.f32.mrb[0].mxu0
      %4321 = vmatprep.mubr.bf16.mxu0 0
      %4322 = vmatmul.mubr.bf16.gmra.mrb[0].mxu0 %v4115
      %v4323 = vpop.f32.mrb[0].mxu0
      %v4324 = vadd.f32 0.0, %v4323
      %v4325 = vpop.f32.mrb[0].mxu0
      %v4326 = vpop.f32.mrb[0].mxu0
      %v4327 = vadd.f32 0.0, %v4326
      %v4328 = vpop.f32.mrb[0].mxu0
      %4329 = vmatprep.mubr.bf16.mxu0 0
      %4330 = vmatmul.mubr.bf16.gmra.mrb[0].mxu0 %v4117
      %v4331 = vpop.f32.mrb[0].mxu0
      %v4332 = vadd.f32 0.0, %v4331
      %v4333 = vpop.f32.mrb[0].mxu0
      %v4334 = vpop.f32.mrb[0].mxu0
      %v4335 = vadd.f32 0.0, %v4334
      %v4336 = vpop.f32.mrb[0].mxu0
      %4337 = vmatprep.mubr.bf16.mxu0 0
      %4338 = vmatmul.mubr.bf16.gmra.mrb[0].mxu0 %v4119
      %v4339 = vpop.f32.mrb[0].mxu0
      %v4340 = vadd.f32 0.0, %v4339
      %v4341 = vpop.f32.mrb[0].mxu0
      %v4342 = vpop.f32.mrb[0].mxu0
      %v4343 = vadd.f32 0.0, %v4342
      %v4344 = vpop.f32.mrb[0].mxu0
      %4345 = vmatprep.mubr.bf16.mxu0 0
      %4346 = vmatmul.mubr.bf16.gmra.mrb[0].mxu0 %v4121
      %v4347 = vpop.f32.mrb[0].mxu0
      %v4348 = vadd.f32 0.0, %v4347
      %v4349 = vpop.f32.mrb[0].mxu0
      %v4350 = vpop.f32.mrb[0].mxu0
      %v4351 = vadd.f32 0.0, %v4350
      %v4352 = vpop.f32.mrb[0].mxu0
      %4353 = vmatprep.mubr.bf16.mxu0 0
      %4354 = vmatmul.mubr.bf16.gmra.mrb[0].mxu0 %v4123
      %v4355 = vpop.f32.mrb[0].mxu0
      %v4356 = vadd.f32 0.0, %v4355
      %v4357 = vpop.f32.mrb[0].mxu0
      %v4358 = vpop.f32.mrb[0].mxu0
      %v4359 = vadd.f32 0.0, %v4358
      %v4360 = vpop.f32.mrb[0].mxu0
      %4361 = vmatprep.mubr.bf16.mxu0 0
      %4362 = vmatmul.mubr.bf16.gmra.mrb[0].mxu0 %v4125
      %v4363 = vpop.f32.mrb[0].mxu0
      %v4364 = vadd.f32 0.0, %v4363
      %v4365 = vpop.f32.mrb[0].mxu0
      %v4366 = vpop.f32.mrb[0].mxu0
      %v4367 = vadd.f32 0.0, %v4366
      %v4368 = vpop.f32.mrb[0].mxu0
      %4369 = vmatprep.mubr.bf16.mxu0 0
      %4370 = vmatmul.mubr.bf16.gmra.mrb[0].mxu0 %v4127
      %v4371 = vpop.f32.mrb[0].mxu0
      %v4372 = vadd.f32 0.0, %v4371
      %v4373 = vpop.f32.mrb[0].mxu0
      %v4374 = vpop.f32.mrb[0].mxu0
      %v4375 = vadd.f32 0.0, %v4374
      %v4376 = vpop.f32.mrb[0].mxu0
      %4377 = vmatprep.mubr.bf16.mxu0 0
      %4378 = vmatmul.mubr.bf16.gmra.mrb[0].mxu0 %v4129
      %v4379 = vpop.f32.mrb[0].mxu0
      %v4380 = vadd.f32 0.0, %v4379
      %v4381 = vpop.f32.mrb[0].mxu0
      %v4382 = vpop.f32.mrb[0].mxu0
      %v4383 = vadd.f32 0.0, %v4382
      %v4384 = vpop.f32.mrb[0].mxu0
      %4385 = vmatprep.mubr.bf16.mxu0 0
      %4386 = vmatmul.mubr.bf16.gmra.mrb[0].mxu0 %v4131
      %v4387 = vpop.f32.mrb[0].mxu0
      %v4388 = vadd.f32 0.0, %v4387
      %v4389 = vpop.f32.mrb[0].mxu0
      %v4390 = vpop.f32.mrb[0].mxu0
      %v4391 = vadd.f32 0.0, %v4390
      %v4392 = vpop.f32.mrb[0].mxu0
      %4393 = vmatprep.mubr.bf16.mxu0 0
      %4394 = vmatmul.mubr.bf16.gmra.mrb[0].mxu0 %v4133
      %v4395 = vpop.f32.mrb[0].mxu0
      %v4396 = vadd.f32 0.0, %v4395
      %v4397 = vpop.f32.mrb[0].mxu0
      %v4398 = vpop.f32.mrb[0].mxu0
      %v4399 = vadd.f32 0.0, %v4398
      %v4400 = vpop.f32.mrb[0].mxu0
      %4401 = vmatprep.mubr.bf16.mxu0 0
      %4402 = vmatmul.mubr.bf16.gmra.mrb[0].mxu0 %v4135
      %v4403 = vpop.f32.mrb[0].mxu0
      %v4404 = vadd.f32 0.0, %v4403
      %v4405 = vpop.f32.mrb[0].mxu0
      %v4406 = vpop.f32.mrb[0].mxu0
      %v4407 = vadd.f32 0.0, %v4406
      %v4408 = vpop.f32.mrb[0].mxu0
      %4409 = vmatprep.mubr.bf16.mxu0 0
      %4410 = vmatmul.mubr.bf16.gmra.mrb[0].mxu0 %v4137
      %v4411 = vpop.f32.mrb[0].mxu0
      %v4412 = vadd.f32 0.0, %v4411
      %v4413 = vpop.f32.mrb[0].mxu0
      %v4414 = vpop.f32.mrb[0].mxu0
      %v4415 = vadd.f32 0.0, %v4414
      %v4416 = vpop.f32.mrb[0].mxu0
      %4417 = vmatprep.mubr.bf16.mxu0 0
      %4418 = vmatmul.mubr.bf16.gmra.mrb[0].mxu0 %v4139
      %v4419 = vpop.f32.mrb[0].mxu0
      %v4420 = vadd.f32 0.0, %v4419
      %v4421 = vpop.f32.mrb[0].mxu0
      %v4422 = vpop.f32.mrb[0].mxu0
      %v4423 = vadd.f32 0.0, %v4422
      %v4424 = vpop.f32.mrb[0].mxu0
      %4425 = vmatprep.mubr.bf16.mxu0 0
      %4426 = vmatmul.mubr.bf16.gmra.mrb[0].mxu0 %v4141
      %v4427 = vpop.f32.mrb[0].mxu0
      %v4428 = vadd.f32 0.0, %v4427
      %v4429 = vpop.f32.mrb[0].mxu0
      %v4430 = vpop.f32.mrb[0].mxu0
      %v4431 = vadd.f32 0.0, %v4430
      %v4432 = vpop.f32.mrb[0].mxu0
      %4433 = vmatprep.mubr.bf16.mxu0 0
      %4434 = vmatmul.mubr.bf16.gmra.mrb[0].mxu0 %v4143
      %v4435 = vpop.f32.mrb[0].mxu0
      %v4436 = vadd.f32 0.0, %v4435
      %v4437 = vpop.f32.mrb[0].mxu0
      %v4438 = vpop.f32.mrb[0].mxu0
      %v4439 = vadd.f32 0.0, %v4438
      %v4440 = vpop.f32.mrb[0].mxu0
      %4441 = vmatprep.mubr.bf16.mxu0 0
      %4442 = vmatmul.mubr.bf16.gmra.mrb[0].mxu0 %v4145
      %v4443 = vpop.f32.mrb[0].mxu0
      %v4444 = vadd.f32 0.0, %v4443
      %v4445 = vpop.f32.mrb[0].mxu0
      %v4446 = vpop.f32.mrb[0].mxu0
      %v4447 = vadd.f32 0.0, %v4446
      %v4448 = vpop.f32.mrb[0].mxu0
      %4449 = vmatprep.mubr.bf16.mxu0 0
      %4450 = vmatmul.mubr.bf16.gmra.mrb[0].mxu0 %v4147
      %v4451 = vpop.f32.mrb[0].mxu0
      %v4452 = vadd.f32 0.0, %v4451
      %v4453 = vpop.f32.mrb[0].mxu0
      %v4454 = vpop.f32.mrb[0].mxu0
      %v4455 = vadd.f32 0.0, %v4454
      %v4456 = vpop.f32.mrb[0].mxu0
      %4457 = vmatprep.mubr.bf16.mxu0 0
      %4458 = vmatmul.mubr.bf16.gmra.mrb[0].mxu0 %v4149
      %v4459 = vpop.f32.mrb[0].mxu0
      %v4460 = vadd.f32 0.0, %v4459
      %v4461 = vpop.f32.mrb[0].mxu0
      %v4462 = vpop.f32.mrb[0].mxu0
      %v4463 = vadd.f32 0.0, %v4462
      %v4464 = vpop.f32.mrb[0].mxu0
      %4465 = vmatprep.mubr.bf16.mxu0 0
      %4466 = vmatmul.mubr.bf16.gmra.mrb[0].mxu0 %v4151
      %v4467 = vpop.f32.mrb[0].mxu0
      %v4468 = vadd.f32 0.0, %v4467
      %v4469 = vpop.f32.mrb[0].mxu0
      %v4470 = vpop.f32.mrb[0].mxu0
      %v4471 = vadd.f32 0.0, %v4470
      %v4472 = vpop.f32.mrb[0].mxu0
      %4473 = vmatprep.mubr.bf16.mxu0 0
      %4474 = vmatmul.mubr.bf16.gmra.mrb[0].mxu0 %v4153
      %v4475 = vpop.f32.mrb[0].mxu0
      %v4476 = vadd.f32 0.0, %v4475
      %v4477 = vpop.f32.mrb[0].mxu0
      %v4478 = vpop.f32.mrb[0].mxu0
      %v4479 = vadd.f32 0.0, %v4478
      %v4480 = vpop.f32.mrb[0].mxu0
      %4481 = vmatprep.mubr.bf16.mxu0 0
      %4482 = vmatmul.mubr.bf16.gmra.mrb[0].mxu0 %v4155
      %v4483 = vpop.f32.mrb[0].mxu0
      %v4484 = vadd.f32 0.0, %v4483
      %v4485 = vpop.f32.mrb[0].mxu0
      %v4486 = vpop.f32.mrb[0].mxu0
      %v4487 = vadd.f32 0.0, %v4486
      %v4488 = vpop.f32.mrb[0].mxu0
      %4489 = vmatprep.mubr.bf16.mxu0 0
      %4490 = vmatmul.mubr.bf16.gmra.mrb[0].mxu0 %v4157
      %v4491 = vpop.f32.mrb[0].mxu0
      %v4492 = vadd.f32 0.0, %v4491
      %v4493 = vpop.f32.mrb[0].mxu0
      %v4494 = vpop.f32.mrb[0].mxu0
      %v4495 = vadd.f32 0.0, %v4494
      %v4496 = vpop.f32.mrb[0].mxu0
      %4497 = vmatprep.mubr.bf16.mxu0 0
      %4498 = vmatmul.mubr.bf16.gmra.mrb[0].mxu0 %v4159
      %v4499 = vpop.f32.mrb[0].mxu0
      %v4500 = vadd.f32 0.0, %v4499
      %v4501 = vpop.f32.mrb[0].mxu0
      %v4502 = vpop.f32.mrb[0].mxu0
      %v4503 = vadd.f32 0.0, %v4502
      %v4504 = vpop.f32.mrb[0].mxu0
      %4505 = vmatprep.mubr.bf16.mxu0 0
      %4506 = vmatmul.mubr.bf16.gmra.mrb[0].mxu0 %v4161
      %v4507 = vpop.f32.mrb[0].mxu0
      %v4508 = vadd.f32 0.0, %v4507
      %v4509 = vpop.f32.mrb[0].mxu0
      %v4510 = vpop.f32.mrb[0].mxu0
      %v4511 = vadd.f32 0.0, %v4510
      %v4512 = vpop.f32.mrb[0].mxu0
      %4513 = vmatprep.mubr.bf16.mxu0 0
      %4514 = vmatmul.mubr.bf16.gmra.mrb[0].mxu0 %v4163
      %v4515 = vpop.f32.mrb[0].mxu0
      %v4516 = vadd.f32 0.0, %v4515
      %v4517 = vpop.f32.mrb[0].mxu0
      %v4518 = vpop.f32.mrb[0].mxu0
      %v4519 = vadd.f32 0.0, %v4518
      %v4520 = vpop.f32.mrb[0].mxu0
      %4521 = vmatprep.mubr.bf16.mxu0 0
      %4522 = vmatmul.mubr.bf16.gmra.mrb[0].mxu0 %v4165
      %v4523 = vpop.f32.mrb[0].mxu0
      %v4524 = vadd.f32 0.0, %v4523
      %v4525 = vpop.f32.mrb[0].mxu0
      %v4526 = vpop.f32.mrb[0].mxu0
      %v4527 = vadd.f32 0.0, %v4526
      %v4528 = vpop.f32.mrb[0].mxu0
      %4529 = vmatprep.mubr.bf16.mxu0 0
      %4530 = vmatmul.mubr.bf16.gmra.mrb[0].mxu0 %v4167
      %v4531 = vpop.f32.mrb[0].mxu0
      %v4532 = vadd.f32 0.0, %v4531
      %v4533 = vpop.f32.mrb[0].mxu0
      %v4534 = vpop.f32.mrb[0].mxu0
      %v4535 = vadd.f32 0.0, %v4534
      %v4536 = vpop.f32.mrb[0].mxu0
      %4537 = vmatprep.mubr.bf16.mxu0 0
      %4538 = vmatmul.mubr.bf16.gmra.mrb[0].mxu0 %v4169
      %v4539 = vpop.f32.mrb[0].mxu0
      %v4540 = vadd.f32 0.0, %v4539
      %v4541 = vpop.f32.mrb[0].mxu0
      %v4542 = vpop.f32.mrb[0].mxu0
      %v4543 = vadd.f32 0.0, %v4542
      %v4544 = vpop.f32.mrb[0].mxu0
      %4545 = vmatprep.mubr.bf16.mxu0 0
      %4546 = vmatmul.mubr.bf16.gmra.mrb[0].mxu0 %v4171
      %v4547 = vpop.f32.mrb[0].mxu0
      %v4548 = vadd.f32 0.0, %v4547
      %v4549 = vpop.f32.mrb[0].mxu0
      %v4550 = vpop.f32.mrb[0].mxu0
      %v4551 = vadd.f32 0.0, %v4550
      %v4552 = vpop.f32.mrb[0].mxu0
      %4553 = vmatprep.mubr.bf16.mxu0 0
      %4554 = vmatmul.mubr.bf16.gmra.mrb[0].mxu0 %v4173
      %v4555 = vpop.f32.mrb[0].mxu0
      %v4556 = vadd.f32 0.0, %v4555
      %v4557 = vpop.f32.mrb[0].mxu0
      %v4558 = vpop.f32.mrb[0].mxu0
      %v4559 = vadd.f32 0.0, %v4558
      %v4560 = vpop.f32.mrb[0].mxu0
      %4561 = vmatprep.mubr.bf16.mxu0 0
      %4562 = vmatmul.mubr.bf16.gmra.mrb[0].mxu0 %v4175
      %v4563 = vpop.f32.mrb[0].mxu0
      %v4564 = vadd.f32 0.0, %v4563
      %v4565 = vpop.f32.mrb[0].mxu0
      %v4566 = vpop.f32.mrb[0].mxu0
      %v4567 = vadd.f32 0.0, %v4566
      %v4568 = vpop.f32.mrb[0].mxu0
      %4569 = vmatprep.mubr.bf16.mxu0 0
      %4570 = vmatmul.mubr.bf16.gmra.mrb[0].mxu0 %v4177
      %v4571 = vpop.f32.mrb[0].mxu0
      %v4572 = vadd.f32 0.0, %v4571
      %v4573 = vpop.f32.mrb[0].mxu0
      %v4574 = vpop.f32.mrb[0].mxu0
      %v4575 = vadd.f32 0.0, %v4574
      %v4576 = vpop.f32.mrb[0].mxu0
      %4577 = vmatprep.mubr.bf16.mxu0 0
      %4578 = vmatmul.mubr.bf16.gmra.mrb[0].mxu0 %v4179
      %v4579 = vpop.f32.mrb[0].mxu0
      %v4580 = vadd.f32 0.0, %v4579
      %v4581 = vpop.f32.mrb[0].mxu0
      %v4582 = vpop.f32.mrb[0].mxu0
      %v4583 = vadd.f32 0.0, %v4582
      %v4584 = vpop.f32.mrb[0].mxu0
      %4585 = vmatprep.mubr.bf16.mxu0 0
      %4586 = vmatmul.mubr.bf16.gmra.mrb[0].mxu0 %v4181
      %v4587 = vpop.f32.mrb[0].mxu0
      %v4588 = vadd.f32 0.0, %v4587
      %v4589 = vpop.f32.mrb[0].mxu0
      %v4590 = vpop.f32.mrb[0].mxu0
      %v4591 = vadd.f32 0.0, %v4590
      %v4592 = vpop.f32.mrb[0].mxu0
      %4593 = vmatprep.mubr.bf16.mxu0 0
      %4594 = vmatmul.mubr.bf16.gmra.mrb[0].mxu0 %v4183
      %v4595 = vpop.f32.mrb[0].mxu0
      %v4596 = vadd.f32 0.0, %v4595
      %v4597 = vpop.f32.mrb[0].mxu0
      %v4598 = vpop.f32.mrb[0].mxu0
      %v4599 = vadd.f32 0.0, %v4598
      %v4600 = vpop.f32.mrb[0].mxu0
      %4601 = vmatprep.mubr.bf16.mxu0 0
      %4602 = vmatmul.mubr.bf16.gmra.mrb[0].mxu0 %v4185
      %v4603 = vpop.f32.mrb[0].mxu0
      %v4604 = vadd.f32 0.0, %v4603
      %v4605 = vpop.f32.mrb[0].mxu0
      %v4606 = vpop.f32.mrb[0].mxu0
      %v4607 = vadd.f32 0.0, %v4606
      %v4608 = vpop.f32.mrb[0].mxu0
      %4609 = vmatprep.mubr.bf16.mxu0 0
      %4610 = vmatmul.mubr.bf16.gmra.mrb[0].mxu0 %v4187
      %v4611 = vpop.f32.mrb[0].mxu0
      %v4612 = vadd.f32 0.0, %v4611
      %v4613 = vpop.f32.mrb[0].mxu0
      %v4614 = vpop.f32.mrb[0].mxu0
      %v4615 = vadd.f32 0.0, %v4614
      %v4616 = vpop.f32.mrb[0].mxu0
      %4617 = vmatprep.mubr.bf16.mxu0 0
      %4618 = vmatmul.mubr.bf16.gmra.mrb[0].mxu0 %v4189
      %v4619 = vpop.f32.mrb[0].mxu0
      %v4620 = vadd.f32 0.0, %v4619
      %v4621 = vpop.f32.mrb[0].mxu0
      %v4622 = vpop.f32.mrb[0].mxu0
      %v4623 = vadd.f32 0.0, %v4622
      %v4624 = vpop.f32.mrb[0].mxu0
      %4625 = vmatprep.mubr.bf16.mxu0 0
      %4626 = vmatmul.mubr.bf16.gmra.mrb[0].mxu0 %v4191
      %v4627 = vpop.f32.mrb[0].mxu0
      %v4628 = vadd.f32 0.0, %v4627
      %v4629 = vpop.f32.mrb[0].mxu0
      %v4630 = vpop.f32.mrb[0].mxu0
      %v4631 = vadd.f32 0.0, %v4630
      %v4632 = vpop.f32.mrb[0].mxu0
      %4633 = vmatprep.mubr.bf16.mxu0 0
      %4634 = vmatmul.mubr.bf16.gmra.mrb[0].mxu0 %v4190
      %v4635 = vpop.f32.mrb[0].mxu0
      %v4636 = vadd.f32 0.0, %v4635
      %v4637 = vpop.f32.mrb[0].mxu0
      %v4638 = vpop.f32.mrb[0].mxu0
      %v4639 = vpop.f32.mrb[0].mxu0
      %4640 = vdwg.mxu0
      %v4641 = vadd.f32 %v3931, %v4316
      %v4642 = vadd.f32 %v3932, %v4319
      %v4643 = vadd.f32 %v3933, %v4324
      %v4644 = vadd.f32 %v3934, %v4327
      %v4645 = vadd.f32 %v3935, %v4332
      %v4646 = vadd.f32 %v3936, %v4335
      %v4647 = vadd.f32 %v3937, %v4340
      %v4648 = vadd.f32 %v3938, %v4343
      %v4649 = vadd.f32 %v3939, %v4348
      %v4650 = vadd.f32 %v3940, %v4351
      %v4651 = vadd.f32 %v3941, %v4356
      %v4652 = vadd.f32 %v3942, %v4359
      %v4653 = vadd.f32 %v3943, %v4364
      %v4654 = vadd.f32 %v3944, %v4367
      %v4655 = vadd.f32 %v3945, %v4372
      %v4656 = vadd.f32 %v3946, %v4375
      %v4657 = vadd.f32 %v3947, %v4380
      %v4658 = vadd.f32 %v3948, %v4383
      %v4659 = vadd.f32 %v3949, %v4388
      %v4660 = vadd.f32 %v3950, %v4391
      %v4661 = vadd.f32 %v3951, %v4396
      %v4662 = vadd.f32 %v3952, %v4399
      %v4663 = vadd.f32 %v3953, %v4404
      %v4664 = vadd.f32 %v3954, %v4407
      %v4665 = vadd.f32 %v3955, %v4412
      %v4666 = vadd.f32 %v3956, %v4415
      %v4667 = vadd.f32 %v3957, %v4420
      %v4668 = vadd.f32 %v3958, %v4423
      %v4669 = vadd.f32 %v3959, %v4428
      %v4670 = vadd.f32 %v3960, %v4431
      %v4671 = vadd.f32 %v3961, %v4436
      %v4672 = vadd.f32 %v3962, %v4439
      %v4673 = vadd.f32 %v3963, %v4444
      %v4674 = vadd.f32 %v3964, %v4447
      %v4675 = vadd.f32 %v3965, %v4452
      %v4676 = vadd.f32 %v3966, %v4455
      %v4677 = vadd.f32 %v3967, %v4460
      %v4678 = vadd.f32 %v3968, %v4463
      %v4679 = vadd.f32 %v3969, %v4468
      %v4680 = vadd.f32 %v3970, %v4471
      %v4681 = vadd.f32 %v3971, %v4476
      %v4682 = vadd.f32 %v3972, %v4479
      %v4683 = vadd.f32 %v3973, %v4484
      %v4684 = vadd.f32 %v3974, %v4487
      %v4685 = vadd.f32 %v3975, %v4492
      %v4686 = vadd.f32 %v3976, %v4495
      %v4687 = vadd.f32 %v3977, %v4500
      %v4688 = vadd.f32 %v3978, %v4503
      %v4689 = vadd.f32 %v3979, %v4508
      %v4690 = vadd.f32 %v3980, %v4511
      %v4691 = vadd.f32 %v3981, %v4516
      %v4692 = vadd.f32 %v3982, %v4519
      %v4693 = vadd.f32 %v3983, %v4524
      %v4694 = vadd.f32 %v3984, %v4527
      %v4695 = vadd.f32 %v3985, %v4532
      %v4696 = vadd.f32 %v3986, %v4535
      %v4697 = vadd.f32 %v3987, %v4540
      %v4698 = vadd.f32 %v3988, %v4543
      %v4699 = vadd.f32 %v3989, %v4548
      %v4700 = vadd.f32 %v3990, %v4551
      %v4701 = vadd.f32 %v3991, %v4556
      %v4702 = vadd.f32 %v3992, %v4559
      %v4703 = vadd.f32 %v3993, %v4564
      %v4704 = vadd.f32 %v3994, %v4567
      %v4705 = vadd.f32 %v3995, %v4572
      %v4706 = vadd.f32 %v3996, %v4575
      %v4707 = vadd.f32 %v3997, %v4580
      %v4708 = vadd.f32 %v3998, %v4583
      %v4709 = vadd.f32 %v3999, %v4588
      %v4710 = vadd.f32 %v4000, %v4591
      %v4711 = vadd.f32 %v4001, %v4596
      %v4712 = vadd.f32 %v4002, %v4599
      %v4713 = vadd.f32 %v4003, %v4604
      %v4714 = vadd.f32 %v4004, %v4607
      %v4715 = vadd.f32 %v4005, %v4612
      %v4716 = vadd.f32 %v4006, %v4615
      %v4717 = vadd.f32 %v4007, %v4620
      %v4718 = vadd.f32 %v4008, %v4623
      %v4719 = vadd.f32 %v4009, %v4628
      %v4720 = vadd.f32 %v4010, %v4631
      %v4721 = vadd.f32 %v4011, %v4636
      %v4722 = vld [vmem:[#allocation2 + $0x148] sm:$0x3f]
      %s4723 = scalar_lea.vmem %s5, 256
      %v4724 = vld [vmem:[%s4723] sm:$0xf]
      %v4725 = vld [vmem:[%s4723 + $0x4] sm:$0xf]
      %v4726 = vld [vmem:[%s4723 + $0x8] sm:$0xf]
      %v4727 = vld [vmem:[%s4723 + $0xc] sm:$0xf]
      %v4728 = vld [vmem:[%s4723 + $0x10] sm:$0xf]
      %v4729 = vld [vmem:[%s4723 + $0x14] sm:$0xf]
      %v4730 = vld [vmem:[%s4723 + $0x18] sm:$0xf]
      %v4731 = vld [vmem:[%s4723 + $0x1c] sm:$0xf]
      %v4732 = vld [vmem:[%s4723 + $0x20] sm:$0xf]
      %v4733 = vld [vmem:[%s4723 + $0x24] sm:$0xf]
      %v4734 = vld [vmem:[%s4723 + $0x28] sm:$0xf]
      %v4735 = vld [vmem:[%s4723 + $0x2c] sm:$0xf]
      %v4736 = vld [vmem:[%s4723 + $0x30] sm:$0xf]
      %v4737 = vld [vmem:[%s4723 + $0x34] sm:$0xf]
      %v4738 = vld [vmem:[%s4723 + $0x38] sm:$0xf]
      %v4739 = vld [vmem:[%s4723 + $0x3c] sm:$0xf]
      %vm4740 = vsmask.f32 6400
      %v4742 = vshrl.u32 %v4012, 16
      %v4744 = vrot.slane %v4742, 1
      %v4745 = vshll.u32 %v4012, 16
      %v4747 = vrot.slane %v4745, 2
      %v4748 = vor.u32 %v4744, %v4747
      %v4750 = vshrl.u32 %v4013, 16
      %v4752 = vrot.slane %v4750, 1
      %v4753 = vshll.u32 %v4013, 16
      %v4755 = vrot.slane %v4753, 2
      %v4756 = vor.u32 %v4752, %v4755
      %v4757 = vsel %vm4740, %v4748, %v4756
      %v4759 = vshrl.u32 %v4014, 16
      %v4761 = vrot.slane %v4759, 1
      %v4762 = vshll.u32 %v4014, 16
      %v4764 = vrot.slane %v4762, 2
      %v4765 = vor.u32 %v4761, %v4764
      %v4766 = vsel %vm4740, %v4756, %v4765
      %v4768 = vshrl.u32 %v4015, 16
      %v4770 = vrot.slane %v4768, 1
      %v4771 = vshll.u32 %v4015, 16
      %v4773 = vrot.slane %v4771, 2
      %v4774 = vor.u32 %v4770, %v4773
      %v4775 = vsel %vm4740, %v4765, %v4774
      %v4777 = vshrl.u32 %v4016, 16
      %v4779 = vrot.slane %v4777, 1
      %v4780 = vshll.u32 %v4016, 16
      %v4782 = vrot.slane %v4780, 2
      %v4783 = vor.u32 %v4779, %v4782
      %v4784 = vsel %vm4740, %v4774, %v4783
      %v4786 = vshrl.u32 %v4017, 16
      %v4788 = vrot.slane %v4786, 1
      %v4789 = vshll.u32 %v4017, 16
      %v4791 = vrot.slane %v4789, 2
      %v4792 = vor.u32 %v4788, %v4791
      %v4793 = vsel %vm4740, %v4783, %v4792
      %v4795 = vshrl.u32 %v4018, 16
      %v4797 = vrot.slane %v4795, 1
      %v4798 = vshll.u32 %v4018, 16
      %v4800 = vrot.slane %v4798, 2
      %v4801 = vor.u32 %v4797, %v4800
      %v4802 = vsel %vm4740, %v4792, %v4801
      %v4804 = vshrl.u32 %v4019, 16
      %v4806 = vrot.slane %v4804, 1
      %v4807 = vshll.u32 %v4019, 16
      %v4809 = vrot.slane %v4807, 2
      %v4810 = vor.u32 %v4806, %v4809
      %v4811 = vsel %vm4740, %v4801, %v4810
      %v4813 = vshrl.u32 %v4020, 16
      %v4815 = vrot.slane %v4813, 1
      %v4816 = vshll.u32 %v4020, 16
      %v4818 = vrot.slane %v4816, 2
      %v4819 = vor.u32 %v4815, %v4818
      %v4820 = vsel %vm4740, %v4810, %v4819
      %v4822 = vshrl.u32 %v4021, 16
      %v4824 = vrot.slane %v4822, 1
      %v4825 = vshll.u32 %v4021, 16
      %v4827 = vrot.slane %v4825, 2
      %v4828 = vor.u32 %v4824, %v4827
      %v4829 = vsel %vm4740, %v4819, %v4828
      %v4831 = vshrl.u32 %v4022, 16
      %v4833 = vrot.slane %v4831, 1
      %v4834 = vshll.u32 %v4022, 16
      %v4836 = vrot.slane %v4834, 2
      %v4837 = vor.u32 %v4833, %v4836
      %v4838 = vsel %vm4740, %v4828, %v4837
      %v4840 = vshrl.u32 %v4023, 16
      %v4842 = vrot.slane %v4840, 1
      %v4843 = vshll.u32 %v4023, 16
      %v4845 = vrot.slane %v4843, 2
      %v4846 = vor.u32 %v4842, %v4845
      %v4847 = vsel %vm4740, %v4837, %v4846
      %v4849 = vshrl.u32 %v4024, 16
      %v4851 = vrot.slane %v4849, 1
      %v4852 = vshll.u32 %v4024, 16
      %v4854 = vrot.slane %v4852, 2
      %v4855 = vor.u32 %v4851, %v4854
      %v4856 = vsel %vm4740, %v4846, %v4855
      %v4858 = vshrl.u32 %v4025, 16
      %v4860 = vrot.slane %v4858, 1
      %v4861 = vshll.u32 %v4025, 16
      %v4863 = vrot.slane %v4861, 2
      %v4864 = vor.u32 %v4860, %v4863
      %v4865 = vsel %vm4740, %v4855, %v4864
      %v4867 = vshrl.u32 %v4026, 16
      %v4869 = vrot.slane %v4867, 1
      %v4870 = vshll.u32 %v4026, 16
      %v4872 = vrot.slane %v4870, 2
      %v4873 = vor.u32 %v4869, %v4872
      %v4874 = vsel %vm4740, %v4864, %v4873
      %v4876 = vshrl.u32 %v4027, 16
      %v4878 = vrot.slane %v4876, 1
      %v4879 = vshll.u32 %v4027, 16
      %v4881 = vrot.slane %v4879, 2
      %v4882 = vor.u32 %v4878, %v4881
      %v4883 = vsel %vm4740, %v4873, %v4882
      %v4885 = vshrl.u32 %v4028, 16
      %v4887 = vrot.slane %v4885, 1
      %v4888 = vshll.u32 %v4028, 16
      %v4890 = vrot.slane %v4888, 2
      %v4891 = vor.u32 %v4887, %v4890
      %v4892 = vsel %vm4740, %v4882, %v4891
      %v4894 = vshrl.u32 %v4029, 16
      %v4896 = vrot.slane %v4894, 1
      %v4897 = vshll.u32 %v4029, 16
      %v4899 = vrot.slane %v4897, 2
      %v4900 = vor.u32 %v4896, %v4899
      %v4901 = vsel %vm4740, %v4891, %v4900
      %v4903 = vshrl.u32 %v4030, 16
      %v4905 = vrot.slane %v4903, 1
      %v4906 = vshll.u32 %v4030, 16
      %v4908 = vrot.slane %v4906, 2
      %v4909 = vor.u32 %v4905, %v4908
      %v4910 = vsel %vm4740, %v4900, %v4909
      %v4912 = vshrl.u32 %v4031, 16
      %v4914 = vrot.slane %v4912, 1
      %v4915 = vshll.u32 %v4031, 16
      %v4917 = vrot.slane %v4915, 2
      %v4918 = vor.u32 %v4914, %v4917
      %v4919 = vsel %vm4740, %v4909, %v4918
      %v4921 = vshrl.u32 %v4032, 16
      %v4923 = vrot.slane %v4921, 1
      %v4924 = vshll.u32 %v4032, 16
      %v4926 = vrot.slane %v4924, 2
      %v4927 = vor.u32 %v4923, %v4926
      %v4928 = vsel %vm4740, %v4918, %v4927
      %v4930 = vshrl.u32 %v4033, 16
      %v4932 = vrot.slane %v4930, 1
      %v4933 = vshll.u32 %v4033, 16
      %v4935 = vrot.slane %v4933, 2
      %v4936 = vor.u32 %v4932, %v4935
      %v4937 = vsel %vm4740, %v4927, %v4936
      %v4939 = vshrl.u32 %v4034, 16
      %v4941 = vrot.slane %v4939, 1
      %v4942 = vshll.u32 %v4034, 16
      %v4944 = vrot.slane %v4942, 2
      %v4945 = vor.u32 %v4941, %v4944
      %v4946 = vsel %vm4740, %v4936, %v4945
      %v4948 = vshrl.u32 %v4035, 16
      %v4950 = vrot.slane %v4948, 1
      %v4951 = vshll.u32 %v4035, 16
      %v4953 = vrot.slane %v4951, 2
      %v4954 = vor.u32 %v4950, %v4953
      %v4955 = vsel %vm4740, %v4945, %v4954
      %v4957 = vshrl.u32 %v4036, 16
      %v4959 = vrot.slane %v4957, 1
      %v4960 = vshll.u32 %v4036, 16
      %v4962 = vrot.slane %v4960, 2
      %v4963 = vor.u32 %v4959, %v4962
      %v4964 = vsel %vm4740, %v4954, %v4963
      %v4966 = vshrl.u32 %v4037, 16
      %v4968 = vrot.slane %v4966, 1
      %v4969 = vshll.u32 %v4037, 16
      %v4971 = vrot.slane %v4969, 2
      %v4972 = vor.u32 %v4968, %v4971
      %v4973 = vsel %vm4740, %v4963, %v4972
      %v4975 = vshrl.u32 %v4038, 16
      %v4977 = vrot.slane %v4975, 1
      %v4978 = vshll.u32 %v4038, 16
      %v4980 = vrot.slane %v4978, 2
      %v4981 = vor.u32 %v4977, %v4980
      %v4982 = vsel %vm4740, %v4972, %v4981
      %v4984 = vshrl.u32 %v4039, 16
      %v4986 = vrot.slane %v4984, 1
      %v4987 = vshll.u32 %v4039, 16
      %v4989 = vrot.slane %v4987, 2
      %v4990 = vor.u32 %v4986, %v4989
      %v4991 = vsel %vm4740, %v4981, %v4990
      %v4993 = vshrl.u32 %v4040, 16
      %v4995 = vrot.slane %v4993, 1
      %v4996 = vshll.u32 %v4040, 16
      %v4998 = vrot.slane %v4996, 2
      %v4999 = vor.u32 %v4995, %v4998
      %v5000 = vsel %vm4740, %v4990, %v4999
      %v5002 = vshrl.u32 %v4041, 16
      %v5004 = vrot.slane %v5002, 1
      %v5005 = vshll.u32 %v4041, 16
      %v5007 = vrot.slane %v5005, 2
      %v5008 = vor.u32 %v5004, %v5007
      %v5009 = vsel %vm4740, %v4999, %v5008
      %v5011 = vshrl.u32 %v4042, 16
      %v5013 = vrot.slane %v5011, 1
      %v5014 = vshll.u32 %v4042, 16
      %v5016 = vrot.slane %v5014, 2
      %v5017 = vor.u32 %v5013, %v5016
      %v5018 = vsel %vm4740, %v5008, %v5017
      %v5020 = vshrl.u32 %v4043, 16
      %v5022 = vrot.slane %v5020, 1
      %v5023 = vshll.u32 %v4043, 16
      %v5025 = vrot.slane %v5023, 2
      %v5026 = vor.u32 %v5022, %v5025
      %v5027 = vsel %vm4740, %v5017, %v5026
      %v5029 = vshrl.u32 %v4044, 16
      %v5031 = vrot.slane %v5029, 1
      %v5032 = vshll.u32 %v4044, 16
      %v5034 = vrot.slane %v5032, 2
      %v5035 = vor.u32 %v5031, %v5034
      %v5036 = vsel %vm4740, %v5026, %v5035
      %v5038 = vshrl.u32 %v4045, 16
      %v5040 = vrot.slane %v5038, 1
      %v5041 = vshll.u32 %v4045, 16
      %v5043 = vrot.slane %v5041, 2
      %v5044 = vor.u32 %v5040, %v5043
      %v5045 = vsel %vm4740, %v5035, %v5044
      %v5047 = vshrl.u32 %v4046, 16
      %v5049 = vrot.slane %v5047, 1
      %v5050 = vshll.u32 %v4046, 16
      %v5052 = vrot.slane %v5050, 2
      %v5053 = vor.u32 %v5049, %v5052
      %v5054 = vsel %vm4740, %v5044, %v5053
      %v5056 = vshrl.u32 %v4047, 16
      %v5058 = vrot.slane %v5056, 1
      %v5059 = vshll.u32 %v4047, 16
      %v5061 = vrot.slane %v5059, 2
      %v5062 = vor.u32 %v5058, %v5061
      %v5063 = vsel %vm4740, %v5053, %v5062
      %v5065 = vshrl.u32 %v4048, 16
      %v5067 = vrot.slane %v5065, 1
      %v5068 = vshll.u32 %v4048, 16
      %v5070 = vrot.slane %v5068, 2
      %v5071 = vor.u32 %v5067, %v5070
      %v5072 = vsel %vm4740, %v5062, %v5071
      %v5074 = vshrl.u32 %v4049, 16
      %v5076 = vrot.slane %v5074, 1
      %v5077 = vshll.u32 %v4049, 16
      %v5079 = vrot.slane %v5077, 2
      %v5080 = vor.u32 %v5076, %v5079
      %v5081 = vsel %vm4740, %v5071, %v5080
      %v5083 = vshrl.u32 %v4050, 16
      %v5085 = vrot.slane %v5083, 1
      %v5086 = vshll.u32 %v4050, 16
      %v5088 = vrot.slane %v5086, 2
      %v5089 = vor.u32 %v5085, %v5088
      %v5090 = vsel %vm4740, %v5080, %v5089
      %v5092 = vshrl.u32 %v4051, 16
      %v5094 = vrot.slane %v5092, 1
      %v5095 = vshll.u32 %v4051, 16
      %v5097 = vrot.slane %v5095, 2
      %v5098 = vor.u32 %v5094, %v5097
      %v5099 = vsel %vm4740, %v5089, %v5098
      %v5101 = vshrl.u32 %v4722, 16
      %v5103 = vrot.slane %v5101, 1
      %v5104 = vshll.u32 %v4722, 16
      %v5106 = vrot.slane %v5104, 2
      %v5107 = vor.u32 %v5103, %v5106
      %v5108 = vsel %vm4740, %v5098, %v5107
      %v5166 = vunpack.c.l.b16 %v4724
      %v5167 = vunpack.c.l.b16 %v4725
      %v5168 = vunpack.c.l.b16 %v4726
      %v5169 = vunpack.c.l.b16 %v4727
      %v5170 = vunpack.c.l.b16 %v4728
      %v5171 = vunpack.c.l.b16 %v4729
      %v5172 = vunpack.c.l.b16 %v4730
      %v5173 = vunpack.c.l.b16 %v4731
      %v5174 = vunpack.c.l.b16 %v4732
      %v5175 = vunpack.c.l.b16 %v4733
      %v5176 = vunpack.c.l.b16 %v4734
      %v5177 = vunpack.c.l.b16 %v4735
      %v5178 = vunpack.c.l.b16 %v4736
      %v5179 = vunpack.c.l.b16 %v4737
      %v5180 = vunpack.c.l.b16 %v4738
      %v5181 = vunpack.c.l.b16 %v4739
      %v5182 = vpack.c.b16 %v5167, %v5166
      %v5183 = vpack.c.b16 %v5169, %v5168
      %v5184 = vpack.c.b16 %v5171, %v5170
      %v5185 = vpack.c.b16 %v5173, %v5172
      %v5186 = vpack.c.b16 %v5175, %v5174
      %v5187 = vpack.c.b16 %v5177, %v5176
      %v5188 = vpack.c.b16 %v5179, %v5178
      %v5189 = vpack.c.b16 %v5181, %v5180
      %5198 = vmatprep.subr.bf16.mxu0 0
      %5199 = vmatpush1.bf16.msra.mxu0 %v5182
      %5200 = vmatprep.subr.bf16.mxu0 0
      %5201 = vmatpush1.bf16.msra.mxu0 %v5183
      %5202 = vmatprep.subr.bf16.mxu0 0
      %5203 = vmatpush1.bf16.msra.mxu0 %v5184
      %5204 = vmatprep.subr.bf16.mxu0 0
      %5205 = vmatpush1.bf16.msra.mxu0 %v5185
      %5206 = vmatprep.subr.bf16.mxu0 0
      %5207 = vmatpush1.bf16.msra.mxu0 %v5186
      %5208 = vmatprep.subr.bf16.mxu0 0
      %5209 = vmatpush1.bf16.msra.mxu0 %v5187
      %5210 = vmatprep.subr.bf16.mxu0 0
      %5211 = vmatpush1.bf16.msra.mxu0 %v5188
      %5212 = vmatprep.subr.bf16.mxu0 0
      %5213 = vmatpush1.bf16.msra.mxu0 %v5189
      %5214 = vmatprep.subr.bf16.mxu0 0
      %5215 = vmatpush1.bf16.msra.mxu0 0
      %5216 = vmatprep.subr.bf16.mxu0 0
      %5217 = vmatpush1.bf16.msra.mxu0 0
      %5218 = vmatprep.subr.bf16.mxu0 0
      %5219 = vmatpush1.bf16.msra.mxu0 0
      %5220 = vmatprep.subr.bf16.mxu0 0
      %5221 = vmatpush1.bf16.msra.mxu0 0
      %5222 = vmatprep.subr.bf16.mxu0 0
      %5223 = vmatpush1.bf16.msra.mxu0 0
      %5224 = vmatprep.subr.bf16.mxu0 0
      %5225 = vmatpush1.bf16.msra.mxu0 0
      %5226 = vmatprep.subr.bf16.mxu0 0
      %5227 = vmatpush1.bf16.msra.mxu0 0
      %5228 = vmatprep.subr.bf16.mxu0 0
      %5229 = vmatpush1.bf16.msra.mxu0 0
      %5230 = vmatprep.mubr.bf16.mxu0 0
      %5231 = vmatmul.mubr.bf16.gmra.mrb[0].mxu0 %v4757
      %v5232 = vpop.f32.mrb[0].mxu0
      %v5233 = vadd.f32 0.0, %v5232
      %v5234 = vpop.f32.mrb[0].mxu0
      %v5235 = vpop.f32.mrb[0].mxu0
      %v5236 = vadd.f32 0.0, %v5235
      %v5237 = vpop.f32.mrb[0].mxu0
      %5238 = vmatprep.mubr.bf16.mxu0 0
      %5239 = vmatmul.mubr.bf16.gmra.mrb[0].mxu0 %v4766
      %v5240 = vpop.f32.mrb[0].mxu0
      %v5241 = vadd.f32 0.0, %v5240
      %v5242 = vpop.f32.mrb[0].mxu0
      %v5243 = vpop.f32.mrb[0].mxu0
      %v5244 = vadd.f32 0.0, %v5243
      %v5245 = vpop.f32.mrb[0].mxu0
      %5246 = vmatprep.mubr.bf16.mxu0 0
      %5247 = vmatmul.mubr.bf16.gmra.mrb[0].mxu0 %v4775
      %v5248 = vpop.f32.mrb[0].mxu0
      %v5249 = vadd.f32 0.0, %v5248
      %v5250 = vpop.f32.mrb[0].mxu0
      %v5251 = vpop.f32.mrb[0].mxu0
      %v5252 = vadd.f32 0.0, %v5251
      %v5253 = vpop.f32.mrb[0].mxu0
      %5254 = vmatprep.mubr.bf16.mxu0 0
      %5255 = vmatmul.mubr.bf16.gmra.mrb[0].mxu0 %v4784
      %v5256 = vpop.f32.mrb[0].mxu0
      %v5257 = vadd.f32 0.0, %v5256
      %v5258 = vpop.f32.mrb[0].mxu0
      %v5259 = vpop.f32.mrb[0].mxu0
      %v5260 = vadd.f32 0.0, %v5259
      %v5261 = vpop.f32.mrb[0].mxu0
      %5262 = vmatprep.mubr.bf16.mxu0 0
      %5263 = vmatmul.mubr.bf16.gmra.mrb[0].mxu0 %v4793
      %v5264 = vpop.f32.mrb[0].mxu0
      %v5265 = vadd.f32 0.0, %v5264
      %v5266 = vpop.f32.mrb[0].mxu0
      %v5267 = vpop.f32.mrb[0].mxu0
      %v5268 = vadd.f32 0.0, %v5267
      %v5269 = vpop.f32.mrb[0].mxu0
      %5270 = vmatprep.mubr.bf16.mxu0 0
      %5271 = vmatmul.mubr.bf16.gmra.mrb[0].mxu0 %v4802
      %v5272 = vpop.f32.mrb[0].mxu0
      %v5273 = vadd.f32 0.0, %v5272
      %v5274 = vpop.f32.mrb[0].mxu0
      %v5275 = vpop.f32.mrb[0].mxu0
      %v5276 = vadd.f32 0.0, %v5275
      %v5277 = vpop.f32.mrb[0].mxu0
      %5278 = vmatprep.mubr.bf16.mxu0 0
      %5279 = vmatmul.mubr.bf16.gmra.mrb[0].mxu0 %v4811
      %v5280 = vpop.f32.mrb[0].mxu0
      %v5281 = vadd.f32 0.0, %v5280
      %v5282 = vpop.f32.mrb[0].mxu0
      %v5283 = vpop.f32.mrb[0].mxu0
      %v5284 = vadd.f32 0.0, %v5283
      %v5285 = vpop.f32.mrb[0].mxu0
      %5286 = vmatprep.mubr.bf16.mxu0 0
      %5287 = vmatmul.mubr.bf16.gmra.mrb[0].mxu0 %v4820
      %v5288 = vpop.f32.mrb[0].mxu0
      %v5289 = vadd.f32 0.0, %v5288
      %v5290 = vpop.f32.mrb[0].mxu0
      %v5291 = vpop.f32.mrb[0].mxu0
      %v5292 = vadd.f32 0.0, %v5291
      %v5293 = vpop.f32.mrb[0].mxu0
      %5294 = vmatprep.mubr.bf16.mxu0 0
      %5295 = vmatmul.mubr.bf16.gmra.mrb[0].mxu0 %v4829
      %v5296 = vpop.f32.mrb[0].mxu0
      %v5297 = vadd.f32 0.0, %v5296
      %v5298 = vpop.f32.mrb[0].mxu0
      %v5299 = vpop.f32.mrb[0].mxu0
      %v5300 = vadd.f32 0.0, %v5299
      %v5301 = vpop.f32.mrb[0].mxu0
      %5302 = vmatprep.mubr.bf16.mxu0 0
      %5303 = vmatmul.mubr.bf16.gmra.mrb[0].mxu0 %v4838
      %v5304 = vpop.f32.mrb[0].mxu0
      %v5305 = vadd.f32 0.0, %v5304
      %v5306 = vpop.f32.mrb[0].mxu0
      %v5307 = vpop.f32.mrb[0].mxu0
      %v5308 = vadd.f32 0.0, %v5307
      %v5309 = vpop.f32.mrb[0].mxu0
      %5310 = vmatprep.mubr.bf16.mxu0 0
      %5311 = vmatmul.mubr.bf16.gmra.mrb[0].mxu0 %v4847
      %v5312 = vpop.f32.mrb[0].mxu0
      %v5313 = vadd.f32 0.0, %v5312
      %v5314 = vpop.f32.mrb[0].mxu0
      %v5315 = vpop.f32.mrb[0].mxu0
      %v5316 = vadd.f32 0.0, %v5315
      %v5317 = vpop.f32.mrb[0].mxu0
      %5318 = vmatprep.mubr.bf16.mxu0 0
      %5319 = vmatmul.mubr.bf16.gmra.mrb[0].mxu0 %v4856
      %v5320 = vpop.f32.mrb[0].mxu0
      %v5321 = vadd.f32 0.0, %v5320
      %v5322 = vpop.f32.mrb[0].mxu0
      %v5323 = vpop.f32.mrb[0].mxu0
      %v5324 = vadd.f32 0.0, %v5323
      %v5325 = vpop.f32.mrb[0].mxu0
      %5326 = vmatprep.mubr.bf16.mxu0 0
      %5327 = vmatmul.mubr.bf16.gmra.mrb[0].mxu0 %v4865
      %v5328 = vpop.f32.mrb[0].mxu0
      %v5329 = vadd.f32 0.0, %v5328
      %v5330 = vpop.f32.mrb[0].mxu0
      %v5331 = vpop.f32.mrb[0].mxu0
      %v5332 = vadd.f32 0.0, %v5331
      %v5333 = vpop.f32.mrb[0].mxu0
      %5334 = vmatprep.mubr.bf16.mxu0 0
      %5335 = vmatmul.mubr.bf16.gmra.mrb[0].mxu0 %v4874
      %v5336 = vpop.f32.mrb[0].mxu0
      %v5337 = vadd.f32 0.0, %v5336
      %v5338 = vpop.f32.mrb[0].mxu0
      %v5339 = vpop.f32.mrb[0].mxu0
      %v5340 = vadd.f32 0.0, %v5339
      %v5341 = vpop.f32.mrb[0].mxu0
      %5342 = vmatprep.mubr.bf16.mxu0 0
      %5343 = vmatmul.mubr.bf16.gmra.mrb[0].mxu0 %v4883
      %v5344 = vpop.f32.mrb[0].mxu0
      %v5345 = vadd.f32 0.0, %v5344
      %v5346 = vpop.f32.mrb[0].mxu0
      %v5347 = vpop.f32.mrb[0].mxu0
      %v5348 = vadd.f32 0.0, %v5347
      %v5349 = vpop.f32.mrb[0].mxu0
      %5350 = vmatprep.mubr.bf16.mxu0 0
      %5351 = vmatmul.mubr.bf16.gmra.mrb[0].mxu0 %v4892
      %v5352 = vpop.f32.mrb[0].mxu0
      %v5353 = vadd.f32 0.0, %v5352
      %v5354 = vpop.f32.mrb[0].mxu0
      %v5355 = vpop.f32.mrb[0].mxu0
      %v5356 = vadd.f32 0.0, %v5355
      %v5357 = vpop.f32.mrb[0].mxu0
      %5358 = vmatprep.mubr.bf16.mxu0 0
      %5359 = vmatmul.mubr.bf16.gmra.mrb[0].mxu0 %v4901
      %v5360 = vpop.f32.mrb[0].mxu0
      %v5361 = vadd.f32 0.0, %v5360
      %v5362 = vpop.f32.mrb[0].mxu0
      %v5363 = vpop.f32.mrb[0].mxu0
      %v5364 = vadd.f32 0.0, %v5363
      %v5365 = vpop.f32.mrb[0].mxu0
      %5366 = vmatprep.mubr.bf16.mxu0 0
      %5367 = vmatmul.mubr.bf16.gmra.mrb[0].mxu0 %v4910
      %v5368 = vpop.f32.mrb[0].mxu0
      %v5369 = vadd.f32 0.0, %v5368
      %v5370 = vpop.f32.mrb[0].mxu0
      %v5371 = vpop.f32.mrb[0].mxu0
      %v5372 = vadd.f32 0.0, %v5371
      %v5373 = vpop.f32.mrb[0].mxu0
      %5374 = vmatprep.mubr.bf16.mxu0 0
      %5375 = vmatmul.mubr.bf16.gmra.mrb[0].mxu0 %v4919
      %v5376 = vpop.f32.mrb[0].mxu0
      %v5377 = vadd.f32 0.0, %v5376
      %v5378 = vpop.f32.mrb[0].mxu0
      %v5379 = vpop.f32.mrb[0].mxu0
      %v5380 = vadd.f32 0.0, %v5379
      %v5381 = vpop.f32.mrb[0].mxu0
      %5382 = vmatprep.mubr.bf16.mxu0 0
      %5383 = vmatmul.mubr.bf16.gmra.mrb[0].mxu0 %v4928
      %v5384 = vpop.f32.mrb[0].mxu0
      %v5385 = vadd.f32 0.0, %v5384
      %v5386 = vpop.f32.mrb[0].mxu0
      %v5387 = vpop.f32.mrb[0].mxu0
      %v5388 = vadd.f32 0.0, %v5387
      %v5389 = vpop.f32.mrb[0].mxu0
      %5390 = vmatprep.mubr.bf16.mxu0 0
      %5391 = vmatmul.mubr.bf16.gmra.mrb[0].mxu0 %v4937
      %v5392 = vpop.f32.mrb[0].mxu0
      %v5393 = vadd.f32 0.0, %v5392
      %v5394 = vpop.f32.mrb[0].mxu0
      %v5395 = vpop.f32.mrb[0].mxu0
      %v5396 = vadd.f32 0.0, %v5395
      %v5397 = vpop.f32.mrb[0].mxu0
      %5398 = vmatprep.mubr.bf16.mxu0 0
      %5399 = vmatmul.mubr.bf16.gmra.mrb[0].mxu0 %v4946
      %v5400 = vpop.f32.mrb[0].mxu0
      %v5401 = vadd.f32 0.0, %v5400
      %v5402 = vpop.f32.mrb[0].mxu0
      %v5403 = vpop.f32.mrb[0].mxu0
      %v5404 = vadd.f32 0.0, %v5403
      %v5405 = vpop.f32.mrb[0].mxu0
      %5406 = vmatprep.mubr.bf16.mxu0 0
      %5407 = vmatmul.mubr.bf16.gmra.mrb[0].mxu0 %v4955
      %v5408 = vpop.f32.mrb[0].mxu0
      %v5409 = vadd.f32 0.0, %v5408
      %v5410 = vpop.f32.mrb[0].mxu0
      %v5411 = vpop.f32.mrb[0].mxu0
      %v5412 = vadd.f32 0.0, %v5411
      %v5413 = vpop.f32.mrb[0].mxu0
      %5414 = vmatprep.mubr.bf16.mxu0 0
      %5415 = vmatmul.mubr.bf16.gmra.mrb[0].mxu0 %v4964
      %v5416 = vpop.f32.mrb[0].mxu0
      %v5417 = vadd.f32 0.0, %v5416
      %v5418 = vpop.f32.mrb[0].mxu0
      %v5419 = vpop.f32.mrb[0].mxu0
      %v5420 = vadd.f32 0.0, %v5419
      %v5421 = vpop.f32.mrb[0].mxu0
      %5422 = vmatprep.mubr.bf16.mxu0 0
      %5423 = vmatmul.mubr.bf16.gmra.mrb[0].mxu0 %v4973
      %v5424 = vpop.f32.mrb[0].mxu0
      %v5425 = vadd.f32 0.0, %v5424
      %v5426 = vpop.f32.mrb[0].mxu0
      %v5427 = vpop.f32.mrb[0].mxu0
      %v5428 = vadd.f32 0.0, %v5427
      %v5429 = vpop.f32.mrb[0].mxu0
      %5430 = vmatprep.mubr.bf16.mxu0 0
      %5431 = vmatmul.mubr.bf16.gmra.mrb[0].mxu0 %v4982
      %v5432 = vpop.f32.mrb[0].mxu0
      %v5433 = vadd.f32 0.0, %v5432
      %v5434 = vpop.f32.mrb[0].mxu0
      %v5435 = vpop.f32.mrb[0].mxu0
      %v5436 = vadd.f32 0.0, %v5435
      %v5437 = vpop.f32.mrb[0].mxu0
      %5438 = vmatprep.mubr.bf16.mxu0 0
      %5439 = vmatmul.mubr.bf16.gmra.mrb[0].mxu0 %v4991
      %v5440 = vpop.f32.mrb[0].mxu0
      %v5441 = vadd.f32 0.0, %v5440
      %v5442 = vpop.f32.mrb[0].mxu0
      %v5443 = vpop.f32.mrb[0].mxu0
      %v5444 = vadd.f32 0.0, %v5443
      %v5445 = vpop.f32.mrb[0].mxu0
      %5446 = vmatprep.mubr.bf16.mxu0 0
      %5447 = vmatmul.mubr.bf16.gmra.mrb[0].mxu0 %v5000
      %v5448 = vpop.f32.mrb[0].mxu0
      %v5449 = vadd.f32 0.0, %v5448
      %v5450 = vpop.f32.mrb[0].mxu0
      %v5451 = vpop.f32.mrb[0].mxu0
      %v5452 = vadd.f32 0.0, %v5451
      %v5453 = vpop.f32.mrb[0].mxu0
      %5454 = vmatprep.mubr.bf16.mxu0 0
      %5455 = vmatmul.mubr.bf16.gmra.mrb[0].mxu0 %v5009
      %v5456 = vpop.f32.mrb[0].mxu0
      %v5457 = vadd.f32 0.0, %v5456
      %v5458 = vpop.f32.mrb[0].mxu0
      %v5459 = vpop.f32.mrb[0].mxu0
      %v5460 = vadd.f32 0.0, %v5459
      %v5461 = vpop.f32.mrb[0].mxu0
      %5462 = vmatprep.mubr.bf16.mxu0 0
      %5463 = vmatmul.mubr.bf16.gmra.mrb[0].mxu0 %v5018
      %v5464 = vpop.f32.mrb[0].mxu0
      %v5465 = vadd.f32 0.0, %v5464
      %v5466 = vpop.f32.mrb[0].mxu0
      %v5467 = vpop.f32.mrb[0].mxu0
      %v5468 = vadd.f32 0.0, %v5467
      %v5469 = vpop.f32.mrb[0].mxu0
      %5470 = vmatprep.mubr.bf16.mxu0 0
      %5471 = vmatmul.mubr.bf16.gmra.mrb[0].mxu0 %v5027
      %v5472 = vpop.f32.mrb[0].mxu0
      %v5473 = vadd.f32 0.0, %v5472
      %v5474 = vpop.f32.mrb[0].mxu0
      %v5475 = vpop.f32.mrb[0].mxu0
      %v5476 = vadd.f32 0.0, %v5475
      %v5477 = vpop.f32.mrb[0].mxu0
      %5478 = vmatprep.mubr.bf16.mxu0 0
      %5479 = vmatmul.mubr.bf16.gmra.mrb[0].mxu0 %v5036
      %v5480 = vpop.f32.mrb[0].mxu0
      %v5481 = vadd.f32 0.0, %v5480
      %v5482 = vpop.f32.mrb[0].mxu0
      %v5483 = vpop.f32.mrb[0].mxu0
      %v5484 = vadd.f32 0.0, %v5483
      %v5485 = vpop.f32.mrb[0].mxu0
      %5486 = vmatprep.mubr.bf16.mxu0 0
      %5487 = vmatmul.mubr.bf16.gmra.mrb[0].mxu0 %v5045
      %v5488 = vpop.f32.mrb[0].mxu0
      %v5489 = vadd.f32 0.0, %v5488
      %v5490 = vpop.f32.mrb[0].mxu0
      %v5491 = vpop.f32.mrb[0].mxu0
      %v5492 = vadd.f32 0.0, %v5491
      %v5493 = vpop.f32.mrb[0].mxu0
      %5494 = vmatprep.mubr.bf16.mxu0 0
      %5495 = vmatmul.mubr.bf16.gmra.mrb[0].mxu0 %v5054
      %v5496 = vpop.f32.mrb[0].mxu0
      %v5497 = vadd.f32 0.0, %v5496
      %v5498 = vpop.f32.mrb[0].mxu0
      %v5499 = vpop.f32.mrb[0].mxu0
      %v5500 = vadd.f32 0.0, %v5499
      %v5501 = vpop.f32.mrb[0].mxu0
      %5502 = vmatprep.mubr.bf16.mxu0 0
      %5503 = vmatmul.mubr.bf16.gmra.mrb[0].mxu0 %v5063
      %v5504 = vpop.f32.mrb[0].mxu0
      %v5505 = vadd.f32 0.0, %v5504
      %v5506 = vpop.f32.mrb[0].mxu0
      %v5507 = vpop.f32.mrb[0].mxu0
      %v5508 = vadd.f32 0.0, %v5507
      %v5509 = vpop.f32.mrb[0].mxu0
      %5510 = vmatprep.mubr.bf16.mxu0 0
      %5511 = vmatmul.mubr.bf16.gmra.mrb[0].mxu0 %v5072
      %v5512 = vpop.f32.mrb[0].mxu0
      %v5513 = vadd.f32 0.0, %v5512
      %v5514 = vpop.f32.mrb[0].mxu0
      %v5515 = vpop.f32.mrb[0].mxu0
      %v5516 = vadd.f32 0.0, %v5515
      %v5517 = vpop.f32.mrb[0].mxu0
      %5518 = vmatprep.mubr.bf16.mxu0 0
      %5519 = vmatmul.mubr.bf16.gmra.mrb[0].mxu0 %v5081
      %v5520 = vpop.f32.mrb[0].mxu0
      %v5521 = vadd.f32 0.0, %v5520
      %v5522 = vpop.f32.mrb[0].mxu0
      %v5523 = vpop.f32.mrb[0].mxu0
      %v5524 = vadd.f32 0.0, %v5523
      %v5525 = vpop.f32.mrb[0].mxu0
      %5526 = vmatprep.mubr.bf16.mxu0 0
      %5527 = vmatmul.mubr.bf16.gmra.mrb[0].mxu0 %v5090
      %v5528 = vpop.f32.mrb[0].mxu0
      %v5529 = vadd.f32 0.0, %v5528
      %v5530 = vpop.f32.mrb[0].mxu0
      %v5531 = vpop.f32.mrb[0].mxu0
      %v5532 = vadd.f32 0.0, %v5531
      %v5533 = vpop.f32.mrb[0].mxu0
      %5534 = vmatprep.mubr.bf16.mxu0 0
      %5535 = vmatmul.mubr.bf16.gmra.mrb[0].mxu0 %v5099
      %v5536 = vpop.f32.mrb[0].mxu0
      %v5537 = vadd.f32 0.0, %v5536
      %v5538 = vpop.f32.mrb[0].mxu0
      %v5539 = vpop.f32.mrb[0].mxu0
      %v5540 = vadd.f32 0.0, %v5539
      %v5541 = vpop.f32.mrb[0].mxu0
      %5542 = vmatprep.mubr.bf16.mxu0 0
      %5543 = vmatmul.mubr.bf16.gmra.mrb[0].mxu0 %v5108
      %v5544 = vpop.f32.mrb[0].mxu0
      %v5545 = vadd.f32 0.0, %v5544
      %v5546 = vpop.f32.mrb[0].mxu0
      %v5547 = vpop.f32.mrb[0].mxu0
      %v5548 = vadd.f32 0.0, %v5547
      %v5549 = vpop.f32.mrb[0].mxu0
      %5550 = vmatprep.mubr.bf16.mxu0 0
      %5551 = vmatmul.mubr.bf16.gmra.mrb[0].mxu0 %v5107
      %v5552 = vpop.f32.mrb[0].mxu0
      %v5553 = vadd.f32 0.0, %v5552
      %v5554 = vpop.f32.mrb[0].mxu0
      %v5555 = vpop.f32.mrb[0].mxu0
      %v5556 = vpop.f32.mrb[0].mxu0
      %5557 = vdwg.mxu0
      %v5558 = vadd.f32 %v4641, %v5233
      %v5559 = vadd.f32 %v4642, %v5236
      %v5560 = vadd.f32 %v4643, %v5241
      %v5561 = vadd.f32 %v4644, %v5244
      %v5562 = vadd.f32 %v4645, %v5249
      %v5563 = vadd.f32 %v4646, %v5252
      %v5564 = vadd.f32 %v4647, %v5257
      %v5565 = vadd.f32 %v4648, %v5260
      %v5566 = vadd.f32 %v4649, %v5265
      %v5567 = vadd.f32 %v4650, %v5268
      %v5568 = vadd.f32 %v4651, %v5273
      %v5569 = vadd.f32 %v4652, %v5276
      %v5570 = vadd.f32 %v4653, %v5281
      %v5571 = vadd.f32 %v4654, %v5284
      %v5572 = vadd.f32 %v4655, %v5289
      %v5573 = vadd.f32 %v4656, %v5292
      %v5574 = vadd.f32 %v4657, %v5297
      %v5575 = vadd.f32 %v4658, %v5300
      %v5576 = vadd.f32 %v4659, %v5305
      %v5577 = vadd.f32 %v4660, %v5308
      %v5578 = vadd.f32 %v4661, %v5313
      %v5579 = vadd.f32 %v4662, %v5316
      %v5580 = vadd.f32 %v4663, %v5321
      %v5581 = vadd.f32 %v4664, %v5324
      %v5582 = vadd.f32 %v4665, %v5329
      %v5583 = vadd.f32 %v4666, %v5332
      %v5584 = vadd.f32 %v4667, %v5337
      %v5585 = vadd.f32 %v4668, %v5340
      %v5586 = vadd.f32 %v4669, %v5345
      %v5587 = vadd.f32 %v4670, %v5348
      %v5588 = vadd.f32 %v4671, %v5353
      %v5589 = vadd.f32 %v4672, %v5356
      %v5590 = vadd.f32 %v4673, %v5361
      %v5591 = vadd.f32 %v4674, %v5364
      %v5592 = vadd.f32 %v4675, %v5369
      %v5593 = vadd.f32 %v4676, %v5372
      %v5594 = vadd.f32 %v4677, %v5377
      %v5595 = vadd.f32 %v4678, %v5380
      %v5596 = vadd.f32 %v4679, %v5385
      %v5597 = vadd.f32 %v4680, %v5388
      %v5598 = vadd.f32 %v4681, %v5393
      %v5599 = vadd.f32 %v4682, %v5396
      %v5600 = vadd.f32 %v4683, %v5401
      %v5601 = vadd.f32 %v4684, %v5404
      %v5602 = vadd.f32 %v4685, %v5409
      %v5603 = vadd.f32 %v4686, %v5412
      %v5604 = vadd.f32 %v4687, %v5417
      %v5605 = vadd.f32 %v4688, %v5420
      %v5606 = vadd.f32 %v4689, %v5425
      %v5607 = vadd.f32 %v4690, %v5428
      %v5608 = vadd.f32 %v4691, %v5433
      %v5609 = vadd.f32 %v4692, %v5436
      %v5610 = vadd.f32 %v4693, %v5441
      %v5611 = vadd.f32 %v4694, %v5444
      %v5612 = vadd.f32 %v4695, %v5449
      %v5613 = vadd.f32 %v4696, %v5452
      %v5614 = vadd.f32 %v4697, %v5457
      %v5615 = vadd.f32 %v4698, %v5460
      %v5616 = vadd.f32 %v4699, %v5465
      %v5617 = vadd.f32 %v4700, %v5468
      %v5618 = vadd.f32 %v4701, %v5473
      %v5619 = vadd.f32 %v4702, %v5476
      %v5620 = vadd.f32 %v4703, %v5481
      %v5621 = vadd.f32 %v4704, %v5484
      %v5622 = vadd.f32 %v4705, %v5489
      %v5623 = vadd.f32 %v4706, %v5492
      %v5624 = vadd.f32 %v4707, %v5497
      %v5625 = vadd.f32 %v4708, %v5500
      %v5626 = vadd.f32 %v4709, %v5505
      %v5627 = vadd.f32 %v4710, %v5508
      %v5628 = vadd.f32 %v4711, %v5513
      %v5629 = vadd.f32 %v4712, %v5516
      %v5630 = vadd.f32 %v4713, %v5521
      %v5631 = vadd.f32 %v4714, %v5524
      %v5632 = vadd.f32 %v4715, %v5529
      %v5633 = vadd.f32 %v4716, %v5532
      %v5634 = vadd.f32 %v4717, %v5537
      %v5635 = vadd.f32 %v4718, %v5540
      %v5636 = vadd.f32 %v4719, %v5545
      %v5637 = vadd.f32 %v4720, %v5548
      %v5638 = vadd.f32 %v4721, %v5553
      %v5639 = vld [vmem:[#allocation2 + $0x8] sm:$0xfc]
      %s5640 = scalar_lea.vmem %s5, 320
      %v5641 = vld [vmem:[%s5640] sm:$0xf]
      %v5642 = vld [vmem:[%s5640 + $0x4] sm:$0xf]
      %v5643 = vld [vmem:[%s5640 + $0x8] sm:$0xf]
      %v5644 = vld [vmem:[%s5640 + $0xc] sm:$0xf]
      %v5645 = vld [vmem:[%s5640 + $0x10] sm:$0xf]
      %v5646 = vld [vmem:[%s5640 + $0x14] sm:$0xf]
      %v5647 = vld [vmem:[%s5640 + $0x18] sm:$0xf]
      %v5648 = vld [vmem:[%s5640 + $0x1c] sm:$0xf]
      %v5649 = vld [vmem:[%s5640 + $0x20] sm:$0xf]
      %v5650 = vld [vmem:[%s5640 + $0x24] sm:$0xf]
      %v5651 = vld [vmem:[%s5640 + $0x28] sm:$0xf]
      %v5652 = vld [vmem:[%s5640 + $0x2c] sm:$0xf]
      %v5653 = vld [vmem:[%s5640 + $0x30] sm:$0xf]
      %v5654 = vld [vmem:[%s5640 + $0x34] sm:$0xf]
      %v5655 = vld [vmem:[%s5640 + $0x38] sm:$0xf]
      %v5656 = vld [vmem:[%s5640 + $0x3c] sm:$0xf]
      %vm5659 = vcmask 1045504
      %v5660 = vrot.slane %v5639, 2
      %v5661 = vrot.slane %v4013, 2
      %v5662 = vsel %vm5659, %v5660, %v5661
      %v5663 = vrot.slane %v4014, 2
      %v5664 = vsel %vm5659, %v5661, %v5663
      %v5665 = vrot.slane %v4015, 2
      %v5666 = vsel %vm5659, %v5663, %v5665
      %v5667 = vrot.slane %v4016, 2
      %v5668 = vsel %vm5659, %v5665, %v5667
      %v5669 = vrot.slane %v4017, 2
      %v5670 = vsel %vm5659, %v5667, %v5669
      %v5671 = vrot.slane %v4018, 2
      %v5672 = vsel %vm5659, %v5669, %v5671
      %v5673 = vrot.slane %v4019, 2
      %v5674 = vsel %vm5659, %v5671, %v5673
      %v5675 = vrot.slane %v4020, 2
      %v5676 = vsel %vm5659, %v5673, %v5675
      %v5677 = vrot.slane %v4021, 2
      %v5678 = vsel %vm5659, %v5675, %v5677
      %v5679 = vrot.slane %v4022, 2
      %v5680 = vsel %vm5659, %v5677, %v5679
      %v5681 = vrot.slane %v4023, 2
      %v5682 = vsel %vm5659, %v5679, %v5681
      %v5683 = vrot.slane %v4024, 2
      %v5684 = vsel %vm5659, %v5681, %v5683
      %v5685 = vrot.slane %v4025, 2
      %v5686 = vsel %vm5659, %v5683, %v5685
      %v5687 = vrot.slane %v4026, 2
      %v5688 = vsel %vm5659, %v5685, %v5687
      %v5689 = vrot.slane %v4027, 2
      %v5690 = vsel %vm5659, %v5687, %v5689
      %v5691 = vrot.slane %v4028, 2
      %v5692 = vsel %vm5659, %v5689, %v5691
      %v5693 = vrot.slane %v4029, 2
      %v5694 = vsel %vm5659, %v5691, %v5693
      %v5695 = vrot.slane %v4030, 2
      %v5696 = vsel %vm5659, %v5693, %v5695
      %v5697 = vrot.slane %v4031, 2
      %v5698 = vsel %vm5659, %v5695, %v5697
      %v5699 = vrot.slane %v4032, 2
      %v5700 = vsel %vm5659, %v5697, %v5699
      %v5701 = vrot.slane %v4033, 2
      %v5702 = vsel %vm5659, %v5699, %v5701
      %v5703 = vrot.slane %v4034, 2
      %v5704 = vsel %vm5659, %v5701, %v5703
      %v5705 = vrot.slane %v4035, 2
      %v5706 = vsel %vm5659, %v5703, %v5705
      %v5707 = vrot.slane %v4036, 2
      %v5708 = vsel %vm5659, %v5705, %v5707
      %v5709 = vrot.slane %v4037, 2
      %v5710 = vsel %vm5659, %v5707, %v5709
      %v5711 = vrot.slane %v4038, 2
      %v5712 = vsel %vm5659, %v5709, %v5711
      %v5713 = vrot.slane %v4039, 2
      %v5714 = vsel %vm5659, %v5711, %v5713
      %v5715 = vrot.slane %v4040, 2
      %v5716 = vsel %vm5659, %v5713, %v5715
      %v5717 = vrot.slane %v4041, 2
      %v5718 = vsel %vm5659, %v5715, %v5717
      %v5719 = vrot.slane %v4042, 2
      %v5720 = vsel %vm5659, %v5717, %v5719
      %v5721 = vrot.slane %v4043, 2
      %v5722 = vsel %vm5659, %v5719, %v5721
      %v5723 = vrot.slane %v4044, 2
      %v5724 = vsel %vm5659, %v5721, %v5723
      %v5725 = vrot.slane %v4045, 2
      %v5726 = vsel %vm5659, %v5723, %v5725
      %v5727 = vrot.slane %v4046, 2
      %v5728 = vsel %vm5659, %v5725, %v5727
      %v5729 = vrot.slane %v4047, 2
      %v5730 = vsel %vm5659, %v5727, %v5729
      %v5731 = vrot.slane %v4048, 2
      %v5732 = vsel %vm5659, %v5729, %v5731
      %v5733 = vrot.slane %v4049, 2
      %v5734 = vsel %vm5659, %v5731, %v5733
      %v5735 = vrot.slane %v4050, 2
      %v5736 = vsel %vm5659, %v5733, %v5735
      %v5737 = vrot.slane %v4051, 2
      %v5738 = vsel %vm5659, %v5735, %v5737
      %v5739 = vrot.slane %v4722, 2
      %v5740 = vsel %vm5659, %v5737, %v5739
      %v5798 = vunpack.c.l.b16 %v5641
      %v5799 = vunpack.c.l.b16 %v5642
      %v5800 = vunpack.c.l.b16 %v5643
      %v5801 = vunpack.c.l.b16 %v5644
      %v5802 = vunpack.c.l.b16 %v5645
      %v5803 = vunpack.c.l.b16 %v5646
      %v5804 = vunpack.c.l.b16 %v5647
      %v5805 = vunpack.c.l.b16 %v5648
      %v5806 = vunpack.c.l.b16 %v5649
      %v5807 = vunpack.c.l.b16 %v5650
      %v5808 = vunpack.c.l.b16 %v5651
      %v5809 = vunpack.c.l.b16 %v5652
      %v5810 = vunpack.c.l.b16 %v5653
      %v5811 = vunpack.c.l.b16 %v5654
      %v5812 = vunpack.c.l.b16 %v5655
      %v5813 = vunpack.c.l.b16 %v5656
      %v5814 = vpack.c.b16 %v5799, %v5798
      %v5815 = vpack.c.b16 %v5801, %v5800
      %v5816 = vpack.c.b16 %v5803, %v5802
      %v5817 = vpack.c.b16 %v5805, %v5804
      %v5818 = vpack.c.b16 %v5807, %v5806
      %v5819 = vpack.c.b16 %v5809, %v5808
      %v5820 = vpack.c.b16 %v5811, %v5810
      %v5821 = vpack.c.b16 %v5813, %v5812
      %5830 = vmatprep.subr.bf16.mxu0 0
      %5831 = vmatpush1.bf16.msra.mxu0 %v5814
      %5832 = vmatprep.subr.bf16.mxu0 0
      %5833 = vmatpush1.bf16.msra.mxu0 %v5815
      %5834 = vmatprep.subr.bf16.mxu0 0
      %5835 = vmatpush1.bf16.msra.mxu0 %v5816
      %5836 = vmatprep.subr.bf16.mxu0 0
      %5837 = vmatpush1.bf16.msra.mxu0 %v5817
      %5838 = vmatprep.subr.bf16.mxu0 0
      %5839 = vmatpush1.bf16.msra.mxu0 %v5818
      %5840 = vmatprep.subr.bf16.mxu0 0
      %5841 = vmatpush1.bf16.msra.mxu0 %v5819
      %5842 = vmatprep.subr.bf16.mxu0 0
      %5843 = vmatpush1.bf16.msra.mxu0 %v5820
      %5844 = vmatprep.subr.bf16.mxu0 0
      %5845 = vmatpush1.bf16.msra.mxu0 %v5821
      %5846 = vmatprep.subr.bf16.mxu0 0
      %5847 = vmatpush1.bf16.msra.mxu0 0
      %5848 = vmatprep.subr.bf16.mxu0 0
      %5849 = vmatpush1.bf16.msra.mxu0 0
      %5850 = vmatprep.subr.bf16.mxu0 0
      %5851 = vmatpush1.bf16.msra.mxu0 0
      %5852 = vmatprep.subr.bf16.mxu0 0
      %5853 = vmatpush1.bf16.msra.mxu0 0
      %5854 = vmatprep.subr.bf16.mxu0 0
      %5855 = vmatpush1.bf16.msra.mxu0 0
      %5856 = vmatprep.subr.bf16.mxu0 0
      %5857 = vmatpush1.bf16.msra.mxu0 0
      %5858 = vmatprep.subr.bf16.mxu0 0
      %5859 = vmatpush1.bf16.msra.mxu0 0
      %5860 = vmatprep.subr.bf16.mxu0 0
      %5861 = vmatpush1.bf16.msra.mxu0 0
      %5862 = vmatprep.mubr.bf16.mxu0 0
      %5863 = vmatmul.mubr.bf16.gmra.mrb[0].mxu0 %v5662
      %v5864 = vpop.f32.mrb[0].mxu0
      %v5865 = vadd.f32 0.0, %v5864
      %v5866 = vpop.f32.mrb[0].mxu0
      %v5867 = vpop.f32.mrb[0].mxu0
      %v5868 = vadd.f32 0.0, %v5867
      %v5869 = vpop.f32.mrb[0].mxu0
      %5870 = vmatprep.mubr.bf16.mxu0 0
      %5871 = vmatmul.mubr.bf16.gmra.mrb[0].mxu0 %v5664
      %v5872 = vpop.f32.mrb[0].mxu0
      %v5873 = vadd.f32 0.0, %v5872
      %v5874 = vpop.f32.mrb[0].mxu0
      %v5875 = vpop.f32.mrb[0].mxu0
      %v5876 = vadd.f32 0.0, %v5875
      %v5877 = vpop.f32.mrb[0].mxu0
      %5878 = vmatprep.mubr.bf16.mxu0 0
      %5879 = vmatmul.mubr.bf16.gmra.mrb[0].mxu0 %v5666
      %v5880 = vpop.f32.mrb[0].mxu0
      %v5881 = vadd.f32 0.0, %v5880
      %v5882 = vpop.f32.mrb[0].mxu0
      %v5883 = vpop.f32.mrb[0].mxu0
      %v5884 = vadd.f32 0.0, %v5883
      %v5885 = vpop.f32.mrb[0].mxu0
      %5886 = vmatprep.mubr.bf16.mxu0 0
      %5887 = vmatmul.mubr.bf16.gmra.mrb[0].mxu0 %v5668
      %v5888 = vpop.f32.mrb[0].mxu0
      %v5889 = vadd.f32 0.0, %v5888
      %v5890 = vpop.f32.mrb[0].mxu0
      %v5891 = vpop.f32.mrb[0].mxu0
      %v5892 = vadd.f32 0.0, %v5891
      %v5893 = vpop.f32.mrb[0].mxu0
      %5894 = vmatprep.mubr.bf16.mxu0 0
      %5895 = vmatmul.mubr.bf16.gmra.mrb[0].mxu0 %v5670
      %v5896 = vpop.f32.mrb[0].mxu0
      %v5897 = vadd.f32 0.0, %v5896
      %v5898 = vpop.f32.mrb[0].mxu0
      %v5899 = vpop.f32.mrb[0].mxu0
      %v5900 = vadd.f32 0.0, %v5899
      %v5901 = vpop.f32.mrb[0].mxu0
      %5902 = vmatprep.mubr.bf16.mxu0 0
      %5903 = vmatmul.mubr.bf16.gmra.mrb[0].mxu0 %v5672
      %v5904 = vpop.f32.mrb[0].mxu0
      %v5905 = vadd.f32 0.0, %v5904
      %v5906 = vpop.f32.mrb[0].mxu0
      %v5907 = vpop.f32.mrb[0].mxu0
      %v5908 = vadd.f32 0.0, %v5907
      %v5909 = vpop.f32.mrb[0].mxu0
      %5910 = vmatprep.mubr.bf16.mxu0 0
      %5911 = vmatmul.mubr.bf16.gmra.mrb[0].mxu0 %v5674
      %v5912 = vpop.f32.mrb[0].mxu0
      %v5913 = vadd.f32 0.0, %v5912
      %v5914 = vpop.f32.mrb[0].mxu0
      %v5915 = vpop.f32.mrb[0].mxu0
      %v5916 = vadd.f32 0.0, %v5915
      %v5917 = vpop.f32.mrb[0].mxu0
      %5918 = vmatprep.mubr.bf16.mxu0 0
      %5919 = vmatmul.mubr.bf16.gmra.mrb[0].mxu0 %v5676
      %v5920 = vpop.f32.mrb[0].mxu0
      %v5921 = vadd.f32 0.0, %v5920
      %v5922 = vpop.f32.mrb[0].mxu0
      %v5923 = vpop.f32.mrb[0].mxu0
      %v5924 = vadd.f32 0.0, %v5923
      %v5925 = vpop.f32.mrb[0].mxu0
      %5926 = vmatprep.mubr.bf16.mxu0 0
      %5927 = vmatmul.mubr.bf16.gmra.mrb[0].mxu0 %v5678
      %v5928 = vpop.f32.mrb[0].mxu0
      %v5929 = vadd.f32 0.0, %v5928
      %v5930 = vpop.f32.mrb[0].mxu0
      %v5931 = vpop.f32.mrb[0].mxu0
      %v5932 = vadd.f32 0.0, %v5931
      %v5933 = vpop.f32.mrb[0].mxu0
      %5934 = vmatprep.mubr.bf16.mxu0 0
      %5935 = vmatmul.mubr.bf16.gmra.mrb[0].mxu0 %v5680
      %v5936 = vpop.f32.mrb[0].mxu0
      %v5937 = vadd.f32 0.0, %v5936
      %v5938 = vpop.f32.mrb[0].mxu0
      %v5939 = vpop.f32.mrb[0].mxu0
      %v5940 = vadd.f32 0.0, %v5939
      %v5941 = vpop.f32.mrb[0].mxu0
      %5942 = vmatprep.mubr.bf16.mxu0 0
      %5943 = vmatmul.mubr.bf16.gmra.mrb[0].mxu0 %v5682
      %v5944 = vpop.f32.mrb[0].mxu0
      %v5945 = vadd.f32 0.0, %v5944
      %v5946 = vpop.f32.mrb[0].mxu0
      %v5947 = vpop.f32.mrb[0].mxu0
      %v5948 = vadd.f32 0.0, %v5947
      %v5949 = vpop.f32.mrb[0].mxu0
      %5950 = vmatprep.mubr.bf16.mxu0 0
      %5951 = vmatmul.mubr.bf16.gmra.mrb[0].mxu0 %v5684
      %v5952 = vpop.f32.mrb[0].mxu0
      %v5953 = vadd.f32 0.0, %v5952
      %v5954 = vpop.f32.mrb[0].mxu0
      %v5955 = vpop.f32.mrb[0].mxu0
      %v5956 = vadd.f32 0.0, %v5955
      %v5957 = vpop.f32.mrb[0].mxu0
      %5958 = vmatprep.mubr.bf16.mxu0 0
      %5959 = vmatmul.mubr.bf16.gmra.mrb[0].mxu0 %v5686
      %v5960 = vpop.f32.mrb[0].mxu0
      %v5961 = vadd.f32 0.0, %v5960
      %v5962 = vpop.f32.mrb[0].mxu0
      %v5963 = vpop.f32.mrb[0].mxu0
      %v5964 = vadd.f32 0.0, %v5963
      %v5965 = vpop.f32.mrb[0].mxu0
      %5966 = vmatprep.mubr.bf16.mxu0 0
      %5967 = vmatmul.mubr.bf16.gmra.mrb[0].mxu0 %v5688
      %v5968 = vpop.f32.mrb[0].mxu0
      %v5969 = vadd.f32 0.0, %v5968
      %v5970 = vpop.f32.mrb[0].mxu0
      %v5971 = vpop.f32.mrb[0].mxu0
      %v5972 = vadd.f32 0.0, %v5971
      %v5973 = vpop.f32.mrb[0].mxu0
      %5974 = vmatprep.mubr.bf16.mxu0 0
      %5975 = vmatmul.mubr.bf16.gmra.mrb[0].mxu0 %v5690
      %v5976 = vpop.f32.mrb[0].mxu0
      %v5977 = vadd.f32 0.0, %v5976
      %v5978 = vpop.f32.mrb[0].mxu0
      %v5979 = vpop.f32.mrb[0].mxu0
      %v5980 = vadd.f32 0.0, %v5979
      %v5981 = vpop.f32.mrb[0].mxu0
      %5982 = vmatprep.mubr.bf16.mxu0 0
      %5983 = vmatmul.mubr.bf16.gmra.mrb[0].mxu0 %v5692
      %v5984 = vpop.f32.mrb[0].mxu0
      %v5985 = vadd.f32 0.0, %v5984
      %v5986 = vpop.f32.mrb[0].mxu0
      %v5987 = vpop.f32.mrb[0].mxu0
      %v5988 = vadd.f32 0.0, %v5987
      %v5989 = vpop.f32.mrb[0].mxu0
      %5990 = vmatprep.mubr.bf16.mxu0 0
      %5991 = vmatmul.mubr.bf16.gmra.mrb[0].mxu0 %v5694
      %v5992 = vpop.f32.mrb[0].mxu0
      %v5993 = vadd.f32 0.0, %v5992
      %v5994 = vpop.f32.mrb[0].mxu0
      %v5995 = vpop.f32.mrb[0].mxu0
      %v5996 = vadd.f32 0.0, %v5995
      %v5997 = vpop.f32.mrb[0].mxu0
      %5998 = vmatprep.mubr.bf16.mxu0 0
      %5999 = vmatmul.mubr.bf16.gmra.mrb[0].mxu0 %v5696
      %v6000 = vpop.f32.mrb[0].mxu0
      %v6001 = vadd.f32 0.0, %v6000
      %v6002 = vpop.f32.mrb[0].mxu0
      %v6003 = vpop.f32.mrb[0].mxu0
      %v6004 = vadd.f32 0.0, %v6003
      %v6005 = vpop.f32.mrb[0].mxu0
      %6006 = vmatprep.mubr.bf16.mxu0 0
      %6007 = vmatmul.mubr.bf16.gmra.mrb[0].mxu0 %v5698
      %v6008 = vpop.f32.mrb[0].mxu0
      %v6009 = vadd.f32 0.0, %v6008
      %v6010 = vpop.f32.mrb[0].mxu0
      %v6011 = vpop.f32.mrb[0].mxu0
      %v6012 = vadd.f32 0.0, %v6011
      %v6013 = vpop.f32.mrb[0].mxu0
      %6014 = vmatprep.mubr.bf16.mxu0 0
      %6015 = vmatmul.mubr.bf16.gmra.mrb[0].mxu0 %v5700
      %v6016 = vpop.f32.mrb[0].mxu0
      %v6017 = vadd.f32 0.0, %v6016
      %v6018 = vpop.f32.mrb[0].mxu0
      %v6019 = vpop.f32.mrb[0].mxu0
      %v6020 = vadd.f32 0.0, %v6019
      %v6021 = vpop.f32.mrb[0].mxu0
      %6022 = vmatprep.mubr.bf16.mxu0 0
      %6023 = vmatmul.mubr.bf16.gmra.mrb[0].mxu0 %v5702
      %v6024 = vpop.f32.mrb[0].mxu0
      %v6025 = vadd.f32 0.0, %v6024
      %v6026 = vpop.f32.mrb[0].mxu0
      %v6027 = vpop.f32.mrb[0].mxu0
      %v6028 = vadd.f32 0.0, %v6027
      %v6029 = vpop.f32.mrb[0].mxu0
      %6030 = vmatprep.mubr.bf16.mxu0 0
      %6031 = vmatmul.mubr.bf16.gmra.mrb[0].mxu0 %v5704
      %v6032 = vpop.f32.mrb[0].mxu0
      %v6033 = vadd.f32 0.0, %v6032
      %v6034 = vpop.f32.mrb[0].mxu0
      %v6035 = vpop.f32.mrb[0].mxu0
      %v6036 = vadd.f32 0.0, %v6035
      %v6037 = vpop.f32.mrb[0].mxu0
      %6038 = vmatprep.mubr.bf16.mxu0 0
      %6039 = vmatmul.mubr.bf16.gmra.mrb[0].mxu0 %v5706
      %v6040 = vpop.f32.mrb[0].mxu0
      %v6041 = vadd.f32 0.0, %v6040
      %v6042 = vpop.f32.mrb[0].mxu0
      %v6043 = vpop.f32.mrb[0].mxu0
      %v6044 = vadd.f32 0.0, %v6043
      %v6045 = vpop.f32.mrb[0].mxu0
      %6046 = vmatprep.mubr.bf16.mxu0 0
      %6047 = vmatmul.mubr.bf16.gmra.mrb[0].mxu0 %v5708
      %v6048 = vpop.f32.mrb[0].mxu0
      %v6049 = vadd.f32 0.0, %v6048
      %v6050 = vpop.f32.mrb[0].mxu0
      %v6051 = vpop.f32.mrb[0].mxu0
      %v6052 = vadd.f32 0.0, %v6051
      %v6053 = vpop.f32.mrb[0].mxu0
      %6054 = vmatprep.mubr.bf16.mxu0 0
      %6055 = vmatmul.mubr.bf16.gmra.mrb[0].mxu0 %v5710
      %v6056 = vpop.f32.mrb[0].mxu0
      %v6057 = vadd.f32 0.0, %v6056
      %v6058 = vpop.f32.mrb[0].mxu0
      %v6059 = vpop.f32.mrb[0].mxu0
      %v6060 = vadd.f32 0.0, %v6059
      %v6061 = vpop.f32.mrb[0].mxu0
      %6062 = vmatprep.mubr.bf16.mxu0 0
      %6063 = vmatmul.mubr.bf16.gmra.mrb[0].mxu0 %v5712
      %v6064 = vpop.f32.mrb[0].mxu0
      %v6065 = vadd.f32 0.0, %v6064
      %v6066 = vpop.f32.mrb[0].mxu0
      %v6067 = vpop.f32.mrb[0].mxu0
      %v6068 = vadd.f32 0.0, %v6067
      %v6069 = vpop.f32.mrb[0].mxu0
      %6070 = vmatprep.mubr.bf16.mxu0 0
      %6071 = vmatmul.mubr.bf16.gmra.mrb[0].mxu0 %v5714
      %v6072 = vpop.f32.mrb[0].mxu0
      %v6073 = vadd.f32 0.0, %v6072
      %v6074 = vpop.f32.mrb[0].mxu0
      %v6075 = vpop.f32.mrb[0].mxu0
      %v6076 = vadd.f32 0.0, %v6075
      %v6077 = vpop.f32.mrb[0].mxu0
      %6078 = vmatprep.mubr.bf16.mxu0 0
      %6079 = vmatmul.mubr.bf16.gmra.mrb[0].mxu0 %v5716
      %v6080 = vpop.f32.mrb[0].mxu0
      %v6081 = vadd.f32 0.0, %v6080
      %v6082 = vpop.f32.mrb[0].mxu0
      %v6083 = vpop.f32.mrb[0].mxu0
      %v6084 = vadd.f32 0.0, %v6083
      %v6085 = vpop.f32.mrb[0].mxu0
      %6086 = vmatprep.mubr.bf16.mxu0 0
      %6087 = vmatmul.mubr.bf16.gmra.mrb[0].mxu0 %v5718
      %v6088 = vpop.f32.mrb[0].mxu0
      %v6089 = vadd.f32 0.0, %v6088
      %v6090 = vpop.f32.mrb[0].mxu0
      %v6091 = vpop.f32.mrb[0].mxu0
      %v6092 = vadd.f32 0.0, %v6091
      %v6093 = vpop.f32.mrb[0].mxu0
      %6094 = vmatprep.mubr.bf16.mxu0 0
      %6095 = vmatmul.mubr.bf16.gmra.mrb[0].mxu0 %v5720
      %v6096 = vpop.f32.mrb[0].mxu0
      %v6097 = vadd.f32 0.0, %v6096
      %v6098 = vpop.f32.mrb[0].mxu0
      %v6099 = vpop.f32.mrb[0].mxu0
      %v6100 = vadd.f32 0.0, %v6099
      %v6101 = vpop.f32.mrb[0].mxu0
      %6102 = vmatprep.mubr.bf16.mxu0 0
      %6103 = vmatmul.mubr.bf16.gmra.mrb[0].mxu0 %v5722
      %v6104 = vpop.f32.mrb[0].mxu0
      %v6105 = vadd.f32 0.0, %v6104
      %v6106 = vpop.f32.mrb[0].mxu0
      %v6107 = vpop.f32.mrb[0].mxu0
      %v6108 = vadd.f32 0.0, %v6107
      %v6109 = vpop.f32.mrb[0].mxu0
      %6110 = vmatprep.mubr.bf16.mxu0 0
      %6111 = vmatmul.mubr.bf16.gmra.mrb[0].mxu0 %v5724
      %v6112 = vpop.f32.mrb[0].mxu0
      %v6113 = vadd.f32 0.0, %v6112
      %v6114 = vpop.f32.mrb[0].mxu0
      %v6115 = vpop.f32.mrb[0].mxu0
      %v6116 = vadd.f32 0.0, %v6115
      %v6117 = vpop.f32.mrb[0].mxu0
      %6118 = vmatprep.mubr.bf16.mxu0 0
      %6119 = vmatmul.mubr.bf16.gmra.mrb[0].mxu0 %v5726
      %v6120 = vpop.f32.mrb[0].mxu0
      %v6121 = vadd.f32 0.0, %v6120
      %v6122 = vpop.f32.mrb[0].mxu0
      %v6123 = vpop.f32.mrb[0].mxu0
      %v6124 = vadd.f32 0.0, %v6123
      %v6125 = vpop.f32.mrb[0].mxu0
      %6126 = vmatprep.mubr.bf16.mxu0 0
      %6127 = vmatmul.mubr.bf16.gmra.mrb[0].mxu0 %v5728
      %v6128 = vpop.f32.mrb[0].mxu0
      %v6129 = vadd.f32 0.0, %v6128
      %v6130 = vpop.f32.mrb[0].mxu0
      %v6131 = vpop.f32.mrb[0].mxu0
      %v6132 = vadd.f32 0.0, %v6131
      %v6133 = vpop.f32.mrb[0].mxu0
      %6134 = vmatprep.mubr.bf16.mxu0 0
      %6135 = vmatmul.mubr.bf16.gmra.mrb[0].mxu0 %v5730
      %v6136 = vpop.f32.mrb[0].mxu0
      %v6137 = vadd.f32 0.0, %v6136
      %v6138 = vpop.f32.mrb[0].mxu0
      %v6139 = vpop.f32.mrb[0].mxu0
      %v6140 = vadd.f32 0.0, %v6139
      %v6141 = vpop.f32.mrb[0].mxu0
      %6142 = vmatprep.mubr.bf16.mxu0 0
      %6143 = vmatmul.mubr.bf16.gmra.mrb[0].mxu0 %v5732
      %v6144 = vpop.f32.mrb[0].mxu0
      %v6145 = vadd.f32 0.0, %v6144
      %v6146 = vpop.f32.mrb[0].mxu0
      %v6147 = vpop.f32.mrb[0].mxu0
      %v6148 = vadd.f32 0.0, %v6147
      %v6149 = vpop.f32.mrb[0].mxu0
      %6150 = vmatprep.mubr.bf16.mxu0 0
      %6151 = vmatmul.mubr.bf16.gmra.mrb[0].mxu0 %v5734
      %v6152 = vpop.f32.mrb[0].mxu0
      %v6153 = vadd.f32 0.0, %v6152
      %v6154 = vpop.f32.mrb[0].mxu0
      %v6155 = vpop.f32.mrb[0].mxu0
      %v6156 = vadd.f32 0.0, %v6155
      %v6157 = vpop.f32.mrb[0].mxu0
      %6158 = vmatprep.mubr.bf16.mxu0 0
      %6159 = vmatmul.mubr.bf16.gmra.mrb[0].mxu0 %v5736
      %v6160 = vpop.f32.mrb[0].mxu0
      %v6161 = vadd.f32 0.0, %v6160
      %v6162 = vpop.f32.mrb[0].mxu0
      %v6163 = vpop.f32.mrb[0].mxu0
      %v6164 = vadd.f32 0.0, %v6163
      %v6165 = vpop.f32.mrb[0].mxu0
      %6166 = vmatprep.mubr.bf16.mxu0 0
      %6167 = vmatmul.mubr.bf16.gmra.mrb[0].mxu0 %v5738
      %v6168 = vpop.f32.mrb[0].mxu0
      %v6169 = vadd.f32 0.0, %v6168
      %v6170 = vpop.f32.mrb[0].mxu0
      %v6171 = vpop.f32.mrb[0].mxu0
      %v6172 = vadd.f32 0.0, %v6171
      %v6173 = vpop.f32.mrb[0].mxu0
      %6174 = vmatprep.mubr.bf16.mxu0 0
      %6175 = vmatmul.mubr.bf16.gmra.mrb[0].mxu0 %v5740
      %v6176 = vpop.f32.mrb[0].mxu0
      %v6177 = vadd.f32 0.0, %v6176
      %v6178 = vpop.f32.mrb[0].mxu0
      %v6179 = vpop.f32.mrb[0].mxu0
      %v6180 = vadd.f32 0.0, %v6179
      %v6181 = vpop.f32.mrb[0].mxu0
      %6182 = vmatprep.mubr.bf16.mxu0 0
      %6183 = vmatmul.mubr.bf16.gmra.mrb[0].mxu0 %v5739
      %v6184 = vpop.f32.mrb[0].mxu0
      %v6185 = vadd.f32 0.0, %v6184
      %v6186 = vpop.f32.mrb[0].mxu0
      %v6187 = vpop.f32.mrb[0].mxu0
      %v6188 = vpop.f32.mrb[0].mxu0
      %6189 = vdwg.mxu0
      %v6190 = vadd.f32 %v5558, %v5865
      %v6191 = vadd.f32 %v5559, %v5868
      %v6192 = vadd.f32 %v5560, %v5873
      %v6193 = vadd.f32 %v5561, %v5876
      %v6194 = vadd.f32 %v5562, %v5881
      %v6195 = vadd.f32 %v5563, %v5884
      %v6196 = vadd.f32 %v5564, %v5889
      %v6197 = vadd.f32 %v5565, %v5892
      %v6198 = vadd.f32 %v5566, %v5897
      %v6199 = vadd.f32 %v5567, %v5900
      %v6200 = vadd.f32 %v5568, %v5905
      %v6201 = vadd.f32 %v5569, %v5908
      %v6202 = vadd.f32 %v5570, %v5913
      %v6203 = vadd.f32 %v5571, %v5916
      %v6204 = vadd.f32 %v5572, %v5921
      %v6205 = vadd.f32 %v5573, %v5924
      %v6206 = vadd.f32 %v5574, %v5929
      %v6207 = vadd.f32 %v5575, %v5932
      %v6208 = vadd.f32 %v5576, %v5937
      %v6209 = vadd.f32 %v5577, %v5940
      %v6210 = vadd.f32 %v5578, %v5945
      %v6211 = vadd.f32 %v5579, %v5948
      %v6212 = vadd.f32 %v5580, %v5953
      %v6213 = vadd.f32 %v5581, %v5956
      %v6214 = vadd.f32 %v5582, %v5961
      %v6215 = vadd.f32 %v5583, %v5964
      %v6216 = vadd.f32 %v5584, %v5969
      %v6217 = vadd.f32 %v5585, %v5972
      %v6218 = vadd.f32 %v5586, %v5977
      %v6219 = vadd.f32 %v5587, %v5980
      %v6220 = vadd.f32 %v5588, %v5985
      %v6221 = vadd.f32 %v5589, %v5988
      %v6222 = vadd.f32 %v5590, %v5993
      %v6223 = vadd.f32 %v5591, %v5996
      %v6224 = vadd.f32 %v5592, %v6001
      %v6225 = vadd.f32 %v5593, %v6004
      %v6226 = vadd.f32 %v5594, %v6009
      %v6227 = vadd.f32 %v5595, %v6012
      %v6228 = vadd.f32 %v5596, %v6017
      %v6229 = vadd.f32 %v5597, %v6020
      %v6230 = vadd.f32 %v5598, %v6025
      %v6231 = vadd.f32 %v5599, %v6028
      %v6232 = vadd.f32 %v5600, %v6033
      %v6233 = vadd.f32 %v5601, %v6036
      %v6234 = vadd.f32 %v5602, %v6041
      %v6235 = vadd.f32 %v5603, %v6044
      %v6236 = vadd.f32 %v5604, %v6049
      %v6237 = vadd.f32 %v5605, %v6052
      %v6238 = vadd.f32 %v5606, %v6057
      %v6239 = vadd.f32 %v5607, %v6060
      %v6240 = vadd.f32 %v5608, %v6065
      %v6241 = vadd.f32 %v5609, %v6068
      %v6242 = vadd.f32 %v5610, %v6073
      %v6243 = vadd.f32 %v5611, %v6076
      %v6244 = vadd.f32 %v5612, %v6081
      %v6245 = vadd.f32 %v5613, %v6084
      %v6246 = vadd.f32 %v5614, %v6089
      %v6247 = vadd.f32 %v5615, %v6092
      %v6248 = vadd.f32 %v5616, %v6097
      %v6249 = vadd.f32 %v5617, %v6100
      %v6250 = vadd.f32 %v5618, %v6105
      %v6251 = vadd.f32 %v5619, %v6108
      %v6252 = vadd.f32 %v5620, %v6113
      %v6253 = vadd.f32 %v5621, %v6116
      %v6254 = vadd.f32 %v5622, %v6121
      %v6255 = vadd.f32 %v5623, %v6124
      %v6256 = vadd.f32 %v5624, %v6129
      %v6257 = vadd.f32 %v5625, %v6132
      %v6258 = vadd.f32 %v5626, %v6137
      %v6259 = vadd.f32 %v5627, %v6140
      %v6260 = vadd.f32 %v5628, %v6145
      %v6261 = vadd.f32 %v5629, %v6148
      %v6262 = vadd.f32 %v5630, %v6153
      %v6263 = vadd.f32 %v5631, %v6156
      %v6264 = vadd.f32 %v5632, %v6161
      %v6265 = vadd.f32 %v5633, %v6164
      %v6266 = vadd.f32 %v5634, %v6169
      %v6267 = vadd.f32 %v5635, %v6172
      %v6268 = vadd.f32 %v5636, %v6177
      %v6269 = vadd.f32 %v5637, %v6180
      %v6270 = vadd.f32 %v5638, %v6185
      %v6271 = vld [vmem:[#allocation2 + $0x10] sm:$0xfc]
      %v6272 = vld [vmem:[#allocation2 + $0x18] sm:$0xff]
      %v6273 = vld [vmem:[#allocation2 + $0x20] sm:$0xff]
      %v6274 = vld [vmem:[#allocation2 + $0x28] sm:$0xff]
      %v6275 = vld [vmem:[#allocation2 + $0x30] sm:$0xff]
      %v6276 = vld [vmem:[#allocation2 + $0x38] sm:$0xff]
      %v6277 = vld [vmem:[#allocation2 + $0x40] sm:$0xff]
      %v6278 = vld [vmem:[#allocation2 + $0x48] sm:$0xff]
      %v6279 = vld [vmem:[#allocation2 + $0x50] sm:$0xff]
      %v6280 = vld [vmem:[#allocation2 + $0x58] sm:$0xff]
      %v6281 = vld [vmem:[#allocation2 + $0x60] sm:$0xff]
      %v6282 = vld [vmem:[#allocation2 + $0x68] sm:$0xff]
      %v6283 = vld [vmem:[#allocation2 + $0x70] sm:$0xff]
      %v6284 = vld [vmem:[#allocation2 + $0x78] sm:$0xff]
      %v6285 = vld [vmem:[#allocation2 + $0x80] sm:$0xff]
      %v6286 = vld [vmem:[#allocation2 + $0x88] sm:$0xff]
      %v6287 = vld [vmem:[#allocation2 + $0x90] sm:$0xff]
      %v6288 = vld [vmem:[#allocation2 + $0x98] sm:$0xff]
      %v6289 = vld [vmem:[#allocation2 + $0xa0] sm:$0xff]
      %v6290 = vld [vmem:[#allocation2 + $0xa8] sm:$0xff]
      %v6291 = vld [vmem:[#allocation2 + $0xb0] sm:$0xff]
      %v6292 = vld [vmem:[#allocation2 + $0xb8] sm:$0xff]
      %v6293 = vld [vmem:[#allocation2 + $0xc0] sm:$0xff]
      %v6294 = vld [vmem:[#allocation2 + $0xc8] sm:$0xff]
      %v6295 = vld [vmem:[#allocation2 + $0xd0] sm:$0xff]
      %v6296 = vld [vmem:[#allocation2 + $0xd8] sm:$0xff]
      %v6297 = vld [vmem:[#allocation2 + $0xe0] sm:$0xff]
      %v6298 = vld [vmem:[#allocation2 + $0xe8] sm:$0xff]
      %v6299 = vld [vmem:[#allocation2 + $0xf0] sm:$0xff]
      %v6300 = vld [vmem:[#allocation2 + $0xf8] sm:$0xff]
      %v6301 = vld [vmem:[#allocation2 + $0x100] sm:$0xff]
      %v6302 = vld [vmem:[#allocation2 + $0x108] sm:$0xff]
      %v6303 = vld [vmem:[#allocation2 + $0x110] sm:$0xff]
      %v6304 = vld [vmem:[#allocation2 + $0x118] sm:$0xff]
      %v6305 = vld [vmem:[#allocation2 + $0x120] sm:$0xff]
      %v6306 = vld [vmem:[#allocation2 + $0x128] sm:$0xff]
      %v6307 = vld [vmem:[#allocation2 + $0x130] sm:$0xff]
      %v6308 = vld [vmem:[#allocation2 + $0x138] sm:$0xff]
      %v6309 = vld [vmem:[#allocation2 + $0x140] sm:$0xff]
      %v6310 = vld [vmem:[#allocation2 + $0x148] sm:$0xff]
      %v6311 = vld [vmem:[#allocation2 + $0x150] sm:$0x3f]
      %s6312 = scalar_lea.vmem %s5, 384
      %v6313 = vld [vmem:[%s6312] sm:$0xf]
      %v6314 = vld [vmem:[%s6312 + $0x4] sm:$0xf]
      %v6315 = vld [vmem:[%s6312 + $0x8] sm:$0xf]
      %v6316 = vld [vmem:[%s6312 + $0xc] sm:$0xf]
      %v6317 = vld [vmem:[%s6312 + $0x10] sm:$0xf]
      %v6318 = vld [vmem:[%s6312 + $0x14] sm:$0xf]
      %v6319 = vld [vmem:[%s6312 + $0x18] sm:$0xf]
      %v6320 = vld [vmem:[%s6312 + $0x1c] sm:$0xf]
      %v6321 = vld [vmem:[%s6312 + $0x20] sm:$0xf]
      %v6322 = vld [vmem:[%s6312 + $0x24] sm:$0xf]
      %v6323 = vld [vmem:[%s6312 + $0x28] sm:$0xf]
      %v6324 = vld [vmem:[%s6312 + $0x2c] sm:$0xf]
      %v6325 = vld [vmem:[%s6312 + $0x30] sm:$0xf]
      %v6326 = vld [vmem:[%s6312 + $0x34] sm:$0xf]
      %v6327 = vld [vmem:[%s6312 + $0x38] sm:$0xf]
      %v6328 = vld [vmem:[%s6312 + $0x3c] sm:$0xf]
      %v6370 = vrot.slane %v6271, 2
      %v6371 = vrot.slane %v6272, 2
      %v6372 = vsel %vm5659, %v6370, %v6371
      %v6373 = vrot.slane %v6273, 2
      %v6374 = vsel %vm5659, %v6371, %v6373
      %v6375 = vrot.slane %v6274, 2
      %v6376 = vsel %vm5659, %v6373, %v6375
      %v6377 = vrot.slane %v6275, 2
      %v6378 = vsel %vm5659, %v6375, %v6377
      %v6379 = vrot.slane %v6276, 2
      %v6380 = vsel %vm5659, %v6377, %v6379
      %v6381 = vrot.slane %v6277, 2
      %v6382 = vsel %vm5659, %v6379, %v6381
      %v6383 = vrot.slane %v6278, 2
      %v6384 = vsel %vm5659, %v6381, %v6383
      %v6385 = vrot.slane %v6279, 2
      %v6386 = vsel %vm5659, %v6383, %v6385
      %v6387 = vrot.slane %v6280, 2
      %v6388 = vsel %vm5659, %v6385, %v6387
      %v6389 = vrot.slane %v6281, 2
      %v6390 = vsel %vm5659, %v6387, %v6389
      %v6391 = vrot.slane %v6282, 2
      %v6392 = vsel %vm5659, %v6389, %v6391
      %v6393 = vrot.slane %v6283, 2
      %v6394 = vsel %vm5659, %v6391, %v6393
      %v6395 = vrot.slane %v6284, 2
      %v6396 = vsel %vm5659, %v6393, %v6395
      %v6397 = vrot.slane %v6285, 2
      %v6398 = vsel %vm5659, %v6395, %v6397
      %v6399 = vrot.slane %v6286, 2
      %v6400 = vsel %vm5659, %v6397, %v6399
      %v6401 = vrot.slane %v6287, 2
      %v6402 = vsel %vm5659, %v6399, %v6401
      %v6403 = vrot.slane %v6288, 2
      %v6404 = vsel %vm5659, %v6401, %v6403
      %v6405 = vrot.slane %v6289, 2
      %v6406 = vsel %vm5659, %v6403, %v6405
      %v6407 = vrot.slane %v6290, 2
      %v6408 = vsel %vm5659, %v6405, %v6407
      %v6409 = vrot.slane %v6291, 2
      %v6410 = vsel %vm5659, %v6407, %v6409
      %v6411 = vrot.slane %v6292, 2
      %v6412 = vsel %vm5659, %v6409, %v6411
      %v6413 = vrot.slane %v6293, 2
      %v6414 = vsel %vm5659, %v6411, %v6413
      %v6415 = vrot.slane %v6294, 2
      %v6416 = vsel %vm5659, %v6413, %v6415
      %v6417 = vrot.slane %v6295, 2
      %v6418 = vsel %vm5659, %v6415, %v6417
      %v6419 = vrot.slane %v6296, 2
      %v6420 = vsel %vm5659, %v6417, %v6419
      %v6421 = vrot.slane %v6297, 2
      %v6422 = vsel %vm5659, %v6419, %v6421
      %v6423 = vrot.slane %v6298, 2
      %v6424 = vsel %vm5659, %v6421, %v6423
      %v6425 = vrot.slane %v6299, 2
      %v6426 = vsel %vm5659, %v6423, %v6425
      %v6427 = vrot.slane %v6300, 2
      %v6428 = vsel %vm5659, %v6425, %v6427
      %v6429 = vrot.slane %v6301, 2
      %v6430 = vsel %vm5659, %v6427, %v6429
      %v6431 = vrot.slane %v6302, 2
      %v6432 = vsel %vm5659, %v6429, %v6431
      %v6433 = vrot.slane %v6303, 2
      %v6434 = vsel %vm5659, %v6431, %v6433
      %v6435 = vrot.slane %v6304, 2
      %v6436 = vsel %vm5659, %v6433, %v6435
      %v6437 = vrot.slane %v6305, 2
      %v6438 = vsel %vm5659, %v6435, %v6437
      %v6439 = vrot.slane %v6306, 2
      %v6440 = vsel %vm5659, %v6437, %v6439
      %v6441 = vrot.slane %v6307, 2
      %v6442 = vsel %vm5659, %v6439, %v6441
      %v6443 = vrot.slane %v6308, 2
      %v6444 = vsel %vm5659, %v6441, %v6443
      %v6445 = vrot.slane %v6309, 2
      %v6446 = vsel %vm5659, %v6443, %v6445
      %v6447 = vrot.slane %v6310, 2
      %v6448 = vsel %vm5659, %v6445, %v6447
      %v6449 = vrot.slane %v6311, 2
      %v6450 = vsel %vm5659, %v6447, %v6449
      %v6508 = vunpack.c.l.b16 %v6313
      %v6509 = vunpack.c.l.b16 %v6314
      %v6510 = vunpack.c.l.b16 %v6315
      %v6511 = vunpack.c.l.b16 %v6316
      %v6512 = vunpack.c.l.b16 %v6317
      %v6513 = vunpack.c.l.b16 %v6318
      %v6514 = vunpack.c.l.b16 %v6319
      %v6515 = vunpack.c.l.b16 %v6320
      %v6516 = vunpack.c.l.b16 %v6321
      %v6517 = vunpack.c.l.b16 %v6322
      %v6518 = vunpack.c.l.b16 %v6323
      %v6519 = vunpack.c.l.b16 %v6324
      %v6520 = vunpack.c.l.b16 %v6325
      %v6521 = vunpack.c.l.b16 %v6326
      %v6522 = vunpack.c.l.b16 %v6327
      %v6523 = vunpack.c.l.b16 %v6328
      %v6524 = vpack.c.b16 %v6509, %v6508
      %v6525 = vpack.c.b16 %v6511, %v6510
      %v6526 = vpack.c.b16 %v6513, %v6512
      %v6527 = vpack.c.b16 %v6515, %v6514
      %v6528 = vpack.c.b16 %v6517, %v6516
      %v6529 = vpack.c.b16 %v6519, %v6518
      %v6530 = vpack.c.b16 %v6521, %v6520
      %v6531 = vpack.c.b16 %v6523, %v6522
      %6540 = vmatprep.subr.bf16.mxu0 0
      %6541 = vmatpush1.bf16.msra.mxu0 %v6524
      %6542 = vmatprep.subr.bf16.mxu0 0
      %6543 = vmatpush1.bf16.msra.mxu0 %v6525
      %6544 = vmatprep.subr.bf16.mxu0 0
      %6545 = vmatpush1.bf16.msra.mxu0 %v6526
      %6546 = vmatprep.subr.bf16.mxu0 0
      %6547 = vmatpush1.bf16.msra.mxu0 %v6527
      %6548 = vmatprep.subr.bf16.mxu0 0
      %6549 = vmatpush1.bf16.msra.mxu0 %v6528
      %6550 = vmatprep.subr.bf16.mxu0 0
      %6551 = vmatpush1.bf16.msra.mxu0 %v6529
      %6552 = vmatprep.subr.bf16.mxu0 0
      %6553 = vmatpush1.bf16.msra.mxu0 %v6530
      %6554 = vmatprep.subr.bf16.mxu0 0
      %6555 = vmatpush1.bf16.msra.mxu0 %v6531
      %6556 = vmatprep.subr.bf16.mxu0 0
      %6557 = vmatpush1.bf16.msra.mxu0 0
      %6558 = vmatprep.subr.bf16.mxu0 0
      %6559 = vmatpush1.bf16.msra.mxu0 0
      %6560 = vmatprep.subr.bf16.mxu0 0
      %6561 = vmatpush1.bf16.msra.mxu0 0
      %6562 = vmatprep.subr.bf16.mxu0 0
      %6563 = vmatpush1.bf16.msra.mxu0 0
      %6564 = vmatprep.subr.bf16.mxu0 0
      %6565 = vmatpush1.bf16.msra.mxu0 0
      %6566 = vmatprep.subr.bf16.mxu0 0
      %6567 = vmatpush1.bf16.msra.mxu0 0
      %6568 = vmatprep.subr.bf16.mxu0 0
      %6569 = vmatpush1.bf16.msra.mxu0 0
      %6570 = vmatprep.subr.bf16.mxu0 0
      %6571 = vmatpush1.bf16.msra.mxu0 0
      %6572 = vmatprep.mubr.bf16.mxu0 0
      %6573 = vmatmul.mubr.bf16.gmra.mrb[0].mxu0 %v6372
      %v6574 = vpop.f32.mrb[0].mxu0
      %v6575 = vadd.f32 0.0, %v6574
      %v6576 = vpop.f32.mrb[0].mxu0
      %v6577 = vpop.f32.mrb[0].mxu0
      %v6578 = vadd.f32 0.0, %v6577
      %v6579 = vpop.f32.mrb[0].mxu0
      %6580 = vmatprep.mubr.bf16.mxu0 0
      %6581 = vmatmul.mubr.bf16.gmra.mrb[0].mxu0 %v6374
      %v6582 = vpop.f32.mrb[0].mxu0
      %v6583 = vadd.f32 0.0, %v6582
      %v6584 = vpop.f32.mrb[0].mxu0
      %v6585 = vpop.f32.mrb[0].mxu0
      %v6586 = vadd.f32 0.0, %v6585
      %v6587 = vpop.f32.mrb[0].mxu0
      %6588 = vmatprep.mubr.bf16.mxu0 0
      %6589 = vmatmul.mubr.bf16.gmra.mrb[0].mxu0 %v6376
      %v6590 = vpop.f32.mrb[0].mxu0
      %v6591 = vadd.f32 0.0, %v6590
      %v6592 = vpop.f32.mrb[0].mxu0
      %v6593 = vpop.f32.mrb[0].mxu0
      %v6594 = vadd.f32 0.0, %v6593
      %v6595 = vpop.f32.mrb[0].mxu0
      %6596 = vmatprep.mubr.bf16.mxu0 0
      %6597 = vmatmul.mubr.bf16.gmra.mrb[0].mxu0 %v6378
      %v6598 = vpop.f32.mrb[0].mxu0
      %v6599 = vadd.f32 0.0, %v6598
      %v6600 = vpop.f32.mrb[0].mxu0
      %v6601 = vpop.f32.mrb[0].mxu0
      %v6602 = vadd.f32 0.0, %v6601
      %v6603 = vpop.f32.mrb[0].mxu0
      %6604 = vmatprep.mubr.bf16.mxu0 0
      %6605 = vmatmul.mubr.bf16.gmra.mrb[0].mxu0 %v6380
      %v6606 = vpop.f32.mrb[0].mxu0
      %v6607 = vadd.f32 0.0, %v6606
      %v6608 = vpop.f32.mrb[0].mxu0
      %v6609 = vpop.f32.mrb[0].mxu0
      %v6610 = vadd.f32 0.0, %v6609
      %v6611 = vpop.f32.mrb[0].mxu0
      %6612 = vmatprep.mubr.bf16.mxu0 0
      %6613 = vmatmul.mubr.bf16.gmra.mrb[0].mxu0 %v6382
      %v6614 = vpop.f32.mrb[0].mxu0
      %v6615 = vadd.f32 0.0, %v6614
      %v6616 = vpop.f32.mrb[0].mxu0
      %v6617 = vpop.f32.mrb[0].mxu0
      %v6618 = vadd.f32 0.0, %v6617
      %v6619 = vpop.f32.mrb[0].mxu0
      %6620 = vmatprep.mubr.bf16.mxu0 0
      %6621 = vmatmul.mubr.bf16.gmra.mrb[0].mxu0 %v6384
      %v6622 = vpop.f32.mrb[0].mxu0
      %v6623 = vadd.f32 0.0, %v6622
      %v6624 = vpop.f32.mrb[0].mxu0
      %v6625 = vpop.f32.mrb[0].mxu0
      %v6626 = vadd.f32 0.0, %v6625
      %v6627 = vpop.f32.mrb[0].mxu0
      %6628 = vmatprep.mubr.bf16.mxu0 0
      %6629 = vmatmul.mubr.bf16.gmra.mrb[0].mxu0 %v6386
      %v6630 = vpop.f32.mrb[0].mxu0
      %v6631 = vadd.f32 0.0, %v6630
      %v6632 = vpop.f32.mrb[0].mxu0
      %v6633 = vpop.f32.mrb[0].mxu0
      %v6634 = vadd.f32 0.0, %v6633
      %v6635 = vpop.f32.mrb[0].mxu0
      %6636 = vmatprep.mubr.bf16.mxu0 0
      %6637 = vmatmul.mubr.bf16.gmra.mrb[0].mxu0 %v6388
      %v6638 = vpop.f32.mrb[0].mxu0
      %v6639 = vadd.f32 0.0, %v6638
      %v6640 = vpop.f32.mrb[0].mxu0
      %v6641 = vpop.f32.mrb[0].mxu0
      %v6642 = vadd.f32 0.0, %v6641
      %v6643 = vpop.f32.mrb[0].mxu0
      %6644 = vmatprep.mubr.bf16.mxu0 0
      %6645 = vmatmul.mubr.bf16.gmra.mrb[0].mxu0 %v6390
      %v6646 = vpop.f32.mrb[0].mxu0
      %v6647 = vadd.f32 0.0, %v6646
      %v6648 = vpop.f32.mrb[0].mxu0
      %v6649 = vpop.f32.mrb[0].mxu0
      %v6650 = vadd.f32 0.0, %v6649
      %v6651 = vpop.f32.mrb[0].mxu0
      %6652 = vmatprep.mubr.bf16.mxu0 0
      %6653 = vmatmul.mubr.bf16.gmra.mrb[0].mxu0 %v6392
      %v6654 = vpop.f32.mrb[0].mxu0
      %v6655 = vadd.f32 0.0, %v6654
      %v6656 = vpop.f32.mrb[0].mxu0
      %v6657 = vpop.f32.mrb[0].mxu0
      %v6658 = vadd.f32 0.0, %v6657
      %v6659 = vpop.f32.mrb[0].mxu0
      %6660 = vmatprep.mubr.bf16.mxu0 0
      %6661 = vmatmul.mubr.bf16.gmra.mrb[0].mxu0 %v6394
      %v6662 = vpop.f32.mrb[0].mxu0
      %v6663 = vadd.f32 0.0, %v6662
      %v6664 = vpop.f32.mrb[0].mxu0
      %v6665 = vpop.f32.mrb[0].mxu0
      %v6666 = vadd.f32 0.0, %v6665
      %v6667 = vpop.f32.mrb[0].mxu0
      %6668 = vmatprep.mubr.bf16.mxu0 0
      %6669 = vmatmul.mubr.bf16.gmra.mrb[0].mxu0 %v6396
      %v6670 = vpop.f32.mrb[0].mxu0
      %v6671 = vadd.f32 0.0, %v6670
      %v6672 = vpop.f32.mrb[0].mxu0
      %v6673 = vpop.f32.mrb[0].mxu0
      %v6674 = vadd.f32 0.0, %v6673
      %v6675 = vpop.f32.mrb[0].mxu0
      %6676 = vmatprep.mubr.bf16.mxu0 0
      %6677 = vmatmul.mubr.bf16.gmra.mrb[0].mxu0 %v6398
      %v6678 = vpop.f32.mrb[0].mxu0
      %v6679 = vadd.f32 0.0, %v6678
      %v6680 = vpop.f32.mrb[0].mxu0
      %v6681 = vpop.f32.mrb[0].mxu0
      %v6682 = vadd.f32 0.0, %v6681
      %v6683 = vpop.f32.mrb[0].mxu0
      %6684 = vmatprep.mubr.bf16.mxu0 0
      %6685 = vmatmul.mubr.bf16.gmra.mrb[0].mxu0 %v6400
      %v6686 = vpop.f32.mrb[0].mxu0
      %v6687 = vadd.f32 0.0, %v6686
      %v6688 = vpop.f32.mrb[0].mxu0
      %v6689 = vpop.f32.mrb[0].mxu0
      %v6690 = vadd.f32 0.0, %v6689
      %v6691 = vpop.f32.mrb[0].mxu0
      %6692 = vmatprep.mubr.bf16.mxu0 0
      %6693 = vmatmul.mubr.bf16.gmra.mrb[0].mxu0 %v6402
      %v6694 = vpop.f32.mrb[0].mxu0
      %v6695 = vadd.f32 0.0, %v6694
      %v6696 = vpop.f32.mrb[0].mxu0
      %v6697 = vpop.f32.mrb[0].mxu0
      %v6698 = vadd.f32 0.0, %v6697
      %v6699 = vpop.f32.mrb[0].mxu0
      %6700 = vmatprep.mubr.bf16.mxu0 0
      %6701 = vmatmul.mubr.bf16.gmra.mrb[0].mxu0 %v6404
      %v6702 = vpop.f32.mrb[0].mxu0
      %v6703 = vadd.f32 0.0, %v6702
      %v6704 = vpop.f32.mrb[0].mxu0
      %v6705 = vpop.f32.mrb[0].mxu0
      %v6706 = vadd.f32 0.0, %v6705
      %v6707 = vpop.f32.mrb[0].mxu0
      %6708 = vmatprep.mubr.bf16.mxu0 0
      %6709 = vmatmul.mubr.bf16.gmra.mrb[0].mxu0 %v6406
      %v6710 = vpop.f32.mrb[0].mxu0
      %v6711 = vadd.f32 0.0, %v6710
      %v6712 = vpop.f32.mrb[0].mxu0
      %v6713 = vpop.f32.mrb[0].mxu0
      %v6714 = vadd.f32 0.0, %v6713
      %v6715 = vpop.f32.mrb[0].mxu0
      %6716 = vmatprep.mubr.bf16.mxu0 0
      %6717 = vmatmul.mubr.bf16.gmra.mrb[0].mxu0 %v6408
      %v6718 = vpop.f32.mrb[0].mxu0
      %v6719 = vadd.f32 0.0, %v6718
      %v6720 = vpop.f32.mrb[0].mxu0
      %v6721 = vpop.f32.mrb[0].mxu0
      %v6722 = vadd.f32 0.0, %v6721
      %v6723 = vpop.f32.mrb[0].mxu0
      %6724 = vmatprep.mubr.bf16.mxu0 0
      %6725 = vmatmul.mubr.bf16.gmra.mrb[0].mxu0 %v6410
      %v6726 = vpop.f32.mrb[0].mxu0
      %v6727 = vadd.f32 0.0, %v6726
      %v6728 = vpop.f32.mrb[0].mxu0
      %v6729 = vpop.f32.mrb[0].mxu0
      %v6730 = vadd.f32 0.0, %v6729
      %v6731 = vpop.f32.mrb[0].mxu0
      %6732 = vmatprep.mubr.bf16.mxu0 0
      %6733 = vmatmul.mubr.bf16.gmra.mrb[0].mxu0 %v6412
      %v6734 = vpop.f32.mrb[0].mxu0
      %v6735 = vadd.f32 0.0, %v6734
      %v6736 = vpop.f32.mrb[0].mxu0
      %v6737 = vpop.f32.mrb[0].mxu0
      %v6738 = vadd.f32 0.0, %v6737
      %v6739 = vpop.f32.mrb[0].mxu0
      %6740 = vmatprep.mubr.bf16.mxu0 0
      %6741 = vmatmul.mubr.bf16.gmra.mrb[0].mxu0 %v6414
      %v6742 = vpop.f32.mrb[0].mxu0
      %v6743 = vadd.f32 0.0, %v6742
      %v6744 = vpop.f32.mrb[0].mxu0
      %v6745 = vpop.f32.mrb[0].mxu0
      %v6746 = vadd.f32 0.0, %v6745
      %v6747 = vpop.f32.mrb[0].mxu0
      %6748 = vmatprep.mubr.bf16.mxu0 0
      %6749 = vmatmul.mubr.bf16.gmra.mrb[0].mxu0 %v6416
      %v6750 = vpop.f32.mrb[0].mxu0
      %v6751 = vadd.f32 0.0, %v6750
      %v6752 = vpop.f32.mrb[0].mxu0
      %v6753 = vpop.f32.mrb[0].mxu0
      %v6754 = vadd.f32 0.0, %v6753
      %v6755 = vpop.f32.mrb[0].mxu0
      %6756 = vmatprep.mubr.bf16.mxu0 0
      %6757 = vmatmul.mubr.bf16.gmra.mrb[0].mxu0 %v6418
      %v6758 = vpop.f32.mrb[0].mxu0
      %v6759 = vadd.f32 0.0, %v6758
      %v6760 = vpop.f32.mrb[0].mxu0
      %v6761 = vpop.f32.mrb[0].mxu0
      %v6762 = vadd.f32 0.0, %v6761
      %v6763 = vpop.f32.mrb[0].mxu0
      %6764 = vmatprep.mubr.bf16.mxu0 0
      %6765 = vmatmul.mubr.bf16.gmra.mrb[0].mxu0 %v6420
      %v6766 = vpop.f32.mrb[0].mxu0
      %v6767 = vadd.f32 0.0, %v6766
      %v6768 = vpop.f32.mrb[0].mxu0
      %v6769 = vpop.f32.mrb[0].mxu0
      %v6770 = vadd.f32 0.0, %v6769
      %v6771 = vpop.f32.mrb[0].mxu0
      %6772 = vmatprep.mubr.bf16.mxu0 0
      %6773 = vmatmul.mubr.bf16.gmra.mrb[0].mxu0 %v6422
      %v6774 = vpop.f32.mrb[0].mxu0
      %v6775 = vadd.f32 0.0, %v6774
      %v6776 = vpop.f32.mrb[0].mxu0
      %v6777 = vpop.f32.mrb[0].mxu0
      %v6778 = vadd.f32 0.0, %v6777
      %v6779 = vpop.f32.mrb[0].mxu0
      %6780 = vmatprep.mubr.bf16.mxu0 0
      %6781 = vmatmul.mubr.bf16.gmra.mrb[0].mxu0 %v6424
      %v6782 = vpop.f32.mrb[0].mxu0
      %v6783 = vadd.f32 0.0, %v6782
      %v6784 = vpop.f32.mrb[0].mxu0
      %v6785 = vpop.f32.mrb[0].mxu0
      %v6786 = vadd.f32 0.0, %v6785
      %v6787 = vpop.f32.mrb[0].mxu0
      %6788 = vmatprep.mubr.bf16.mxu0 0
      %6789 = vmatmul.mubr.bf16.gmra.mrb[0].mxu0 %v6426
      %v6790 = vpop.f32.mrb[0].mxu0
      %v6791 = vadd.f32 0.0, %v6790
      %v6792 = vpop.f32.mrb[0].mxu0
      %v6793 = vpop.f32.mrb[0].mxu0
      %v6794 = vadd.f32 0.0, %v6793
      %v6795 = vpop.f32.mrb[0].mxu0
      %6796 = vmatprep.mubr.bf16.mxu0 0
      %6797 = vmatmul.mubr.bf16.gmra.mrb[0].mxu0 %v6428
      %v6798 = vpop.f32.mrb[0].mxu0
      %v6799 = vadd.f32 0.0, %v6798
      %v6800 = vpop.f32.mrb[0].mxu0
      %v6801 = vpop.f32.mrb[0].mxu0
      %v6802 = vadd.f32 0.0, %v6801
      %v6803 = vpop.f32.mrb[0].mxu0
      %6804 = vmatprep.mubr.bf16.mxu0 0
      %6805 = vmatmul.mubr.bf16.gmra.mrb[0].mxu0 %v6430
      %v6806 = vpop.f32.mrb[0].mxu0
      %v6807 = vadd.f32 0.0, %v6806
      %v6808 = vpop.f32.mrb[0].mxu0
      %v6809 = vpop.f32.mrb[0].mxu0
      %v6810 = vadd.f32 0.0, %v6809
      %v6811 = vpop.f32.mrb[0].mxu0
      %6812 = vmatprep.mubr.bf16.mxu0 0
      %6813 = vmatmul.mubr.bf16.gmra.mrb[0].mxu0 %v6432
      %v6814 = vpop.f32.mrb[0].mxu0
      %v6815 = vadd.f32 0.0, %v6814
      %v6816 = vpop.f32.mrb[0].mxu0
      %v6817 = vpop.f32.mrb[0].mxu0
      %v6818 = vadd.f32 0.0, %v6817
      %v6819 = vpop.f32.mrb[0].mxu0
      %6820 = vmatprep.mubr.bf16.mxu0 0
      %6821 = vmatmul.mubr.bf16.gmra.mrb[0].mxu0 %v6434
      %v6822 = vpop.f32.mrb[0].mxu0
      %v6823 = vadd.f32 0.0, %v6822
      %v6824 = vpop.f32.mrb[0].mxu0
      %v6825 = vpop.f32.mrb[0].mxu0
      %v6826 = vadd.f32 0.0, %v6825
      %v6827 = vpop.f32.mrb[0].mxu0
      %6828 = vmatprep.mubr.bf16.mxu0 0
      %6829 = vmatmul.mubr.bf16.gmra.mrb[0].mxu0 %v6436
      %v6830 = vpop.f32.mrb[0].mxu0
      %v6831 = vadd.f32 0.0, %v6830
      %v6832 = vpop.f32.mrb[0].mxu0
      %v6833 = vpop.f32.mrb[0].mxu0
      %v6834 = vadd.f32 0.0, %v6833
      %v6835 = vpop.f32.mrb[0].mxu0
      %6836 = vmatprep.mubr.bf16.mxu0 0
      %6837 = vmatmul.mubr.bf16.gmra.mrb[0].mxu0 %v6438
      %v6838 = vpop.f32.mrb[0].mxu0
      %v6839 = vadd.f32 0.0, %v6838
      %v6840 = vpop.f32.mrb[0].mxu0
      %v6841 = vpop.f32.mrb[0].mxu0
      %v6842 = vadd.f32 0.0, %v6841
      %v6843 = vpop.f32.mrb[0].mxu0
      %6844 = vmatprep.mubr.bf16.mxu0 0
      %6845 = vmatmul.mubr.bf16.gmra.mrb[0].mxu0 %v6440
      %v6846 = vpop.f32.mrb[0].mxu0
      %v6847 = vadd.f32 0.0, %v6846
      %v6848 = vpop.f32.mrb[0].mxu0
      %v6849 = vpop.f32.mrb[0].mxu0
      %v6850 = vadd.f32 0.0, %v6849
      %v6851 = vpop.f32.mrb[0].mxu0
      %6852 = vmatprep.mubr.bf16.mxu0 0
      %6853 = vmatmul.mubr.bf16.gmra.mrb[0].mxu0 %v6442
      %v6854 = vpop.f32.mrb[0].mxu0
      %v6855 = vadd.f32 0.0, %v6854
      %v6856 = vpop.f32.mrb[0].mxu0
      %v6857 = vpop.f32.mrb[0].mxu0
      %v6858 = vadd.f32 0.0, %v6857
      %v6859 = vpop.f32.mrb[0].mxu0
      %6860 = vmatprep.mubr.bf16.mxu0 0
      %6861 = vmatmul.mubr.bf16.gmra.mrb[0].mxu0 %v6444
      %v6862 = vpop.f32.mrb[0].mxu0
      %v6863 = vadd.f32 0.0, %v6862
      %v6864 = vpop.f32.mrb[0].mxu0
      %v6865 = vpop.f32.mrb[0].mxu0
      %v6866 = vadd.f32 0.0, %v6865
      %v6867 = vpop.f32.mrb[0].mxu0
      %6868 = vmatprep.mubr.bf16.mxu0 0
      %6869 = vmatmul.mubr.bf16.gmra.mrb[0].mxu0 %v6446
      %v6870 = vpop.f32.mrb[0].mxu0
      %v6871 = vadd.f32 0.0, %v6870
      %v6872 = vpop.f32.mrb[0].mxu0
      %v6873 = vpop.f32.mrb[0].mxu0
      %v6874 = vadd.f32 0.0, %v6873
      %v6875 = vpop.f32.mrb[0].mxu0
      %6876 = vmatprep.mubr.bf16.mxu0 0
      %6877 = vmatmul.mubr.bf16.gmra.mrb[0].mxu0 %v6448
      %v6878 = vpop.f32.mrb[0].mxu0
      %v6879 = vadd.f32 0.0, %v6878
      %v6880 = vpop.f32.mrb[0].mxu0
      %v6881 = vpop.f32.mrb[0].mxu0
      %v6882 = vadd.f32 0.0, %v6881
      %v6883 = vpop.f32.mrb[0].mxu0
      %6884 = vmatprep.mubr.bf16.mxu0 0
      %6885 = vmatmul.mubr.bf16.gmra.mrb[0].mxu0 %v6450
      %v6886 = vpop.f32.mrb[0].mxu0
      %v6887 = vadd.f32 0.0, %v6886
      %v6888 = vpop.f32.mrb[0].mxu0
      %v6889 = vpop.f32.mrb[0].mxu0
      %v6890 = vadd.f32 0.0, %v6889
      %v6891 = vpop.f32.mrb[0].mxu0
      %6892 = vmatprep.mubr.bf16.mxu0 0
      %6893 = vmatmul.mubr.bf16.gmra.mrb[0].mxu0 %v6449
      %v6894 = vpop.f32.mrb[0].mxu0
      %v6895 = vadd.f32 0.0, %v6894
      %v6896 = vpop.f32.mrb[0].mxu0
      %v6897 = vpop.f32.mrb[0].mxu0
      %v6898 = vpop.f32.mrb[0].mxu0
      %6899 = vdwg.mxu0
      %v6900 = vadd.f32 %v6190, %v6575
      %v6901 = vadd.f32 %v6191, %v6578
      %v6902 = vadd.f32 %v6192, %v6583
      %v6903 = vadd.f32 %v6193, %v6586
      %v6904 = vadd.f32 %v6194, %v6591
      %v6905 = vadd.f32 %v6195, %v6594
      %v6906 = vadd.f32 %v6196, %v6599
      %v6907 = vadd.f32 %v6197, %v6602
      %v6908 = vadd.f32 %v6198, %v6607
      %v6909 = vadd.f32 %v6199, %v6610
      %v6910 = vadd.f32 %v6200, %v6615
      %v6911 = vadd.f32 %v6201, %v6618
      %v6912 = vadd.f32 %v6202, %v6623
      %v6913 = vadd.f32 %v6203, %v6626
      %v6914 = vadd.f32 %v6204, %v6631
      %v6915 = vadd.f32 %v6205, %v6634
      %v6916 = vadd.f32 %v6206, %v6639
      %v6917 = vadd.f32 %v6207, %v6642
      %v6918 = vadd.f32 %v6208, %v6647
      %v6919 = vadd.f32 %v6209, %v6650
      %v6920 = vadd.f32 %v6210, %v6655
      %v6921 = vadd.f32 %v6211, %v6658
      %v6922 = vadd.f32 %v6212, %v6663
      %v6923 = vadd.f32 %v6213, %v6666
      %v6924 = vadd.f32 %v6214, %v6671
      %v6925 = vadd.f32 %v6215, %v6674
      %v6926 = vadd.f32 %v6216, %v6679
      %v6927 = vadd.f32 %v6217, %v6682
      %v6928 = vadd.f32 %v6218, %v6687
      %v6929 = vadd.f32 %v6219, %v6690
      %v6930 = vadd.f32 %v6220, %v6695
      %v6931 = vadd.f32 %v6221, %v6698
      %v6932 = vadd.f32 %v6222, %v6703
      %v6933 = vadd.f32 %v6223, %v6706
      %v6934 = vadd.f32 %v6224, %v6711
      %v6935 = vadd.f32 %v6225, %v6714
      %v6936 = vadd.f32 %v6226, %v6719
      %v6937 = vadd.f32 %v6227, %v6722
      %v6938 = vadd.f32 %v6228, %v6727
      %v6939 = vadd.f32 %v6229, %v6730
      %v6940 = vadd.f32 %v6230, %v6735
      %v6941 = vadd.f32 %v6231, %v6738
      %v6942 = vadd.f32 %v6232, %v6743
      %v6943 = vadd.f32 %v6233, %v6746
      %v6944 = vadd.f32 %v6234, %v6751
      %v6945 = vadd.f32 %v6235, %v6754
      %v6946 = vadd.f32 %v6236, %v6759
      %v6947 = vadd.f32 %v6237, %v6762
      %v6948 = vadd.f32 %v6238, %v6767
      %v6949 = vadd.f32 %v6239, %v6770
      %v6950 = vadd.f32 %v6240, %v6775
      %v6951 = vadd.f32 %v6241, %v6778
      %v6952 = vadd.f32 %v6242, %v6783
      %v6953 = vadd.f32 %v6243, %v6786
      %v6954 = vadd.f32 %v6244, %v6791
      %v6955 = vadd.f32 %v6245, %v6794
      %v6956 = vadd.f32 %v6246, %v6799
      %v6957 = vadd.f32 %v6247, %v6802
      %v6958 = vadd.f32 %v6248, %v6807
      %v6959 = vadd.f32 %v6249, %v6810
      %v6960 = vadd.f32 %v6250, %v6815
      %v6961 = vadd.f32 %v6251, %v6818
      %v6962 = vadd.f32 %v6252, %v6823
      %v6963 = vadd.f32 %v6253, %v6826
      %v6964 = vadd.f32 %v6254, %v6831
      %v6965 = vadd.f32 %v6255, %v6834
      %v6966 = vadd.f32 %v6256, %v6839
      %v6967 = vadd.f32 %v6257, %v6842
      %v6968 = vadd.f32 %v6258, %v6847
      %v6969 = vadd.f32 %v6259, %v6850
      %v6970 = vadd.f32 %v6260, %v6855
      %v6971 = vadd.f32 %v6261, %v6858
      %v6972 = vadd.f32 %v6262, %v6863
      %v6973 = vadd.f32 %v6263, %v6866
      %v6974 = vadd.f32 %v6264, %v6871
      %v6975 = vadd.f32 %v6265, %v6874
      %v6976 = vadd.f32 %v6266, %v6879
      %v6977 = vadd.f32 %v6267, %v6882
      %v6978 = vadd.f32 %v6268, %v6887
      %v6979 = vadd.f32 %v6269, %v6890
      %v6980 = vadd.f32 %v6270, %v6895
      %v6981 = vld [vmem:[#allocation2 + $0x150] sm:$0x7f]
      %s6982 = scalar_lea.vmem %s5, 448
      %v6983 = vld [vmem:[%s6982] sm:$0xf]
      %v6984 = vld [vmem:[%s6982 + $0x4] sm:$0xf]
      %v6985 = vld [vmem:[%s6982 + $0x8] sm:$0xf]
      %v6986 = vld [vmem:[%s6982 + $0xc] sm:$0xf]
      %v6987 = vld [vmem:[%s6982 + $0x10] sm:$0xf]
      %v6988 = vld [vmem:[%s6982 + $0x14] sm:$0xf]
      %v6989 = vld [vmem:[%s6982 + $0x18] sm:$0xf]
      %v6990 = vld [vmem:[%s6982 + $0x1c] sm:$0xf]
      %v6991 = vld [vmem:[%s6982 + $0x20] sm:$0xf]
      %v6992 = vld [vmem:[%s6982 + $0x24] sm:$0xf]
      %v6993 = vld [vmem:[%s6982 + $0x28] sm:$0xf]
      %v6994 = vld [vmem:[%s6982 + $0x2c] sm:$0xf]
      %v6995 = vld [vmem:[%s6982 + $0x30] sm:$0xf]
      %v6996 = vld [vmem:[%s6982 + $0x34] sm:$0xf]
      %v6997 = vld [vmem:[%s6982 + $0x38] sm:$0xf]
      %v6998 = vld [vmem:[%s6982 + $0x3c] sm:$0xf]
      %vm6999 = vsmask.f32 5376
      %v7001 = vshrl.u32 %v6271, 16
      %v7003 = vrot.slane %v7001, 2
      %v7004 = vshll.u32 %v6271, 16
      %v7006 = vrot.slane %v7004, 3
      %v7007 = vor.u32 %v7003, %v7006
      %v7009 = vshrl.u32 %v6272, 16
      %v7011 = vrot.slane %v7009, 2
      %v7012 = vshll.u32 %v6272, 16
      %v7014 = vrot.slane %v7012, 3
      %v7015 = vor.u32 %v7011, %v7014
      %v7016 = vsel %vm6999, %v7007, %v7015
      %v7018 = vshrl.u32 %v6273, 16
      %v7020 = vrot.slane %v7018, 2
      %v7021 = vshll.u32 %v6273, 16
      %v7023 = vrot.slane %v7021, 3
      %v7024 = vor.u32 %v7020, %v7023
      %v7025 = vsel %vm6999, %v7015, %v7024
      %v7027 = vshrl.u32 %v6274, 16
      %v7029 = vrot.slane %v7027, 2
      %v7030 = vshll.u32 %v6274, 16
      %v7032 = vrot.slane %v7030, 3
      %v7033 = vor.u32 %v7029, %v7032
      %v7034 = vsel %vm6999, %v7024, %v7033
      %v7036 = vshrl.u32 %v6275, 16
      %v7038 = vrot.slane %v7036, 2
      %v7039 = vshll.u32 %v6275, 16
      %v7041 = vrot.slane %v7039, 3
      %v7042 = vor.u32 %v7038, %v7041
      %v7043 = vsel %vm6999, %v7033, %v7042
      %v7045 = vshrl.u32 %v6276, 16
      %v7047 = vrot.slane %v7045, 2
      %v7048 = vshll.u32 %v6276, 16
      %v7050 = vrot.slane %v7048, 3
      %v7051 = vor.u32 %v7047, %v7050
      %v7052 = vsel %vm6999, %v7042, %v7051
      %v7054 = vshrl.u32 %v6277, 16
      %v7056 = vrot.slane %v7054, 2
      %v7057 = vshll.u32 %v6277, 16
      %v7059 = vrot.slane %v7057, 3
      %v7060 = vor.u32 %v7056, %v7059
      %v7061 = vsel %vm6999, %v7051, %v7060
      %v7063 = vshrl.u32 %v6278, 16
      %v7065 = vrot.slane %v7063, 2
      %v7066 = vshll.u32 %v6278, 16
      %v7068 = vrot.slane %v7066, 3
      %v7069 = vor.u32 %v7065, %v7068
      %v7070 = vsel %vm6999, %v7060, %v7069
      %v7072 = vshrl.u32 %v6279, 16
      %v7074 = vrot.slane %v7072, 2
      %v7075 = vshll.u32 %v6279, 16
      %v7077 = vrot.slane %v7075, 3
      %v7078 = vor.u32 %v7074, %v7077
      %v7079 = vsel %vm6999, %v7069, %v7078
      %v7081 = vshrl.u32 %v6280, 16
      %v7083 = vrot.slane %v7081, 2
      %v7084 = vshll.u32 %v6280, 16
      %v7086 = vrot.slane %v7084, 3
      %v7087 = vor.u32 %v7083, %v7086
      %v7088 = vsel %vm6999, %v7078, %v7087
      %v7090 = vshrl.u32 %v6281, 16
      %v7092 = vrot.slane %v7090, 2
      %v7093 = vshll.u32 %v6281, 16
      %v7095 = vrot.slane %v7093, 3
      %v7096 = vor.u32 %v7092, %v7095
      %v7097 = vsel %vm6999, %v7087, %v7096
      %v7099 = vshrl.u32 %v6282, 16
      %v7101 = vrot.slane %v7099, 2
      %v7102 = vshll.u32 %v6282, 16
      %v7104 = vrot.slane %v7102, 3
      %v7105 = vor.u32 %v7101, %v7104
      %v7106 = vsel %vm6999, %v7096, %v7105
      %v7108 = vshrl.u32 %v6283, 16
      %v7110 = vrot.slane %v7108, 2
      %v7111 = vshll.u32 %v6283, 16
      %v7113 = vrot.slane %v7111, 3
      %v7114 = vor.u32 %v7110, %v7113
      %v7115 = vsel %vm6999, %v7105, %v7114
      %v7117 = vshrl.u32 %v6284, 16
      %v7119 = vrot.slane %v7117, 2
      %v7120 = vshll.u32 %v6284, 16
      %v7122 = vrot.slane %v7120, 3
      %v7123 = vor.u32 %v7119, %v7122
      %v7124 = vsel %vm6999, %v7114, %v7123
      %v7126 = vshrl.u32 %v6285, 16
      %v7128 = vrot.slane %v7126, 2
      %v7129 = vshll.u32 %v6285, 16
      %v7131 = vrot.slane %v7129, 3
      %v7132 = vor.u32 %v7128, %v7131
      %v7133 = vsel %vm6999, %v7123, %v7132
      %v7135 = vshrl.u32 %v6286, 16
      %v7137 = vrot.slane %v7135, 2
      %v7138 = vshll.u32 %v6286, 16
      %v7140 = vrot.slane %v7138, 3
      %v7141 = vor.u32 %v7137, %v7140
      %v7142 = vsel %vm6999, %v7132, %v7141
      %v7144 = vshrl.u32 %v6287, 16
      %v7146 = vrot.slane %v7144, 2
      %v7147 = vshll.u32 %v6287, 16
      %v7149 = vrot.slane %v7147, 3
      %v7150 = vor.u32 %v7146, %v7149
      %v7151 = vsel %vm6999, %v7141, %v7150
      %v7153 = vshrl.u32 %v6288, 16
      %v7155 = vrot.slane %v7153, 2
      %v7156 = vshll.u32 %v6288, 16
      %v7158 = vrot.slane %v7156, 3
      %v7159 = vor.u32 %v7155, %v7158
      %v7160 = vsel %vm6999, %v7150, %v7159
      %v7162 = vshrl.u32 %v6289, 16
      %v7164 = vrot.slane %v7162, 2
      %v7165 = vshll.u32 %v6289, 16
      %v7167 = vrot.slane %v7165, 3
      %v7168 = vor.u32 %v7164, %v7167
      %v7169 = vsel %vm6999, %v7159, %v7168
      %v7171 = vshrl.u32 %v6290, 16
      %v7173 = vrot.slane %v7171, 2
      %v7174 = vshll.u32 %v6290, 16
      %v7176 = vrot.slane %v7174, 3
      %v7177 = vor.u32 %v7173, %v7176
      %v7178 = vsel %vm6999, %v7168, %v7177
      %v7180 = vshrl.u32 %v6291, 16
      %v7182 = vrot.slane %v7180, 2
      %v7183 = vshll.u32 %v6291, 16
      %v7185 = vrot.slane %v7183, 3
      %v7186 = vor.u32 %v7182, %v7185
      %v7187 = vsel %vm6999, %v7177, %v7186
      %v7189 = vshrl.u32 %v6292, 16
      %v7191 = vrot.slane %v7189, 2
      %v7192 = vshll.u32 %v6292, 16
      %v7194 = vrot.slane %v7192, 3
      %v7195 = vor.u32 %v7191, %v7194
      %v7196 = vsel %vm6999, %v7186, %v7195
      %v7198 = vshrl.u32 %v6293, 16
      %v7200 = vrot.slane %v7198, 2
      %v7201 = vshll.u32 %v6293, 16
      %v7203 = vrot.slane %v7201, 3
      %v7204 = vor.u32 %v7200, %v7203
      %v7205 = vsel %vm6999, %v7195, %v7204
      %v7207 = vshrl.u32 %v6294, 16
      %v7209 = vrot.slane %v7207, 2
      %v7210 = vshll.u32 %v6294, 16
      %v7212 = vrot.slane %v7210, 3
      %v7213 = vor.u32 %v7209, %v7212
      %v7214 = vsel %vm6999, %v7204, %v7213
      %v7216 = vshrl.u32 %v6295, 16
      %v7218 = vrot.slane %v7216, 2
      %v7219 = vshll.u32 %v6295, 16
      %v7221 = vrot.slane %v7219, 3
      %v7222 = vor.u32 %v7218, %v7221
      %v7223 = vsel %vm6999, %v7213, %v7222
      %v7225 = vshrl.u32 %v6296, 16
      %v7227 = vrot.slane %v7225, 2
      %v7228 = vshll.u32 %v6296, 16
      %v7230 = vrot.slane %v7228, 3
      %v7231 = vor.u32 %v7227, %v7230
      %v7232 = vsel %vm6999, %v7222, %v7231
      %v7234 = vshrl.u32 %v6297, 16
      %v7236 = vrot.slane %v7234, 2
      %v7237 = vshll.u32 %v6297, 16
      %v7239 = vrot.slane %v7237, 3
      %v7240 = vor.u32 %v7236, %v7239
      %v7241 = vsel %vm6999, %v7231, %v7240
      %v7243 = vshrl.u32 %v6298, 16
      %v7245 = vrot.slane %v7243, 2
      %v7246 = vshll.u32 %v6298, 16
      %v7248 = vrot.slane %v7246, 3
      %v7249 = vor.u32 %v7245, %v7248
      %v7250 = vsel %vm6999, %v7240, %v7249
      %v7252 = vshrl.u32 %v6299, 16
      %v7254 = vrot.slane %v7252, 2
      %v7255 = vshll.u32 %v6299, 16
      %v7257 = vrot.slane %v7255, 3
      %v7258 = vor.u32 %v7254, %v7257
      %v7259 = vsel %vm6999, %v7249, %v7258
      %v7261 = vshrl.u32 %v6300, 16
      %v7263 = vrot.slane %v7261, 2
      %v7264 = vshll.u32 %v6300, 16
      %v7266 = vrot.slane %v7264, 3
      %v7267 = vor.u32 %v7263, %v7266
      %v7268 = vsel %vm6999, %v7258, %v7267
      %v7270 = vshrl.u32 %v6301, 16
      %v7272 = vrot.slane %v7270, 2
      %v7273 = vshll.u32 %v6301, 16
      %v7275 = vrot.slane %v7273, 3
      %v7276 = vor.u32 %v7272, %v7275
      %v7277 = vsel %vm6999, %v7267, %v7276
      %v7279 = vshrl.u32 %v6302, 16
      %v7281 = vrot.slane %v7279, 2
      %v7282 = vshll.u32 %v6302, 16
      %v7284 = vrot.slane %v7282, 3
      %v7285 = vor.u32 %v7281, %v7284
      %v7286 = vsel %vm6999, %v7276, %v7285
      %v7288 = vshrl.u32 %v6303, 16
      %v7290 = vrot.slane %v7288, 2
      %v7291 = vshll.u32 %v6303, 16
      %v7293 = vrot.slane %v7291, 3
      %v7294 = vor.u32 %v7290, %v7293
      %v7295 = vsel %vm6999, %v7285, %v7294
      %v7297 = vshrl.u32 %v6304, 16
      %v7299 = vrot.slane %v7297, 2
      %v7300 = vshll.u32 %v6304, 16
      %v7302 = vrot.slane %v7300, 3
      %v7303 = vor.u32 %v7299, %v7302
      %v7304 = vsel %vm6999, %v7294, %v7303
      %v7306 = vshrl.u32 %v6305, 16
      %v7308 = vrot.slane %v7306, 2
      %v7309 = vshll.u32 %v6305, 16
      %v7311 = vrot.slane %v7309, 3
      %v7312 = vor.u32 %v7308, %v7311
      %v7313 = vsel %vm6999, %v7303, %v7312
      %v7315 = vshrl.u32 %v6306, 16
      %v7317 = vrot.slane %v7315, 2
      %v7318 = vshll.u32 %v6306, 16
      %v7320 = vrot.slane %v7318, 3
      %v7321 = vor.u32 %v7317, %v7320
      %v7322 = vsel %vm6999, %v7312, %v7321
      %v7324 = vshrl.u32 %v6307, 16
      %v7326 = vrot.slane %v7324, 2
      %v7327 = vshll.u32 %v6307, 16
      %v7329 = vrot.slane %v7327, 3
      %v7330 = vor.u32 %v7326, %v7329
      %v7331 = vsel %vm6999, %v7321, %v7330
      %v7333 = vshrl.u32 %v6308, 16
      %v7335 = vrot.slane %v7333, 2
      %v7336 = vshll.u32 %v6308, 16
      %v7338 = vrot.slane %v7336, 3
      %v7339 = vor.u32 %v7335, %v7338
      %v7340 = vsel %vm6999, %v7330, %v7339
      %v7342 = vshrl.u32 %v6309, 16
      %v7344 = vrot.slane %v7342, 2
      %v7345 = vshll.u32 %v6309, 16
      %v7347 = vrot.slane %v7345, 3
      %v7348 = vor.u32 %v7344, %v7347
      %v7349 = vsel %vm6999, %v7339, %v7348
      %v7351 = vshrl.u32 %v6310, 16
      %v7353 = vrot.slane %v7351, 2
      %v7354 = vshll.u32 %v6310, 16
      %v7356 = vrot.slane %v7354, 3
      %v7357 = vor.u32 %v7353, %v7356
      %v7358 = vsel %vm6999, %v7348, %v7357
      %v7360 = vshrl.u32 %v6981, 16
      %v7362 = vrot.slane %v7360, 2
      %v7363 = vshll.u32 %v6981, 16
      %v7365 = vrot.slane %v7363, 3
      %v7366 = vor.u32 %v7362, %v7365
      %v7367 = vsel %vm6999, %v7357, %v7366
      %v7425 = vunpack.c.l.b16 %v6983
      %v7426 = vunpack.c.l.b16 %v6984
      %v7427 = vunpack.c.l.b16 %v6985
      %v7428 = vunpack.c.l.b16 %v6986
      %v7429 = vunpack.c.l.b16 %v6987
      %v7430 = vunpack.c.l.b16 %v6988
      %v7431 = vunpack.c.l.b16 %v6989
      %v7432 = vunpack.c.l.b16 %v6990
      %v7433 = vunpack.c.l.b16 %v6991
      %v7434 = vunpack.c.l.b16 %v6992
      %v7435 = vunpack.c.l.b16 %v6993
      %v7436 = vunpack.c.l.b16 %v6994
      %v7437 = vunpack.c.l.b16 %v6995
      %v7438 = vunpack.c.l.b16 %v6996
      %v7439 = vunpack.c.l.b16 %v6997
      %v7440 = vunpack.c.l.b16 %v6998
      %v7441 = vpack.c.b16 %v7426, %v7425
      %v7442 = vpack.c.b16 %v7428, %v7427
      %v7443 = vpack.c.b16 %v7430, %v7429
      %v7444 = vpack.c.b16 %v7432, %v7431
      %v7445 = vpack.c.b16 %v7434, %v7433
      %v7446 = vpack.c.b16 %v7436, %v7435
      %v7447 = vpack.c.b16 %v7438, %v7437
      %v7448 = vpack.c.b16 %v7440, %v7439
      %7457 = vmatprep.subr.bf16.mxu0 0
      %7458 = vmatpush1.bf16.msra.mxu0 %v7441
      %7459 = vmatprep.subr.bf16.mxu0 0
      %7460 = vmatpush1.bf16.msra.mxu0 %v7442
      %7461 = vmatprep.subr.bf16.mxu0 0
      %7462 = vmatpush1.bf16.msra.mxu0 %v7443
      %7463 = vmatprep.subr.bf16.mxu0 0
      %7464 = vmatpush1.bf16.msra.mxu0 %v7444
      %7465 = vmatprep.subr.bf16.mxu0 0
      %7466 = vmatpush1.bf16.msra.mxu0 %v7445
      %7467 = vmatprep.subr.bf16.mxu0 0
      %7468 = vmatpush1.bf16.msra.mxu0 %v7446
      %7469 = vmatprep.subr.bf16.mxu0 0
      %7470 = vmatpush1.bf16.msra.mxu0 %v7447
      %7471 = vmatprep.subr.bf16.mxu0 0
      %7472 = vmatpush1.bf16.msra.mxu0 %v7448
      %7473 = vmatprep.subr.bf16.mxu0 0
      %7474 = vmatpush1.bf16.msra.mxu0 0
      %7475 = vmatprep.subr.bf16.mxu0 0
      %7476 = vmatpush1.bf16.msra.mxu0 0
      %7477 = vmatprep.subr.bf16.mxu0 0
      %7478 = vmatpush1.bf16.msra.mxu0 0
      %7479 = vmatprep.subr.bf16.mxu0 0
      %7480 = vmatpush1.bf16.msra.mxu0 0
      %7481 = vmatprep.subr.bf16.mxu0 0
      %7482 = vmatpush1.bf16.msra.mxu0 0
      %7483 = vmatprep.subr.bf16.mxu0 0
      %7484 = vmatpush1.bf16.msra.mxu0 0
      %7485 = vmatprep.subr.bf16.mxu0 0
      %7486 = vmatpush1.bf16.msra.mxu0 0
      %7487 = vmatprep.subr.bf16.mxu0 0
      %7488 = vmatpush1.bf16.msra.mxu0 0
      %7489 = vmatprep.mubr.bf16.mxu0 0
      %7490 = vmatmul.mubr.bf16.gmra.mrb[0].mxu0 %v7016
      %v7491 = vpop.f32.mrb[0].mxu0
      %v7492 = vadd.f32 0.0, %v7491
      %v7493 = vpop.f32.mrb[0].mxu0
      %v7494 = vpop.f32.mrb[0].mxu0
      %v7495 = vadd.f32 0.0, %v7494
      %v7496 = vpop.f32.mrb[0].mxu0
      %7497 = vmatprep.mubr.bf16.mxu0 0
      %7498 = vmatmul.mubr.bf16.gmra.mrb[0].mxu0 %v7025
      %v7499 = vpop.f32.mrb[0].mxu0
      %v7500 = vadd.f32 0.0, %v7499
      %v7501 = vpop.f32.mrb[0].mxu0
      %v7502 = vpop.f32.mrb[0].mxu0
      %v7503 = vadd.f32 0.0, %v7502
      %v7504 = vpop.f32.mrb[0].mxu0
      %7505 = vmatprep.mubr.bf16.mxu0 0
      %7506 = vmatmul.mubr.bf16.gmra.mrb[0].mxu0 %v7034
      %v7507 = vpop.f32.mrb[0].mxu0
      %v7508 = vadd.f32 0.0, %v7507
      %v7509 = vpop.f32.mrb[0].mxu0
      %v7510 = vpop.f32.mrb[0].mxu0
      %v7511 = vadd.f32 0.0, %v7510
      %v7512 = vpop.f32.mrb[0].mxu0
      %7513 = vmatprep.mubr.bf16.mxu0 0
      %7514 = vmatmul.mubr.bf16.gmra.mrb[0].mxu0 %v7043
      %v7515 = vpop.f32.mrb[0].mxu0
      %v7516 = vadd.f32 0.0, %v7515
      %v7517 = vpop.f32.mrb[0].mxu0
      %v7518 = vpop.f32.mrb[0].mxu0
      %v7519 = vadd.f32 0.0, %v7518
      %v7520 = vpop.f32.mrb[0].mxu0
      %7521 = vmatprep.mubr.bf16.mxu0 0
      %7522 = vmatmul.mubr.bf16.gmra.mrb[0].mxu0 %v7052
      %v7523 = vpop.f32.mrb[0].mxu0
      %v7524 = vadd.f32 0.0, %v7523
      %v7525 = vpop.f32.mrb[0].mxu0
      %v7526 = vpop.f32.mrb[0].mxu0
      %v7527 = vadd.f32 0.0, %v7526
      %v7528 = vpop.f32.mrb[0].mxu0
      %7529 = vmatprep.mubr.bf16.mxu0 0
      %7530 = vmatmul.mubr.bf16.gmra.mrb[0].mxu0 %v7061
      %v7531 = vpop.f32.mrb[0].mxu0
      %v7532 = vadd.f32 0.0, %v7531
      %v7533 = vpop.f32.mrb[0].mxu0
      %v7534 = vpop.f32.mrb[0].mxu0
      %v7535 = vadd.f32 0.0, %v7534
      %v7536 = vpop.f32.mrb[0].mxu0
      %7537 = vmatprep.mubr.bf16.mxu0 0
      %7538 = vmatmul.mubr.bf16.gmra.mrb[0].mxu0 %v7070
      %v7539 = vpop.f32.mrb[0].mxu0
      %v7540 = vadd.f32 0.0, %v7539
      %v7541 = vpop.f32.mrb[0].mxu0
      %v7542 = vpop.f32.mrb[0].mxu0
      %v7543 = vadd.f32 0.0, %v7542
      %v7544 = vpop.f32.mrb[0].mxu0
      %7545 = vmatprep.mubr.bf16.mxu0 0
      %7546 = vmatmul.mubr.bf16.gmra.mrb[0].mxu0 %v7079
      %v7547 = vpop.f32.mrb[0].mxu0
      %v7548 = vadd.f32 0.0, %v7547
      %v7549 = vpop.f32.mrb[0].mxu0
      %v7550 = vpop.f32.mrb[0].mxu0
      %v7551 = vadd.f32 0.0, %v7550
      %v7552 = vpop.f32.mrb[0].mxu0
      %7553 = vmatprep.mubr.bf16.mxu0 0
      %7554 = vmatmul.mubr.bf16.gmra.mrb[0].mxu0 %v7088
      %v7555 = vpop.f32.mrb[0].mxu0
      %v7556 = vadd.f32 0.0, %v7555
      %v7557 = vpop.f32.mrb[0].mxu0
      %v7558 = vpop.f32.mrb[0].mxu0
      %v7559 = vadd.f32 0.0, %v7558
      %v7560 = vpop.f32.mrb[0].mxu0
      %7561 = vmatprep.mubr.bf16.mxu0 0
      %7562 = vmatmul.mubr.bf16.gmra.mrb[0].mxu0 %v7097
      %v7563 = vpop.f32.mrb[0].mxu0
      %v7564 = vadd.f32 0.0, %v7563
      %v7565 = vpop.f32.mrb[0].mxu0
      %v7566 = vpop.f32.mrb[0].mxu0
      %v7567 = vadd.f32 0.0, %v7566
      %v7568 = vpop.f32.mrb[0].mxu0
      %7569 = vmatprep.mubr.bf16.mxu0 0
      %7570 = vmatmul.mubr.bf16.gmra.mrb[0].mxu0 %v7106
      %v7571 = vpop.f32.mrb[0].mxu0
      %v7572 = vadd.f32 0.0, %v7571
      %v7573 = vpop.f32.mrb[0].mxu0
      %v7574 = vpop.f32.mrb[0].mxu0
      %v7575 = vadd.f32 0.0, %v7574
      %v7576 = vpop.f32.mrb[0].mxu0
      %7577 = vmatprep.mubr.bf16.mxu0 0
      %7578 = vmatmul.mubr.bf16.gmra.mrb[0].mxu0 %v7115
      %v7579 = vpop.f32.mrb[0].mxu0
      %v7580 = vadd.f32 0.0, %v7579
      %v7581 = vpop.f32.mrb[0].mxu0
      %v7582 = vpop.f32.mrb[0].mxu0
      %v7583 = vadd.f32 0.0, %v7582
      %v7584 = vpop.f32.mrb[0].mxu0
      %7585 = vmatprep.mubr.bf16.mxu0 0
      %7586 = vmatmul.mubr.bf16.gmra.mrb[0].mxu0 %v7124
      %v7587 = vpop.f32.mrb[0].mxu0
      %v7588 = vadd.f32 0.0, %v7587
      %v7589 = vpop.f32.mrb[0].mxu0
      %v7590 = vpop.f32.mrb[0].mxu0
      %v7591 = vadd.f32 0.0, %v7590
      %v7592 = vpop.f32.mrb[0].mxu0
      %7593 = vmatprep.mubr.bf16.mxu0 0
      %7594 = vmatmul.mubr.bf16.gmra.mrb[0].mxu0 %v7133
      %v7595 = vpop.f32.mrb[0].mxu0
      %v7596 = vadd.f32 0.0, %v7595
      %v7597 = vpop.f32.mrb[0].mxu0
      %v7598 = vpop.f32.mrb[0].mxu0
      %v7599 = vadd.f32 0.0, %v7598
      %v7600 = vpop.f32.mrb[0].mxu0
      %7601 = vmatprep.mubr.bf16.mxu0 0
      %7602 = vmatmul.mubr.bf16.gmra.mrb[0].mxu0 %v7142
      %v7603 = vpop.f32.mrb[0].mxu0
      %v7604 = vadd.f32 0.0, %v7603
      %v7605 = vpop.f32.mrb[0].mxu0
      %v7606 = vpop.f32.mrb[0].mxu0
      %v7607 = vadd.f32 0.0, %v7606
      %v7608 = vpop.f32.mrb[0].mxu0
      %7609 = vmatprep.mubr.bf16.mxu0 0
      %7610 = vmatmul.mubr.bf16.gmra.mrb[0].mxu0 %v7151
      %v7611 = vpop.f32.mrb[0].mxu0
      %v7612 = vadd.f32 0.0, %v7611
      %v7613 = vpop.f32.mrb[0].mxu0
      %v7614 = vpop.f32.mrb[0].mxu0
      %v7615 = vadd.f32 0.0, %v7614
      %v7616 = vpop.f32.mrb[0].mxu0
      %7617 = vmatprep.mubr.bf16.mxu0 0
      %7618 = vmatmul.mubr.bf16.gmra.mrb[0].mxu0 %v7160
      %v7619 = vpop.f32.mrb[0].mxu0
      %v7620 = vadd.f32 0.0, %v7619
      %v7621 = vpop.f32.mrb[0].mxu0
      %v7622 = vpop.f32.mrb[0].mxu0
      %v7623 = vadd.f32 0.0, %v7622
      %v7624 = vpop.f32.mrb[0].mxu0
      %7625 = vmatprep.mubr.bf16.mxu0 0
      %7626 = vmatmul.mubr.bf16.gmra.mrb[0].mxu0 %v7169
      %v7627 = vpop.f32.mrb[0].mxu0
      %v7628 = vadd.f32 0.0, %v7627
      %v7629 = vpop.f32.mrb[0].mxu0
      %v7630 = vpop.f32.mrb[0].mxu0
      %v7631 = vadd.f32 0.0, %v7630
      %v7632 = vpop.f32.mrb[0].mxu0
      %7633 = vmatprep.mubr.bf16.mxu0 0
      %7634 = vmatmul.mubr.bf16.gmra.mrb[0].mxu0 %v7178
      %v7635 = vpop.f32.mrb[0].mxu0
      %v7636 = vadd.f32 0.0, %v7635
      %v7637 = vpop.f32.mrb[0].mxu0
      %v7638 = vpop.f32.mrb[0].mxu0
      %v7639 = vadd.f32 0.0, %v7638
      %v7640 = vpop.f32.mrb[0].mxu0
      %7641 = vmatprep.mubr.bf16.mxu0 0
      %7642 = vmatmul.mubr.bf16.gmra.mrb[0].mxu0 %v7187
      %v7643 = vpop.f32.mrb[0].mxu0
      %v7644 = vadd.f32 0.0, %v7643
      %v7645 = vpop.f32.mrb[0].mxu0
      %v7646 = vpop.f32.mrb[0].mxu0
      %v7647 = vadd.f32 0.0, %v7646
      %v7648 = vpop.f32.mrb[0].mxu0
      %7649 = vmatprep.mubr.bf16.mxu0 0
      %7650 = vmatmul.mubr.bf16.gmra.mrb[0].mxu0 %v7196
      %v7651 = vpop.f32.mrb[0].mxu0
      %v7652 = vadd.f32 0.0, %v7651
      %v7653 = vpop.f32.mrb[0].mxu0
      %v7654 = vpop.f32.mrb[0].mxu0
      %v7655 = vadd.f32 0.0, %v7654
      %v7656 = vpop.f32.mrb[0].mxu0
      %7657 = vmatprep.mubr.bf16.mxu0 0
      %7658 = vmatmul.mubr.bf16.gmra.mrb[0].mxu0 %v7205
      %v7659 = vpop.f32.mrb[0].mxu0
      %v7660 = vadd.f32 0.0, %v7659
      %v7661 = vpop.f32.mrb[0].mxu0
      %v7662 = vpop.f32.mrb[0].mxu0
      %v7663 = vadd.f32 0.0, %v7662
      %v7664 = vpop.f32.mrb[0].mxu0
      %7665 = vmatprep.mubr.bf16.mxu0 0
      %7666 = vmatmul.mubr.bf16.gmra.mrb[0].mxu0 %v7214
      %v7667 = vpop.f32.mrb[0].mxu0
      %v7668 = vadd.f32 0.0, %v7667
      %v7669 = vpop.f32.mrb[0].mxu0
      %v7670 = vpop.f32.mrb[0].mxu0
      %v7671 = vadd.f32 0.0, %v7670
      %v7672 = vpop.f32.mrb[0].mxu0
      %7673 = vmatprep.mubr.bf16.mxu0 0
      %7674 = vmatmul.mubr.bf16.gmra.mrb[0].mxu0 %v7223
      %v7675 = vpop.f32.mrb[0].mxu0
      %v7676 = vadd.f32 0.0, %v7675
      %v7677 = vpop.f32.mrb[0].mxu0
      %v7678 = vpop.f32.mrb[0].mxu0
      %v7679 = vadd.f32 0.0, %v7678
      %v7680 = vpop.f32.mrb[0].mxu0
      %7681 = vmatprep.mubr.bf16.mxu0 0
      %7682 = vmatmul.mubr.bf16.gmra.mrb[0].mxu0 %v7232
      %v7683 = vpop.f32.mrb[0].mxu0
      %v7684 = vadd.f32 0.0, %v7683
      %v7685 = vpop.f32.mrb[0].mxu0
      %v7686 = vpop.f32.mrb[0].mxu0
      %v7687 = vadd.f32 0.0, %v7686
      %v7688 = vpop.f32.mrb[0].mxu0
      %7689 = vmatprep.mubr.bf16.mxu0 0
      %7690 = vmatmul.mubr.bf16.gmra.mrb[0].mxu0 %v7241
      %v7691 = vpop.f32.mrb[0].mxu0
      %v7692 = vadd.f32 0.0, %v7691
      %v7693 = vpop.f32.mrb[0].mxu0
      %v7694 = vpop.f32.mrb[0].mxu0
      %v7695 = vadd.f32 0.0, %v7694
      %v7696 = vpop.f32.mrb[0].mxu0
      %7697 = vmatprep.mubr.bf16.mxu0 0
      %7698 = vmatmul.mubr.bf16.gmra.mrb[0].mxu0 %v7250
      %v7699 = vpop.f32.mrb[0].mxu0
      %v7700 = vadd.f32 0.0, %v7699
      %v7701 = vpop.f32.mrb[0].mxu0
      %v7702 = vpop.f32.mrb[0].mxu0
      %v7703 = vadd.f32 0.0, %v7702
      %v7704 = vpop.f32.mrb[0].mxu0
      %7705 = vmatprep.mubr.bf16.mxu0 0
      %7706 = vmatmul.mubr.bf16.gmra.mrb[0].mxu0 %v7259
      %v7707 = vpop.f32.mrb[0].mxu0
      %v7708 = vadd.f32 0.0, %v7707
      %v7709 = vpop.f32.mrb[0].mxu0
      %v7710 = vpop.f32.mrb[0].mxu0
      %v7711 = vadd.f32 0.0, %v7710
      %v7712 = vpop.f32.mrb[0].mxu0
      %7713 = vmatprep.mubr.bf16.mxu0 0
      %7714 = vmatmul.mubr.bf16.gmra.mrb[0].mxu0 %v7268
      %v7715 = vpop.f32.mrb[0].mxu0
      %v7716 = vadd.f32 0.0, %v7715
      %v7717 = vpop.f32.mrb[0].mxu0
      %v7718 = vpop.f32.mrb[0].mxu0
      %v7719 = vadd.f32 0.0, %v7718
      %v7720 = vpop.f32.mrb[0].mxu0
      %7721 = vmatprep.mubr.bf16.mxu0 0
      %7722 = vmatmul.mubr.bf16.gmra.mrb[0].mxu0 %v7277
      %v7723 = vpop.f32.mrb[0].mxu0
      %v7724 = vadd.f32 0.0, %v7723
      %v7725 = vpop.f32.mrb[0].mxu0
      %v7726 = vpop.f32.mrb[0].mxu0
      %v7727 = vadd.f32 0.0, %v7726
      %v7728 = vpop.f32.mrb[0].mxu0
      %7729 = vmatprep.mubr.bf16.mxu0 0
      %7730 = vmatmul.mubr.bf16.gmra.mrb[0].mxu0 %v7286
      %v7731 = vpop.f32.mrb[0].mxu0
      %v7732 = vadd.f32 0.0, %v7731
      %v7733 = vpop.f32.mrb[0].mxu0
      %v7734 = vpop.f32.mrb[0].mxu0
      %v7735 = vadd.f32 0.0, %v7734
      %v7736 = vpop.f32.mrb[0].mxu0
      %7737 = vmatprep.mubr.bf16.mxu0 0
      %7738 = vmatmul.mubr.bf16.gmra.mrb[0].mxu0 %v7295
      %v7739 = vpop.f32.mrb[0].mxu0
      %v7740 = vadd.f32 0.0, %v7739
      %v7741 = vpop.f32.mrb[0].mxu0
      %v7742 = vpop.f32.mrb[0].mxu0
      %v7743 = vadd.f32 0.0, %v7742
      %v7744 = vpop.f32.mrb[0].mxu0
      %7745 = vmatprep.mubr.bf16.mxu0 0
      %7746 = vmatmul.mubr.bf16.gmra.mrb[0].mxu0 %v7304
      %v7747 = vpop.f32.mrb[0].mxu0
      %v7748 = vadd.f32 0.0, %v7747
      %v7749 = vpop.f32.mrb[0].mxu0
      %v7750 = vpop.f32.mrb[0].mxu0
      %v7751 = vadd.f32 0.0, %v7750
      %v7752 = vpop.f32.mrb[0].mxu0
      %7753 = vmatprep.mubr.bf16.mxu0 0
      %7754 = vmatmul.mubr.bf16.gmra.mrb[0].mxu0 %v7313
      %v7755 = vpop.f32.mrb[0].mxu0
      %v7756 = vadd.f32 0.0, %v7755
      %v7757 = vpop.f32.mrb[0].mxu0
      %v7758 = vpop.f32.mrb[0].mxu0
      %v7759 = vadd.f32 0.0, %v7758
      %v7760 = vpop.f32.mrb[0].mxu0
      %7761 = vmatprep.mubr.bf16.mxu0 0
      %7762 = vmatmul.mubr.bf16.gmra.mrb[0].mxu0 %v7322
      %v7763 = vpop.f32.mrb[0].mxu0
      %v7764 = vadd.f32 0.0, %v7763
      %v7765 = vpop.f32.mrb[0].mxu0
      %v7766 = vpop.f32.mrb[0].mxu0
      %v7767 = vadd.f32 0.0, %v7766
      %v7768 = vpop.f32.mrb[0].mxu0
      %7769 = vmatprep.mubr.bf16.mxu0 0
      %7770 = vmatmul.mubr.bf16.gmra.mrb[0].mxu0 %v7331
      %v7771 = vpop.f32.mrb[0].mxu0
      %v7772 = vadd.f32 0.0, %v7771
      %v7773 = vpop.f32.mrb[0].mxu0
      %v7774 = vpop.f32.mrb[0].mxu0
      %v7775 = vadd.f32 0.0, %v7774
      %v7776 = vpop.f32.mrb[0].mxu0
      %7777 = vmatprep.mubr.bf16.mxu0 0
      %7778 = vmatmul.mubr.bf16.gmra.mrb[0].mxu0 %v7340
      %v7779 = vpop.f32.mrb[0].mxu0
      %v7780 = vadd.f32 0.0, %v7779
      %v7781 = vpop.f32.mrb[0].mxu0
      %v7782 = vpop.f32.mrb[0].mxu0
      %v7783 = vadd.f32 0.0, %v7782
      %v7784 = vpop.f32.mrb[0].mxu0
      %7785 = vmatprep.mubr.bf16.mxu0 0
      %7786 = vmatmul.mubr.bf16.gmra.mrb[0].mxu0 %v7349
      %v7787 = vpop.f32.mrb[0].mxu0
      %v7788 = vadd.f32 0.0, %v7787
      %v7789 = vpop.f32.mrb[0].mxu0
      %v7790 = vpop.f32.mrb[0].mxu0
      %v7791 = vadd.f32 0.0, %v7790
      %v7792 = vpop.f32.mrb[0].mxu0
      %7793 = vmatprep.mubr.bf16.mxu0 0
      %7794 = vmatmul.mubr.bf16.gmra.mrb[0].mxu0 %v7358
      %v7795 = vpop.f32.mrb[0].mxu0
      %v7796 = vadd.f32 0.0, %v7795
      %v7797 = vpop.f32.mrb[0].mxu0
      %v7798 = vpop.f32.mrb[0].mxu0
      %v7799 = vadd.f32 0.0, %v7798
      %v7800 = vpop.f32.mrb[0].mxu0
      %7801 = vmatprep.mubr.bf16.mxu0 0
      %7802 = vmatmul.mubr.bf16.gmra.mrb[0].mxu0 %v7367
      %v7803 = vpop.f32.mrb[0].mxu0
      %v7804 = vadd.f32 0.0, %v7803
      %v7805 = vpop.f32.mrb[0].mxu0
      %v7806 = vpop.f32.mrb[0].mxu0
      %v7807 = vadd.f32 0.0, %v7806
      %v7808 = vpop.f32.mrb[0].mxu0
      %7809 = vmatprep.mubr.bf16.mxu0 0
      %7810 = vmatmul.mubr.bf16.gmra.mrb[0].mxu0 %v7366
      %v7811 = vpop.f32.mrb[0].mxu0
      %v7812 = vadd.f32 0.0, %v7811
      %v7813 = vpop.f32.mrb[0].mxu0
      %v7814 = vpop.f32.mrb[0].mxu0
      %v7815 = vpop.f32.mrb[0].mxu0
      %7816 = vdwg.mxu0
      %v7817 = vadd.f32 %v6900, %v7492
      %v7818 = vadd.f32 %v6901, %v7495
      %v7819 = vadd.f32 %v6902, %v7500
      %v7820 = vadd.f32 %v6903, %v7503
      %v7821 = vadd.f32 %v6904, %v7508
      %v7822 = vadd.f32 %v6905, %v7511
      %v7823 = vadd.f32 %v6906, %v7516
      %v7824 = vadd.f32 %v6907, %v7519
      %v7825 = vadd.f32 %v6908, %v7524
      %v7826 = vadd.f32 %v6909, %v7527
      %v7827 = vadd.f32 %v6910, %v7532
      %v7828 = vadd.f32 %v6911, %v7535
      %v7829 = vadd.f32 %v6912, %v7540
      %v7830 = vadd.f32 %v6913, %v7543
      %v7831 = vadd.f32 %v6914, %v7548
      %v7832 = vadd.f32 %v6915, %v7551
      %v7833 = vadd.f32 %v6916, %v7556
      %v7834 = vadd.f32 %v6917, %v7559
      %v7835 = vadd.f32 %v6918, %v7564
      %v7836 = vadd.f32 %v6919, %v7567
      %v7837 = vadd.f32 %v6920, %v7572
      %v7838 = vadd.f32 %v6921, %v7575
      %v7839 = vadd.f32 %v6922, %v7580
      %v7840 = vadd.f32 %v6923, %v7583
      %v7841 = vadd.f32 %v6924, %v7588
      %v7842 = vadd.f32 %v6925, %v7591
      %v7843 = vadd.f32 %v6926, %v7596
      %v7844 = vadd.f32 %v6927, %v7599
      %v7845 = vadd.f32 %v6928, %v7604
      %v7846 = vadd.f32 %v6929, %v7607
      %v7847 = vadd.f32 %v6930, %v7612
      %v7848 = vadd.f32 %v6931, %v7615
      %v7849 = vadd.f32 %v6932, %v7620
      %v7850 = vadd.f32 %v6933, %v7623
      %v7851 = vadd.f32 %v6934, %v7628
      %v7852 = vadd.f32 %v6935, %v7631
      %v7853 = vadd.f32 %v6936, %v7636
      %v7854 = vadd.f32 %v6937, %v7639
      %v7855 = vadd.f32 %v6938, %v7644
      %v7856 = vadd.f32 %v6939, %v7647
      %v7857 = vadd.f32 %v6940, %v7652
      %v7858 = vadd.f32 %v6941, %v7655
      %v7859 = vadd.f32 %v6942, %v7660
      %v7860 = vadd.f32 %v6943, %v7663
      %v7861 = vadd.f32 %v6944, %v7668
      %v7862 = vadd.f32 %v6945, %v7671
      %v7863 = vadd.f32 %v6946, %v7676
      %v7864 = vadd.f32 %v6947, %v7679
      %v7865 = vadd.f32 %v6948, %v7684
      %v7866 = vadd.f32 %v6949, %v7687
      %v7867 = vadd.f32 %v6950, %v7692
      %v7868 = vadd.f32 %v6951, %v7695
      %v7869 = vadd.f32 %v6952, %v7700
      %v7870 = vadd.f32 %v6953, %v7703
      %v7871 = vadd.f32 %v6954, %v7708
      %v7872 = vadd.f32 %v6955, %v7711
      %v7873 = vadd.f32 %v6956, %v7716
      %v7874 = vadd.f32 %v6957, %v7719
      %v7875 = vadd.f32 %v6958, %v7724
      %v7876 = vadd.f32 %v6959, %v7727
      %v7877 = vadd.f32 %v6960, %v7732
      %v7878 = vadd.f32 %v6961, %v7735
      %v7879 = vadd.f32 %v6962, %v7740
      %v7880 = vadd.f32 %v6963, %v7743
      %v7881 = vadd.f32 %v6964, %v7748
      %v7882 = vadd.f32 %v6965, %v7751
      %v7883 = vadd.f32 %v6966, %v7756
      %v7884 = vadd.f32 %v6967, %v7759
      %v7885 = vadd.f32 %v6968, %v7764
      %v7886 = vadd.f32 %v6969, %v7767
      %v7887 = vadd.f32 %v6970, %v7772
      %v7888 = vadd.f32 %v6971, %v7775
      %v7889 = vadd.f32 %v6972, %v7780
      %v7890 = vadd.f32 %v6973, %v7783
      %v7891 = vadd.f32 %v6974, %v7788
      %v7892 = vadd.f32 %v6975, %v7791
      %v7893 = vadd.f32 %v6976, %v7796
      %v7894 = vadd.f32 %v6977, %v7799
      %v7895 = vadd.f32 %v6978, %v7804
      %v7896 = vadd.f32 %v6979, %v7807
      %v7897 = vadd.f32 %v6980, %v7812
      %v7898 = vld [vmem:[#allocation2 + $0x10] sm:$0xf8]
      %s7899 = scalar_lea.vmem %s5, 512
      %v7900 = vld [vmem:[%s7899] sm:$0xf]
      %v7901 = vld [vmem:[%s7899 + $0x4] sm:$0xf]
      %v7902 = vld [vmem:[%s7899 + $0x8] sm:$0xf]
      %v7903 = vld [vmem:[%s7899 + $0xc] sm:$0xf]
      %v7904 = vld [vmem:[%s7899 + $0x10] sm:$0xf]
      %v7905 = vld [vmem:[%s7899 + $0x14] sm:$0xf]
      %v7906 = vld [vmem:[%s7899 + $0x18] sm:$0xf]
      %v7907 = vld [vmem:[%s7899 + $0x1c] sm:$0xf]
      %v7908 = vld [vmem:[%s7899 + $0x20] sm:$0xf]
      %v7909 = vld [vmem:[%s7899 + $0x24] sm:$0xf]
      %v7910 = vld [vmem:[%s7899 + $0x28] sm:$0xf]
      %v7911 = vld [vmem:[%s7899 + $0x2c] sm:$0xf]
      %v7912 = vld [vmem:[%s7899 + $0x30] sm:$0xf]
      %v7913 = vld [vmem:[%s7899 + $0x34] sm:$0xf]
      %v7914 = vld [vmem:[%s7899 + $0x38] sm:$0xf]
      %v7915 = vld [vmem:[%s7899 + $0x3c] sm:$0xf]
      %vm7918 = vcmask 1044480
      %v7919 = vrot.slane %v7898, 3
      %v7920 = vrot.slane %v6272, 3
      %v7921 = vsel %vm7918, %v7919, %v7920
      %v7922 = vrot.slane %v6273, 3
      %v7923 = vsel %vm7918, %v7920, %v7922
      %v7924 = vrot.slane %v6274, 3
      %v7925 = vsel %vm7918, %v7922, %v7924
      %v7926 = vrot.slane %v6275, 3
      %v7927 = vsel %vm7918, %v7924, %v7926
      %v7928 = vrot.slane %v6276, 3
      %v7929 = vsel %vm7918, %v7926, %v7928
      %v7930 = vrot.slane %v6277, 3
      %v7931 = vsel %vm7918, %v7928, %v7930
      %v7932 = vrot.slane %v6278, 3
      %v7933 = vsel %vm7918, %v7930, %v7932
      %v7934 = vrot.slane %v6279, 3
      %v7935 = vsel %vm7918, %v7932, %v7934
      %v7936 = vrot.slane %v6280, 3
      %v7937 = vsel %vm7918, %v7934, %v7936
      %v7938 = vrot.slane %v6281, 3
      %v7939 = vsel %vm7918, %v7936, %v7938
      %v7940 = vrot.slane %v6282, 3
      %v7941 = vsel %vm7918, %v7938, %v7940
      %v7942 = vrot.slane %v6283, 3
      %v7943 = vsel %vm7918, %v7940, %v7942
      %v7944 = vrot.slane %v6284, 3
      %v7945 = vsel %vm7918, %v7942, %v7944
      %v7946 = vrot.slane %v6285, 3
      %v7947 = vsel %vm7918, %v7944, %v7946
      %v7948 = vrot.slane %v6286, 3
      %v7949 = vsel %vm7918, %v7946, %v7948
      %v7950 = vrot.slane %v6287, 3
      %v7951 = vsel %vm7918, %v7948, %v7950
      %v7952 = vrot.slane %v6288, 3
      %v7953 = vsel %vm7918, %v7950, %v7952
      %v7954 = vrot.slane %v6289, 3
      %v7955 = vsel %vm7918, %v7952, %v7954
      %v7956 = vrot.slane %v6290, 3
      %v7957 = vsel %vm7918, %v7954, %v7956
      %v7958 = vrot.slane %v6291, 3
      %v7959 = vsel %vm7918, %v7956, %v7958
      %v7960 = vrot.slane %v6292, 3
      %v7961 = vsel %vm7918, %v7958, %v7960
      %v7962 = vrot.slane %v6293, 3
      %v7963 = vsel %vm7918, %v7960, %v7962
      %v7964 = vrot.slane %v6294, 3
      %v7965 = vsel %vm7918, %v7962, %v7964
      %v7966 = vrot.slane %v6295, 3
      %v7967 = vsel %vm7918, %v7964, %v7966
      %v7968 = vrot.slane %v6296, 3
      %v7969 = vsel %vm7918, %v7966, %v7968
      %v7970 = vrot.slane %v6297, 3
      %v7971 = vsel %vm7918, %v7968, %v7970
      %v7972 = vrot.slane %v6298, 3
      %v7973 = vsel %vm7918, %v7970, %v7972
      %v7974 = vrot.slane %v6299, 3
      %v7975 = vsel %vm7918, %v7972, %v7974
      %v7976 = vrot.slane %v6300, 3
      %v7977 = vsel %vm7918, %v7974, %v7976
      %v7978 = vrot.slane %v6301, 3
      %v7979 = vsel %vm7918, %v7976, %v7978
      %v7980 = vrot.slane %v6302, 3
      %v7981 = vsel %vm7918, %v7978, %v7980
      %v7982 = vrot.slane %v6303, 3
      %v7983 = vsel %vm7918, %v7980, %v7982
      %v7984 = vrot.slane %v6304, 3
      %v7985 = vsel %vm7918, %v7982, %v7984
      %v7986 = vrot.slane %v6305, 3
      %v7987 = vsel %vm7918, %v7984, %v7986
      %v7988 = vrot.slane %v6306, 3
      %v7989 = vsel %vm7918, %v7986, %v7988
      %v7990 = vrot.slane %v6307, 3
      %v7991 = vsel %vm7918, %v7988, %v7990
      %v7992 = vrot.slane %v6308, 3
      %v7993 = vsel %vm7918, %v7990, %v7992
      %v7994 = vrot.slane %v6309, 3
      %v7995 = vsel %vm7918, %v7992, %v7994
      %v7996 = vrot.slane %v6310, 3
      %v7997 = vsel %vm7918, %v7994, %v7996
      %v7998 = vrot.slane %v6981, 3
      %v7999 = vsel %vm7918, %v7996, %v7998
      %v8057 = vunpack.c.l.b16 %v7900
      %v8058 = vunpack.c.l.b16 %v7901
      %v8059 = vunpack.c.l.b16 %v7902
      %v8060 = vunpack.c.l.b16 %v7903
      %v8061 = vunpack.c.l.b16 %v7904
      %v8062 = vunpack.c.l.b16 %v7905
      %v8063 = vunpack.c.l.b16 %v7906
      %v8064 = vunpack.c.l.b16 %v7907
      %v8065 = vunpack.c.l.b16 %v7908
      %v8066 = vunpack.c.l.b16 %v7909
      %v8067 = vunpack.c.l.b16 %v7910
      %v8068 = vunpack.c.l.b16 %v7911
      %v8069 = vunpack.c.l.b16 %v7912
      %v8070 = vunpack.c.l.b16 %v7913
      %v8071 = vunpack.c.l.b16 %v7914
      %v8072 = vunpack.c.l.b16 %v7915
      %v8073 = vpack.c.b16 %v8058, %v8057
      %v8074 = vpack.c.b16 %v8060, %v8059
      %v8075 = vpack.c.b16 %v8062, %v8061
      %v8076 = vpack.c.b16 %v8064, %v8063
      %v8077 = vpack.c.b16 %v8066, %v8065
      %v8078 = vpack.c.b16 %v8068, %v8067
      %v8079 = vpack.c.b16 %v8070, %v8069
      %v8080 = vpack.c.b16 %v8072, %v8071
      %8089 = vmatprep.subr.bf16.mxu0 0
      %8090 = vmatpush1.bf16.msra.mxu0 %v8073
      %8091 = vmatprep.subr.bf16.mxu0 0
      %8092 = vmatpush1.bf16.msra.mxu0 %v8074
      %8093 = vmatprep.subr.bf16.mxu0 0
      %8094 = vmatpush1.bf16.msra.mxu0 %v8075
      %8095 = vmatprep.subr.bf16.mxu0 0
      %8096 = vmatpush1.bf16.msra.mxu0 %v8076
      %8097 = vmatprep.subr.bf16.mxu0 0
      %8098 = vmatpush1.bf16.msra.mxu0 %v8077
      %8099 = vmatprep.subr.bf16.mxu0 0
      %8100 = vmatpush1.bf16.msra.mxu0 %v8078
      %8101 = vmatprep.subr.bf16.mxu0 0
      %8102 = vmatpush1.bf16.msra.mxu0 %v8079
      %8103 = vmatprep.subr.bf16.mxu0 0
      %8104 = vmatpush1.bf16.msra.mxu0 %v8080
      %8105 = vmatprep.subr.bf16.mxu0 0
      %8106 = vmatpush1.bf16.msra.mxu0 0
      %8107 = vmatprep.subr.bf16.mxu0 0
      %8108 = vmatpush1.bf16.msra.mxu0 0
      %8109 = vmatprep.subr.bf16.mxu0 0
      %8110 = vmatpush1.bf16.msra.mxu0 0
      %8111 = vmatprep.subr.bf16.mxu0 0
      %8112 = vmatpush1.bf16.msra.mxu0 0
      %8113 = vmatprep.subr.bf16.mxu0 0
      %8114 = vmatpush1.bf16.msra.mxu0 0
      %8115 = vmatprep.subr.bf16.mxu0 0
      %8116 = vmatpush1.bf16.msra.mxu0 0
      %8117 = vmatprep.subr.bf16.mxu0 0
      %8118 = vmatpush1.bf16.msra.mxu0 0
      %8119 = vmatprep.subr.bf16.mxu0 0
      %8120 = vmatpush1.bf16.msra.mxu0 0
      %8121 = vmatprep.mubr.bf16.mxu0 0
      %8122 = vmatmul.mubr.bf16.gmra.mrb[0].mxu0 %v7921
      %v8123 = vpop.f32.mrb[0].mxu0
      %v8124 = vadd.f32 0.0, %v8123
      %v8125 = vpop.f32.mrb[0].mxu0
      %v8126 = vpop.f32.mrb[0].mxu0
      %v8127 = vadd.f32 0.0, %v8126
      %v8128 = vpop.f32.mrb[0].mxu0
      %8129 = vmatprep.mubr.bf16.mxu0 0
      %8130 = vmatmul.mubr.bf16.gmra.mrb[0].mxu0 %v7923
      %v8131 = vpop.f32.mrb[0].mxu0
      %v8132 = vadd.f32 0.0, %v8131
      %v8133 = vpop.f32.mrb[0].mxu0
      %v8134 = vpop.f32.mrb[0].mxu0
      %v8135 = vadd.f32 0.0, %v8134
      %v8136 = vpop.f32.mrb[0].mxu0
      %8137 = vmatprep.mubr.bf16.mxu0 0
      %8138 = vmatmul.mubr.bf16.gmra.mrb[0].mxu0 %v7925
      %v8139 = vpop.f32.mrb[0].mxu0
      %v8140 = vadd.f32 0.0, %v8139
      %v8141 = vpop.f32.mrb[0].mxu0
      %v8142 = vpop.f32.mrb[0].mxu0
      %v8143 = vadd.f32 0.0, %v8142
      %v8144 = vpop.f32.mrb[0].mxu0
      %8145 = vmatprep.mubr.bf16.mxu0 0
      %8146 = vmatmul.mubr.bf16.gmra.mrb[0].mxu0 %v7927
      %v8147 = vpop.f32.mrb[0].mxu0
      %v8148 = vadd.f32 0.0, %v8147
      %v8149 = vpop.f32.mrb[0].mxu0
      %v8150 = vpop.f32.mrb[0].mxu0
      %v8151 = vadd.f32 0.0, %v8150
      %v8152 = vpop.f32.mrb[0].mxu0
      %8153 = vmatprep.mubr.bf16.mxu0 0
      %8154 = vmatmul.mubr.bf16.gmra.mrb[0].mxu0 %v7929
      %v8155 = vpop.f32.mrb[0].mxu0
      %v8156 = vadd.f32 0.0, %v8155
      %v8157 = vpop.f32.mrb[0].mxu0
      %v8158 = vpop.f32.mrb[0].mxu0
      %v8159 = vadd.f32 0.0, %v8158
      %v8160 = vpop.f32.mrb[0].mxu0
      %8161 = vmatprep.mubr.bf16.mxu0 0
      %8162 = vmatmul.mubr.bf16.gmra.mrb[0].mxu0 %v7931
      %v8163 = vpop.f32.mrb[0].mxu0
      %v8164 = vadd.f32 0.0, %v8163
      %v8165 = vpop.f32.mrb[0].mxu0
      %v8166 = vpop.f32.mrb[0].mxu0
      %v8167 = vadd.f32 0.0, %v8166
      %v8168 = vpop.f32.mrb[0].mxu0
      %8169 = vmatprep.mubr.bf16.mxu0 0
      %8170 = vmatmul.mubr.bf16.gmra.mrb[0].mxu0 %v7933
      %v8171 = vpop.f32.mrb[0].mxu0
      %v8172 = vadd.f32 0.0, %v8171
      %v8173 = vpop.f32.mrb[0].mxu0
      %v8174 = vpop.f32.mrb[0].mxu0
      %v8175 = vadd.f32 0.0, %v8174
      %v8176 = vpop.f32.mrb[0].mxu0
      %8177 = vmatprep.mubr.bf16.mxu0 0
      %8178 = vmatmul.mubr.bf16.gmra.mrb[0].mxu0 %v7935
      %v8179 = vpop.f32.mrb[0].mxu0
      %v8180 = vadd.f32 0.0, %v8179
      %v8181 = vpop.f32.mrb[0].mxu0
      %v8182 = vpop.f32.mrb[0].mxu0
      %v8183 = vadd.f32 0.0, %v8182
      %v8184 = vpop.f32.mrb[0].mxu0
      %8185 = vmatprep.mubr.bf16.mxu0 0
      %8186 = vmatmul.mubr.bf16.gmra.mrb[0].mxu0 %v7937
      %v8187 = vpop.f32.mrb[0].mxu0
      %v8188 = vadd.f32 0.0, %v8187
      %v8189 = vpop.f32.mrb[0].mxu0
      %v8190 = vpop.f32.mrb[0].mxu0
      %v8191 = vadd.f32 0.0, %v8190
      %v8192 = vpop.f32.mrb[0].mxu0
      %8193 = vmatprep.mubr.bf16.mxu0 0
      %8194 = vmatmul.mubr.bf16.gmra.mrb[0].mxu0 %v7939
      %v8195 = vpop.f32.mrb[0].mxu0
      %v8196 = vadd.f32 0.0, %v8195
      %v8197 = vpop.f32.mrb[0].mxu0
      %v8198 = vpop.f32.mrb[0].mxu0
      %v8199 = vadd.f32 0.0, %v8198
      %v8200 = vpop.f32.mrb[0].mxu0
      %8201 = vmatprep.mubr.bf16.mxu0 0
      %8202 = vmatmul.mubr.bf16.gmra.mrb[0].mxu0 %v7941
      %v8203 = vpop.f32.mrb[0].mxu0
      %v8204 = vadd.f32 0.0, %v8203
      %v8205 = vpop.f32.mrb[0].mxu0
      %v8206 = vpop.f32.mrb[0].mxu0
      %v8207 = vadd.f32 0.0, %v8206
      %v8208 = vpop.f32.mrb[0].mxu0
      %8209 = vmatprep.mubr.bf16.mxu0 0
      %8210 = vmatmul.mubr.bf16.gmra.mrb[0].mxu0 %v7943
      %v8211 = vpop.f32.mrb[0].mxu0
      %v8212 = vadd.f32 0.0, %v8211
      %v8213 = vpop.f32.mrb[0].mxu0
      %v8214 = vpop.f32.mrb[0].mxu0
      %v8215 = vadd.f32 0.0, %v8214
      %v8216 = vpop.f32.mrb[0].mxu0
      %8217 = vmatprep.mubr.bf16.mxu0 0
      %8218 = vmatmul.mubr.bf16.gmra.mrb[0].mxu0 %v7945
      %v8219 = vpop.f32.mrb[0].mxu0
      %v8220 = vadd.f32 0.0, %v8219
      %v8221 = vpop.f32.mrb[0].mxu0
      %v8222 = vpop.f32.mrb[0].mxu0
      %v8223 = vadd.f32 0.0, %v8222
      %v8224 = vpop.f32.mrb[0].mxu0
      %8225 = vmatprep.mubr.bf16.mxu0 0
      %8226 = vmatmul.mubr.bf16.gmra.mrb[0].mxu0 %v7947
      %v8227 = vpop.f32.mrb[0].mxu0
      %v8228 = vadd.f32 0.0, %v8227
      %v8229 = vpop.f32.mrb[0].mxu0
      %v8230 = vpop.f32.mrb[0].mxu0
      %v8231 = vadd.f32 0.0, %v8230
      %v8232 = vpop.f32.mrb[0].mxu0
      %8233 = vmatprep.mubr.bf16.mxu0 0
      %8234 = vmatmul.mubr.bf16.gmra.mrb[0].mxu0 %v7949
      %v8235 = vpop.f32.mrb[0].mxu0
      %v8236 = vadd.f32 0.0, %v8235
      %v8237 = vpop.f32.mrb[0].mxu0
      %v8238 = vpop.f32.mrb[0].mxu0
      %v8239 = vadd.f32 0.0, %v8238
      %v8240 = vpop.f32.mrb[0].mxu0
      %8241 = vmatprep.mubr.bf16.mxu0 0
      %8242 = vmatmul.mubr.bf16.gmra.mrb[0].mxu0 %v7951
      %v8243 = vpop.f32.mrb[0].mxu0
      %v8244 = vadd.f32 0.0, %v8243
      %v8245 = vpop.f32.mrb[0].mxu0
      %v8246 = vpop.f32.mrb[0].mxu0
      %v8247 = vadd.f32 0.0, %v8246
      %v8248 = vpop.f32.mrb[0].mxu0
      %8249 = vmatprep.mubr.bf16.mxu0 0
      %8250 = vmatmul.mubr.bf16.gmra.mrb[0].mxu0 %v7953
      %v8251 = vpop.f32.mrb[0].mxu0
      %v8252 = vadd.f32 0.0, %v8251
      %v8253 = vpop.f32.mrb[0].mxu0
      %v8254 = vpop.f32.mrb[0].mxu0
      %v8255 = vadd.f32 0.0, %v8254
      %v8256 = vpop.f32.mrb[0].mxu0
      %8257 = vmatprep.mubr.bf16.mxu0 0
      %8258 = vmatmul.mubr.bf16.gmra.mrb[0].mxu0 %v7955
      %v8259 = vpop.f32.mrb[0].mxu0
      %v8260 = vadd.f32 0.0, %v8259
      %v8261 = vpop.f32.mrb[0].mxu0
      %v8262 = vpop.f32.mrb[0].mxu0
      %v8263 = vadd.f32 0.0, %v8262
      %v8264 = vpop.f32.mrb[0].mxu0
      %8265 = vmatprep.mubr.bf16.mxu0 0
      %8266 = vmatmul.mubr.bf16.gmra.mrb[0].mxu0 %v7957
      %v8267 = vpop.f32.mrb[0].mxu0
      %v8268 = vadd.f32 0.0, %v8267
      %v8269 = vpop.f32.mrb[0].mxu0
      %v8270 = vpop.f32.mrb[0].mxu0
      %v8271 = vadd.f32 0.0, %v8270
      %v8272 = vpop.f32.mrb[0].mxu0
      %8273 = vmatprep.mubr.bf16.mxu0 0
      %8274 = vmatmul.mubr.bf16.gmra.mrb[0].mxu0 %v7959
      %v8275 = vpop.f32.mrb[0].mxu0
      %v8276 = vadd.f32 0.0, %v8275
      %v8277 = vpop.f32.mrb[0].mxu0
      %v8278 = vpop.f32.mrb[0].mxu0
      %v8279 = vadd.f32 0.0, %v8278
      %v8280 = vpop.f32.mrb[0].mxu0
      %8281 = vmatprep.mubr.bf16.mxu0 0
      %8282 = vmatmul.mubr.bf16.gmra.mrb[0].mxu0 %v7961
      %v8283 = vpop.f32.mrb[0].mxu0
      %v8284 = vadd.f32 0.0, %v8283
      %v8285 = vpop.f32.mrb[0].mxu0
      %v8286 = vpop.f32.mrb[0].mxu0
      %v8287 = vadd.f32 0.0, %v8286
      %v8288 = vpop.f32.mrb[0].mxu0
      %8289 = vmatprep.mubr.bf16.mxu0 0
      %8290 = vmatmul.mubr.bf16.gmra.mrb[0].mxu0 %v7963
      %v8291 = vpop.f32.mrb[0].mxu0
      %v8292 = vadd.f32 0.0, %v8291
      %v8293 = vpop.f32.mrb[0].mxu0
      %v8294 = vpop.f32.mrb[0].mxu0
      %v8295 = vadd.f32 0.0, %v8294
      %v8296 = vpop.f32.mrb[0].mxu0
      %8297 = vmatprep.mubr.bf16.mxu0 0
      %8298 = vmatmul.mubr.bf16.gmra.mrb[0].mxu0 %v7965
      %v8299 = vpop.f32.mrb[0].mxu0
      %v8300 = vadd.f32 0.0, %v8299
      %v8301 = vpop.f32.mrb[0].mxu0
      %v8302 = vpop.f32.mrb[0].mxu0
      %v8303 = vadd.f32 0.0, %v8302
      %v8304 = vpop.f32.mrb[0].mxu0
      %8305 = vmatprep.mubr.bf16.mxu0 0
      %8306 = vmatmul.mubr.bf16.gmra.mrb[0].mxu0 %v7967
      %v8307 = vpop.f32.mrb[0].mxu0
      %v8308 = vadd.f32 0.0, %v8307
      %v8309 = vpop.f32.mrb[0].mxu0
      %v8310 = vpop.f32.mrb[0].mxu0
      %v8311 = vadd.f32 0.0, %v8310
      %v8312 = vpop.f32.mrb[0].mxu0
      %8313 = vmatprep.mubr.bf16.mxu0 0
      %8314 = vmatmul.mubr.bf16.gmra.mrb[0].mxu0 %v7969
      %v8315 = vpop.f32.mrb[0].mxu0
      %v8316 = vadd.f32 0.0, %v8315
      %v8317 = vpop.f32.mrb[0].mxu0
      %v8318 = vpop.f32.mrb[0].mxu0
      %v8319 = vadd.f32 0.0, %v8318
      %v8320 = vpop.f32.mrb[0].mxu0
      %8321 = vmatprep.mubr.bf16.mxu0 0
      %8322 = vmatmul.mubr.bf16.gmra.mrb[0].mxu0 %v7971
      %v8323 = vpop.f32.mrb[0].mxu0
      %v8324 = vadd.f32 0.0, %v8323
      %v8325 = vpop.f32.mrb[0].mxu0
      %v8326 = vpop.f32.mrb[0].mxu0
      %v8327 = vadd.f32 0.0, %v8326
      %v8328 = vpop.f32.mrb[0].mxu0
      %8329 = vmatprep.mubr.bf16.mxu0 0
      %8330 = vmatmul.mubr.bf16.gmra.mrb[0].mxu0 %v7973
      %v8331 = vpop.f32.mrb[0].mxu0
      %v8332 = vadd.f32 0.0, %v8331
      %v8333 = vpop.f32.mrb[0].mxu0
      %v8334 = vpop.f32.mrb[0].mxu0
      %v8335 = vadd.f32 0.0, %v8334
      %v8336 = vpop.f32.mrb[0].mxu0
      %8337 = vmatprep.mubr.bf16.mxu0 0
      %8338 = vmatmul.mubr.bf16.gmra.mrb[0].mxu0 %v7975
      %v8339 = vpop.f32.mrb[0].mxu0
      %v8340 = vadd.f32 0.0, %v8339
      %v8341 = vpop.f32.mrb[0].mxu0
      %v8342 = vpop.f32.mrb[0].mxu0
      %v8343 = vadd.f32 0.0, %v8342
      %v8344 = vpop.f32.mrb[0].mxu0
      %8345 = vmatprep.mubr.bf16.mxu0 0
      %8346 = vmatmul.mubr.bf16.gmra.mrb[0].mxu0 %v7977
      %v8347 = vpop.f32.mrb[0].mxu0
      %v8348 = vadd.f32 0.0, %v8347
      %v8349 = vpop.f32.mrb[0].mxu0
      %v8350 = vpop.f32.mrb[0].mxu0
      %v8351 = vadd.f32 0.0, %v8350
      %v8352 = vpop.f32.mrb[0].mxu0
      %8353 = vmatprep.mubr.bf16.mxu0 0
      %8354 = vmatmul.mubr.bf16.gmra.mrb[0].mxu0 %v7979
      %v8355 = vpop.f32.mrb[0].mxu0
      %v8356 = vadd.f32 0.0, %v8355
      %v8357 = vpop.f32.mrb[0].mxu0
      %v8358 = vpop.f32.mrb[0].mxu0
      %v8359 = vadd.f32 0.0, %v8358
      %v8360 = vpop.f32.mrb[0].mxu0
      %8361 = vmatprep.mubr.bf16.mxu0 0
      %8362 = vmatmul.mubr.bf16.gmra.mrb[0].mxu0 %v7981
      %v8363 = vpop.f32.mrb[0].mxu0
      %v8364 = vadd.f32 0.0, %v8363
      %v8365 = vpop.f32.mrb[0].mxu0
      %v8366 = vpop.f32.mrb[0].mxu0
      %v8367 = vadd.f32 0.0, %v8366
      %v8368 = vpop.f32.mrb[0].mxu0
      %8369 = vmatprep.mubr.bf16.mxu0 0
      %8370 = vmatmul.mubr.bf16.gmra.mrb[0].mxu0 %v7983
      %v8371 = vpop.f32.mrb[0].mxu0
      %v8372 = vadd.f32 0.0, %v8371
      %v8373 = vpop.f32.mrb[0].mxu0
      %v8374 = vpop.f32.mrb[0].mxu0
      %v8375 = vadd.f32 0.0, %v8374
      %v8376 = vpop.f32.mrb[0].mxu0
      %8377 = vmatprep.mubr.bf16.mxu0 0
      %8378 = vmatmul.mubr.bf16.gmra.mrb[0].mxu0 %v7985
      %v8379 = vpop.f32.mrb[0].mxu0
      %v8380 = vadd.f32 0.0, %v8379
      %v8381 = vpop.f32.mrb[0].mxu0
      %v8382 = vpop.f32.mrb[0].mxu0
      %v8383 = vadd.f32 0.0, %v8382
      %v8384 = vpop.f32.mrb[0].mxu0
      %8385 = vmatprep.mubr.bf16.mxu0 0
      %8386 = vmatmul.mubr.bf16.gmra.mrb[0].mxu0 %v7987
      %v8387 = vpop.f32.mrb[0].mxu0
      %v8388 = vadd.f32 0.0, %v8387
      %v8389 = vpop.f32.mrb[0].mxu0
      %v8390 = vpop.f32.mrb[0].mxu0
      %v8391 = vadd.f32 0.0, %v8390
      %v8392 = vpop.f32.mrb[0].mxu0
      %8393 = vmatprep.mubr.bf16.mxu0 0
      %8394 = vmatmul.mubr.bf16.gmra.mrb[0].mxu0 %v7989
      %v8395 = vpop.f32.mrb[0].mxu0
      %v8396 = vadd.f32 0.0, %v8395
      %v8397 = vpop.f32.mrb[0].mxu0
      %v8398 = vpop.f32.mrb[0].mxu0
      %v8399 = vadd.f32 0.0, %v8398
      %v8400 = vpop.f32.mrb[0].mxu0
      %8401 = vmatprep.mubr.bf16.mxu0 0
      %8402 = vmatmul.mubr.bf16.gmra.mrb[0].mxu0 %v7991
      %v8403 = vpop.f32.mrb[0].mxu0
      %v8404 = vadd.f32 0.0, %v8403
      %v8405 = vpop.f32.mrb[0].mxu0
      %v8406 = vpop.f32.mrb[0].mxu0
      %v8407 = vadd.f32 0.0, %v8406
      %v8408 = vpop.f32.mrb[0].mxu0
      %8409 = vmatprep.mubr.bf16.mxu0 0
      %8410 = vmatmul.mubr.bf16.gmra.mrb[0].mxu0 %v7993
      %v8411 = vpop.f32.mrb[0].mxu0
      %v8412 = vadd.f32 0.0, %v8411
      %v8413 = vpop.f32.mrb[0].mxu0
      %v8414 = vpop.f32.mrb[0].mxu0
      %v8415 = vadd.f32 0.0, %v8414
      %v8416 = vpop.f32.mrb[0].mxu0
      %8417 = vmatprep.mubr.bf16.mxu0 0
      %8418 = vmatmul.mubr.bf16.gmra.mrb[0].mxu0 %v7995
      %v8419 = vpop.f32.mrb[0].mxu0
      %v8420 = vadd.f32 0.0, %v8419
      %v8421 = vpop.f32.mrb[0].mxu0
      %v8422 = vpop.f32.mrb[0].mxu0
      %v8423 = vadd.f32 0.0, %v8422
      %v8424 = vpop.f32.mrb[0].mxu0
      %8425 = vmatprep.mubr.bf16.mxu0 0
      %8426 = vmatmul.mubr.bf16.gmra.mrb[0].mxu0 %v7997
      %v8427 = vpop.f32.mrb[0].mxu0
      %v8428 = vadd.f32 0.0, %v8427
      %v8429 = vpop.f32.mrb[0].mxu0
      %v8430 = vpop.f32.mrb[0].mxu0
      %v8431 = vadd.f32 0.0, %v8430
      %v8432 = vpop.f32.mrb[0].mxu0
      %8433 = vmatprep.mubr.bf16.mxu0 0
      %8434 = vmatmul.mubr.bf16.gmra.mrb[0].mxu0 %v7999
      %v8435 = vpop.f32.mrb[0].mxu0
      %v8436 = vadd.f32 0.0, %v8435
      %v8437 = vpop.f32.mrb[0].mxu0
      %v8438 = vpop.f32.mrb[0].mxu0
      %v8439 = vadd.f32 0.0, %v8438
      %v8440 = vpop.f32.mrb[0].mxu0
      %8441 = vmatprep.mubr.bf16.mxu0 0
      %8442 = vmatmul.mubr.bf16.gmra.mrb[0].mxu0 %v7998
      %v8443 = vpop.f32.mrb[0].mxu0
      %v8444 = vadd.f32 0.0, %v8443
      %v8445 = vpop.f32.mrb[0].mxu0
      %v8446 = vpop.f32.mrb[0].mxu0
      %v8447 = vpop.f32.mrb[0].mxu0
      %8448 = vdwg.mxu0
      %v8449 = vadd.f32 %v7817, %v8124
      %v8450 = vadd.f32 %v7818, %v8127
      %v8451 = vadd.f32 %v7819, %v8132
      %v8452 = vadd.f32 %v7820, %v8135
      %v8453 = vadd.f32 %v7821, %v8140
      %v8454 = vadd.f32 %v7822, %v8143
      %v8455 = vadd.f32 %v7823, %v8148
      %v8456 = vadd.f32 %v7824, %v8151
      %v8457 = vadd.f32 %v7825, %v8156
      %v8458 = vadd.f32 %v7826, %v8159
      %v8459 = vadd.f32 %v7827, %v8164
      %v8460 = vadd.f32 %v7828, %v8167
      %v8461 = vadd.f32 %v7829, %v8172
      %v8462 = vadd.f32 %v7830, %v8175
      %v8463 = vadd.f32 %v7831, %v8180
      %v8464 = vadd.f32 %v7832, %v8183
      %v8465 = vadd.f32 %v7833, %v8188
      %v8466 = vadd.f32 %v7834, %v8191
      %v8467 = vadd.f32 %v7835, %v8196
      %v8468 = vadd.f32 %v7836, %v8199
      %v8469 = vadd.f32 %v7837, %v8204
      %v8470 = vadd.f32 %v7838, %v8207
      %v8471 = vadd.f32 %v7839, %v8212
      %v8472 = vadd.f32 %v7840, %v8215
      %v8473 = vadd.f32 %v7841, %v8220
      %v8474 = vadd.f32 %v7842, %v8223
      %v8475 = vadd.f32 %v7843, %v8228
      %v8476 = vadd.f32 %v7844, %v8231
      %v8477 = vadd.f32 %v7845, %v8236
      %v8478 = vadd.f32 %v7846, %v8239
      %v8479 = vadd.f32 %v7847, %v8244
      %v8480 = vadd.f32 %v7848, %v8247
      %v8481 = vadd.f32 %v7849, %v8252
      %v8482 = vadd.f32 %v7850, %v8255
      %v8483 = vadd.f32 %v7851, %v8260
      %v8484 = vadd.f32 %v7852, %v8263
      %v8485 = vadd.f32 %v7853, %v8268
      %v8486 = vadd.f32 %v7854, %v8271
      %v8487 = vadd.f32 %v7855, %v8276
      %v8488 = vadd.f32 %v7856, %v8279
      %v8489 = vadd.f32 %v7857, %v8284
      %v8490 = vadd.f32 %v7858, %v8287
      %v8491 = vadd.f32 %v7859, %v8292
      %v8492 = vadd.f32 %v7860, %v8295
      %v8493 = vadd.f32 %v7861, %v8300
      %v8494 = vadd.f32 %v7862, %v8303
      %v8495 = vadd.f32 %v7863, %v8308
      %v8496 = vadd.f32 %v7864, %v8311
      %v8497 = vadd.f32 %v7865, %v8316
      %v8498 = vadd.f32 %v7866, %v8319
      %v8499 = vadd.f32 %v7867, %v8324
      %v8500 = vadd.f32 %v7868, %v8327
      %v8501 = vadd.f32 %v7869, %v8332
      %v8502 = vadd.f32 %v7870, %v8335
      %v8503 = vadd.f32 %v7871, %v8340
      %v8504 = vadd.f32 %v7872, %v8343
      %v8505 = vadd.f32 %v7873, %v8348
      %v8506 = vadd.f32 %v7874, %v8351
      %v8507 = vadd.f32 %v7875, %v8356
      %v8508 = vadd.f32 %v7876, %v8359
      %v8509 = vadd.f32 %v7877, %v8364
      %v8510 = vadd.f32 %v7878, %v8367
      %v8511 = vadd.f32 %v7879, %v8372
      %v8512 = vadd.f32 %v7880, %v8375
      %v8513 = vadd.f32 %v7881, %v8380
      %v8514 = vadd.f32 %v7882, %v8383
      %v8515 = vadd.f32 %v7883, %v8388
      %v8516 = vadd.f32 %v7884, %v8391
      %v8517 = vadd.f32 %v7885, %v8396
      %v8518 = vadd.f32 %v7886, %v8399
      %v8519 = vadd.f32 %v7887, %v8404
      %v8520 = vadd.f32 %v7888, %v8407
      %v8521 = vadd.f32 %v7889, %v8412
      %v8522 = vadd.f32 %v7890, %v8415
      %v8523 = vadd.f32 %v7891, %v8420
      %v8524 = vadd.f32 %v7892, %v8423
      %v8525 = vadd.f32 %v7893, %v8428
      %v8526 = vadd.f32 %v7894, %v8431
      %v8527 = vadd.f32 %v7895, %v8436
      %v8528 = vadd.f32 %v7896, %v8439
      %v8529 = vadd.f32 %v7897, %v8444
      %v8530 = vld [vmem:[%s6] sm:$0x1]
      %v8532 = vlaneseq
      %v8533 = vshrl.u32 %v8532, 7
      %v8534 = vsub.s32 0, %v8533
      %v8535 = vrot.slane %v8530, %v8534
      %v8537 = vmul.f32 %v8449, %v8535
      %v8538 = vmul.f32 %v8450, %v8535
      %v8539 = vmul.f32 %v8451, %v8535
      %v8540 = vmul.f32 %v8452, %v8535
      %v8541 = vmul.f32 %v8453, %v8535
      %v8542 = vmul.f32 %v8454, %v8535
      %v8543 = vmul.f32 %v8455, %v8535
      %v8544 = vmul.f32 %v8456, %v8535
      %v8545 = vmul.f32 %v8457, %v8535
      %v8546 = vmul.f32 %v8458, %v8535
      %v8547 = vmul.f32 %v8459, %v8535
      %v8548 = vmul.f32 %v8460, %v8535
      %v8549 = vmul.f32 %v8461, %v8535
      %v8550 = vmul.f32 %v8462, %v8535
      %v8551 = vmul.f32 %v8463, %v8535
      %v8552 = vmul.f32 %v8464, %v8535
      %v8553 = vmul.f32 %v8465, %v8535
      %v8554 = vmul.f32 %v8466, %v8535
      %v8555 = vmul.f32 %v8467, %v8535
      %v8556 = vmul.f32 %v8468, %v8535
      %v8557 = vmul.f32 %v8469, %v8535
      %v8558 = vmul.f32 %v8470, %v8535
      %v8559 = vmul.f32 %v8471, %v8535
      %v8560 = vmul.f32 %v8472, %v8535
      %v8561 = vmul.f32 %v8473, %v8535
      %v8562 = vmul.f32 %v8474, %v8535
      %v8563 = vmul.f32 %v8475, %v8535
      %v8564 = vmul.f32 %v8476, %v8535
      %v8565 = vmul.f32 %v8477, %v8535
      %v8566 = vmul.f32 %v8478, %v8535
      %v8567 = vmul.f32 %v8479, %v8535
      %v8568 = vmul.f32 %v8480, %v8535
      %v8569 = vmul.f32 %v8481, %v8535
      %v8570 = vmul.f32 %v8482, %v8535
      %v8571 = vmul.f32 %v8483, %v8535
      %v8572 = vmul.f32 %v8484, %v8535
      %v8573 = vmul.f32 %v8485, %v8535
      %v8574 = vmul.f32 %v8486, %v8535
      %v8575 = vmul.f32 %v8487, %v8535
      %v8576 = vmul.f32 %v8488, %v8535
      %v8577 = vmul.f32 %v8489, %v8535
      %v8578 = vmul.f32 %v8490, %v8535
      %v8579 = vmul.f32 %v8491, %v8535
      %v8580 = vmul.f32 %v8492, %v8535
      %v8581 = vmul.f32 %v8493, %v8535
      %v8582 = vmul.f32 %v8494, %v8535
      %v8583 = vmul.f32 %v8495, %v8535
      %v8584 = vmul.f32 %v8496, %v8535
      %v8585 = vmul.f32 %v8497, %v8535
      %v8586 = vmul.f32 %v8498, %v8535
      %v8587 = vmul.f32 %v8499, %v8535
      %v8588 = vmul.f32 %v8500, %v8535
      %v8589 = vmul.f32 %v8501, %v8535
      %v8590 = vmul.f32 %v8502, %v8535
      %v8591 = vmul.f32 %v8503, %v8535
      %v8592 = vmul.f32 %v8504, %v8535
      %v8593 = vmul.f32 %v8505, %v8535
      %v8594 = vmul.f32 %v8506, %v8535
      %v8595 = vmul.f32 %v8507, %v8535
      %v8596 = vmul.f32 %v8508, %v8535
      %v8597 = vmul.f32 %v8509, %v8535
      %v8598 = vmul.f32 %v8510, %v8535
      %v8599 = vmul.f32 %v8511, %v8535
      %v8600 = vmul.f32 %v8512, %v8535
      %v8601 = vmul.f32 %v8513, %v8535
      %v8602 = vmul.f32 %v8514, %v8535
      %v8603 = vmul.f32 %v8515, %v8535
      %v8604 = vmul.f32 %v8516, %v8535
      %v8605 = vmul.f32 %v8517, %v8535
      %v8606 = vmul.f32 %v8518, %v8535
      %v8607 = vmul.f32 %v8519, %v8535
      %v8608 = vmul.f32 %v8520, %v8535
      %v8609 = vmul.f32 %v8521, %v8535
      %v8610 = vmul.f32 %v8522, %v8535
      %v8611 = vmul.f32 %v8523, %v8535
      %v8612 = vmul.f32 %v8524, %v8535
      %v8613 = vmul.f32 %v8525, %v8535
      %v8614 = vmul.f32 %v8526, %v8535
      %v8615 = vmul.f32 %v8527, %v8535
      %v8616 = vmul.f32 %v8528, %v8535
      %v8617 = vmul.f32 %v8529, %v8535
      %v8618 = vld [vmem:[%s7] sm:$0x1]
      %v8620 = vlaneseq
      %v8621 = vshrl.u32 %v8620, 7
      %v8622 = vsub.s32 0, %v8621
      %v8623 = vrot.slane %v8618, %v8622
      %v8625 = vadd.f32 %v8537, %v8623
      %v8626 = vadd.f32 %v8538, %v8623
      %v8627 = vadd.f32 %v8539, %v8623
      %v8628 = vadd.f32 %v8540, %v8623
      %v8629 = vadd.f32 %v8541, %v8623
      %v8630 = vadd.f32 %v8542, %v8623
      %v8631 = vadd.f32 %v8543, %v8623
      %v8632 = vadd.f32 %v8544, %v8623
      %v8633 = vadd.f32 %v8545, %v8623
      %v8634 = vadd.f32 %v8546, %v8623
      %v8635 = vadd.f32 %v8547, %v8623
      %v8636 = vadd.f32 %v8548, %v8623
      %v8637 = vadd.f32 %v8549, %v8623
      %v8638 = vadd.f32 %v8550, %v8623
      %v8639 = vadd.f32 %v8551, %v8623
      %v8640 = vadd.f32 %v8552, %v8623
      %v8641 = vadd.f32 %v8553, %v8623
      %v8642 = vadd.f32 %v8554, %v8623
      %v8643 = vadd.f32 %v8555, %v8623
      %v8644 = vadd.f32 %v8556, %v8623
      %v8645 = vadd.f32 %v8557, %v8623
      %v8646 = vadd.f32 %v8558, %v8623
      %v8647 = vadd.f32 %v8559, %v8623
      %v8648 = vadd.f32 %v8560, %v8623
      %v8649 = vadd.f32 %v8561, %v8623
      %v8650 = vadd.f32 %v8562, %v8623
      %v8651 = vadd.f32 %v8563, %v8623
      %v8652 = vadd.f32 %v8564, %v8623
      %v8653 = vadd.f32 %v8565, %v8623
      %v8654 = vadd.f32 %v8566, %v8623
      %v8655 = vadd.f32 %v8567, %v8623
      %v8656 = vadd.f32 %v8568, %v8623
      %v8657 = vadd.f32 %v8569, %v8623
      %v8658 = vadd.f32 %v8570, %v8623
      %v8659 = vadd.f32 %v8571, %v8623
      %v8660 = vadd.f32 %v8572, %v8623
      %v8661 = vadd.f32 %v8573, %v8623
      %v8662 = vadd.f32 %v8574, %v8623
      %v8663 = vadd.f32 %v8575, %v8623
      %v8664 = vadd.f32 %v8576, %v8623
      %v8665 = vadd.f32 %v8577, %v8623
      %v8666 = vadd.f32 %v8578, %v8623
      %v8667 = vadd.f32 %v8579, %v8623
      %v8668 = vadd.f32 %v8580, %v8623
      %v8669 = vadd.f32 %v8581, %v8623
      %v8670 = vadd.f32 %v8582, %v8623
      %v8671 = vadd.f32 %v8583, %v8623
      %v8672 = vadd.f32 %v8584, %v8623
      %v8673 = vadd.f32 %v8585, %v8623
      %v8674 = vadd.f32 %v8586, %v8623
      %v8675 = vadd.f32 %v8587, %v8623
      %v8676 = vadd.f32 %v8588, %v8623
      %v8677 = vadd.f32 %v8589, %v8623
      %v8678 = vadd.f32 %v8590, %v8623
      %v8679 = vadd.f32 %v8591, %v8623
      %v8680 = vadd.f32 %v8592, %v8623
      %v8681 = vadd.f32 %v8593, %v8623
      %v8682 = vadd.f32 %v8594, %v8623
      %v8683 = vadd.f32 %v8595, %v8623
      %v8684 = vadd.f32 %v8596, %v8623
      %v8685 = vadd.f32 %v8597, %v8623
      %v8686 = vadd.f32 %v8598, %v8623
      %v8687 = vadd.f32 %v8599, %v8623
      %v8688 = vadd.f32 %v8600, %v8623
      %v8689 = vadd.f32 %v8601, %v8623
      %v8690 = vadd.f32 %v8602, %v8623
      %v8691 = vadd.f32 %v8603, %v8623
      %v8692 = vadd.f32 %v8604, %v8623
      %v8693 = vadd.f32 %v8605, %v8623
      %v8694 = vadd.f32 %v8606, %v8623
      %v8695 = vadd.f32 %v8607, %v8623
      %v8696 = vadd.f32 %v8608, %v8623
      %v8697 = vadd.f32 %v8609, %v8623
      %v8698 = vadd.f32 %v8610, %v8623
      %v8699 = vadd.f32 %v8611, %v8623
      %v8700 = vadd.f32 %v8612, %v8623
      %v8701 = vadd.f32 %v8613, %v8623
      %v8702 = vadd.f32 %v8614, %v8623
      %v8703 = vadd.f32 %v8615, %v8623
      %v8704 = vadd.f32 %v8616, %v8623
      %v8705 = vadd.f32 %v8617, %v8623
      %v8706 = vmax.f32 %v8625, 0.0
      %v8707 = vmax.f32 %v8626, 0.0
      %v8708 = vmax.f32 %v8627, 0.0
      %v8709 = vmax.f32 %v8628, 0.0
      %v8710 = vmax.f32 %v8629, 0.0
      %v8711 = vmax.f32 %v8630, 0.0
      %v8712 = vmax.f32 %v8631, 0.0
      %v8713 = vmax.f32 %v8632, 0.0
      %v8714 = vmax.f32 %v8633, 0.0
      %v8715 = vmax.f32 %v8634, 0.0
      %v8716 = vmax.f32 %v8635, 0.0
      %v8717 = vmax.f32 %v8636, 0.0
      %v8718 = vmax.f32 %v8637, 0.0
      %v8719 = vmax.f32 %v8638, 0.0
      %v8720 = vmax.f32 %v8639, 0.0
      %v8721 = vmax.f32 %v8640, 0.0
      %v8722 = vmax.f32 %v8641, 0.0
      %v8723 = vmax.f32 %v8642, 0.0
      %v8724 = vmax.f32 %v8643, 0.0
      %v8725 = vmax.f32 %v8644, 0.0
      %v8726 = vmax.f32 %v8645, 0.0
      %v8727 = vmax.f32 %v8646, 0.0
      %v8728 = vmax.f32 %v8647, 0.0
      %v8729 = vmax.f32 %v8648, 0.0
      %v8730 = vmax.f32 %v8649, 0.0
      %v8731 = vmax.f32 %v8650, 0.0
      %v8732 = vmax.f32 %v8651, 0.0
      %v8733 = vmax.f32 %v8652, 0.0
      %v8734 = vmax.f32 %v8653, 0.0
      %v8735 = vmax.f32 %v8654, 0.0
      %v8736 = vmax.f32 %v8655, 0.0
      %v8737 = vmax.f32 %v8656, 0.0
      %v8738 = vmax.f32 %v8657, 0.0
      %v8739 = vmax.f32 %v8658, 0.0
      %v8740 = vmax.f32 %v8659, 0.0
      %v8741 = vmax.f32 %v8660, 0.0
      %v8742 = vmax.f32 %v8661, 0.0
      %v8743 = vmax.f32 %v8662, 0.0
      %v8744 = vmax.f32 %v8663, 0.0
      %v8745 = vmax.f32 %v8664, 0.0
      %v8746 = vmax.f32 %v8665, 0.0
      %v8747 = vmax.f32 %v8666, 0.0
      %v8748 = vmax.f32 %v8667, 0.0
      %v8749 = vmax.f32 %v8668, 0.0
      %v8750 = vmax.f32 %v8669, 0.0
      %v8751 = vmax.f32 %v8670, 0.0
      %v8752 = vmax.f32 %v8671, 0.0
      %v8753 = vmax.f32 %v8672, 0.0
      %v8754 = vmax.f32 %v8673, 0.0
      %v8755 = vmax.f32 %v8674, 0.0
      %v8756 = vmax.f32 %v8675, 0.0
      %v8757 = vmax.f32 %v8676, 0.0
      %v8758 = vmax.f32 %v8677, 0.0
      %v8759 = vmax.f32 %v8678, 0.0
      %v8760 = vmax.f32 %v8679, 0.0
      %v8761 = vmax.f32 %v8680, 0.0
      %v8762 = vmax.f32 %v8681, 0.0
      %v8763 = vmax.f32 %v8682, 0.0
      %v8764 = vmax.f32 %v8683, 0.0
      %v8765 = vmax.f32 %v8684, 0.0
      %v8766 = vmax.f32 %v8685, 0.0
      %v8767 = vmax.f32 %v8686, 0.0
      %v8768 = vmax.f32 %v8687, 0.0
      %v8769 = vmax.f32 %v8688, 0.0
      %v8770 = vmax.f32 %v8689, 0.0
      %v8771 = vmax.f32 %v8690, 0.0
      %v8772 = vmax.f32 %v8691, 0.0
      %v8773 = vmax.f32 %v8692, 0.0
      %v8774 = vmax.f32 %v8693, 0.0
      %v8775 = vmax.f32 %v8694, 0.0
      %v8776 = vmax.f32 %v8695, 0.0
      %v8777 = vmax.f32 %v8696, 0.0
      %v8778 = vmax.f32 %v8697, 0.0
      %v8779 = vmax.f32 %v8698, 0.0
      %v8780 = vmax.f32 %v8699, 0.0
      %v8781 = vmax.f32 %v8700, 0.0
      %v8782 = vmax.f32 %v8701, 0.0
      %v8783 = vmax.f32 %v8702, 0.0
      %v8784 = vmax.f32 %v8703, 0.0
      %v8785 = vmax.f32 %v8704, 0.0
      %v8786 = vmax.f32 %v8705, 0.0
      %v8787 = vld [vmem:[%s8] sm:$0xff]
      %v8788 = vld [vmem:[%s8 + $0x8] sm:$0xff]
      %v8789 = vld [vmem:[%s8 + $0x10] sm:$0xff]
      %v8790 = vld [vmem:[%s8 + $0x18] sm:$0xff]
      %v8791 = vld [vmem:[%s8 + $0x20] sm:$0xff]
      %v8792 = vld [vmem:[%s8 + $0x28] sm:$0xff]
      %vm8793 = vcmask 64512
      %v8795 = vsel %vm8793, %v8792, 0
      %8797 = vmatprep.subr.mxu0 0.0
      %8798 = vmatpush1.msra.mxu0 %v8706
      %8799 = vmatprep.subr.mxu0 0.0
      %8800 = vmatpush1.msra.mxu0 %v8707
      %8801 = vmatprep.subr.mxu0 0.0
      %8802 = vmatpush1.msra.mxu0 %v8708
      %8803 = vmatprep.subr.mxu0 0.0
      %8804 = vmatpush1.msra.mxu0 %v8709
      %8805 = vmatprep.subr.mxu0 0.0
      %8806 = vmatpush1.msra.mxu0 %v8710
      %8807 = vmatprep.subr.mxu0 0.0
      %8808 = vmatpush1.msra.mxu0 %v8711
      %8809 = vmatprep.subr.mxu0 0.0
      %8810 = vmatpush1.msra.mxu0 %v8712
      %8811 = vmatprep.subr.mxu0 0.0
      %8812 = vmatpush1.msra.mxu0 %v8713
      %8813 = vmatprep.subr.mxu0 0.0
      %8814 = vmatpush1.msra.mxu0 %v8714
      %8815 = vmatprep.subr.mxu0 0.0
      %8816 = vmatpush1.msra.mxu0 %v8715
      %8817 = vmatprep.subr.mxu0 0.0
      %8818 = vmatpush1.msra.mxu0 %v8716
      %8819 = vmatprep.subr.mxu0 0.0
      %8820 = vmatpush1.msra.mxu0 %v8717
      %8821 = vmatprep.subr.mxu0 0.0
      %8822 = vmatpush1.msra.mxu0 %v8718
      %8823 = vmatprep.subr.mxu0 0.0
      %8824 = vmatpush1.msra.mxu0 %v8719
      %8825 = vmatprep.subr.mxu0 0.0
      %8826 = vmatpush1.msra.mxu0 %v8720
      %8827 = vmatprep.subr.mxu0 0.0
      %8828 = vmatpush1.msra.mxu0 %v8721
      %8829 = vmatprep.subr.mxu0 0.0
      %8830 = vmatpush1.msra.mxu0 %v8722
      %8831 = vmatprep.subr.mxu0 0.0
      %8832 = vmatpush1.msra.mxu0 %v8723
      %8833 = vmatprep.subr.mxu0 0.0
      %8834 = vmatpush1.msra.mxu0 %v8724
      %8835 = vmatprep.subr.mxu0 0.0
      %8836 = vmatpush1.msra.mxu0 %v8725
      %8837 = vmatprep.subr.mxu0 0.0
      %8838 = vmatpush1.msra.mxu0 %v8726
      %8839 = vmatprep.subr.mxu0 0.0
      %8840 = vmatpush1.msra.mxu0 %v8727
      %8841 = vmatprep.subr.mxu0 0.0
      %8842 = vmatpush1.msra.mxu0 %v8728
      %8843 = vmatprep.subr.mxu0 0.0
      %8844 = vmatpush1.msra.mxu0 %v8729
      %8845 = vmatprep.subr.mxu0 0.0
      %8846 = vmatpush1.msra.mxu0 %v8730
      %8847 = vmatprep.subr.mxu0 0.0
      %8848 = vmatpush1.msra.mxu0 %v8731
      %8849 = vmatprep.subr.mxu0 0.0
      %8850 = vmatpush1.msra.mxu0 %v8732
      %8851 = vmatprep.subr.mxu0 0.0
      %8852 = vmatpush1.msra.mxu0 %v8733
      %8853 = vmatprep.subr.mxu0 0.0
      %8854 = vmatpush1.msra.mxu0 %v8734
      %8855 = vmatprep.subr.mxu0 0.0
      %8856 = vmatpush1.msra.mxu0 %v8735
      %8857 = vmatprep.subr.mxu0 0.0
      %8858 = vmatpush1.msra.mxu0 %v8736
      %8859 = vmatprep.subr.mxu0 0.0
      %8860 = vmatpush1.msra.mxu0 %v8737
      %8861 = vmatprep.mubr.f32.mxu0 %v8788
      %8862 = vmatmul.mubr.f32.gmra.mrb[0].mxu0 %v8787
      %v8863 = vpop.f32.mrb[0].mxu0
      %v8864 = vadd.f32 0.0, %v8863
      %v8865 = vpop.f32.mrb[0].mxu0
      %8866 = vdwg.mxu0
      %8867 = vmatprep.subr.mxu0 0.0
      %8868 = vmatpush1.msra.mxu0 %v8738
      %8869 = vmatprep.subr.mxu0 0.0
      %8870 = vmatpush1.msra.mxu0 %v8739
      %8871 = vmatprep.subr.mxu0 0.0
      %8872 = vmatpush1.msra.mxu0 %v8740
      %8873 = vmatprep.subr.mxu0 0.0
      %8874 = vmatpush1.msra.mxu0 %v8741
      %8875 = vmatprep.subr.mxu0 0.0
      %8876 = vmatpush1.msra.mxu0 %v8742
      %8877 = vmatprep.subr.mxu0 0.0
      %8878 = vmatpush1.msra.mxu0 %v8743
      %8879 = vmatprep.subr.mxu0 0.0
      %8880 = vmatpush1.msra.mxu0 %v8744
      %8881 = vmatprep.subr.mxu0 0.0
      %8882 = vmatpush1.msra.mxu0 %v8745
      %8883 = vmatprep.subr.mxu0 0.0
      %8884 = vmatpush1.msra.mxu0 %v8746
      %8885 = vmatprep.subr.mxu0 0.0
      %8886 = vmatpush1.msra.mxu0 %v8747
      %8887 = vmatprep.subr.mxu0 0.0
      %8888 = vmatpush1.msra.mxu0 %v8748
      %8889 = vmatprep.subr.mxu0 0.0
      %8890 = vmatpush1.msra.mxu0 %v8749
      %8891 = vmatprep.subr.mxu0 0.0
      %8892 = vmatpush1.msra.mxu0 %v8750
      %8893 = vmatprep.subr.mxu0 0.0
      %8894 = vmatpush1.msra.mxu0 %v8751
      %8895 = vmatprep.subr.mxu0 0.0
      %8896 = vmatpush1.msra.mxu0 %v8752
      %8897 = vmatprep.subr.mxu0 0.0
      %8898 = vmatpush1.msra.mxu0 %v8753
      %8899 = vmatprep.subr.mxu0 0.0
      %8900 = vmatpush1.msra.mxu0 %v8754
      %8901 = vmatprep.subr.mxu0 0.0
      %8902 = vmatpush1.msra.mxu0 %v8755
      %8903 = vmatprep.subr.mxu0 0.0
      %8904 = vmatpush1.msra.mxu0 %v8756
      %8905 = vmatprep.subr.mxu0 0.0
      %8906 = vmatpush1.msra.mxu0 %v8757
      %8907 = vmatprep.subr.mxu0 0.0
      %8908 = vmatpush1.msra.mxu0 %v8758
      %8909 = vmatprep.subr.mxu0 0.0
      %8910 = vmatpush1.msra.mxu0 %v8759
      %8911 = vmatprep.subr.mxu0 0.0
      %8912 = vmatpush1.msra.mxu0 %v8760
      %8913 = vmatprep.subr.mxu0 0.0
      %8914 = vmatpush1.msra.mxu0 %v8761
      %8915 = vmatprep.subr.mxu0 0.0
      %8916 = vmatpush1.msra.mxu0 %v8762
      %8917 = vmatprep.subr.mxu0 0.0
      %8918 = vmatpush1.msra.mxu0 %v8763
      %8919 = vmatprep.subr.mxu0 0.0
      %8920 = vmatpush1.msra.mxu0 %v8764
      %8921 = vmatprep.subr.mxu0 0.0
      %8922 = vmatpush1.msra.mxu0 %v8765
      %8923 = vmatprep.subr.mxu0 0.0
      %8924 = vmatpush1.msra.mxu0 %v8766
      %8925 = vmatprep.subr.mxu0 0.0
      %8926 = vmatpush1.msra.mxu0 %v8767
      %8927 = vmatprep.subr.mxu0 0.0
      %8928 = vmatpush1.msra.mxu0 %v8768
      %8929 = vmatprep.subr.mxu0 0.0
      %8930 = vmatpush1.msra.mxu0 %v8769
      %8931 = vmatprep.mubr.f32.mxu0 %v8790
      %8932 = vmatmul.mubr.f32.gmra.mrb[0].mxu0 %v8789
      %v8933 = vpop.f32.mrb[0].mxu0
      %v8934 = vadd.f32 %v8864, %v8933
      %v8935 = vpop.f32.mrb[0].mxu0
      %8936 = vdwg.mxu0
      %8937 = vmatprep.subr.mxu0 0.0
      %8938 = vmatpush1.msra.mxu0 %v8770
      %8939 = vmatprep.subr.mxu0 0.0
      %8940 = vmatpush1.msra.mxu0 %v8771
      %8941 = vmatprep.subr.mxu0 0.0
      %8942 = vmatpush1.msra.mxu0 %v8772
      %8943 = vmatprep.subr.mxu0 0.0
      %8944 = vmatpush1.msra.mxu0 %v8773
      %8945 = vmatprep.subr.mxu0 0.0
      %8946 = vmatpush1.msra.mxu0 %v8774
      %8947 = vmatprep.subr.mxu0 0.0
      %8948 = vmatpush1.msra.mxu0 %v8775
      %8949 = vmatprep.subr.mxu0 0.0
      %8950 = vmatpush1.msra.mxu0 %v8776
      %8951 = vmatprep.subr.mxu0 0.0
      %8952 = vmatpush1.msra.mxu0 %v8777
      %8953 = vmatprep.subr.mxu0 0.0
      %8954 = vmatpush1.msra.mxu0 %v8778
      %8955 = vmatprep.subr.mxu0 0.0
      %8956 = vmatpush1.msra.mxu0 %v8779
      %8957 = vmatprep.subr.mxu0 0.0
      %8958 = vmatpush1.msra.mxu0 %v8780
      %8959 = vmatprep.subr.mxu0 0.0
      %8960 = vmatpush1.msra.mxu0 %v8781
      %8961 = vmatprep.subr.mxu0 0.0
      %8962 = vmatpush1.msra.mxu0 %v8782
      %8963 = vmatprep.subr.mxu0 0.0
      %8964 = vmatpush1.msra.mxu0 %v8783
      %8965 = vmatprep.subr.mxu0 0.0
      %8966 = vmatpush1.msra.mxu0 %v8784
      %8967 = vmatprep.subr.mxu0 0.0
      %8968 = vmatpush1.msra.mxu0 %v8785
      %8969 = vmatprep.subr.mxu0 0.0
      %8970 = vmatpush1.msra.mxu0 %v8786
      %8971 = vmatprep.subr.mxu0 0.0
      %8972 = vmatpush1.msra.mxu0 0.0
      %8973 = vmatprep.subr.mxu0 0.0
      %8974 = vmatpush1.msra.mxu0 0.0
      %8975 = vmatprep.subr.mxu0 0.0
      %8976 = vmatpush1.msra.mxu0 0.0
      %8977 = vmatprep.subr.mxu0 0.0
      %8978 = vmatpush1.msra.mxu0 0.0
      %8979 = vmatprep.subr.mxu0 0.0
      %8980 = vmatpush1.msra.mxu0 0.0
      %8981 = vmatprep.subr.mxu0 0.0
      %8982 = vmatpush1.msra.mxu0 0.0
      %8983 = vmatprep.subr.mxu0 0.0
      %8984 = vmatpush1.msra.mxu0 0.0
      %8985 = vmatprep.subr.mxu0 0.0
      %8986 = vmatpush1.msra.mxu0 0.0
      %8987 = vmatprep.subr.mxu0 0.0
      %8988 = vmatpush1.msra.mxu0 0.0
      %8989 = vmatprep.subr.mxu0 0.0
      %8990 = vmatpush1.msra.mxu0 0.0
      %8991 = vmatprep.subr.mxu0 0.0
      %8992 = vmatpush1.msra.mxu0 0.0
      %8993 = vmatprep.subr.mxu0 0.0
      %8994 = vmatpush1.msra.mxu0 0.0
      %8995 = vmatprep.subr.mxu0 0.0
      %8996 = vmatpush1.msra.mxu0 0.0
      %8997 = vmatprep.subr.mxu0 0.0
      %8998 = vmatpush1.msra.mxu0 0.0
      %8999 = vmatprep.subr.mxu0 0.0
      %9000 = vmatpush1.msra.mxu0 0.0
      %9001 = vmatprep.mubr.f32.mxu0 %v8795
      %9002 = vmatmul.mubr.f32.gmra.mrb[0].mxu0 %v8791
      %v9003 = vpop.f32.mrb[0].mxu0
      %v9004 = vadd.f32 %v8934, %v9003
      %v9005 = vpop.f32.mrb[0].mxu0
      %9006 = vdwg.mxu0
      %v9007 = vpack.c.bf16 %v9004, %v9004
      %v9008 = vld [vmem:[%s9] sm:$0xf]
      %v9009 = vld [vmem:[%s9 + $0x4] sm:$0xf]
      %v9010 = vld [vmem:[%s9 + $0x8] sm:$0xf]
      %v9011 = vld [vmem:[%s9 + $0xc] sm:$0xf]
      %v9012 = vld [vmem:[%s9 + $0x10] sm:$0xf]
      %v9013 = vld [vmem:[%s9 + $0x14] sm:$0xf]
      %v9014 = vld [vmem:[%s9 + $0x18] sm:$0xf]
      %v9015 = vld [vmem:[%s9 + $0x1c] sm:$0xf]
      %v9016 = vld [vmem:[%s9 + $0x20] sm:$0xf]
      %v9017 = vld [vmem:[%s9 + $0x24] sm:$0xf]
      %v9018 = vld [vmem:[%s9 + $0x28] sm:$0xf]
      %v9019 = vld [vmem:[%s9 + $0x2c] sm:$0xf]
      %v9020 = vld [vmem:[%s9 + $0x30] sm:$0xf]
      %v9021 = vld [vmem:[%s9 + $0x34] sm:$0xf]
      %v9022 = vld [vmem:[%s9 + $0x38] sm:$0xf]
      %v9023 = vld [vmem:[%s9 + $0x3c] sm:$0xf]
      %v9024 = vld [vmem:[%s10] sm:$0x1]
      %v9026 = vlaneseq
      %v9027 = vshrl.u32 %v9026, 7
      %v9028 = vsub.s32 0, %v9027
      %v9029 = vrot.slane %v9024, %v9028
      %v9047 = vunpack.c.l.b16 %v9008
      %v9048 = vunpack.c.l.b16 %v9009
      %v9049 = vunpack.c.l.b16 %v9010
      %v9050 = vunpack.c.l.b16 %v9011
      %v9051 = vunpack.c.l.b16 %v9012
      %v9052 = vunpack.c.l.b16 %v9013
      %v9053 = vunpack.c.l.b16 %v9014
      %v9054 = vunpack.c.l.b16 %v9015
      %v9055 = vunpack.c.l.b16 %v9016
      %v9056 = vunpack.c.l.b16 %v9017
      %v9057 = vunpack.c.l.b16 %v9018
      %v9058 = vunpack.c.l.b16 %v9019
      %v9059 = vunpack.c.l.b16 %v9020
      %v9060 = vunpack.c.l.b16 %v9021
      %v9061 = vunpack.c.l.b16 %v9022
      %v9062 = vunpack.c.l.b16 %v9023
      %v9063 = vpack.c.b16 %v9048, %v9047
      %v9064 = vpack.c.b16 %v9050, %v9049
      %v9065 = vpack.c.b16 %v9052, %v9051
      %v9066 = vpack.c.b16 %v9054, %v9053
      %v9067 = vpack.c.b16 %v9056, %v9055
      %v9068 = vpack.c.b16 %v9058, %v9057
      %v9069 = vpack.c.b16 %v9060, %v9059
      %v9070 = vpack.c.b16 %v9062, %v9061
      %9079 = vmatprep.subr.bf16.mxu0 0
      %9080 = vmatpush1.bf16.msra.mxu0 %v9063
      %9081 = vmatprep.subr.bf16.mxu0 0
      %9082 = vmatpush1.bf16.msra.mxu0 %v9064
      %9083 = vmatprep.subr.bf16.mxu0 0
      %9084 = vmatpush1.bf16.msra.mxu0 %v9065
      %9085 = vmatprep.subr.bf16.mxu0 0
      %9086 = vmatpush1.bf16.msra.mxu0 %v9066
      %9087 = vmatprep.subr.bf16.mxu0 0
      %9088 = vmatpush1.bf16.msra.mxu0 %v9067
      %9089 = vmatprep.subr.bf16.mxu0 0
      %9090 = vmatpush1.bf16.msra.mxu0 %v9068
      %9091 = vmatprep.subr.bf16.mxu0 0
      %9092 = vmatpush1.bf16.msra.mxu0 %v9069
      %9093 = vmatprep.subr.bf16.mxu0 0
      %9094 = vmatpush1.bf16.msra.mxu0 %v9070
      %9095 = vmatprep.subr.bf16.mxu0 0
      %9096 = vmatpush1.bf16.msra.mxu0 0
      %9097 = vmatprep.subr.bf16.mxu0 0
      %9098 = vmatpush1.bf16.msra.mxu0 0
      %9099 = vmatprep.subr.bf16.mxu0 0
      %9100 = vmatpush1.bf16.msra.mxu0 0
      %9101 = vmatprep.subr.bf16.mxu0 0
      %9102 = vmatpush1.bf16.msra.mxu0 0
      %9103 = vmatprep.subr.bf16.mxu0 0
      %9104 = vmatpush1.bf16.msra.mxu0 0
      %9105 = vmatprep.subr.bf16.mxu0 0
      %9106 = vmatpush1.bf16.msra.mxu0 0
      %9107 = vmatprep.subr.bf16.mxu0 0
      %9108 = vmatpush1.bf16.msra.mxu0 0
      %9109 = vmatprep.subr.bf16.mxu0 0
      %9110 = vmatpush1.bf16.msra.mxu0 0
      %9111 = vmatprep.mubr.bf16.mxu0 0
      %9112 = vmatmul.mubr.bf16.gmra.mrb[0].mxu0 %v9007
      %v9113 = vpop.f32.mrb[0].mxu0
      %v9114 = vadd.f32 %v9029, %v9113
      %v9115 = vpop.f32.mrb[0].mxu0
      %v9116 = vpop.f32.mrb[0].mxu0
      %v9117 = vpop.f32.mrb[0].mxu0
      %9118 = vdwg.mxu0
      %v9119 = vmul.f32 %v9114, %v9114
      %9120 = vadd.xlane.f32.xlu0 %v9119
      %v9121 = vpop.xlane.xlu0 %9120
      %v9122 = vmax.f32 %v9121, 1e-24
      %v9123 = vrsqrt.pop %v9122
      %v9124 = vmul.f32 %v9114, %v9123
      %9125 = vst [vmem:[%s386] sm:$0x3] %v9124
      %p9126 = scmp.lt.s32.totalorder %s22, 1
      %s9127 = scalar_select %p9126, %s22, 1
      %s9128 = smul.addr %s9127, 2
      %s9129 = scalar_lea.vmem %s11, %s9128
      // Predicated region
      $region65: #{cov_model3_forward.1} parent=63 // pred_check
        %p9130 = pneg %p276
      $region66: #{cov_model3_forward.1} parent=63 // pred_check_branch
        %9132 = sbr.rel (%p9130) target = $region68
      $region67: #{cov_model3_forward.1} parent=63 // pred_region
        _
      $region68: #{cov_model3_forward.1} parent=63 // pred_fallthru
        _
    $region64: #{cov_model3_forward.1} parent=5 // pred_fallthru
      _
    %p9133 = scmp.le.s32.totalorder 2, %s17
    // Predicated region
    $region69: #{cov_model3_forward.1} parent=5 // pred_check
      %p9134 = pneg %p9133
    $region70: #{cov_model3_forward.1} parent=5 // pred_check_branch
      %9136 = sbr.rel (%p9134) target = $region72
    $region71: #{cov_model3_forward.1} parent=5 // pred_region
      %s9137 = ssub.s32 %s17, 2
      // Predicated region
      $region73: #{cov_model3_forward.1} parent=71 // pred_check
        %p9138 = pneg %p282
      $region74: #{cov_model3_forward.1} parent=71 // pred_check_branch
        %9140 = sbr.rel (%p9138) target = $region76
      $region75: #{cov_model3_forward.1} parent=71 // pred_region
        %p9141 = scmp.lt.s32.totalorder %s23, 1
        %s9142 = scalar_select %p9141, %s23, 1
        %s9143 = smul.addr %s9142, 2
        %s9144 = scalar_lea.vmem %s11, %s9143
      $region76: #{cov_model3_forward.1} parent=71 // pred_fallthru
        _
    $region72: #{cov_model3_forward.1} parent=5 // pred_fallthru
      _
  $region6: #{cov_model3_forward.1} parent=0 // loop_footer
    %s21 = sadd.s32 1, %s17
  $region7: #{cov_model3_forward.1} parent=0 // loop_footer_branch
    %16 = sbr.rel target = $region3
  $region8: #{cov_model3_forward.1} parent=0 // loop_exit
    _

</llo_original>
